<compile_context>
chip_gen: v6e
topology: v6e:2x2x1
jax: 0.10.0
libtpu: 0.0.40
codegen_flags: <defaults>
</compile_context>

<pallas_src>
import functools

import jax
import jax.numpy as jnp
from jax.experimental import pallas as pl
from jax.experimental.pallas import tpu as pltpu


# ----------------------------------------------------------------------------
# Fused kernel
# ----------------------------------------------------------------------------
def _mnist_fused_kernel(x_ref, w1_ref, b1_ref, w2_ref, b2_ref,
                        wf1_ref, bf1_ref, wf2_ref, bf2_ref,
                        o_ref, yw_ref, p1_ref, *, tb):
    """One batch tile (tb images) end-to-end.

    Layouts inside the kernel (all 2-D, rows = spatial_h * tb + batch):
      x_ref  : (1, 28*tb, 28)  f32   input pixels, row = h*tb + b
      w1_ref : (5, 28, 24*20)  bf16  banded conv1 weights (one slab per kernel row)
      w2_ref : (5, 12*20, 8*50) bf16 banded conv2 weights
      wf1_ref: (16, 50, 512)   bf16  fc1 split by (h,w) pool position, N padded 500->512
      wf2_ref: (512, 10)       bf16  fc2, K padded 500->512
      yw_ref : (24*tb, 12*20)  f32   scratch: conv1 output after W-direction pool
      p1_ref : (12*tb, 12*20)  f32   scratch: pool1 output (post bias+ReLU)
    """
    f32 = jnp.float32
    bf16 = jnp.bfloat16

    # ---------------- conv1: 5 banded matmuls, f32 accumulation ----------------
    xv = x_ref[0]                                        # (28*tb, 28) f32
    y1 = jnp.zeros((24 * tb, 24 * 20), f32)              # rows = oh*tb+b, cols = ow*20+co
    for i in range(5):
        slab = xv[i * tb:(i + 24) * tb, :].astype(bf16)  # (24*tb, 28)
        y1 = y1 + jnp.dot(slab, w1_ref[i], preferred_element_type=f32)

    # ------------- pool1 (2x2 / 2) fused with bias + ReLU epilogue -------------
    # W-direction pairwise max -> yw_ref (24*tb, 12*20)
    for q in range(12):
        yw_ref[:, q * 20:(q + 1) * 20] = jnp.maximum(
            y1[:, (2 * q) * 20:(2 * q + 1) * 20],
            y1[:, (2 * q + 1) * 20:(2 * q + 2) * 20])
    # H-direction pairwise max, then +bias, ReLU -> p1_ref (12*tb, 12*20)
    for p in range(12):
        h = jnp.maximum(yw_ref[(2 * p) * tb:(2 * p + 1) * tb, :],
                        yw_ref[(2 * p + 1) * tb:(2 * p + 2) * tb, :])
        p1_ref[p * tb:(p + 1) * tb, :] = jnp.maximum(h + b1_ref[...], 0.0)

    # ---------------- conv2: 5 banded matmuls, f32 accumulation ----------------
    y2 = jnp.zeros((8 * tb, 8 * 50), f32)                # rows = oh*tb+b, cols = ow*50+co
    for i in range(5):
        slab = p1_ref[i * tb:(i + 8) * tb, :].astype(bf16)   # (8*tb, 12*20)
        y2 = y2 + jnp.dot(slab, w2_ref[i], preferred_element_type=f32)

    # ------- pool2 (2x2 / 2) + bias + ReLU, then fc1 as sum of 16 matmuls -------
    wp = []
    for q2 in range(4):                                   # W-direction pool pieces
        wp.append(jnp.maximum(y2[:, (2 * q2) * 50:(2 * q2 + 1) * 50],
                              y2[:, (2 * q2 + 1) * 50:(2 * q2 + 2) * 50]))  # (8*tb, 50)

    h1 = jnp.zeros((tb, 512), f32)
    for p2 in range(4):
        for q2 in range(4):
            g = p2 * 4 + q2                               # pool position (h=p2, w=q2)
            piece = jnp.maximum(wp[q2][(2 * p2) * tb:(2 * p2 + 1) * tb, :],
                                wp[q2][(2 * p2 + 1) * tb:(2 * p2 + 2) * tb, :])
            piece = jnp.maximum(piece + b2_ref[...], 0.0).astype(bf16)      # (tb, 50)
            h1 = h1 + jnp.dot(piece, wf1_ref[g], preferred_element_type=f32)
    h1 = jnp.maximum(h1 + bf1_ref[...], 0.0).astype(bf16)                   # (tb, 512)

    # --------------------------- fc2 + log_softmax -----------------------------
    logits = jnp.dot(h1, wf2_ref[...], preferred_element_type=f32) + bf2_ref[...]
    m = jnp.max(logits, axis=-1, keepdims=True)
    s = logits - m
    lse = jnp.log(jnp.sum(jnp.exp(s), axis=-1, keepdims=True))
    o_ref[...] = (s - lse).astype(o_ref.dtype)


# ----------------------------------------------------------------------------
# Parameter packing (trace-time layout work; numerically identical to the module)
# ----------------------------------------------------------------------------
def pack_params(params):
    f32 = jnp.float32
    bf16 = jnp.bfloat16
    w1 = params["w_conv1"].astype(f32)                    # (5,5,1,20)  HWIO
    w2 = params["w_conv2"].astype(f32)                    # (5,5,20,50) HWIO

    # conv1 banded weights: w1_band[i][w, ow*20+co] = w1[i, w-ow, 0, co] (0<=w-ow<5)
    rows = []
    for i in range(5):
        m = jnp.zeros((28, 24, 20), f32)
        for j in range(5):
            sel = jnp.eye(28, 24, k=-j, dtype=f32)        # [w, ow] = 1 iff w == ow + j
            m = m + sel[:, :, None] * w1[i, j, 0][None, None, :]
        rows.append(m.reshape(28, 24 * 20))
    w1_band = jnp.stack(rows).astype(bf16)                # (5, 28, 480)

    # conv2 banded weights: w2_band[i][q*20+c, ow*50+co] = w2[i, q-ow, c, co]
    rows = []
    for i in range(5):
        m = jnp.zeros((12, 20, 8, 50), f32)
        for j in range(5):
            sel = jnp.eye(12, 8, k=-j, dtype=f32)         # [q, ow] = 1 iff q == ow + j
            m = m + sel[:, None, :, None] * w2[i, j][None, :, None, :]
        rows.append(m.reshape(12 * 20, 8 * 50))
    w2_band = jnp.stack(rows).astype(bf16)                # (5, 240, 400)

    b1t = jnp.tile(params["b_conv1"].astype(f32), 12).reshape(1, 240)
    b2r = params["b_conv2"].astype(f32).reshape(1, 50)

    # fc1: fold PyTorch (C,H,W) flatten order + pad 500 -> 512
    wf1 = params["w_fc1"].astype(f32)                     # (800, 500), row = c*16 + h*4 + w
    wf1 = wf1.reshape(50, 16, 500).transpose(1, 0, 2)     # (16, 50, 500), g = h*4 + w
    wf1 = jnp.pad(wf1, ((0, 0), (0, 0), (0, 12))).astype(bf16)   # (16, 50, 512)
    bf1 = jnp.pad(params["b_fc1"].astype(f32), (0, 12)).reshape(1, 512)

    wf2 = jnp.pad(params["w_fc2"].astype(f32), ((0, 12), (0, 0))).astype(bf16)  # (512, 10)
    bf2 = params["b_fc2"].astype(f32).reshape(1, 10)
    return w1_band, b1t, w2_band, b2r, wf1, bf1, wf2, bf2


def _prep_input(x_nchw, tb):
    """NCHW -> per-tile 2-D layout (nt, 28*tb, 28) with row = h*tb + batch."""
    n = x_nchw.shape[0]
    n_pad = ((n + tb - 1) // tb) * tb
    x = x_nchw.reshape(n, 28, 28).astype(jnp.float32)
    if n_pad != n:
        x = jnp.pad(x, ((0, n_pad - n), (0, 0), (0, 0)))
    nt = n_pad // tb
    x = x.reshape(nt, tb, 28, 28).transpose(0, 2, 1, 3).reshape(nt, 28 * tb, 28)
    return x, nt, n_pad


# ----------------------------------------------------------------------------
# Forward pass
# ----------------------------------------------------------------------------
def mnist_net_forward(x_nchw, params, *, tb=8):
    assert tb % 8 == 0
    n = x_nchw.shape[0]
    w1_band, b1t, w2_band, b2r, wf1, bf1, wf2, bf2 = pack_params(params)
    x_t, nt, n_pad = _prep_input(x_nchw, tb)

    kernel = functools.partial(_mnist_fused_kernel, tb=tb)
    out = pl.pallas_call(
        kernel,
        out_shape=jax.ShapeDtypeStruct((n_pad, 10), jnp.float32),
        grid_spec=pltpu.PrefetchScalarGridSpec(
            num_scalar_prefetch=0,
            grid=(nt,),
            in_specs=[
                pl.BlockSpec((1, 28 * tb, 28), lambda t: (t, 0, 0)),   # input tile
                pl.BlockSpec((5, 28, 480), lambda t: (0, 0, 0)),       # conv1 banded W
                pl.BlockSpec((1, 240), lambda t: (0, 0)),              # conv1 bias (tiled)
                pl.BlockSpec((5, 240, 400), lambda t: (0, 0, 0)),      # conv2 banded W
                pl.BlockSpec((1, 50), lambda t: (0, 0)),               # conv2 bias
                pl.BlockSpec((16, 50, 512), lambda t: (0, 0, 0)),      # fc1 W (permuted+padded)
                pl.BlockSpec((1, 512), lambda t: (0, 0)),              # fc1 bias
                pl.BlockSpec((512, 10), lambda t: (0, 0)),             # fc2 W (K padded)
                pl.BlockSpec((1, 10), lambda t: (0, 0)),               # fc2 bias
            ],
            out_specs=pl.BlockSpec((tb, 10), lambda t: (t, 0)),
            scratch_shapes=[
                pltpu.VMEM((24 * tb, 240), jnp.float32),   # conv1 W-pooled
                pltpu.VMEM((12 * tb, 240), jnp.float32),   # pool1 output
            ],
        ),
        compiler_params=pltpu.CompilerParams(
            dimension_semantics=("parallel",),
            vmem_limit_bytes=32 * 1024 * 1024,
        ),
    )(x_t, w1_band, b1t, w2_band, b2r, wf1, bf1, wf2, bf2)
    return out[:n]


# ----------------------------------------------------------------------------
# Plain-JAX reference (validation only)
# ----------------------------------------------------------------------------
def mnist_net_reference(x_nchw, params):
    x = jnp.transpose(x_nchw, (0, 2, 3, 1))
    y = jax.lax.conv_general_dilated(x, params["w_conv1"], (1, 1), "VALID",
                                     dimension_numbers=("NHWC", "HWIO", "NHWC"))
    y = jax.nn.relu(y + params["b_conv1"])
    y = jax.lax.reduce_window(y, -jnp.inf, jax.lax.max, (1, 2, 2, 1), (1, 2, 2, 1), "VALID")
    y = jax.lax.conv_general_dilated(y, params["w_conv2"], (1, 1), "VALID",
                                     dimension_numbers=("NHWC", "HWIO", "NHWC"))
    y = jax.nn.relu(y + params["b_conv2"])
    y = jax.lax.reduce_window(y, -jnp.inf, jax.lax.max, (1, 2, 2, 1), (1, 2, 2, 1), "VALID")
    n = y.shape[0]
    y = jnp.transpose(y, (0, 3, 1, 2)).reshape(n, 800)    # (C,H,W) flatten, like PyTorch
    y = jax.nn.relu(y @ params["w_fc1"] + params["b_fc1"])
    y = y @ params["w_fc2"] + params["b_fc2"]
    return jax.nn.log_softmax(y, axis=-1)


def init_params(key):
    """Deterministic synthetic parameters (shapes match the PyTorch module)."""
    ks = jax.random.split(key, 8)

    def norm(k, shape, scale):
        return jax.random.normal(k, shape, jnp.float32) * scale

    return {
        "w_conv1": norm(ks[0], (5, 5, 1, 20), 0.10),   # Conv2d(1, 20, 5)
        "b_conv1": norm(ks[1], (20,), 0.10),
        "w_conv2": norm(ks[2], (5, 5, 20, 50), 0.05),  # Conv2d(20, 50, 5)
        "b_conv2": norm(ks[3], (50,), 0.05),
        "w_fc1": norm(ks[4], (800, 500), 0.02),        # Linear(800, 500)  (x @ W)
        "b_fc1": norm(ks[5], (500,), 0.02),
        "w_fc2": norm(ks[6], (500, 10), 0.05),         # Linear(500, 10)
        "b_fc2": norm(ks[7], (10,), 0.05),
    }


if __name__ == "__main__":
    key = jax.random.PRNGKey(0)
    pkey, xkey = jax.random.split(key)
    params = init_params(pkey)
    # Spatial size must be 28x28 so the flatten hits exactly 4*4*50 = 800.
    x = jax.random.normal(xkey, (2, 1, 28, 28), jnp.float32)

    fwd = jax.jit(mnist_net_forward)
    out = jax.block_until_ready(fwd(x, params))

    assert out.shape == (2, 10), out.shape
    # log_softmax rows must exp-sum to 1
    assert jnp.allclose(jnp.sum(jnp.exp(out), axis=1), 1.0, atol=1e-4)
    # numerical check vs plain-JAX reference (bf16 MXU inputs, f32 accumulation)
    ref = jax.jit(mnist_net_reference)(x, params)
    err = float(jnp.max(jnp.abs(out - ref)))
    assert err < 1e-1, f"max abs err vs reference: {err}"
    print("KERNEL_OK")
</pallas_src>

<mosaic_0001>
module attributes {stable_mosaic.version = 11 : i64} {
  func.func @_mnist_fused_kernel(%arg0: i32, %arg1: memref<1x224x28xf32, #tpu.memory_space<vmem>>, %arg2: memref<5x28x480xbf16, #tpu.memory_space<vmem>>, %arg3: memref<1x240xf32, #tpu.memory_space<vmem>>, %arg4: memref<5x240x400xbf16, #tpu.memory_space<vmem>>, %arg5: memref<1x50xf32, #tpu.memory_space<vmem>>, %arg6: memref<16x50x512xbf16, #tpu.memory_space<vmem>>, %arg7: memref<1x512xf32, #tpu.memory_space<vmem>>, %arg8: memref<512x10xbf16, #tpu.memory_space<vmem>>, %arg9: memref<1x10xf32, #tpu.memory_space<vmem>>, %arg10: memref<8x10xf32, #tpu.memory_space<vmem>>, %arg11: memref<192x240xf32, #tpu.memory_space<vmem>>, %arg12: memref<96x240xf32, #tpu.memory_space<vmem>>) attributes {dimension_semantics = [#tpu.dimension_semantics<parallel>], iteration_bounds = array<i64: 1>, scalar_prefetch = 0 : i64, scratch_operands = 2 : i64, tpu.core_type = #tpu.core_type<tc>, window_params = [{transform_indices = @transform_0, window_bounds = array<i64: 1, 224, 28>}, {pipeline_mode = #tpu.pipeline_mode<synchronous>, transform_indices = @transform_1, window_bounds = array<i64: 5, 28, 480>}, {pipeline_mode = #tpu.pipeline_mode<synchronous>, transform_indices = @transform_2, window_bounds = array<i64: 1, 240>}, {pipeline_mode = #tpu.pipeline_mode<synchronous>, transform_indices = @transform_3, window_bounds = array<i64: 5, 240, 400>}, {pipeline_mode = #tpu.pipeline_mode<synchronous>, transform_indices = @transform_4, window_bounds = array<i64: 1, 50>}, {pipeline_mode = #tpu.pipeline_mode<synchronous>, transform_indices = @transform_5, window_bounds = array<i64: 16, 50, 512>}, {pipeline_mode = #tpu.pipeline_mode<synchronous>, transform_indices = @transform_6, window_bounds = array<i64: 1, 512>}, {pipeline_mode = #tpu.pipeline_mode<synchronous>, transform_indices = @transform_7, window_bounds = array<i64: 512, 10>}, {pipeline_mode = #tpu.pipeline_mode<synchronous>, transform_indices = @transform_8, window_bounds = array<i64: 1, 10>}, {transform_indices = @transform_9, window_bounds = array<i64: 8, 10>}]} {
    %c0 = arith.constant 0 : index
    %c0_0 = arith.constant 0 : index
    %c0_1 = arith.constant 0 : index
    %0 = vector.load %arg1[%c0, %c0_0, %c0_1] : memref<1x224x28xf32, #tpu.memory_space<vmem>>, vector<1x224x28xf32>
    %1 = vector.shape_cast %0 : vector<1x224x28xf32> to vector<224x28xf32>
    %cst = arith.constant 0.000000e+00 : f32
    %2 = vector.broadcast %cst : f32 to vector<192x480xf32>
    %3 = vector.extract_strided_slice %1 {offsets = [0, 0], sizes = [192, 28], strides = [1, 1]} : vector<224x28xf32> to vector<192x28xf32>
    %4 = arith.truncf %3 : vector<192x28xf32> to vector<192x28xbf16>
    %c0_2 = arith.constant 0 : index
    %c0_3 = arith.constant 0 : index
    %c0_4 = arith.constant 0 : index
    %5 = vector.load %arg2[%c0_2, %c0_3, %c0_4] : memref<5x28x480xbf16, #tpu.memory_space<vmem>>, vector<1x28x480xbf16>
    %6 = vector.shape_cast %5 : vector<1x28x480xbf16> to vector<28x480xbf16>
    %cst_5 = arith.constant dense<0.000000e+00> : vector<192x480xf32>
    %7 = tpu.matmul %4, %6, %cst_5 {dimension_numbers = #tpu.dot_dimension_numbers<[1], [0], [0], [1], [0, 0, 1, 1], [], []>} : vector<192x28xbf16>, vector<28x480xbf16>, vector<192x480xf32> -> vector<192x480xf32>
    %8 = arith.addf %2, %7 : vector<192x480xf32>
    %9 = vector.extract_strided_slice %1 {offsets = [8, 0], sizes = [192, 28], strides = [1, 1]} : vector<224x28xf32> to vector<192x28xf32>
    %10 = arith.truncf %9 : vector<192x28xf32> to vector<192x28xbf16>
    %c1 = arith.constant 1 : index
    %c0_6 = arith.constant 0 : index
    %c0_7 = arith.constant 0 : index
    %11 = vector.load %arg2[%c1, %c0_6, %c0_7] : memref<5x28x480xbf16, #tpu.memory_space<vmem>>, vector<1x28x480xbf16>
    %12 = vector.shape_cast %11 : vector<1x28x480xbf16> to vector<28x480xbf16>
    %cst_8 = arith.constant dense<0.000000e+00> : vector<192x480xf32>
    %13 = tpu.matmul %10, %12, %cst_8 {dimension_numbers = #tpu.dot_dimension_numbers<[1], [0], [0], [1], [0, 0, 1, 1], [], []>} : vector<192x28xbf16>, vector<28x480xbf16>, vector<192x480xf32> -> vector<192x480xf32>
    %14 = arith.addf %8, %13 : vector<192x480xf32>
    %15 = vector.extract_strided_slice %1 {offsets = [16, 0], sizes = [192, 28], strides = [1, 1]} : vector<224x28xf32> to vector<192x28xf32>
    %16 = arith.truncf %15 : vector<192x28xf32> to vector<192x28xbf16>
    %c2 = arith.constant 2 : index
    %c0_9 = arith.constant 0 : index
    %c0_10 = arith.constant 0 : index
    %17 = vector.load %arg2[%c2, %c0_9, %c0_10] : memref<5x28x480xbf16, #tpu.memory_space<vmem>>, vector<1x28x480xbf16>
    %18 = vector.shape_cast %17 : vector<1x28x480xbf16> to vector<28x480xbf16>
    %cst_11 = arith.constant dense<0.000000e+00> : vector<192x480xf32>
    %19 = tpu.matmul %16, %18, %cst_11 {dimension_numbers = #tpu.dot_dimension_numbers<[1], [0], [0], [1], [0, 0, 1, 1], [], []>} : vector<192x28xbf16>, vector<28x480xbf16>, vector<192x480xf32> -> vector<192x480xf32>
    %20 = arith.addf %14, %19 : vector<192x480xf32>
    %21 = vector.extract_strided_slice %1 {offsets = [24, 0], sizes = [192, 28], strides = [1, 1]} : vector<224x28xf32> to vector<192x28xf32>
    %22 = arith.truncf %21 : vector<192x28xf32> to vector<192x28xbf16>
    %c3 = arith.constant 3 : index
    %c0_12 = arith.constant 0 : index
    %c0_13 = arith.constant 0 : index
    %23 = vector.load %arg2[%c3, %c0_12, %c0_13] : memref<5x28x480xbf16, #tpu.memory_space<vmem>>, vector<1x28x480xbf16>
    %24 = vector.shape_cast %23 : vector<1x28x480xbf16> to vector<28x480xbf16>
    %cst_14 = arith.constant dense<0.000000e+00> : vector<192x480xf32>
    %25 = tpu.matmul %22, %24, %cst_14 {dimension_numbers = #tpu.dot_dimension_numbers<[1], [0], [0], [1], [0, 0, 1, 1], [], []>} : vector<192x28xbf16>, vector<28x480xbf16>, vector<192x480xf32> -> vector<192x480xf32>
    %26 = arith.addf %20, %25 : vector<192x480xf32>
    %27 = vector.extract_strided_slice %1 {offsets = [32, 0], sizes = [192, 28], strides = [1, 1]} : vector<224x28xf32> to vector<192x28xf32>
    %28 = arith.truncf %27 : vector<192x28xf32> to vector<192x28xbf16>
    %c4 = arith.constant 4 : index
    %c0_15 = arith.constant 0 : index
    %c0_16 = arith.constant 0 : index
    %29 = vector.load %arg2[%c4, %c0_15, %c0_16] : memref<5x28x480xbf16, #tpu.memory_space<vmem>>, vector<1x28x480xbf16>
    %30 = vector.shape_cast %29 : vector<1x28x480xbf16> to vector<28x480xbf16>
    %cst_17 = arith.constant dense<0.000000e+00> : vector<192x480xf32>
    %31 = tpu.matmul %28, %30, %cst_17 {dimension_numbers = #tpu.dot_dimension_numbers<[1], [0], [0], [1], [0, 0, 1, 1], [], []>} : vector<192x28xbf16>, vector<28x480xbf16>, vector<192x480xf32> -> vector<192x480xf32>
    %32 = arith.addf %26, %31 : vector<192x480xf32>
    %33 = vector.extract_strided_slice %32 {offsets = [0, 0], sizes = [192, 20], strides = [1, 1]} : vector<192x480xf32> to vector<192x20xf32>
    %34 = vector.extract_strided_slice %32 {offsets = [0, 20], sizes = [192, 20], strides = [1, 1]} : vector<192x480xf32> to vector<192x20xf32>
    %35 = arith.maximumf %33, %34 : vector<192x20xf32>
    %c0_18 = arith.constant 0 : index
    %c0_19 = arith.constant 0 : index
    %36 = vector.load %arg11[%c0_18, %c0_19] : memref<192x240xf32, #tpu.memory_space<vmem>>, vector<192x20xf32>
    tpu.vector_store %arg11[%c0_18, %c0_19], %35 {strides = array<i32>} : memref<192x240xf32, #tpu.memory_space<vmem>>, vector<192x20xf32>,
    %37 = vector.extract_strided_slice %32 {offsets = [0, 40], sizes = [192, 20], strides = [1, 1]} : vector<192x480xf32> to vector<192x20xf32>
    %38 = vector.extract_strided_slice %32 {offsets = [0, 60], sizes = [192, 20], strides = [1, 1]} : vector<192x480xf32> to vector<192x20xf32>
    %39 = arith.maximumf %37, %38 : vector<192x20xf32>
    %c0_20 = arith.constant 0 : index
    %c20 = arith.constant 20 : index
    %40 = vector.load %arg11[%c0_20, %c20] : memref<192x240xf32, #tpu.memory_space<vmem>>, vector<192x20xf32>
    tpu.vector_store %arg11[%c0_20, %c20], %39 {strides = array<i32>} : memref<192x240xf32, #tpu.memory_space<vmem>>, vector<192x20xf32>,
    %41 = vector.extract_strided_slice %32 {offsets = [0, 80], sizes = [192, 20], strides = [1, 1]} : vector<192x480xf32> to vector<192x20xf32>
    %42 = vector.extract_strided_slice %32 {offsets = [0, 100], sizes = [192, 20], strides = [1, 1]} : vector<192x480xf32> to vector<192x20xf32>
    %43 = arith.maximumf %41, %42 : vector<192x20xf32>
    %c0_21 = arith.constant 0 : index
    %c40 = arith.constant 40 : index
    %44 = vector.load %arg11[%c0_21, %c40] : memref<192x240xf32, #tpu.memory_space<vmem>>, vector<192x20xf32>
    tpu.vector_store %arg11[%c0_21, %c40], %43 {strides = array<i32>} : memref<192x240xf32, #tpu.memory_space<vmem>>, vector<192x20xf32>,
    %45 = vector.extract_strided_slice %32 {offsets = [0, 120], sizes = [192, 20], strides = [1, 1]} : vector<192x480xf32> to vector<192x20xf32>
    %46 = vector.extract_strided_slice %32 {offsets = [0, 140], sizes = [192, 20], strides = [1, 1]} : vector<192x480xf32> to vector<192x20xf32>
    %47 = arith.maximumf %45, %46 : vector<192x20xf32>
    %c0_22 = arith.constant 0 : index
    %c60 = arith.constant 60 : index
    %48 = vector.load %arg11[%c0_22, %c60] : memref<192x240xf32, #tpu.memory_space<vmem>>, vector<192x20xf32>
    tpu.vector_store %arg11[%c0_22, %c60], %47 {strides = array<i32>} : memref<192x240xf32, #tpu.memory_space<vmem>>, vector<192x20xf32>,
    %49 = vector.extract_strided_slice %32 {offsets = [0, 160], sizes = [192, 20], strides = [1, 1]} : vector<192x480xf32> to vector<192x20xf32>
    %50 = vector.extract_strided_slice %32 {offsets = [0, 180], sizes = [192, 20], strides = [1, 1]} : vector<192x480xf32> to vector<192x20xf32>
    %51 = arith.maximumf %49, %50 : vector<192x20xf32>
    %c0_23 = arith.constant 0 : index
    %c80 = arith.constant 80 : index
    %52 = vector.load %arg11[%c0_23, %c80] : memref<192x240xf32, #tpu.memory_space<vmem>>, vector<192x20xf32>
    tpu.vector_store %arg11[%c0_23, %c80], %51 {strides = array<i32>} : memref<192x240xf32, #tpu.memory_space<vmem>>, vector<192x20xf32>,
    %53 = vector.extract_strided_slice %32 {offsets = [0, 200], sizes = [192, 20], strides = [1, 1]} : vector<192x480xf32> to vector<192x20xf32>
    %54 = vector.extract_strided_slice %32 {offsets = [0, 220], sizes = [192, 20], strides = [1, 1]} : vector<192x480xf32> to vector<192x20xf32>
    %55 = arith.maximumf %53, %54 : vector<192x20xf32>
    %c0_24 = arith.constant 0 : index
    %c100 = arith.constant 100 : index
    %56 = vector.load %arg11[%c0_24, %c100] : memref<192x240xf32, #tpu.memory_space<vmem>>, vector<192x20xf32>
    tpu.vector_store %arg11[%c0_24, %c100], %55 {strides = array<i32>} : memref<192x240xf32, #tpu.memory_space<vmem>>, vector<192x20xf32>,
    %57 = vector.extract_strided_slice %32 {offsets = [0, 240], sizes = [192, 20], strides = [1, 1]} : vector<192x480xf32> to vector<192x20xf32>
    %58 = vector.extract_strided_slice %32 {offsets = [0, 260], sizes = [192, 20], strides = [1, 1]} : vector<192x480xf32> to vector<192x20xf32>
    %59 = arith.maximumf %57, %58 : vector<192x20xf32>
    %c0_25 = arith.constant 0 : index
    %c120 = arith.constant 120 : index
    %60 = vector.load %arg11[%c0_25, %c120] : memref<192x240xf32, #tpu.memory_space<vmem>>, vector<192x20xf32>
    tpu.vector_store %arg11[%c0_25, %c120], %59 {strides = array<i32>} : memref<192x240xf32, #tpu.memory_space<vmem>>, vector<192x20xf32>,
    %61 = vector.extract_strided_slice %32 {offsets = [0, 280], sizes = [192, 20], strides = [1, 1]} : vector<192x480xf32> to vector<192x20xf32>
    %62 = vector.extract_strided_slice %32 {offsets = [0, 300], sizes = [192, 20], strides = [1, 1]} : vector<192x480xf32> to vector<192x20xf32>
    %63 = arith.maximumf %61, %62 : vector<192x20xf32>
    %c0_26 = arith.constant 0 : index
    %c140 = arith.constant 140 : index
    %64 = vector.load %arg11[%c0_26, %c140] : memref<192x240xf32, #tpu.memory_space<vmem>>, vector<192x20xf32>
    tpu.vector_store %arg11[%c0_26, %c140], %63 {strides = array<i32>} : memref<192x240xf32, #tpu.memory_space<vmem>>, vector<192x20xf32>,
    %65 = vector.extract_strided_slice %32 {offsets = [0, 320], sizes = [192, 20], strides = [1, 1]} : vector<192x480xf32> to vector<192x20xf32>
    %66 = vector.extract_strided_slice %32 {offsets = [0, 340], sizes = [192, 20], strides = [1, 1]} : vector<192x480xf32> to vector<192x20xf32>
    %67 = arith.maximumf %65, %66 : vector<192x20xf32>
    %c0_27 = arith.constant 0 : index
    %c160 = arith.constant 160 : index
    %68 = vector.load %arg11[%c0_27, %c160] : memref<192x240xf32, #tpu.memory_space<vmem>>, vector<192x20xf32>
    tpu.vector_store %arg11[%c0_27, %c160], %67 {strides = array<i32>} : memref<192x240xf32, #tpu.memory_space<vmem>>, vector<192x20xf32>,
    %69 = vector.extract_strided_slice %32 {offsets = [0, 360], sizes = [192, 20], strides = [1, 1]} : vector<192x480xf32> to vector<192x20xf32>
    %70 = vector.extract_strided_slice %32 {offsets = [0, 380], sizes = [192, 20], strides = [1, 1]} : vector<192x480xf32> to vector<192x20xf32>
    %71 = arith.maximumf %69, %70 : vector<192x20xf32>
    %c0_28 = arith.constant 0 : index
    %c180 = arith.constant 180 : index
    %72 = vector.load %arg11[%c0_28, %c180] : memref<192x240xf32, #tpu.memory_space<vmem>>, vector<192x20xf32>
    tpu.vector_store %arg11[%c0_28, %c180], %71 {strides = array<i32>} : memref<192x240xf32, #tpu.memory_space<vmem>>, vector<192x20xf32>,
    %73 = vector.extract_strided_slice %32 {offsets = [0, 400], sizes = [192, 20], strides = [1, 1]} : vector<192x480xf32> to vector<192x20xf32>
    %74 = vector.extract_strided_slice %32 {offsets = [0, 420], sizes = [192, 20], strides = [1, 1]} : vector<192x480xf32> to vector<192x20xf32>
    %75 = arith.maximumf %73, %74 : vector<192x20xf32>
    %c0_29 = arith.constant 0 : index
    %c200 = arith.constant 200 : index
    %76 = vector.load %arg11[%c0_29, %c200] : memref<192x240xf32, #tpu.memory_space<vmem>>, vector<192x20xf32>
    tpu.vector_store %arg11[%c0_29, %c200], %75 {strides = array<i32>} : memref<192x240xf32, #tpu.memory_space<vmem>>, vector<192x20xf32>,
    %77 = vector.extract_strided_slice %32 {offsets = [0, 440], sizes = [192, 20], strides = [1, 1]} : vector<192x480xf32> to vector<192x20xf32>
    %78 = vector.extract_strided_slice %32 {offsets = [0, 460], sizes = [192, 20], strides = [1, 1]} : vector<192x480xf32> to vector<192x20xf32>
    %79 = arith.maximumf %77, %78 : vector<192x20xf32>
    %c0_30 = arith.constant 0 : index
    %c220 = arith.constant 220 : index
    %80 = vector.load %arg11[%c0_30, %c220] : memref<192x240xf32, #tpu.memory_space<vmem>>, vector<192x20xf32>
    tpu.vector_store %arg11[%c0_30, %c220], %79 {strides = array<i32>} : memref<192x240xf32, #tpu.memory_space<vmem>>, vector<192x20xf32>,
    %c0_31 = arith.constant 0 : index
    %c0_32 = arith.constant 0 : index
    %81 = vector.load %arg11[%c0_31, %c0_32] : memref<192x240xf32, #tpu.memory_space<vmem>>, vector<8x240xf32>
    %c8 = arith.constant 8 : index
    %c0_33 = arith.constant 0 : index
    %82 = vector.load %arg11[%c8, %c0_33] : memref<192x240xf32, #tpu.memory_space<vmem>>, vector<8x240xf32>
    %83 = arith.maximumf %81, %82 : vector<8x240xf32>
    %c0_34 = arith.constant 0 : index
    %c0_35 = arith.constant 0 : index
    %84 = vector.load %arg3[%c0_34, %c0_35] : memref<1x240xf32, #tpu.memory_space<vmem>>, vector<1x240xf32>
    %85 = vector.broadcast %84 : vector<1x240xf32> to vector<8x240xf32>
    %86 = arith.addf %83, %85 : vector<8x240xf32>
    %cst_36 = arith.constant 0.000000e+00 : f32
    %87 = vector.broadcast %cst_36 : f32 to vector<8x240xf32>
    %88 = arith.maximumf %86, %87 : vector<8x240xf32>
    %c0_37 = arith.constant 0 : index
    %c0_38 = arith.constant 0 : index
    %89 = vector.load %arg12[%c0_37, %c0_38] : memref<96x240xf32, #tpu.memory_space<vmem>>, vector<8x240xf32>
    tpu.vector_store %arg12[%c0_37, %c0_38], %88 {strides = array<i32>} : memref<96x240xf32, #tpu.memory_space<vmem>>, vector<8x240xf32>,
    %c16 = arith.constant 16 : index
    %c0_39 = arith.constant 0 : index
    %90 = vector.load %arg11[%c16, %c0_39] : memref<192x240xf32, #tpu.memory_space<vmem>>, vector<8x240xf32>
    %c24 = arith.constant 24 : index
    %c0_40 = arith.constant 0 : index
    %91 = vector.load %arg11[%c24, %c0_40] : memref<192x240xf32, #tpu.memory_space<vmem>>, vector<8x240xf32>
    %92 = arith.maximumf %90, %91 : vector<8x240xf32>
    %c0_41 = arith.constant 0 : index
    %c0_42 = arith.constant 0 : index
    %93 = vector.load %arg3[%c0_41, %c0_42] : memref<1x240xf32, #tpu.memory_space<vmem>>, vector<1x240xf32>
    %94 = vector.broadcast %93 : vector<1x240xf32> to vector<8x240xf32>
    %95 = arith.addf %92, %94 : vector<8x240xf32>
    %cst_43 = arith.constant 0.000000e+00 : f32
    %96 = vector.broadcast %cst_43 : f32 to vector<8x240xf32>
    %97 = arith.maximumf %95, %96 : vector<8x240xf32>
    %c8_44 = arith.constant 8 : index
    %c0_45 = arith.constant 0 : index
    %98 = vector.load %arg12[%c8_44, %c0_45] : memref<96x240xf32, #tpu.memory_space<vmem>>, vector<8x240xf32>
    tpu.vector_store %arg12[%c8_44, %c0_45], %97 {strides = array<i32>} : memref<96x240xf32, #tpu.memory_space<vmem>>, vector<8x240xf32>,
    %c32 = arith.constant 32 : index
    %c0_46 = arith.constant 0 : index
    %99 = vector.load %arg11[%c32, %c0_46] : memref<192x240xf32, #tpu.memory_space<vmem>>, vector<8x240xf32>
    %c40_47 = arith.constant 40 : index
    %c0_48 = arith.constant 0 : index
    %100 = vector.load %arg11[%c40_47, %c0_48] : memref<192x240xf32, #tpu.memory_space<vmem>>, vector<8x240xf32>
    %101 = arith.maximumf %99, %100 : vector<8x240xf32>
    %c0_49 = arith.constant 0 : index
    %c0_50 = arith.constant 0 : index
    %102 = vector.load %arg3[%c0_49, %c0_50] : memref<1x240xf32, #tpu.memory_space<vmem>>, vector<1x240xf32>
    %103 = vector.broadcast %102 : vector<1x240xf32> to vector<8x240xf32>
    %104 = arith.addf %101, %103 : vector<8x240xf32>
    %cst_51 = arith.constant 0.000000e+00 : f32
    %105 = vector.broadcast %cst_51 : f32 to vector<8x240xf32>
    %106 = arith.maximumf %104, %105 : vector<8x240xf32>
    %c16_52 = arith.constant 16 : index
    %c0_53 = arith.constant 0 : index
    %107 = vector.load %arg12[%c16_52, %c0_53] : memref<96x240xf32, #tpu.memory_space<vmem>>, vector<8x240xf32>
    tpu.vector_store %arg12[%c16_52, %c0_53], %106 {strides = array<i32>} : memref<96x240xf32, #tpu.memory_space<vmem>>, vector<8x240xf32>,
    %c48 = arith.constant 48 : index
    %c0_54 = arith.constant 0 : index
    %108 = vector.load %arg11[%c48, %c0_54] : memref<192x240xf32, #tpu.memory_space<vmem>>, vector<8x240xf32>
    %c56 = arith.constant 56 : index
    %c0_55 = arith.constant 0 : index
    %109 = vector.load %arg11[%c56, %c0_55] : memref<192x240xf32, #tpu.memory_space<vmem>>, vector<8x240xf32>
    %110 = arith.maximumf %108, %109 : vector<8x240xf32>
    %c0_56 = arith.constant 0 : index
    %c0_57 = arith.constant 0 : index
    %111 = vector.load %arg3[%c0_56, %c0_57] : memref<1x240xf32, #tpu.memory_space<vmem>>, vector<1x240xf32>
    %112 = vector.broadcast %111 : vector<1x240xf32> to vector<8x240xf32>
    %113 = arith.addf %110, %112 : vector<8x240xf32>
    %cst_58 = arith.constant 0.000000e+00 : f32
    %114 = vector.broadcast %cst_58 : f32 to vector<8x240xf32>
    %115 = arith.maximumf %113, %114 : vector<8x240xf32>
    %c24_59 = arith.constant 24 : index
    %c0_60 = arith.constant 0 : index
    %116 = vector.load %arg12[%c24_59, %c0_60] : memref<96x240xf32, #tpu.memory_space<vmem>>, vector<8x240xf32>
    tpu.vector_store %arg12[%c24_59, %c0_60], %115 {strides = array<i32>} : memref<96x240xf32, #tpu.memory_space<vmem>>, vector<8x240xf32>,
    %c64 = arith.constant 64 : index
    %c0_61 = arith.constant 0 : index
    %117 = vector.load %arg11[%c64, %c0_61] : memref<192x240xf32, #tpu.memory_space<vmem>>, vector<8x240xf32>
    %c72 = arith.constant 72 : index
    %c0_62 = arith.constant 0 : index
    %118 = vector.load %arg11[%c72, %c0_62] : memref<192x240xf32, #tpu.memory_space<vmem>>, vector<8x240xf32>
    %119 = arith.maximumf %117, %118 : vector<8x240xf32>
    %c0_63 = arith.constant 0 : index
    %c0_64 = arith.constant 0 : index
    %120 = vector.load %arg3[%c0_63, %c0_64] : memref<1x240xf32, #tpu.memory_space<vmem>>, vector<1x240xf32>
    %121 = vector.broadcast %120 : vector<1x240xf32> to vector<8x240xf32>
    %122 = arith.addf %119, %121 : vector<8x240xf32>
    %cst_65 = arith.constant 0.000000e+00 : f32
    %123 = vector.broadcast %cst_65 : f32 to vector<8x240xf32>
    %124 = arith.maximumf %122, %123 : vector<8x240xf32>
    %c32_66 = arith.constant 32 : index
    %c0_67 = arith.constant 0 : index
    %125 = vector.load %arg12[%c32_66, %c0_67] : memref<96x240xf32, #tpu.memory_space<vmem>>, vector<8x240xf32>
    tpu.vector_store %arg12[%c32_66, %c0_67], %124 {strides = array<i32>} : memref<96x240xf32, #tpu.memory_space<vmem>>, vector<8x240xf32>,
    %c80_68 = arith.constant 80 : index
    %c0_69 = arith.constant 0 : index
    %126 = vector.load %arg11[%c80_68, %c0_69] : memref<192x240xf32, #tpu.memory_space<vmem>>, vector<8x240xf32>
    %c88 = arith.constant 88 : index
    %c0_70 = arith.constant 0 : index
    %127 = vector.load %arg11[%c88, %c0_70] : memref<192x240xf32, #tpu.memory_space<vmem>>, vector<8x240xf32>
    %128 = arith.maximumf %126, %127 : vector<8x240xf32>
    %c0_71 = arith.constant 0 : index
    %c0_72 = arith.constant 0 : index
    %129 = vector.load %arg3[%c0_71, %c0_72] : memref<1x240xf32, #tpu.memory_space<vmem>>, vector<1x240xf32>
    %130 = vector.broadcast %129 : vector<1x240xf32> to vector<8x240xf32>
    %131 = arith.addf %128, %130 : vector<8x240xf32>
    %cst_73 = arith.constant 0.000000e+00 : f32
    %132 = vector.broadcast %cst_73 : f32 to vector<8x240xf32>
    %133 = arith.maximumf %131, %132 : vector<8x240xf32>
    %c40_74 = arith.constant 40 : index
    %c0_75 = arith.constant 0 : index
    %134 = vector.load %arg12[%c40_74, %c0_75] : memref<96x240xf32, #tpu.memory_space<vmem>>, vector<8x240xf32>
    tpu.vector_store %arg12[%c40_74, %c0_75], %133 {strides = array<i32>} : memref<96x240xf32, #tpu.memory_space<vmem>>, vector<8x240xf32>,
    %c96 = arith.constant 96 : index
    %c0_76 = arith.constant 0 : index
    %135 = vector.load %arg11[%c96, %c0_76] : memref<192x240xf32, #tpu.memory_space<vmem>>, vector<8x240xf32>
    %c104 = arith.constant 104 : index
    %c0_77 = arith.constant 0 : index
    %136 = vector.load %arg11[%c104, %c0_77] : memref<192x240xf32, #tpu.memory_space<vmem>>, vector<8x240xf32>
    %137 = arith.maximumf %135, %136 : vector<8x240xf32>
    %c0_78 = arith.constant 0 : index
    %c0_79 = arith.constant 0 : index
    %138 = vector.load %arg3[%c0_78, %c0_79] : memref<1x240xf32, #tpu.memory_space<vmem>>, vector<1x240xf32>
    %139 = vector.broadcast %138 : vector<1x240xf32> to vector<8x240xf32>
    %140 = arith.addf %137, %139 : vector<8x240xf32>
    %cst_80 = arith.constant 0.000000e+00 : f32
    %141 = vector.broadcast %cst_80 : f32 to vector<8x240xf32>
    %142 = arith.maximumf %140, %141 : vector<8x240xf32>
    %c48_81 = arith.constant 48 : index
    %c0_82 = arith.constant 0 : index
    %143 = vector.load %arg12[%c48_81, %c0_82] : memref<96x240xf32, #tpu.memory_space<vmem>>, vector<8x240xf32>
    tpu.vector_store %arg12[%c48_81, %c0_82], %142 {strides = array<i32>} : memref<96x240xf32, #tpu.memory_space<vmem>>, vector<8x240xf32>,
    %c112 = arith.constant 112 : index
    %c0_83 = arith.constant 0 : index
    %144 = vector.load %arg11[%c112, %c0_83] : memref<192x240xf32, #tpu.memory_space<vmem>>, vector<8x240xf32>
    %c120_84 = arith.constant 120 : index
    %c0_85 = arith.constant 0 : index
    %145 = vector.load %arg11[%c120_84, %c0_85] : memref<192x240xf32, #tpu.memory_space<vmem>>, vector<8x240xf32>
    %146 = arith.maximumf %144, %145 : vector<8x240xf32>
    %c0_86 = arith.constant 0 : index
    %c0_87 = arith.constant 0 : index
    %147 = vector.load %arg3[%c0_86, %c0_87] : memref<1x240xf32, #tpu.memory_space<vmem>>, vector<1x240xf32>
    %148 = vector.broadcast %147 : vector<1x240xf32> to vector<8x240xf32>
    %149 = arith.addf %146, %148 : vector<8x240xf32>
    %cst_88 = arith.constant 0.000000e+00 : f32
    %150 = vector.broadcast %cst_88 : f32 to vector<8x240xf32>
    %151 = arith.maximumf %149, %150 : vector<8x240xf32>
    %c56_89 = arith.constant 56 : index
    %c0_90 = arith.constant 0 : index
    %152 = vector.load %arg12[%c56_89, %c0_90] : memref<96x240xf32, #tpu.memory_space<vmem>>, vector<8x240xf32>
    tpu.vector_store %arg12[%c56_89, %c0_90], %151 {strides = array<i32>} : memref<96x240xf32, #tpu.memory_space<vmem>>, vector<8x240xf32>,
    %c128 = arith.constant 128 : index
    %c0_91 = arith.constant 0 : index
    %153 = vector.load %arg11[%c128, %c0_91] : memref<192x240xf32, #tpu.memory_space<vmem>>, vector<8x240xf32>
    %c136 = arith.constant 136 : index
    %c0_92 = arith.constant 0 : index
    %154 = vector.load %arg11[%c136, %c0_92] : memref<192x240xf32, #tpu.memory_space<vmem>>, vector<8x240xf32>
    %155 = arith.maximumf %153, %154 : vector<8x240xf32>
    %c0_93 = arith.constant 0 : index
    %c0_94 = arith.constant 0 : index
    %156 = vector.load %arg3[%c0_93, %c0_94] : memref<1x240xf32, #tpu.memory_space<vmem>>, vector<1x240xf32>
    %157 = vector.broadcast %156 : vector<1x240xf32> to vector<8x240xf32>
    %158 = arith.addf %155, %157 : vector<8x240xf32>
    %cst_95 = arith.constant 0.000000e+00 : f32
    %159 = vector.broadcast %cst_95 : f32 to vector<8x240xf32>
    %160 = arith.maximumf %158, %159 : vector<8x240xf32>
    %c64_96 = arith.constant 64 : index
    %c0_97 = arith.constant 0 : index
    %161 = vector.load %arg12[%c64_96, %c0_97] : memref<96x240xf32, #tpu.memory_space<vmem>>, vector<8x240xf32>
    tpu.vector_store %arg12[%c64_96, %c0_97], %160 {strides = array<i32>} : memref<96x240xf32, #tpu.memory_space<vmem>>, vector<8x240xf32>,
    %c144 = arith.constant 144 : index
    %c0_98 = arith.constant 0 : index
    %162 = vector.load %arg11[%c144, %c0_98] : memref<192x240xf32, #tpu.memory_space<vmem>>, vector<8x240xf32>
    %c152 = arith.constant 152 : index
    %c0_99 = arith.constant 0 : index
    %163 = vector.load %arg11[%c152, %c0_99] : memref<192x240xf32, #tpu.memory_space<vmem>>, vector<8x240xf32>
    %164 = arith.maximumf %162, %163 : vector<8x240xf32>
    %c0_100 = arith.constant 0 : index
    %c0_101 = arith.constant 0 : index
    %165 = vector.load %arg3[%c0_100, %c0_101] : memref<1x240xf32, #tpu.memory_space<vmem>>, vector<1x240xf32>
    %166 = vector.broadcast %165 : vector<1x240xf32> to vector<8x240xf32>
    %167 = arith.addf %164, %166 : vector<8x240xf32>
    %cst_102 = arith.constant 0.000000e+00 : f32
    %168 = vector.broadcast %cst_102 : f32 to vector<8x240xf32>
    %169 = arith.maximumf %167, %168 : vector<8x240xf32>
    %c72_103 = arith.constant 72 : index
    %c0_104 = arith.constant 0 : index
    %170 = vector.load %arg12[%c72_103, %c0_104] : memref<96x240xf32, #tpu.memory_space<vmem>>, vector<8x240xf32>
    tpu.vector_store %arg12[%c72_103, %c0_104], %169 {strides = array<i32>} : memref<96x240xf32, #tpu.memory_space<vmem>>, vector<8x240xf32>,
    %c160_105 = arith.constant 160 : index
    %c0_106 = arith.constant 0 : index
    %171 = vector.load %arg11[%c160_105, %c0_106] : memref<192x240xf32, #tpu.memory_space<vmem>>, vector<8x240xf32>
    %c168 = arith.constant 168 : index
    %c0_107 = arith.constant 0 : index
    %172 = vector.load %arg11[%c168, %c0_107] : memref<192x240xf32, #tpu.memory_space<vmem>>, vector<8x240xf32>
    %173 = arith.maximumf %171, %172 : vector<8x240xf32>
    %c0_108 = arith.constant 0 : index
    %c0_109 = arith.constant 0 : index
    %174 = vector.load %arg3[%c0_108, %c0_109] : memref<1x240xf32, #tpu.memory_space<vmem>>, vector<1x240xf32>
    %175 = vector.broadcast %174 : vector<1x240xf32> to vector<8x240xf32>
    %176 = arith.addf %173, %175 : vector<8x240xf32>
    %cst_110 = arith.constant 0.000000e+00 : f32
    %177 = vector.broadcast %cst_110 : f32 to vector<8x240xf32>
    %178 = arith.maximumf %176, %177 : vector<8x240xf32>
    %c80_111 = arith.constant 80 : index
    %c0_112 = arith.constant 0 : index
    %179 = vector.load %arg12[%c80_111, %c0_112] : memref<96x240xf32, #tpu.memory_space<vmem>>, vector<8x240xf32>
    tpu.vector_store %arg12[%c80_111, %c0_112], %178 {strides = array<i32>} : memref<96x240xf32, #tpu.memory_space<vmem>>, vector<8x240xf32>,
    %c176 = arith.constant 176 : index
    %c0_113 = arith.constant 0 : index
    %180 = vector.load %arg11[%c176, %c0_113] : memref<192x240xf32, #tpu.memory_space<vmem>>, vector<8x240xf32>
    %c184 = arith.constant 184 : index
    %c0_114 = arith.constant 0 : index
    %181 = vector.load %arg11[%c184, %c0_114] : memref<192x240xf32, #tpu.memory_space<vmem>>, vector<8x240xf32>
    %182 = arith.maximumf %180, %181 : vector<8x240xf32>
    %c0_115 = arith.constant 0 : index
    %c0_116 = arith.constant 0 : index
    %183 = vector.load %arg3[%c0_115, %c0_116] : memref<1x240xf32, #tpu.memory_space<vmem>>, vector<1x240xf32>
    %184 = vector.broadcast %183 : vector<1x240xf32> to vector<8x240xf32>
    %185 = arith.addf %182, %184 : vector<8x240xf32>
    %cst_117 = arith.constant 0.000000e+00 : f32
    %186 = vector.broadcast %cst_117 : f32 to vector<8x240xf32>
    %187 = arith.maximumf %185, %186 : vector<8x240xf32>
    %c88_118 = arith.constant 88 : index
    %c0_119 = arith.constant 0 : index
    %188 = vector.load %arg12[%c88_118, %c0_119] : memref<96x240xf32, #tpu.memory_space<vmem>>, vector<8x240xf32>
    tpu.vector_store %arg12[%c88_118, %c0_119], %187 {strides = array<i32>} : memref<96x240xf32, #tpu.memory_space<vmem>>, vector<8x240xf32>,
    %cst_120 = arith.constant 0.000000e+00 : f32
    %189 = vector.broadcast %cst_120 : f32 to vector<64x400xf32>
    %c0_121 = arith.constant 0 : index
    %c0_122 = arith.constant 0 : index
    %190 = vector.load %arg12[%c0_121, %c0_122] : memref<96x240xf32, #tpu.memory_space<vmem>>, vector<64x240xf32>
    %191 = arith.truncf %190 : vector<64x240xf32> to vector<64x240xbf16>
    %c0_123 = arith.constant 0 : index
    %c0_124 = arith.constant 0 : index
    %c0_125 = arith.constant 0 : index
    %192 = vector.load %arg4[%c0_123, %c0_124, %c0_125] : memref<5x240x400xbf16, #tpu.memory_space<vmem>>, vector<1x240x400xbf16>
    %193 = vector.shape_cast %192 : vector<1x240x400xbf16> to vector<240x400xbf16>
    %cst_126 = arith.constant dense<0.000000e+00> : vector<64x400xf32>
    %194 = tpu.matmul %191, %193, %cst_126 {dimension_numbers = #tpu.dot_dimension_numbers<[1], [0], [0], [1], [0, 0, 1, 1], [], []>} : vector<64x240xbf16>, vector<240x400xbf16>, vector<64x400xf32> -> vector<64x400xf32>
    %195 = arith.addf %189, %194 : vector<64x400xf32>
    %c8_127 = arith.constant 8 : index
    %c0_128 = arith.constant 0 : index
    %196 = vector.load %arg12[%c8_127, %c0_128] : memref<96x240xf32, #tpu.memory_space<vmem>>, vector<64x240xf32>
    %197 = arith.truncf %196 : vector<64x240xf32> to vector<64x240xbf16>
    %c1_129 = arith.constant 1 : index
    %c0_130 = arith.constant 0 : index
    %c0_131 = arith.constant 0 : index
    %198 = vector.load %arg4[%c1_129, %c0_130, %c0_131] : memref<5x240x400xbf16, #tpu.memory_space<vmem>>, vector<1x240x400xbf16>
    %199 = vector.shape_cast %198 : vector<1x240x400xbf16> to vector<240x400xbf16>
    %cst_132 = arith.constant dense<0.000000e+00> : vector<64x400xf32>
    %200 = tpu.matmul %197, %199, %cst_132 {dimension_numbers = #tpu.dot_dimension_numbers<[1], [0], [0], [1], [0, 0, 1, 1], [], []>} : vector<64x240xbf16>, vector<240x400xbf16>, vector<64x400xf32> -> vector<64x400xf32>
    %201 = arith.addf %195, %200 : vector<64x400xf32>
    %c16_133 = arith.constant 16 : index
    %c0_134 = arith.constant 0 : index
    %202 = vector.load %arg12[%c16_133, %c0_134] : memref<96x240xf32, #tpu.memory_space<vmem>>, vector<64x240xf32>
    %203 = arith.truncf %202 : vector<64x240xf32> to vector<64x240xbf16>
    %c2_135 = arith.constant 2 : index
    %c0_136 = arith.constant 0 : index
    %c0_137 = arith.constant 0 : index
    %204 = vector.load %arg4[%c2_135, %c0_136, %c0_137] : memref<5x240x400xbf16, #tpu.memory_space<vmem>>, vector<1x240x400xbf16>
    %205 = vector.shape_cast %204 : vector<1x240x400xbf16> to vector<240x400xbf16>
    %cst_138 = arith.constant dense<0.000000e+00> : vector<64x400xf32>
    %206 = tpu.matmul %203, %205, %cst_138 {dimension_numbers = #tpu.dot_dimension_numbers<[1], [0], [0], [1], [0, 0, 1, 1], [], []>} : vector<64x240xbf16>, vector<240x400xbf16>, vector<64x400xf32> -> vector<64x400xf32>
    %207 = arith.addf %201, %206 : vector<64x400xf32>
    %c24_139 = arith.constant 24 : index
    %c0_140 = arith.constant 0 : index
    %208 = vector.load %arg12[%c24_139, %c0_140] : memref<96x240xf32, #tpu.memory_space<vmem>>, vector<64x240xf32>
    %209 = arith.truncf %208 : vector<64x240xf32> to vector<64x240xbf16>
    %c3_141 = arith.constant 3 : index
    %c0_142 = arith.constant 0 : index
    %c0_143 = arith.constant 0 : index
    %210 = vector.load %arg4[%c3_141, %c0_142, %c0_143] : memref<5x240x400xbf16, #tpu.memory_space<vmem>>, vector<1x240x400xbf16>
    %211 = vector.shape_cast %210 : vector<1x240x400xbf16> to vector<240x400xbf16>
    %cst_144 = arith.constant dense<0.000000e+00> : vector<64x400xf32>
    %212 = tpu.matmul %209, %211, %cst_144 {dimension_numbers = #tpu.dot_dimension_numbers<[1], [0], [0], [1], [0, 0, 1, 1], [], []>} : vector<64x240xbf16>, vector<240x400xbf16>, vector<64x400xf32> -> vector<64x400xf32>
    %213 = arith.addf %207, %212 : vector<64x400xf32>
    %c32_145 = arith.constant 32 : index
    %c0_146 = arith.constant 0 : index
    %214 = vector.load %arg12[%c32_145, %c0_146] : memref<96x240xf32, #tpu.memory_space<vmem>>, vector<64x240xf32>
    %215 = arith.truncf %214 : vector<64x240xf32> to vector<64x240xbf16>
    %c4_147 = arith.constant 4 : index
    %c0_148 = arith.constant 0 : index
    %c0_149 = arith.constant 0 : index
    %216 = vector.load %arg4[%c4_147, %c0_148, %c0_149] : memref<5x240x400xbf16, #tpu.memory_space<vmem>>, vector<1x240x400xbf16>
    %217 = vector.shape_cast %216 : vector<1x240x400xbf16> to vector<240x400xbf16>
    %cst_150 = arith.constant dense<0.000000e+00> : vector<64x400xf32>
    %218 = tpu.matmul %215, %217, %cst_150 {dimension_numbers = #tpu.dot_dimension_numbers<[1], [0], [0], [1], [0, 0, 1, 1], [], []>} : vector<64x240xbf16>, vector<240x400xbf16>, vector<64x400xf32> -> vector<64x400xf32>
    %219 = arith.addf %213, %218 : vector<64x400xf32>
    %220 = vector.extract_strided_slice %219 {offsets = [0, 0], sizes = [64, 50], strides = [1, 1]} : vector<64x400xf32> to vector<64x50xf32>
    %221 = vector.extract_strided_slice %219 {offsets = [0, 50], sizes = [64, 50], strides = [1, 1]} : vector<64x400xf32> to vector<64x50xf32>
    %222 = arith.maximumf %220, %221 : vector<64x50xf32>
    %223 = vector.extract_strided_slice %219 {offsets = [0, 100], sizes = [64, 50], strides = [1, 1]} : vector<64x400xf32> to vector<64x50xf32>
    %224 = vector.extract_strided_slice %219 {offsets = [0, 150], sizes = [64, 50], strides = [1, 1]} : vector<64x400xf32> to vector<64x50xf32>
    %225 = arith.maximumf %223, %224 : vector<64x50xf32>
    %226 = vector.extract_strided_slice %219 {offsets = [0, 200], sizes = [64, 50], strides = [1, 1]} : vector<64x400xf32> to vector<64x50xf32>
    %227 = vector.extract_strided_slice %219 {offsets = [0, 250], sizes = [64, 50], strides = [1, 1]} : vector<64x400xf32> to vector<64x50xf32>
    %228 = arith.maximumf %226, %227 : vector<64x50xf32>
    %229 = vector.extract_strided_slice %219 {offsets = [0, 300], sizes = [64, 50], strides = [1, 1]} : vector<64x400xf32> to vector<64x50xf32>
    %230 = vector.extract_strided_slice %219 {offsets = [0, 350], sizes = [64, 50], strides = [1, 1]} : vector<64x400xf32> to vector<64x50xf32>
    %231 = arith.maximumf %229, %230 : vector<64x50xf32>
    %cst_151 = arith.constant 0.000000e+00 : f32
    %232 = vector.broadcast %cst_151 : f32 to vector<8x512xf32>
    %233 = vector.extract_strided_slice %222 {offsets = [0, 0], sizes = [8, 50], strides = [1, 1]} : vector<64x50xf32> to vector<8x50xf32>
    %234 = vector.extract_strided_slice %222 {offsets = [8, 0], sizes = [8, 50], strides = [1, 1]} : vector<64x50xf32> to vector<8x50xf32>
    %235 = arith.maximumf %233, %234 : vector<8x50xf32>
    %c0_152 = arith.constant 0 : index
    %c0_153 = arith.constant 0 : index
    %236 = vector.load %arg5[%c0_152, %c0_153] : memref<1x50xf32, #tpu.memory_space<vmem>>, vector<1x50xf32>
    %237 = vector.broadcast %236 : vector<1x50xf32> to vector<8x50xf32>
    %238 = arith.addf %235, %237 : vector<8x50xf32>
    %cst_154 = arith.constant 0.000000e+00 : f32
    %239 = vector.broadcast %cst_154 : f32 to vector<8x50xf32>
    %240 = arith.maximumf %238, %239 : vector<8x50xf32>
    %241 = arith.truncf %240 : vector<8x50xf32> to vector<8x50xbf16>
    %c0_155 = arith.constant 0 : index
    %c0_156 = arith.constant 0 : index
    %c0_157 = arith.constant 0 : index
    %242 = vector.load %arg6[%c0_155, %c0_156, %c0_157] : memref<16x50x512xbf16, #tpu.memory_space<vmem>>, vector<1x50x512xbf16>
    %243 = vector.shape_cast %242 : vector<1x50x512xbf16> to vector<50x512xbf16>
    %cst_158 = arith.constant dense<0.000000e+00> : vector<8x512xf32>
    %244 = tpu.matmul %241, %243, %cst_158 {dimension_numbers = #tpu.dot_dimension_numbers<[1], [0], [0], [1], [0, 0, 1, 1], [], []>} : vector<8x50xbf16>, vector<50x512xbf16>, vector<8x512xf32> -> vector<8x512xf32>
    %245 = arith.addf %232, %244 : vector<8x512xf32>
    %246 = vector.extract_strided_slice %225 {offsets = [0, 0], sizes = [8, 50], strides = [1, 1]} : vector<64x50xf32> to vector<8x50xf32>
    %247 = vector.extract_strided_slice %225 {offsets = [8, 0], sizes = [8, 50], strides = [1, 1]} : vector<64x50xf32> to vector<8x50xf32>
    %248 = arith.maximumf %246, %247 : vector<8x50xf32>
    %c0_159 = arith.constant 0 : index
    %c0_160 = arith.constant 0 : index
    %249 = vector.load %arg5[%c0_159, %c0_160] : memref<1x50xf32, #tpu.memory_space<vmem>>, vector<1x50xf32>
    %250 = vector.broadcast %249 : vector<1x50xf32> to vector<8x50xf32>
    %251 = arith.addf %248, %250 : vector<8x50xf32>
    %cst_161 = arith.constant 0.000000e+00 : f32
    %252 = vector.broadcast %cst_161 : f32 to vector<8x50xf32>
    %253 = arith.maximumf %251, %252 : vector<8x50xf32>
    %254 = arith.truncf %253 : vector<8x50xf32> to vector<8x50xbf16>
    %c1_162 = arith.constant 1 : index
    %c0_163 = arith.constant 0 : index
    %c0_164 = arith.constant 0 : index
    %255 = vector.load %arg6[%c1_162, %c0_163, %c0_164] : memref<16x50x512xbf16, #tpu.memory_space<vmem>>, vector<1x50x512xbf16>
    %256 = vector.shape_cast %255 : vector<1x50x512xbf16> to vector<50x512xbf16>
    %cst_165 = arith.constant dense<0.000000e+00> : vector<8x512xf32>
    %257 = tpu.matmul %254, %256, %cst_165 {dimension_numbers = #tpu.dot_dimension_numbers<[1], [0], [0], [1], [0, 0, 1, 1], [], []>} : vector<8x50xbf16>, vector<50x512xbf16>, vector<8x512xf32> -> vector<8x512xf32>
    %258 = arith.addf %245, %257 : vector<8x512xf32>
    %259 = vector.extract_strided_slice %228 {offsets = [0, 0], sizes = [8, 50], strides = [1, 1]} : vector<64x50xf32> to vector<8x50xf32>
    %260 = vector.extract_strided_slice %228 {offsets = [8, 0], sizes = [8, 50], strides = [1, 1]} : vector<64x50xf32> to vector<8x50xf32>
    %261 = arith.maximumf %259, %260 : vector<8x50xf32>
    %c0_166 = arith.constant 0 : index
    %c0_167 = arith.constant 0 : index
    %262 = vector.load %arg5[%c0_166, %c0_167] : memref<1x50xf32, #tpu.memory_space<vmem>>, vector<1x50xf32>
    %263 = vector.broadcast %262 : vector<1x50xf32> to vector<8x50xf32>
    %264 = arith.addf %261, %263 : vector<8x50xf32>
    %cst_168 = arith.constant 0.000000e+00 : f32
    %265 = vector.broadcast %cst_168 : f32 to vector<8x50xf32>
    %266 = arith.maximumf %264, %265 : vector<8x50xf32>
    %267 = arith.truncf %266 : vector<8x50xf32> to vector<8x50xbf16>
    %c2_169 = arith.constant 2 : index
    %c0_170 = arith.constant 0 : index
    %c0_171 = arith.constant 0 : index
    %268 = vector.load %arg6[%c2_169, %c0_170, %c0_171] : memref<16x50x512xbf16, #tpu.memory_space<vmem>>, vector<1x50x512xbf16>
    %269 = vector.shape_cast %268 : vector<1x50x512xbf16> to vector<50x512xbf16>
    %cst_172 = arith.constant dense<0.000000e+00> : vector<8x512xf32>
    %270 = tpu.matmul %267, %269, %cst_172 {dimension_numbers = #tpu.dot_dimension_numbers<[1], [0], [0], [1], [0, 0, 1, 1], [], []>} : vector<8x50xbf16>, vector<50x512xbf16>, vector<8x512xf32> -> vector<8x512xf32>
    %271 = arith.addf %258, %270 : vector<8x512xf32>
    %272 = vector.extract_strided_slice %231 {offsets = [0, 0], sizes = [8, 50], strides = [1, 1]} : vector<64x50xf32> to vector<8x50xf32>
    %273 = vector.extract_strided_slice %231 {offsets = [8, 0], sizes = [8, 50], strides = [1, 1]} : vector<64x50xf32> to vector<8x50xf32>
    %274 = arith.maximumf %272, %273 : vector<8x50xf32>
    %c0_173 = arith.constant 0 : index
    %c0_174 = arith.constant 0 : index
    %275 = vector.load %arg5[%c0_173, %c0_174] : memref<1x50xf32, #tpu.memory_space<vmem>>, vector<1x50xf32>
    %276 = vector.broadcast %275 : vector<1x50xf32> to vector<8x50xf32>
    %277 = arith.addf %274, %276 : vector<8x50xf32>
    %cst_175 = arith.constant 0.000000e+00 : f32
    %278 = vector.broadcast %cst_175 : f32 to vector<8x50xf32>
    %279 = arith.maximumf %277, %278 : vector<8x50xf32>
    %280 = arith.truncf %279 : vector<8x50xf32> to vector<8x50xbf16>
    %c3_176 = arith.constant 3 : index
    %c0_177 = arith.constant 0 : index
    %c0_178 = arith.constant 0 : index
    %281 = vector.load %arg6[%c3_176, %c0_177, %c0_178] : memref<16x50x512xbf16, #tpu.memory_space<vmem>>, vector<1x50x512xbf16>
    %282 = vector.shape_cast %281 : vector<1x50x512xbf16> to vector<50x512xbf16>
    %cst_179 = arith.constant dense<0.000000e+00> : vector<8x512xf32>
    %283 = tpu.matmul %280, %282, %cst_179 {dimension_numbers = #tpu.dot_dimension_numbers<[1], [0], [0], [1], [0, 0, 1, 1], [], []>} : vector<8x50xbf16>, vector<50x512xbf16>, vector<8x512xf32> -> vector<8x512xf32>
    %284 = arith.addf %271, %283 : vector<8x512xf32>
    %285 = vector.extract_strided_slice %222 {offsets = [16, 0], sizes = [8, 50], strides = [1, 1]} : vector<64x50xf32> to vector<8x50xf32>
    %286 = vector.extract_strided_slice %222 {offsets = [24, 0], sizes = [8, 50], strides = [1, 1]} : vector<64x50xf32> to vector<8x50xf32>
    %287 = arith.maximumf %285, %286 : vector<8x50xf32>
    %c0_180 = arith.constant 0 : index
    %c0_181 = arith.constant 0 : index
    %288 = vector.load %arg5[%c0_180, %c0_181] : memref<1x50xf32, #tpu.memory_space<vmem>>, vector<1x50xf32>
    %289 = vector.broadcast %288 : vector<1x50xf32> to vector<8x50xf32>
    %290 = arith.addf %287, %289 : vector<8x50xf32>
    %cst_182 = arith.constant 0.000000e+00 : f32
    %291 = vector.broadcast %cst_182 : f32 to vector<8x50xf32>
    %292 = arith.maximumf %290, %291 : vector<8x50xf32>
    %293 = arith.truncf %292 : vector<8x50xf32> to vector<8x50xbf16>
    %c4_183 = arith.constant 4 : index
    %c0_184 = arith.constant 0 : index
    %c0_185 = arith.constant 0 : index
    %294 = vector.load %arg6[%c4_183, %c0_184, %c0_185] : memref<16x50x512xbf16, #tpu.memory_space<vmem>>, vector<1x50x512xbf16>
    %295 = vector.shape_cast %294 : vector<1x50x512xbf16> to vector<50x512xbf16>
    %cst_186 = arith.constant dense<0.000000e+00> : vector<8x512xf32>
    %296 = tpu.matmul %293, %295, %cst_186 {dimension_numbers = #tpu.dot_dimension_numbers<[1], [0], [0], [1], [0, 0, 1, 1], [], []>} : vector<8x50xbf16>, vector<50x512xbf16>, vector<8x512xf32> -> vector<8x512xf32>
    %297 = arith.addf %284, %296 : vector<8x512xf32>
    %298 = vector.extract_strided_slice %225 {offsets = [16, 0], sizes = [8, 50], strides = [1, 1]} : vector<64x50xf32> to vector<8x50xf32>
    %299 = vector.extract_strided_slice %225 {offsets = [24, 0], sizes = [8, 50], strides = [1, 1]} : vector<64x50xf32> to vector<8x50xf32>
    %300 = arith.maximumf %298, %299 : vector<8x50xf32>
    %c0_187 = arith.constant 0 : index
    %c0_188 = arith.constant 0 : index
    %301 = vector.load %arg5[%c0_187, %c0_188] : memref<1x50xf32, #tpu.memory_space<vmem>>, vector<1x50xf32>
    %302 = vector.broadcast %301 : vector<1x50xf32> to vector<8x50xf32>
    %303 = arith.addf %300, %302 : vector<8x50xf32>
    %cst_189 = arith.constant 0.000000e+00 : f32
    %304 = vector.broadcast %cst_189 : f32 to vector<8x50xf32>
    %305 = arith.maximumf %303, %304 : vector<8x50xf32>
    %306 = arith.truncf %305 : vector<8x50xf32> to vector<8x50xbf16>
    %c5 = arith.constant 5 : index
    %c0_190 = arith.constant 0 : index
    %c0_191 = arith.constant 0 : index
    %307 = vector.load %arg6[%c5, %c0_190, %c0_191] : memref<16x50x512xbf16, #tpu.memory_space<vmem>>, vector<1x50x512xbf16>
    %308 = vector.shape_cast %307 : vector<1x50x512xbf16> to vector<50x512xbf16>
    %cst_192 = arith.constant dense<0.000000e+00> : vector<8x512xf32>
    %309 = tpu.matmul %306, %308, %cst_192 {dimension_numbers = #tpu.dot_dimension_numbers<[1], [0], [0], [1], [0, 0, 1, 1], [], []>} : vector<8x50xbf16>, vector<50x512xbf16>, vector<8x512xf32> -> vector<8x512xf32>
    %310 = arith.addf %297, %309 : vector<8x512xf32>
    %311 = vector.extract_strided_slice %228 {offsets = [16, 0], sizes = [8, 50], strides = [1, 1]} : vector<64x50xf32> to vector<8x50xf32>
    %312 = vector.extract_strided_slice %228 {offsets = [24, 0], sizes = [8, 50], strides = [1, 1]} : vector<64x50xf32> to vector<8x50xf32>
    %313 = arith.maximumf %311, %312 : vector<8x50xf32>
    %c0_193 = arith.constant 0 : index
    %c0_194 = arith.constant 0 : index
    %314 = vector.load %arg5[%c0_193, %c0_194] : memref<1x50xf32, #tpu.memory_space<vmem>>, vector<1x50xf32>
    %315 = vector.broadcast %314 : vector<1x50xf32> to vector<8x50xf32>
    %316 = arith.addf %313, %315 : vector<8x50xf32>
    %cst_195 = arith.constant 0.000000e+00 : f32
    %317 = vector.broadcast %cst_195 : f32 to vector<8x50xf32>
    %318 = arith.maximumf %316, %317 : vector<8x50xf32>
    %319 = arith.truncf %318 : vector<8x50xf32> to vector<8x50xbf16>
    %c6 = arith.constant 6 : index
    %c0_196 = arith.constant 0 : index
    %c0_197 = arith.constant 0 : index
    %320 = vector.load %arg6[%c6, %c0_196, %c0_197] : memref<16x50x512xbf16, #tpu.memory_space<vmem>>, vector<1x50x512xbf16>
    %321 = vector.shape_cast %320 : vector<1x50x512xbf16> to vector<50x512xbf16>
    %cst_198 = arith.constant dense<0.000000e+00> : vector<8x512xf32>
    %322 = tpu.matmul %319, %321, %cst_198 {dimension_numbers = #tpu.dot_dimension_numbers<[1], [0], [0], [1], [0, 0, 1, 1], [], []>} : vector<8x50xbf16>, vector<50x512xbf16>, vector<8x512xf32> -> vector<8x512xf32>
    %323 = arith.addf %310, %322 : vector<8x512xf32>
    %324 = vector.extract_strided_slice %231 {offsets = [16, 0], sizes = [8, 50], strides = [1, 1]} : vector<64x50xf32> to vector<8x50xf32>
    %325 = vector.extract_strided_slice %231 {offsets = [24, 0], sizes = [8, 50], strides = [1, 1]} : vector<64x50xf32> to vector<8x50xf32>
    %326 = arith.maximumf %324, %325 : vector<8x50xf32>
    %c0_199 = arith.constant 0 : index
    %c0_200 = arith.constant 0 : index
    %327 = vector.load %arg5[%c0_199, %c0_200] : memref<1x50xf32, #tpu.memory_space<vmem>>, vector<1x50xf32>
    %328 = vector.broadcast %327 : vector<1x50xf32> to vector<8x50xf32>
    %329 = arith.addf %326, %328 : vector<8x50xf32>
    %cst_201 = arith.constant 0.000000e+00 : f32
    %330 = vector.broadcast %cst_201 : f32 to vector<8x50xf32>
    %331 = arith.maximumf %329, %330 : vector<8x50xf32>
    %332 = arith.truncf %331 : vector<8x50xf32> to vector<8x50xbf16>
    %c7 = arith.constant 7 : index
    %c0_202 = arith.constant 0 : index
    %c0_203 = arith.constant 0 : index
    %333 = vector.load %arg6[%c7, %c0_202, %c0_203] : memref<16x50x512xbf16, #tpu.memory_space<vmem>>, vector<1x50x512xbf16>
    %334 = vector.shape_cast %333 : vector<1x50x512xbf16> to vector<50x512xbf16>
    %cst_204 = arith.constant dense<0.000000e+00> : vector<8x512xf32>
    %335 = tpu.matmul %332, %334, %cst_204 {dimension_numbers = #tpu.dot_dimension_numbers<[1], [0], [0], [1], [0, 0, 1, 1], [], []>} : vector<8x50xbf16>, vector<50x512xbf16>, vector<8x512xf32> -> vector<8x512xf32>
    %336 = arith.addf %323, %335 : vector<8x512xf32>
    %337 = vector.extract_strided_slice %222 {offsets = [32, 0], sizes = [8, 50], strides = [1, 1]} : vector<64x50xf32> to vector<8x50xf32>
    %338 = vector.extract_strided_slice %222 {offsets = [40, 0], sizes = [8, 50], strides = [1, 1]} : vector<64x50xf32> to vector<8x50xf32>
    %339 = arith.maximumf %337, %338 : vector<8x50xf32>
    %c0_205 = arith.constant 0 : index
    %c0_206 = arith.constant 0 : index
    %340 = vector.load %arg5[%c0_205, %c0_206] : memref<1x50xf32, #tpu.memory_space<vmem>>, vector<1x50xf32>
    %341 = vector.broadcast %340 : vector<1x50xf32> to vector<8x50xf32>
    %342 = arith.addf %339, %341 : vector<8x50xf32>
    %cst_207 = arith.constant 0.000000e+00 : f32
    %343 = vector.broadcast %cst_207 : f32 to vector<8x50xf32>
    %344 = arith.maximumf %342, %343 : vector<8x50xf32>
    %345 = arith.truncf %344 : vector<8x50xf32> to vector<8x50xbf16>
    %c8_208 = arith.constant 8 : index
    %c0_209 = arith.constant 0 : index
    %c0_210 = arith.constant 0 : index
    %346 = vector.load %arg6[%c8_208, %c0_209, %c0_210] : memref<16x50x512xbf16, #tpu.memory_space<vmem>>, vector<1x50x512xbf16>
    %347 = vector.shape_cast %346 : vector<1x50x512xbf16> to vector<50x512xbf16>
    %cst_211 = arith.constant dense<0.000000e+00> : vector<8x512xf32>
    %348 = tpu.matmul %345, %347, %cst_211 {dimension_numbers = #tpu.dot_dimension_numbers<[1], [0], [0], [1], [0, 0, 1, 1], [], []>} : vector<8x50xbf16>, vector<50x512xbf16>, vector<8x512xf32> -> vector<8x512xf32>
    %349 = arith.addf %336, %348 : vector<8x512xf32>
    %350 = vector.extract_strided_slice %225 {offsets = [32, 0], sizes = [8, 50], strides = [1, 1]} : vector<64x50xf32> to vector<8x50xf32>
    %351 = vector.extract_strided_slice %225 {offsets = [40, 0], sizes = [8, 50], strides = [1, 1]} : vector<64x50xf32> to vector<8x50xf32>
    %352 = arith.maximumf %350, %351 : vector<8x50xf32>
    %c0_212 = arith.constant 0 : index
    %c0_213 = arith.constant 0 : index
    %353 = vector.load %arg5[%c0_212, %c0_213] : memref<1x50xf32, #tpu.memory_space<vmem>>, vector<1x50xf32>
    %354 = vector.broadcast %353 : vector<1x50xf32> to vector<8x50xf32>
    %355 = arith.addf %352, %354 : vector<8x50xf32>
    %cst_214 = arith.constant 0.000000e+00 : f32
    %356 = vector.broadcast %cst_214 : f32 to vector<8x50xf32>
    %357 = arith.maximumf %355, %356 : vector<8x50xf32>
    %358 = arith.truncf %357 : vector<8x50xf32> to vector<8x50xbf16>
    %c9 = arith.constant 9 : index
    %c0_215 = arith.constant 0 : index
    %c0_216 = arith.constant 0 : index
    %359 = vector.load %arg6[%c9, %c0_215, %c0_216] : memref<16x50x512xbf16, #tpu.memory_space<vmem>>, vector<1x50x512xbf16>
    %360 = vector.shape_cast %359 : vector<1x50x512xbf16> to vector<50x512xbf16>
    %cst_217 = arith.constant dense<0.000000e+00> : vector<8x512xf32>
    %361 = tpu.matmul %358, %360, %cst_217 {dimension_numbers = #tpu.dot_dimension_numbers<[1], [0], [0], [1], [0, 0, 1, 1], [], []>} : vector<8x50xbf16>, vector<50x512xbf16>, vector<8x512xf32> -> vector<8x512xf32>
    %362 = arith.addf %349, %361 : vector<8x512xf32>
    %363 = vector.extract_strided_slice %228 {offsets = [32, 0], sizes = [8, 50], strides = [1, 1]} : vector<64x50xf32> to vector<8x50xf32>
    %364 = vector.extract_strided_slice %228 {offsets = [40, 0], sizes = [8, 50], strides = [1, 1]} : vector<64x50xf32> to vector<8x50xf32>
    %365 = arith.maximumf %363, %364 : vector<8x50xf32>
    %c0_218 = arith.constant 0 : index
    %c0_219 = arith.constant 0 : index
    %366 = vector.load %arg5[%c0_218, %c0_219] : memref<1x50xf32, #tpu.memory_space<vmem>>, vector<1x50xf32>
    %367 = vector.broadcast %366 : vector<1x50xf32> to vector<8x50xf32>
    %368 = arith.addf %365, %367 : vector<8x50xf32>
    %cst_220 = arith.constant 0.000000e+00 : f32
    %369 = vector.broadcast %cst_220 : f32 to vector<8x50xf32>
    %370 = arith.maximumf %368, %369 : vector<8x50xf32>
    %371 = arith.truncf %370 : vector<8x50xf32> to vector<8x50xbf16>
    %c10 = arith.constant 10 : index
    %c0_221 = arith.constant 0 : index
    %c0_222 = arith.constant 0 : index
    %372 = vector.load %arg6[%c10, %c0_221, %c0_222] : memref<16x50x512xbf16, #tpu.memory_space<vmem>>, vector<1x50x512xbf16>
    %373 = vector.shape_cast %372 : vector<1x50x512xbf16> to vector<50x512xbf16>
    %cst_223 = arith.constant dense<0.000000e+00> : vector<8x512xf32>
    %374 = tpu.matmul %371, %373, %cst_223 {dimension_numbers = #tpu.dot_dimension_numbers<[1], [0], [0], [1], [0, 0, 1, 1], [], []>} : vector<8x50xbf16>, vector<50x512xbf16>, vector<8x512xf32> -> vector<8x512xf32>
    %375 = arith.addf %362, %374 : vector<8x512xf32>
    %376 = vector.extract_strided_slice %231 {offsets = [32, 0], sizes = [8, 50], strides = [1, 1]} : vector<64x50xf32> to vector<8x50xf32>
    %377 = vector.extract_strided_slice %231 {offsets = [40, 0], sizes = [8, 50], strides = [1, 1]} : vector<64x50xf32> to vector<8x50xf32>
    %378 = arith.maximumf %376, %377 : vector<8x50xf32>
    %c0_224 = arith.constant 0 : index
    %c0_225 = arith.constant 0 : index
    %379 = vector.load %arg5[%c0_224, %c0_225] : memref<1x50xf32, #tpu.memory_space<vmem>>, vector<1x50xf32>
    %380 = vector.broadcast %379 : vector<1x50xf32> to vector<8x50xf32>
    %381 = arith.addf %378, %380 : vector<8x50xf32>
    %cst_226 = arith.constant 0.000000e+00 : f32
    %382 = vector.broadcast %cst_226 : f32 to vector<8x50xf32>
    %383 = arith.maximumf %381, %382 : vector<8x50xf32>
    %384 = arith.truncf %383 : vector<8x50xf32> to vector<8x50xbf16>
    %c11 = arith.constant 11 : index
    %c0_227 = arith.constant 0 : index
    %c0_228 = arith.constant 0 : index
    %385 = vector.load %arg6[%c11, %c0_227, %c0_228] : memref<16x50x512xbf16, #tpu.memory_space<vmem>>, vector<1x50x512xbf16>
    %386 = vector.shape_cast %385 : vector<1x50x512xbf16> to vector<50x512xbf16>
    %cst_229 = arith.constant dense<0.000000e+00> : vector<8x512xf32>
    %387 = tpu.matmul %384, %386, %cst_229 {dimension_numbers = #tpu.dot_dimension_numbers<[1], [0], [0], [1], [0, 0, 1, 1], [], []>} : vector<8x50xbf16>, vector<50x512xbf16>, vector<8x512xf32> -> vector<8x512xf32>
    %388 = arith.addf %375, %387 : vector<8x512xf32>
    %389 = vector.extract_strided_slice %222 {offsets = [48, 0], sizes = [8, 50], strides = [1, 1]} : vector<64x50xf32> to vector<8x50xf32>
    %390 = vector.extract_strided_slice %222 {offsets = [56, 0], sizes = [8, 50], strides = [1, 1]} : vector<64x50xf32> to vector<8x50xf32>
    %391 = arith.maximumf %389, %390 : vector<8x50xf32>
    %c0_230 = arith.constant 0 : index
    %c0_231 = arith.constant 0 : index
    %392 = vector.load %arg5[%c0_230, %c0_231] : memref<1x50xf32, #tpu.memory_space<vmem>>, vector<1x50xf32>
    %393 = vector.broadcast %392 : vector<1x50xf32> to vector<8x50xf32>
    %394 = arith.addf %391, %393 : vector<8x50xf32>
    %cst_232 = arith.constant 0.000000e+00 : f32
    %395 = vector.broadcast %cst_232 : f32 to vector<8x50xf32>
    %396 = arith.maximumf %394, %395 : vector<8x50xf32>
    %397 = arith.truncf %396 : vector<8x50xf32> to vector<8x50xbf16>
    %c12 = arith.constant 12 : index
    %c0_233 = arith.constant 0 : index
    %c0_234 = arith.constant 0 : index
    %398 = vector.load %arg6[%c12, %c0_233, %c0_234] : memref<16x50x512xbf16, #tpu.memory_space<vmem>>, vector<1x50x512xbf16>
    %399 = vector.shape_cast %398 : vector<1x50x512xbf16> to vector<50x512xbf16>
    %cst_235 = arith.constant dense<0.000000e+00> : vector<8x512xf32>
    %400 = tpu.matmul %397, %399, %cst_235 {dimension_numbers = #tpu.dot_dimension_numbers<[1], [0], [0], [1], [0, 0, 1, 1], [], []>} : vector<8x50xbf16>, vector<50x512xbf16>, vector<8x512xf32> -> vector<8x512xf32>
    %401 = arith.addf %388, %400 : vector<8x512xf32>
    %402 = vector.extract_strided_slice %225 {offsets = [48, 0], sizes = [8, 50], strides = [1, 1]} : vector<64x50xf32> to vector<8x50xf32>
    %403 = vector.extract_strided_slice %225 {offsets = [56, 0], sizes = [8, 50], strides = [1, 1]} : vector<64x50xf32> to vector<8x50xf32>
    %404 = arith.maximumf %402, %403 : vector<8x50xf32>
    %c0_236 = arith.constant 0 : index
    %c0_237 = arith.constant 0 : index
    %405 = vector.load %arg5[%c0_236, %c0_237] : memref<1x50xf32, #tpu.memory_space<vmem>>, vector<1x50xf32>
    %406 = vector.broadcast %405 : vector<1x50xf32> to vector<8x50xf32>
    %407 = arith.addf %404, %406 : vector<8x50xf32>
    %cst_238 = arith.constant 0.000000e+00 : f32
    %408 = vector.broadcast %cst_238 : f32 to vector<8x50xf32>
    %409 = arith.maximumf %407, %408 : vector<8x50xf32>
    %410 = arith.truncf %409 : vector<8x50xf32> to vector<8x50xbf16>
    %c13 = arith.constant 13 : index
    %c0_239 = arith.constant 0 : index
    %c0_240 = arith.constant 0 : index
    %411 = vector.load %arg6[%c13, %c0_239, %c0_240] : memref<16x50x512xbf16, #tpu.memory_space<vmem>>, vector<1x50x512xbf16>
    %412 = vector.shape_cast %411 : vector<1x50x512xbf16> to vector<50x512xbf16>
    %cst_241 = arith.constant dense<0.000000e+00> : vector<8x512xf32>
    %413 = tpu.matmul %410, %412, %cst_241 {dimension_numbers = #tpu.dot_dimension_numbers<[1], [0], [0], [1], [0, 0, 1, 1], [], []>} : vector<8x50xbf16>, vector<50x512xbf16>, vector<8x512xf32> -> vector<8x512xf32>
    %414 = arith.addf %401, %413 : vector<8x512xf32>
    %415 = vector.extract_strided_slice %228 {offsets = [48, 0], sizes = [8, 50], strides = [1, 1]} : vector<64x50xf32> to vector<8x50xf32>
    %416 = vector.extract_strided_slice %228 {offsets = [56, 0], sizes = [8, 50], strides = [1, 1]} : vector<64x50xf32> to vector<8x50xf32>
    %417 = arith.maximumf %415, %416 : vector<8x50xf32>
    %c0_242 = arith.constant 0 : index
    %c0_243 = arith.constant 0 : index
    %418 = vector.load %arg5[%c0_242, %c0_243] : memref<1x50xf32, #tpu.memory_space<vmem>>, vector<1x50xf32>
    %419 = vector.broadcast %418 : vector<1x50xf32> to vector<8x50xf32>
    %420 = arith.addf %417, %419 : vector<8x50xf32>
    %cst_244 = arith.constant 0.000000e+00 : f32
    %421 = vector.broadcast %cst_244 : f32 to vector<8x50xf32>
    %422 = arith.maximumf %420, %421 : vector<8x50xf32>
    %423 = arith.truncf %422 : vector<8x50xf32> to vector<8x50xbf16>
    %c14 = arith.constant 14 : index
    %c0_245 = arith.constant 0 : index
    %c0_246 = arith.constant 0 : index
    %424 = vector.load %arg6[%c14, %c0_245, %c0_246] : memref<16x50x512xbf16, #tpu.memory_space<vmem>>, vector<1x50x512xbf16>
    %425 = vector.shape_cast %424 : vector<1x50x512xbf16> to vector<50x512xbf16>
    %cst_247 = arith.constant dense<0.000000e+00> : vector<8x512xf32>
    %426 = tpu.matmul %423, %425, %cst_247 {dimension_numbers = #tpu.dot_dimension_numbers<[1], [0], [0], [1], [0, 0, 1, 1], [], []>} : vector<8x50xbf16>, vector<50x512xbf16>, vector<8x512xf32> -> vector<8x512xf32>
    %427 = arith.addf %414, %426 : vector<8x512xf32>
    %428 = vector.extract_strided_slice %231 {offsets = [48, 0], sizes = [8, 50], strides = [1, 1]} : vector<64x50xf32> to vector<8x50xf32>
    %429 = vector.extract_strided_slice %231 {offsets = [56, 0], sizes = [8, 50], strides = [1, 1]} : vector<64x50xf32> to vector<8x50xf32>
    %430 = arith.maximumf %428, %429 : vector<8x50xf32>
    %c0_248 = arith.constant 0 : index
    %c0_249 = arith.constant 0 : index
    %431 = vector.load %arg5[%c0_248, %c0_249] : memref<1x50xf32, #tpu.memory_space<vmem>>, vector<1x50xf32>
    %432 = vector.broadcast %431 : vector<1x50xf32> to vector<8x50xf32>
    %433 = arith.addf %430, %432 : vector<8x50xf32>
    %cst_250 = arith.constant 0.000000e+00 : f32
    %434 = vector.broadcast %cst_250 : f32 to vector<8x50xf32>
    %435 = arith.maximumf %433, %434 : vector<8x50xf32>
    %436 = arith.truncf %435 : vector<8x50xf32> to vector<8x50xbf16>
    %c15 = arith.constant 15 : index
    %c0_251 = arith.constant 0 : index
    %c0_252 = arith.constant 0 : index
    %437 = vector.load %arg6[%c15, %c0_251, %c0_252] : memref<16x50x512xbf16, #tpu.memory_space<vmem>>, vector<1x50x512xbf16>
    %438 = vector.shape_cast %437 : vector<1x50x512xbf16> to vector<50x512xbf16>
    %cst_253 = arith.constant dense<0.000000e+00> : vector<8x512xf32>
    %439 = tpu.matmul %436, %438, %cst_253 {dimension_numbers = #tpu.dot_dimension_numbers<[1], [0], [0], [1], [0, 0, 1, 1], [], []>} : vector<8x50xbf16>, vector<50x512xbf16>, vector<8x512xf32> -> vector<8x512xf32>
    %440 = arith.addf %427, %439 : vector<8x512xf32>
    %c0_254 = arith.constant 0 : index
    %c0_255 = arith.constant 0 : index
    %441 = vector.load %arg7[%c0_254, %c0_255] : memref<1x512xf32, #tpu.memory_space<vmem>>, vector<1x512xf32>
    %442 = vector.broadcast %441 : vector<1x512xf32> to vector<8x512xf32>
    %443 = arith.addf %440, %442 : vector<8x512xf32>
    %cst_256 = arith.constant 0.000000e+00 : f32
    %444 = vector.broadcast %cst_256 : f32 to vector<8x512xf32>
    %445 = arith.maximumf %443, %444 : vector<8x512xf32>
    %446 = arith.truncf %445 : vector<8x512xf32> to vector<8x512xbf16>
    %c0_257 = arith.constant 0 : index
    %c0_258 = arith.constant 0 : index
    %447 = vector.load %arg8[%c0_257, %c0_258] : memref<512x10xbf16, #tpu.memory_space<vmem>>, vector<512x10xbf16>
    %cst_259 = arith.constant dense<0.000000e+00> : vector<8x10xf32>
    %448 = tpu.matmul %446, %447, %cst_259 {dimension_numbers = #tpu.dot_dimension_numbers<[1], [0], [0], [1], [0, 0, 1, 1], [], []>} : vector<8x512xbf16>, vector<512x10xbf16>, vector<8x10xf32> -> vector<8x10xf32>
    %c0_260 = arith.constant 0 : index
    %c0_261 = arith.constant 0 : index
    %449 = vector.load %arg9[%c0_260, %c0_261] : memref<1x10xf32, #tpu.memory_space<vmem>>, vector<1x10xf32>
    %450 = vector.broadcast %449 : vector<1x10xf32> to vector<8x10xf32>
    %451 = arith.addf %448, %450 : vector<8x10xf32>
    %cst_262 = arith.constant dense<0xFF800000> : vector<8xf32>
    %452 = vector.multi_reduction <maximumf>, %451, %cst_262 [1] : vector<8x10xf32> to vector<8xf32>
    %453 = vector.shape_cast %452 : vector<8xf32> to vector<8x1xf32>
    %454 = vector.broadcast %453 : vector<8x1xf32> to vector<8x10xf32>
    %455 = arith.subf %451, %454 : vector<8x10xf32>
    %456 = math.exp %455 : vector<8x10xf32>
    %cst_263 = arith.constant dense<0.000000e+00> : vector<8xf32>
    %457 = vector.multi_reduction <add>, %456, %cst_263 [1] : vector<8x10xf32> to vector<8xf32>
    %458 = vector.shape_cast %457 : vector<8xf32> to vector<8x1xf32>
    %459 = math.log %458 : vector<8x1xf32>
    %460 = vector.broadcast %459 : vector<8x1xf32> to vector<8x10xf32>
    %461 = arith.subf %455, %460 : vector<8x10xf32>
    %c0_264 = arith.constant 0 : index
    %c0_265 = arith.constant 0 : index
    %462 = vector.load %arg10[%c0_264, %c0_265] : memref<8x10xf32, #tpu.memory_space<vmem>>, vector<8x10xf32>
    tpu.vector_store %arg10[%c0_264, %c0_265], %461 {strides = array<i32>} : memref<8x10xf32, #tpu.memory_space<vmem>>, vector<8x10xf32>,
    return
  }
  func.func @transform_0(%arg0: i32) -> (i32, i32, i32) {
    %c0_i32 = arith.constant 0 : i32
    %c0_i32_0 = arith.constant 0 : i32
    %c0_i32_1 = arith.constant 0 : i32
    return %arg0, %c0_i32, %c0_i32_0 : i32, i32, i32
  }
  func.func @transform_1(%arg0: i32) -> (i32, i32, i32) {
    %c0_i32 = arith.constant 0 : i32
    %c0_i32_0 = arith.constant 0 : i32
    %c0_i32_1 = arith.constant 0 : i32
    %c0_i32_2 = arith.constant 0 : i32
    return %c0_i32, %c0_i32_0, %c0_i32_1 : i32, i32, i32
  }
  func.func @transform_2(%arg0: i32) -> (i32, i32) {
    %c0_i32 = arith.constant 0 : i32
    %c0_i32_0 = arith.constant 0 : i32
    %c0_i32_1 = arith.constant 0 : i32
    return %c0_i32, %c0_i32_0 : i32, i32
  }
  func.func @transform_3(%arg0: i32) -> (i32, i32, i32) {
    %c0_i32 = arith.constant 0 : i32
    %c0_i32_0 = arith.constant 0 : i32
    %c0_i32_1 = arith.constant 0 : i32
    %c0_i32_2 = arith.constant 0 : i32
    return %c0_i32, %c0_i32_0, %c0_i32_1 : i32, i32, i32
  }
  func.func @transform_4(%arg0: i32) -> (i32, i32) {
    %c0_i32 = arith.constant 0 : i32
    %c0_i32_0 = arith.constant 0 : i32
    %c0_i32_1 = arith.constant 0 : i32
    return %c0_i32, %c0_i32_0 : i32, i32
  }
  func.func @transform_5(%arg0: i32) -> (i32, i32, i32) {
    %c0_i32 = arith.constant 0 : i32
    %c0_i32_0 = arith.constant 0 : i32
    %c0_i32_1 = arith.constant 0 : i32
    %c0_i32_2 = arith.constant 0 : i32
    return %c0_i32, %c0_i32_0, %c0_i32_1 : i32, i32, i32
  }
  func.func @transform_6(%arg0: i32) -> (i32, i32) {
    %c0_i32 = arith.constant 0 : i32
    %c0_i32_0 = arith.constant 0 : i32
    %c0_i32_1 = arith.constant 0 : i32
    return %c0_i32, %c0_i32_0 : i32, i32
  }
  func.func @transform_7(%arg0: i32) -> (i32, i32) {
    %c0_i32 = arith.constant 0 : i32
    %c0_i32_0 = arith.constant 0 : i32
    %c0_i32_1 = arith.constant 0 : i32
    return %c0_i32, %c0_i32_0 : i32, i32
  }
  func.func @transform_8(%arg0: i32) -> (i32, i32) {
    %c0_i32 = arith.constant 0 : i32
    %c0_i32_0 = arith.constant 0 : i32
    %c0_i32_1 = arith.constant 0 : i32
    return %c0_i32, %c0_i32_0 : i32, i32
  }
  func.func @transform_9(%arg0: i32) -> (i32, i32) {
    %c0_i32 = arith.constant 0 : i32
    %c0_i32_0 = arith.constant 0 : i32
    return %arg0, %c0_i32 : i32, i32
  }
}

</mosaic_0001>

<llo_original>
// kernel: tile.8
$region0: #{tile.8}
  #allocation0 [shape = 's32[1]{0}', space=sflag, size = 0x4, scoped, tag = 'scoped memory for tile.8']
  %s0 = inlined_call_operand.vmem [shape: f32[20], index: 0, kind: input, shape index: {}]
  %s1 = inlined_call_operand.vmem [shape: f32[12,20], index: 1, kind: output, shape index: {}]
  // Predicated region
  $region2: #{tile.8} parent=0 // pred_check
    _
  $region3: #{tile.8} parent=0 // pred_check_branch
    %3 = sbr.rel (0) target = $region5
  $region4: #{tile.8} parent=0 // pred_region
    _
  $region5: #{tile.8} parent=0 // pred_fallthru
    _
  %v4 = vld [vmem:[%s0] ss:$0 sm:$0xff]
  %5 = vst [vmem:[%s1] sm:$0xff] %v4
  %s6 = scalar_lea.vmem %s1, 8
  %7 = vst [vmem:[%s6] sm:$0xff] %v4

// kernel: tile.9
$region0: #{tile.9}
  %s0 = inlined_call_operand.vmem [shape: f32[12,20], index: 0, kind: input, shape index: {}]
  %s1 = inlined_call_operand.vmem [shape: f32[1,240], index: 1, kind: output, shape index: {}]
  $region1: #{tile.9} parent=0
    #allocation0 [shape = 'u8[8192]{0}', space=vmem, size = 0x2000, scoped, tag = 'scoped mem for output reshape']
    %v2 = vld [vmem:[%s0] sm:$0x1]
    %vm3 = vcmask 162816
    %4 = vst.msk [vmem:[#allocation0] sm:$0x1] %vm3, %v2
    %s5 = scalar_lea.vmem %s0, 6
    %v6 = vld [vmem:[%s5] sm:$0x1]
    %s7 = scalar_lea.vmem %s0, 6
    %v8 = vld [vmem:[%s7] sm:$0x1]
    %vm9 = vcmask 64512
    %v10 = vsel %vm9, %v8, %v6
    %11 = vrot.lane.b32.xlu0 %v10, 120
    %v12 = vpop.permute.xlu0 %11
    %vm13 = vcmask 97280
    %s14 = scalar_lea.vmem [#allocation0], 8
    %15 = vst.msk [vmem:[%s14] sm:$0x1] %vm13, %v12
    %vm16 = vcmask 1048512
    %17 = vst.msk [vmem:[#allocation0] sm:$0x1] %vm16, %v12
    %s18 = scalar_lea.vmem %s0, 5
    %v19 = vld [vmem:[%s18] sm:$0x1]
    %20 = vrot.lane.b32.xlu0 %v19, 100
    %v21 = vpop.permute.xlu0 %20
    %vm22 = vcmask 982816
    %23 = vst.msk [vmem:[#allocation0] sm:$0x1] %vm22, %v21
    %s24 = scalar_lea.vmem %s0, 11
    %v25 = vld [vmem:[%s24] sm:$0x1]
    %26 = vrot.lane.b32.xlu0 %v25, 92
    %v27 = vpop.permute.xlu0 %26
    %vm28 = vcmask 917216
    %s29 = scalar_lea.vmem [#allocation0], 8
    %30 = vst.msk [vmem:[%s29] sm:$0x1] %vm28, %v27
    %s31 = scalar_lea.vmem %s0, 4
    %v32 = vld [vmem:[%s31] sm:$0x1]
    %33 = vrot.lane.b32.xlu0 %v32, 80
    %v34 = vpop.permute.xlu0 %33
    %vm35 = vcmask 818816
    %36 = vst.msk [vmem:[#allocation0] sm:$0x1] %vm35, %v34
    %s37 = scalar_lea.vmem %s0, 10
    %v38 = vld [vmem:[%s37] sm:$0x1]
    %39 = vrot.lane.b32.xlu0 %v38, 72
    %v40 = vpop.permute.xlu0 %39
    %vm41 = vcmask 753216
    %s42 = scalar_lea.vmem [#allocation0], 8
    %43 = vst.msk [vmem:[%s42] sm:$0x1] %vm41, %v40
    %s44 = scalar_lea.vmem %s0, 3
    %v45 = vld [vmem:[%s44] sm:$0x1]
    %46 = vrot.lane.b32.xlu0 %v45, 60
    %v47 = vpop.permute.xlu0 %46
    %vm48 = vcmask 654816
    %49 = vst.msk [vmem:[#allocation0] sm:$0x1] %vm48, %v47
    %s50 = scalar_lea.vmem %s0, 9
    %v51 = vld [vmem:[%s50] sm:$0x1]
    %52 = vrot.lane.b32.xlu0 %v51, 52
    %v53 = vpop.permute.xlu0 %52
    %vm54 = vcmask 589216
    %s55 = scalar_lea.vmem [#allocation0], 8
    %56 = vst.msk [vmem:[%s55] sm:$0x1] %vm54, %v53
    %s57 = scalar_lea.vmem %s0, 2
    %v58 = vld [vmem:[%s57] sm:$0x1]
    %59 = vrot.lane.b32.xlu0 %v58, 40
    %v60 = vpop.permute.xlu0 %59
    %vm61 = vcmask 490816
    %62 = vst.msk [vmem:[#allocation0] sm:$0x1] %vm61, %v60
    %s63 = scalar_lea.vmem %s0, 8
    %v64 = vld [vmem:[%s63] sm:$0x1]
    %65 = vrot.lane.b32.xlu0 %v64, 32
    %v66 = vpop.permute.xlu0 %65
    %vm67 = vcmask 425216
    %s68 = scalar_lea.vmem [#allocation0], 8
    %69 = vst.msk [vmem:[%s68] sm:$0x1] %vm67, %v66
    %s70 = scalar_lea.vmem %s0, 1
    %v71 = vld [vmem:[%s70] sm:$0x1]
    %72 = vrot.lane.b32.xlu0 %v71, 20
    %v73 = vpop.permute.xlu0 %72
    %vm74 = vcmask 326816
    %75 = vst.msk [vmem:[#allocation0] sm:$0x1] %vm74, %v73
    %s76 = scalar_lea.vmem %s0, 7
    %v77 = vld [vmem:[%s76] sm:$0x1]
    %78 = vrot.lane.b32.xlu0 %v77, 12
    %v79 = vpop.permute.xlu0 %78
    %vm80 = vcmask 261216
    %s81 = scalar_lea.vmem [#allocation0], 8
    %82 = vst.msk [vmem:[%s81] sm:$0x1] %vm80, %v79
    %s84 = sshll.u32 1, 1
    %s85 = ssub.s32 %s84, 1
    %v87 = vld [vmem:[#allocation0] sm:%s85]
    %s88 = sshll.u32 1, 1
    %s89 = ssub.s32 %s88, 1
    %90 = vst [vmem:[%s1] sm:%s89] %v87
    %s91 = scalar_lea.vmem [#allocation0], 8
    %v92 = vld [vmem:[%s91] sm:%s85]
    %s93 = sshll.u32 1, 1
    %s94 = ssub.s32 %s93, 1
    %s95 = scalar_lea.vmem %s1, 1
    %96 = vst [vmem:[%s95] sm:%s94] %v92

// kernel: mnist_net_forward.1
$region0: #{mnist_net_forward.1}
  #allocation0 [shape = 'u32[]', space=smem, size = 0x4, offset = 0x4, fixed_abs, tag = 'smem constant byte address 0x4 - core index']
  #allocation1 [shape = 'u32[144,128]{1,0:T(1,128)}', space=vmem, size = 0x12000, scoped, tag = 'internal scratch']
  #allocation2 [shape = 'f32[192,240]{1,0:T(8,128)}', space=vmem, size = 0x30000, scoped, tag = 'scratch operand']
  #allocation3 [shape = 'f32[96,240]{1,0:T(8,128)}', space=vmem, size = 0x18000, scoped, tag = 'scratch operand']
  %s0 = inlined_call_operand.vmem [shape: f32[1,224,28], index: 0, kind: input, shape index: {}]
  %s1 = inlined_call_operand.vmem [shape: bf16[5,28,480], index: 1, kind: input, shape index: {}]
  %s2 = inlined_call_operand.vmem [shape: f32[1,240], index: 2, kind: input, shape index: {}]
  %s3 = inlined_call_operand.vmem [shape: bf16[5,240,400], index: 3, kind: input, shape index: {}]
  %s4 = inlined_call_operand.vmem [shape: f32[1,50], index: 4, kind: input, shape index: {}]
  %s5 = inlined_call_operand.vmem [shape: bf16[16,50,512], index: 5, kind: input, shape index: {}]
  %s6 = inlined_call_operand.vmem [shape: f32[1,512], index: 6, kind: input, shape index: {}]
  %s7 = inlined_call_operand.vmem [shape: bf16[512,10], index: 7, kind: input, shape index: {}]
  %s8 = inlined_call_operand.vmem [shape: f32[1,10], index: 8, kind: input, shape index: {}]
  %s9 = inlined_call_operand.vmem [shape: f32[8,10], index: 9, kind: output, shape index: {}]
  %s10 = sld [smem:[#allocation0]]
  $region46: #{mnist_net_forward.1} parent=0
    _
  %s12 = ssub.s32 1, %s10
  %s13 = scalar_select 0, %s12, %s10
  // Predicated region
  $region2: #{mnist_net_forward.1} parent=0 // pred_check
    _
  $region3: #{mnist_net_forward.1} parent=0 // pred_check_branch
    %15 = sbr.rel (0) target = $region5
  $region4: #{mnist_net_forward.1} parent=0 // pred_region
    _
  $region5: #{mnist_net_forward.1} parent=0 // pred_fallthru
    _
  // Predicated region
  $region6: #{mnist_net_forward.1} parent=0 // pred_check
    _
  $region7: #{mnist_net_forward.1} parent=0 // pred_check_branch
    %17 = sbr.rel (0) target = $region9
  $region8: #{mnist_net_forward.1} parent=0 // pred_region
    _
  $region9: #{mnist_net_forward.1} parent=0 // pred_fallthru
    _
  // Predicated region
  $region10: #{mnist_net_forward.1} parent=0 // pred_check
    _
  $region11: #{mnist_net_forward.1} parent=0 // pred_check_branch
    %19 = sbr.rel (0) target = $region13
  $region12: #{mnist_net_forward.1} parent=0 // pred_region
    _
  $region13: #{mnist_net_forward.1} parent=0 // pred_fallthru
    _
  // Predicated region
  $region14: #{mnist_net_forward.1} parent=0 // pred_check
    _
  $region15: #{mnist_net_forward.1} parent=0 // pred_check_branch
    %21 = sbr.rel (0) target = $region17
  $region16: #{mnist_net_forward.1} parent=0 // pred_region
    _
  $region17: #{mnist_net_forward.1} parent=0 // pred_fallthru
    _
  // Predicated region
  $region18: #{mnist_net_forward.1} parent=0 // pred_check
    _
  $region19: #{mnist_net_forward.1} parent=0 // pred_check_branch
    %23 = sbr.rel (0) target = $region21
  $region20: #{mnist_net_forward.1} parent=0 // pred_region
    _
  $region21: #{mnist_net_forward.1} parent=0 // pred_fallthru
    _
  // Predicated region
  $region22: #{mnist_net_forward.1} parent=0 // pred_check
    _
  $region23: #{mnist_net_forward.1} parent=0 // pred_check_branch
    %25 = sbr.rel (0) target = $region25
  $region24: #{mnist_net_forward.1} parent=0 // pred_region
    _
  $region25: #{mnist_net_forward.1} parent=0 // pred_fallthru
    _
  // Predicated region
  $region26: #{mnist_net_forward.1} parent=0 // pred_check
    _
  $region27: #{mnist_net_forward.1} parent=0 // pred_check_branch
    %27 = sbr.rel (0) target = $region29
  $region28: #{mnist_net_forward.1} parent=0 // pred_region
    _
  $region29: #{mnist_net_forward.1} parent=0 // pred_fallthru
    _
  // Predicated region
  $region30: #{mnist_net_forward.1} parent=0 // pred_check
    _
  $region31: #{mnist_net_forward.1} parent=0 // pred_check_branch
    %29 = sbr.rel (0) target = $region33
  $region32: #{mnist_net_forward.1} parent=0 // pred_region
    _
  $region33: #{mnist_net_forward.1} parent=0 // pred_fallthru
    _
  // Predicated region
  $region34: #{mnist_net_forward.1} parent=0 // pred_check
    _
  $region35: #{mnist_net_forward.1} parent=0 // pred_check_branch
    %31 = sbr.rel (0) target = $region37
  $region36: #{mnist_net_forward.1} parent=0 // pred_region
    _
  $region37: #{mnist_net_forward.1} parent=0 // pred_fallthru
    _
  %v33 = vld [vmem:[%s0] sm:$0xff]
  %v34 = vld [vmem:[%s0 + $0x8] sm:$0xff]
  %v35 = vld [vmem:[%s0 + $0x10] sm:$0xff]
  %v36 = vld [vmem:[%s0 + $0x18] sm:$0xff]
  %v37 = vld [vmem:[%s0 + $0x20] sm:$0xff]
  %v38 = vld [vmem:[%s0 + $0x28] sm:$0xff]
  %v39 = vld [vmem:[%s0 + $0x30] sm:$0xff]
  %v40 = vld [vmem:[%s0 + $0x38] sm:$0xff]
  %v41 = vld [vmem:[%s0 + $0x40] sm:$0xff]
  %v42 = vld [vmem:[%s0 + $0x48] sm:$0xff]
  %v43 = vld [vmem:[%s0 + $0x50] sm:$0xff]
  %v44 = vld [vmem:[%s0 + $0x58] sm:$0xff]
  %v45 = vld [vmem:[%s0 + $0x60] sm:$0xff]
  %v46 = vld [vmem:[%s0 + $0x68] sm:$0xff]
  %v47 = vld [vmem:[%s0 + $0x70] sm:$0xff]
  %v48 = vld [vmem:[%s0 + $0x78] sm:$0xff]
  %v49 = vld [vmem:[%s0 + $0x80] sm:$0xff]
  %v50 = vld [vmem:[%s0 + $0x88] sm:$0xff]
  %v51 = vld [vmem:[%s0 + $0x90] sm:$0xff]
  %v52 = vld [vmem:[%s0 + $0x98] sm:$0xff]
  %v53 = vld [vmem:[%s0 + $0xa0] sm:$0xff]
  %v54 = vld [vmem:[%s0 + $0xa8] sm:$0xff]
  %v55 = vld [vmem:[%s0 + $0xb0] sm:$0xff]
  %v56 = vld [vmem:[%s0 + $0xb8] sm:$0xff]
  %v57 = vld [vmem:[%s0 + $0xc0] sm:$0xff]
  %v58 = vld [vmem:[%s0 + $0xc8] sm:$0xff]
  %v59 = vld [vmem:[%s0 + $0xd0] sm:$0xff]
  %v60 = vld [vmem:[%s0 + $0xd8] sm:$0xff]
  %v61 = vpack.c.bf16 %v34, %v33
  %v62 = vpack.c.bf16 %v36, %v35
  %v63 = vpack.c.bf16 %v38, %v37
  %v64 = vpack.c.bf16 %v40, %v39
  %v65 = vpack.c.bf16 %v42, %v41
  %v66 = vpack.c.bf16 %v44, %v43
  %v67 = vpack.c.bf16 %v46, %v45
  %v68 = vpack.c.bf16 %v48, %v47
  %v69 = vpack.c.bf16 %v50, %v49
  %v70 = vpack.c.bf16 %v52, %v51
  %v71 = vpack.c.bf16 %v54, %v53
  %v72 = vpack.c.bf16 %v56, %v55
  %v73 = vld [vmem:[%s1] sm:$0xff]
  %v74 = vld [vmem:[%s1 + $0x8] sm:$0xff]
  %v75 = vld [vmem:[%s1 + $0x10] sm:$0xff]
  %v76 = vld [vmem:[%s1 + $0x18] sm:$0xff]
  %v77 = vld [vmem:[%s1 + $0x20] sm:$0xff]
  %v78 = vld [vmem:[%s1 + $0x28] sm:$0xff]
  %v79 = vld [vmem:[%s1 + $0x30] sm:$0x33]
  %v80 = vld [vmem:[%s1 + $0x38] sm:$0x33]
  %v81 = vpack.c.bf16 %v35, %v34
  %v82 = vpack.c.bf16 %v37, %v36
  %v83 = vpack.c.bf16 %v39, %v38
  %v84 = vpack.c.bf16 %v41, %v40
  %v85 = vpack.c.bf16 %v43, %v42
  %v86 = vpack.c.bf16 %v45, %v44
  %v87 = vpack.c.bf16 %v47, %v46
  %v88 = vpack.c.bf16 %v49, %v48
  %v89 = vpack.c.bf16 %v51, %v50
  %v90 = vpack.c.bf16 %v53, %v52
  %v91 = vpack.c.bf16 %v55, %v54
  %v92 = vpack.c.bf16 %v57, %v56
  %s93 = scalar_lea.vmem %s1, 64
  %v94 = vld [vmem:[%s93] sm:$0xff]
  %v95 = vld [vmem:[%s93 + $0x8] sm:$0xff]
  %v96 = vld [vmem:[%s93 + $0x10] sm:$0xff]
  %v97 = vld [vmem:[%s93 + $0x18] sm:$0xff]
  %v98 = vld [vmem:[%s93 + $0x20] sm:$0xff]
  %v99 = vld [vmem:[%s93 + $0x28] sm:$0xff]
  %v100 = vld [vmem:[%s93 + $0x30] sm:$0x33]
  %v101 = vld [vmem:[%s93 + $0x38] sm:$0x33]
  %v110 = vunpack.c.l.b16 %v94
  %v111 = vunpack.c.h.b16 %v94
  %v112 = vunpack.c.l.b16 %v95
  %v113 = vunpack.c.h.b16 %v95
  %v114 = vunpack.c.l.b16 %v96
  %v115 = vunpack.c.h.b16 %v96
  %v116 = vunpack.c.l.b16 %v97
  %v117 = vunpack.c.h.b16 %v97
  %v118 = vunpack.c.l.b16 %v98
  %v119 = vunpack.c.h.b16 %v98
  %v120 = vunpack.c.l.b16 %v99
  %v121 = vunpack.c.h.b16 %v99
  %v122 = vunpack.c.l.b16 %v100
  %v123 = vunpack.c.h.b16 %v100
  %v124 = vunpack.c.l.b16 %v101
  %v125 = vunpack.c.h.b16 %v101
  %v126 = vpack.c.b16 %v114, %v110
  %v127 = vpack.c.b16 %v115, %v111
  %v128 = vpack.c.b16 %v116, %v112
  %v129 = vpack.c.b16 %v117, %v113
  %v130 = vpack.c.b16 %v122, %v118
  %v131 = vpack.c.b16 %v123, %v119
  %v132 = vpack.c.b16 %v124, %v120
  %v133 = vpack.c.b16 %v125, %v121
  %vm138 = vcmask 228352
  %v140 = vsel %vm138, %v81, 0
  %v143 = vsel %vm138, %v82, 0
  %v146 = vsel %vm138, %v83, 0
  %v149 = vsel %vm138, %v84, 0
  %v152 = vsel %vm138, %v85, 0
  %v155 = vsel %vm138, %v86, 0
  %v158 = vsel %vm138, %v87, 0
  %v161 = vsel %vm138, %v88, 0
  %v164 = vsel %vm138, %v89, 0
  %v167 = vsel %vm138, %v90, 0
  %v170 = vsel %vm138, %v91, 0
  %v173 = vsel %vm138, %v92, 0
  %vm175 = vcmask 1045504
  %v177 = vsel %vm175, %v130, 0
  %v180 = vsel %vm175, %v131, 0
  %v183 = vsel %vm175, %v132, 0
  %v186 = vsel %vm175, %v133, 0
  %188 = vmatprep.subr.bf16.mxu0 0
  %189 = vmatpush1.bf16.msra.mxu0 0
  %190 = vmatprep.subr.bf16.mxu0 0
  %191 = vmatpush1.bf16.msra.mxu0 0
  %192 = vmatprep.subr.bf16.mxu0 0
  %193 = vmatpush1.bf16.msra.mxu0 0
  %194 = vmatprep.subr.bf16.mxu0 0
  %195 = vmatpush1.bf16.msra.mxu0 0
  %196 = vmatprep.subr.bf16.mxu0 0
  %197 = vmatpush1.bf16.msra.mxu0 0
  %198 = vmatprep.subr.bf16.mxu0 0
  %199 = vmatpush1.bf16.msra.mxu0 0
  %200 = vmatprep.subr.bf16.mxu0 %v180
  %201 = vmatpush1.bf16.msra.mxu0 %v177
  %202 = vmatprep.subr.bf16.mxu0 %v127
  %203 = vmatpush1.bf16.msra.mxu0 %v126
  %204 = vmatprep.subr.bf16.mxu0 0
  %205 = vmatpush2.bf16.msra.mxu0 0
  %206 = vmatprep.subr.bf16.mxu0 0
  %207 = vmatpush2.bf16.msra.mxu0 0
  %208 = vmatprep.subr.bf16.mxu0 0
  %209 = vmatpush2.bf16.msra.mxu0 0
  %210 = vmatprep.subr.bf16.mxu0 0
  %211 = vmatpush2.bf16.msra.mxu0 0
  %212 = vmatprep.subr.bf16.mxu0 0
  %213 = vmatpush2.bf16.msra.mxu0 0
  %214 = vmatprep.subr.bf16.mxu0 0
  %215 = vmatpush2.bf16.msra.mxu0 0
  %216 = vmatprep.subr.bf16.mxu0 0
  %217 = vmatpush2.bf16.msra.mxu0 0
  %218 = vmatprep.subr.bf16.mxu0 0
  %219 = vmatpush2.bf16.msra.mxu0 0
  %220 = vmatprep.mubr.bf16.mxu0 0
  %221 = vmatmul.mubr.bf16.gmra.mxu0 %v140
  %v222 = vpop.f32.mrf.mxu0
  %v223 = vadd.f32 0.0, %v222
  %v224 = vpop.f32.mrf.mxu0
  %v225 = vadd.f32 0.0, %v224
  %v226 = vpop.f32.mrf.mxu0
  %v227 = vadd.f32 0.0, %v226
  %v228 = vpop.f32.mrf.mxu0
  %v229 = vadd.f32 0.0, %v228
  %230 = vmatprep.mubr.bf16.mxu0 0
  %231 = vmatmul.mubr.bf16.gmra.mxu0 %v143
  %v232 = vpop.f32.mrf.mxu0
  %v233 = vadd.f32 0.0, %v232
  %v234 = vpop.f32.mrf.mxu0
  %v235 = vadd.f32 0.0, %v234
  %v236 = vpop.f32.mrf.mxu0
  %v237 = vadd.f32 0.0, %v236
  %v238 = vpop.f32.mrf.mxu0
  %v239 = vadd.f32 0.0, %v238
  %240 = vmatprep.mubr.bf16.mxu0 0
  %241 = vmatmul.mubr.bf16.gmra.mxu0 %v146
  %v242 = vpop.f32.mrf.mxu0
  %v243 = vadd.f32 0.0, %v242
  %v244 = vpop.f32.mrf.mxu0
  %v245 = vadd.f32 0.0, %v244
  %v246 = vpop.f32.mrf.mxu0
  %v247 = vadd.f32 0.0, %v246
  %v248 = vpop.f32.mrf.mxu0
  %v249 = vadd.f32 0.0, %v248
  %250 = vmatprep.mubr.bf16.mxu0 0
  %251 = vmatmul.mubr.bf16.gmra.mxu0 %v149
  %v252 = vpop.f32.mrf.mxu0
  %v253 = vadd.f32 0.0, %v252
  %v254 = vpop.f32.mrf.mxu0
  %v255 = vadd.f32 0.0, %v254
  %v256 = vpop.f32.mrf.mxu0
  %v257 = vadd.f32 0.0, %v256
  %v258 = vpop.f32.mrf.mxu0
  %v259 = vadd.f32 0.0, %v258
  %260 = vmatprep.mubr.bf16.mxu0 0
  %261 = vmatmul.mubr.bf16.gmra.mxu0 %v152
  %v262 = vpop.f32.mrf.mxu0
  %v263 = vadd.f32 0.0, %v262
  %v264 = vpop.f32.mrf.mxu0
  %v265 = vadd.f32 0.0, %v264
  %v266 = vpop.f32.mrf.mxu0
  %v267 = vadd.f32 0.0, %v266
  %v268 = vpop.f32.mrf.mxu0
  %v269 = vadd.f32 0.0, %v268
  %270 = vmatprep.mubr.bf16.mxu0 0
  %271 = vmatmul.mubr.bf16.gmra.mxu0 %v155
  %v272 = vpop.f32.mrf.mxu0
  %v273 = vadd.f32 0.0, %v272
  %v274 = vpop.f32.mrf.mxu0
  %v275 = vadd.f32 0.0, %v274
  %v276 = vpop.f32.mrf.mxu0
  %v277 = vadd.f32 0.0, %v276
  %v278 = vpop.f32.mrf.mxu0
  %v279 = vadd.f32 0.0, %v278
  %280 = vmatprep.mubr.bf16.mxu0 0
  %281 = vmatmul.mubr.bf16.gmra.mxu0 %v158
  %v282 = vpop.f32.mrf.mxu0
  %v283 = vadd.f32 0.0, %v282
  %v284 = vpop.f32.mrf.mxu0
  %v285 = vadd.f32 0.0, %v284
  %v286 = vpop.f32.mrf.mxu0
  %v287 = vadd.f32 0.0, %v286
  %v288 = vpop.f32.mrf.mxu0
  %v289 = vadd.f32 0.0, %v288
  %290 = vmatprep.mubr.bf16.mxu0 0
  %291 = vmatmul.mubr.bf16.gmra.mxu0 %v161
  %v292 = vpop.f32.mrf.mxu0
  %v293 = vadd.f32 0.0, %v292
  %v294 = vpop.f32.mrf.mxu0
  %v295 = vadd.f32 0.0, %v294
  %v296 = vpop.f32.mrf.mxu0
  %v297 = vadd.f32 0.0, %v296
  %v298 = vpop.f32.mrf.mxu0
  %v299 = vadd.f32 0.0, %v298
  %300 = vmatprep.mubr.bf16.mxu0 0
  %301 = vmatmul.mubr.bf16.gmra.mxu0 %v164
  %v302 = vpop.f32.mrf.mxu0
  %v303 = vadd.f32 0.0, %v302
  %v304 = vpop.f32.mrf.mxu0
  %v305 = vadd.f32 0.0, %v304
  %v306 = vpop.f32.mrf.mxu0
  %v307 = vadd.f32 0.0, %v306
  %v308 = vpop.f32.mrf.mxu0
  %v309 = vadd.f32 0.0, %v308
  %310 = vmatprep.mubr.bf16.mxu0 0
  %311 = vmatmul.mubr.bf16.gmra.mxu0 %v167
  %v312 = vpop.f32.mrf.mxu0
  %v313 = vadd.f32 0.0, %v312
  %v314 = vpop.f32.mrf.mxu0
  %v315 = vadd.f32 0.0, %v314
  %v316 = vpop.f32.mrf.mxu0
  %v317 = vadd.f32 0.0, %v316
  %v318 = vpop.f32.mrf.mxu0
  %v319 = vadd.f32 0.0, %v318
  %320 = vmatprep.mubr.bf16.mxu0 0
  %321 = vmatmul.mubr.bf16.gmra.mxu0 %v170
  %v322 = vpop.f32.mrf.mxu0
  %v323 = vadd.f32 0.0, %v322
  %v324 = vpop.f32.mrf.mxu0
  %v325 = vadd.f32 0.0, %v324
  %v326 = vpop.f32.mrf.mxu0
  %v327 = vadd.f32 0.0, %v326
  %v328 = vpop.f32.mrf.mxu0
  %v329 = vadd.f32 0.0, %v328
  %330 = vmatprep.mubr.bf16.mxu0 0
  %331 = vmatmul.mubr.bf16.gmra.mxu0 %v173
  %v332 = vpop.f32.mrf.mxu0
  %v333 = vadd.f32 0.0, %v332
  %v334 = vpop.f32.mrf.mxu0
  %v335 = vadd.f32 0.0, %v334
  %v336 = vpop.f32.mrf.mxu0
  %v337 = vadd.f32 0.0, %v336
  %v338 = vpop.f32.mrf.mxu0
  %v339 = vadd.f32 0.0, %v338
  %340 = vdwg.mxu0
  %341 = vmatprep.subr.bf16.mxu0 0
  %342 = vmatpush1.bf16.msra.mxu0 0
  %343 = vmatprep.subr.bf16.mxu0 0
  %344 = vmatpush1.bf16.msra.mxu0 0
  %345 = vmatprep.subr.bf16.mxu0 0
  %346 = vmatpush1.bf16.msra.mxu0 0
  %347 = vmatprep.subr.bf16.mxu0 0
  %348 = vmatpush1.bf16.msra.mxu0 0
  %349 = vmatprep.subr.bf16.mxu0 0
  %350 = vmatpush1.bf16.msra.mxu0 0
  %351 = vmatprep.subr.bf16.mxu0 0
  %352 = vmatpush1.bf16.msra.mxu0 0
  %353 = vmatprep.subr.bf16.mxu0 %v186
  %354 = vmatpush1.bf16.msra.mxu0 %v183
  %355 = vmatprep.subr.bf16.mxu0 %v129
  %356 = vmatpush1.bf16.msra.mxu0 %v128
  %357 = vmatprep.subr.bf16.mxu0 0
  %358 = vmatpush2.bf16.msra.mxu0 0
  %359 = vmatprep.subr.bf16.mxu0 0
  %360 = vmatpush2.bf16.msra.mxu0 0
  %361 = vmatprep.subr.bf16.mxu0 0
  %362 = vmatpush2.bf16.msra.mxu0 0
  %363 = vmatprep.subr.bf16.mxu0 0
  %364 = vmatpush2.bf16.msra.mxu0 0
  %365 = vmatprep.subr.bf16.mxu0 0
  %366 = vmatpush2.bf16.msra.mxu0 0
  %367 = vmatprep.subr.bf16.mxu0 0
  %368 = vmatpush2.bf16.msra.mxu0 0
  %369 = vmatprep.subr.bf16.mxu0 0
  %370 = vmatpush2.bf16.msra.mxu0 0
  %371 = vmatprep.subr.bf16.mxu0 0
  %372 = vmatpush2.bf16.msra.mxu0 0
  %373 = vmatprep.mubr.bf16.mxu0 0
  %374 = vmatmul.mubr.bf16.gmra.mxu0 %v140
  %v375 = vpop.f32.mrf.mxu0
  %v376 = vadd.f32 0.0, %v375
  %v377 = vpop.f32.mrf.mxu0
  %v378 = vadd.f32 0.0, %v377
  %v379 = vpop.f32.mrf.mxu0
  %v380 = vadd.f32 0.0, %v379
  %v381 = vpop.f32.mrf.mxu0
  %v382 = vadd.f32 0.0, %v381
  %383 = vmatprep.mubr.bf16.mxu0 0
  %384 = vmatmul.mubr.bf16.gmra.mxu0 %v143
  %v385 = vpop.f32.mrf.mxu0
  %v386 = vadd.f32 0.0, %v385
  %v387 = vpop.f32.mrf.mxu0
  %v388 = vadd.f32 0.0, %v387
  %v389 = vpop.f32.mrf.mxu0
  %v390 = vadd.f32 0.0, %v389
  %v391 = vpop.f32.mrf.mxu0
  %v392 = vadd.f32 0.0, %v391
  %393 = vmatprep.mubr.bf16.mxu0 0
  %394 = vmatmul.mubr.bf16.gmra.mxu0 %v146
  %v395 = vpop.f32.mrf.mxu0
  %v396 = vadd.f32 0.0, %v395
  %v397 = vpop.f32.mrf.mxu0
  %v398 = vadd.f32 0.0, %v397
  %v399 = vpop.f32.mrf.mxu0
  %v400 = vadd.f32 0.0, %v399
  %v401 = vpop.f32.mrf.mxu0
  %v402 = vadd.f32 0.0, %v401
  %403 = vmatprep.mubr.bf16.mxu0 0
  %404 = vmatmul.mubr.bf16.gmra.mxu0 %v149
  %v405 = vpop.f32.mrf.mxu0
  %v406 = vadd.f32 0.0, %v405
  %v407 = vpop.f32.mrf.mxu0
  %v408 = vadd.f32 0.0, %v407
  %v409 = vpop.f32.mrf.mxu0
  %v410 = vadd.f32 0.0, %v409
  %v411 = vpop.f32.mrf.mxu0
  %v412 = vadd.f32 0.0, %v411
  %413 = vmatprep.mubr.bf16.mxu0 0
  %414 = vmatmul.mubr.bf16.gmra.mxu0 %v152
  %v415 = vpop.f32.mrf.mxu0
  %v416 = vadd.f32 0.0, %v415
  %v417 = vpop.f32.mrf.mxu0
  %v418 = vadd.f32 0.0, %v417
  %v419 = vpop.f32.mrf.mxu0
  %v420 = vadd.f32 0.0, %v419
  %v421 = vpop.f32.mrf.mxu0
  %v422 = vadd.f32 0.0, %v421
  %423 = vmatprep.mubr.bf16.mxu0 0
  %424 = vmatmul.mubr.bf16.gmra.mxu0 %v155
  %v425 = vpop.f32.mrf.mxu0
  %v426 = vadd.f32 0.0, %v425
  %v427 = vpop.f32.mrf.mxu0
  %v428 = vadd.f32 0.0, %v427
  %v429 = vpop.f32.mrf.mxu0
  %v430 = vadd.f32 0.0, %v429
  %v431 = vpop.f32.mrf.mxu0
  %v432 = vadd.f32 0.0, %v431
  %433 = vmatprep.mubr.bf16.mxu0 0
  %434 = vmatmul.mubr.bf16.gmra.mxu0 %v158
  %v435 = vpop.f32.mrf.mxu0
  %v436 = vadd.f32 0.0, %v435
  %v437 = vpop.f32.mrf.mxu0
  %v438 = vadd.f32 0.0, %v437
  %v439 = vpop.f32.mrf.mxu0
  %v440 = vadd.f32 0.0, %v439
  %v441 = vpop.f32.mrf.mxu0
  %v442 = vadd.f32 0.0, %v441
  %443 = vmatprep.mubr.bf16.mxu0 0
  %444 = vmatmul.mubr.bf16.gmra.mxu0 %v161
  %v445 = vpop.f32.mrf.mxu0
  %v446 = vadd.f32 0.0, %v445
  %v447 = vpop.f32.mrf.mxu0
  %v448 = vadd.f32 0.0, %v447
  %v449 = vpop.f32.mrf.mxu0
  %v450 = vadd.f32 0.0, %v449
  %v451 = vpop.f32.mrf.mxu0
  %v452 = vadd.f32 0.0, %v451
  %453 = vmatprep.mubr.bf16.mxu0 0
  %454 = vmatmul.mubr.bf16.gmra.mxu0 %v164
  %v455 = vpop.f32.mrf.mxu0
  %v456 = vadd.f32 0.0, %v455
  %v457 = vpop.f32.mrf.mxu0
  %v458 = vadd.f32 0.0, %v457
  %v459 = vpop.f32.mrf.mxu0
  %v460 = vadd.f32 0.0, %v459
  %v461 = vpop.f32.mrf.mxu0
  %v462 = vadd.f32 0.0, %v461
  %463 = vmatprep.mubr.bf16.mxu0 0
  %464 = vmatmul.mubr.bf16.gmra.mxu0 %v167
  %v465 = vpop.f32.mrf.mxu0
  %v466 = vadd.f32 0.0, %v465
  %v467 = vpop.f32.mrf.mxu0
  %v468 = vadd.f32 0.0, %v467
  %v469 = vpop.f32.mrf.mxu0
  %v470 = vadd.f32 0.0, %v469
  %v471 = vpop.f32.mrf.mxu0
  %v472 = vadd.f32 0.0, %v471
  %473 = vmatprep.mubr.bf16.mxu0 0
  %474 = vmatmul.mubr.bf16.gmra.mxu0 %v170
  %v475 = vpop.f32.mrf.mxu0
  %v476 = vadd.f32 0.0, %v475
  %v477 = vpop.f32.mrf.mxu0
  %v478 = vadd.f32 0.0, %v477
  %v479 = vpop.f32.mrf.mxu0
  %v480 = vadd.f32 0.0, %v479
  %v481 = vpop.f32.mrf.mxu0
  %v482 = vadd.f32 0.0, %v481
  %483 = vmatprep.mubr.bf16.mxu0 0
  %484 = vmatmul.mubr.bf16.gmra.mxu0 %v173
  %v485 = vpop.f32.mrf.mxu0
  %v486 = vadd.f32 0.0, %v485
  %v487 = vpop.f32.mrf.mxu0
  %v488 = vadd.f32 0.0, %v487
  %v489 = vpop.f32.mrf.mxu0
  %v490 = vadd.f32 0.0, %v489
  %v491 = vpop.f32.mrf.mxu0
  %v492 = vadd.f32 0.0, %v491
  %493 = vdwg.mxu0
  %v502 = vunpack.c.l.b16 %v73
  %v503 = vunpack.c.h.b16 %v73
  %v504 = vunpack.c.l.b16 %v74
  %v505 = vunpack.c.h.b16 %v74
  %v506 = vunpack.c.l.b16 %v75
  %v507 = vunpack.c.h.b16 %v75
  %v508 = vunpack.c.l.b16 %v76
  %v509 = vunpack.c.h.b16 %v76
  %v510 = vunpack.c.l.b16 %v77
  %v511 = vunpack.c.h.b16 %v77
  %v512 = vunpack.c.l.b16 %v78
  %v513 = vunpack.c.h.b16 %v78
  %v514 = vunpack.c.l.b16 %v79
  %v515 = vunpack.c.h.b16 %v79
  %v516 = vunpack.c.l.b16 %v80
  %v517 = vunpack.c.h.b16 %v80
  %v518 = vpack.c.b16 %v506, %v502
  %v519 = vpack.c.b16 %v507, %v503
  %v520 = vpack.c.b16 %v508, %v504
  %v521 = vpack.c.b16 %v509, %v505
  %v522 = vpack.c.b16 %v514, %v510
  %v523 = vpack.c.b16 %v515, %v511
  %v524 = vpack.c.b16 %v516, %v512
  %v525 = vpack.c.b16 %v517, %v513
  %v531 = vsel %vm138, %v61, 0
  %v534 = vsel %vm138, %v62, 0
  %v537 = vsel %vm138, %v63, 0
  %v540 = vsel %vm138, %v64, 0
  %v543 = vsel %vm138, %v65, 0
  %v546 = vsel %vm138, %v66, 0
  %v549 = vsel %vm138, %v67, 0
  %v552 = vsel %vm138, %v68, 0
  %v555 = vsel %vm138, %v69, 0
  %v558 = vsel %vm138, %v70, 0
  %v561 = vsel %vm138, %v71, 0
  %v564 = vsel %vm138, %v72, 0
  %v567 = vsel %vm175, %v522, 0
  %v570 = vsel %vm175, %v523, 0
  %v573 = vsel %vm175, %v524, 0
  %v576 = vsel %vm175, %v525, 0
  %578 = vmatprep.subr.bf16.mxu0 0
  %579 = vmatpush1.bf16.msra.mxu0 0
  %580 = vmatprep.subr.bf16.mxu0 0
  %581 = vmatpush1.bf16.msra.mxu0 0
  %582 = vmatprep.subr.bf16.mxu0 0
  %583 = vmatpush1.bf16.msra.mxu0 0
  %584 = vmatprep.subr.bf16.mxu0 0
  %585 = vmatpush1.bf16.msra.mxu0 0
  %586 = vmatprep.subr.bf16.mxu0 0
  %587 = vmatpush1.bf16.msra.mxu0 0
  %588 = vmatprep.subr.bf16.mxu0 0
  %589 = vmatpush1.bf16.msra.mxu0 0
  %590 = vmatprep.subr.bf16.mxu0 %v570
  %591 = vmatpush1.bf16.msra.mxu0 %v567
  %592 = vmatprep.subr.bf16.mxu0 %v519
  %593 = vmatpush1.bf16.msra.mxu0 %v518
  %594 = vmatprep.subr.bf16.mxu0 0
  %595 = vmatpush2.bf16.msra.mxu0 0
  %596 = vmatprep.subr.bf16.mxu0 0
  %597 = vmatpush2.bf16.msra.mxu0 0
  %598 = vmatprep.subr.bf16.mxu0 0
  %599 = vmatpush2.bf16.msra.mxu0 0
  %600 = vmatprep.subr.bf16.mxu0 0
  %601 = vmatpush2.bf16.msra.mxu0 0
  %602 = vmatprep.subr.bf16.mxu0 0
  %603 = vmatpush2.bf16.msra.mxu0 0
  %604 = vmatprep.subr.bf16.mxu0 0
  %605 = vmatpush2.bf16.msra.mxu0 0
  %606 = vmatprep.subr.bf16.mxu0 0
  %607 = vmatpush2.bf16.msra.mxu0 0
  %608 = vmatprep.subr.bf16.mxu0 0
  %609 = vmatpush2.bf16.msra.mxu0 0
  %610 = vmatprep.mubr.bf16.mxu0 0
  %611 = vmatmul.mubr.bf16.gmra.mxu0 %v531
  %v612 = vpop.f32.mrf.mxu0
  %v613 = vadd.f32 %v223, %v612
  %v614 = vpop.f32.mrf.mxu0
  %v615 = vadd.f32 %v225, %v614
  %v616 = vpop.f32.mrf.mxu0
  %v617 = vadd.f32 %v227, %v616
  %v618 = vpop.f32.mrf.mxu0
  %v619 = vadd.f32 %v229, %v618
  %620 = vmatprep.mubr.bf16.mxu0 0
  %621 = vmatmul.mubr.bf16.gmra.mxu0 %v534
  %v622 = vpop.f32.mrf.mxu0
  %v623 = vadd.f32 %v233, %v622
  %v624 = vpop.f32.mrf.mxu0
  %v625 = vadd.f32 %v235, %v624
  %v626 = vpop.f32.mrf.mxu0
  %v627 = vadd.f32 %v237, %v626
  %v628 = vpop.f32.mrf.mxu0
  %v629 = vadd.f32 %v239, %v628
  %630 = vmatprep.mubr.bf16.mxu0 0
  %631 = vmatmul.mubr.bf16.gmra.mxu0 %v537
  %v632 = vpop.f32.mrf.mxu0
  %v633 = vadd.f32 %v243, %v632
  %v634 = vpop.f32.mrf.mxu0
  %v635 = vadd.f32 %v245, %v634
  %v636 = vpop.f32.mrf.mxu0
  %v637 = vadd.f32 %v247, %v636
  %v638 = vpop.f32.mrf.mxu0
  %v639 = vadd.f32 %v249, %v638
  %640 = vmatprep.mubr.bf16.mxu0 0
  %641 = vmatmul.mubr.bf16.gmra.mxu0 %v540
  %v642 = vpop.f32.mrf.mxu0
  %v643 = vadd.f32 %v253, %v642
  %v644 = vpop.f32.mrf.mxu0
  %v645 = vadd.f32 %v255, %v644
  %v646 = vpop.f32.mrf.mxu0
  %v647 = vadd.f32 %v257, %v646
  %v648 = vpop.f32.mrf.mxu0
  %v649 = vadd.f32 %v259, %v648
  %650 = vmatprep.mubr.bf16.mxu0 0
  %651 = vmatmul.mubr.bf16.gmra.mxu0 %v543
  %v652 = vpop.f32.mrf.mxu0
  %v653 = vadd.f32 %v263, %v652
  %v654 = vpop.f32.mrf.mxu0
  %v655 = vadd.f32 %v265, %v654
  %v656 = vpop.f32.mrf.mxu0
  %v657 = vadd.f32 %v267, %v656
  %v658 = vpop.f32.mrf.mxu0
  %v659 = vadd.f32 %v269, %v658
  %660 = vmatprep.mubr.bf16.mxu0 0
  %661 = vmatmul.mubr.bf16.gmra.mxu0 %v546
  %v662 = vpop.f32.mrf.mxu0
  %v663 = vadd.f32 %v273, %v662
  %v664 = vpop.f32.mrf.mxu0
  %v665 = vadd.f32 %v275, %v664
  %v666 = vpop.f32.mrf.mxu0
  %v667 = vadd.f32 %v277, %v666
  %v668 = vpop.f32.mrf.mxu0
  %v669 = vadd.f32 %v279, %v668
  %670 = vmatprep.mubr.bf16.mxu0 0
  %671 = vmatmul.mubr.bf16.gmra.mxu0 %v549
  %v672 = vpop.f32.mrf.mxu0
  %v673 = vadd.f32 %v283, %v672
  %v674 = vpop.f32.mrf.mxu0
  %v675 = vadd.f32 %v285, %v674
  %v676 = vpop.f32.mrf.mxu0
  %v677 = vadd.f32 %v287, %v676
  %v678 = vpop.f32.mrf.mxu0
  %v679 = vadd.f32 %v289, %v678
  %680 = vmatprep.mubr.bf16.mxu0 0
  %681 = vmatmul.mubr.bf16.gmra.mxu0 %v552
  %v682 = vpop.f32.mrf.mxu0
  %v683 = vadd.f32 %v293, %v682
  %v684 = vpop.f32.mrf.mxu0
  %v685 = vadd.f32 %v295, %v684
  %v686 = vpop.f32.mrf.mxu0
  %v687 = vadd.f32 %v297, %v686
  %v688 = vpop.f32.mrf.mxu0
  %v689 = vadd.f32 %v299, %v688
  %690 = vmatprep.mubr.bf16.mxu0 0
  %691 = vmatmul.mubr.bf16.gmra.mxu0 %v555
  %v692 = vpop.f32.mrf.mxu0
  %v693 = vadd.f32 %v303, %v692
  %v694 = vpop.f32.mrf.mxu0
  %v695 = vadd.f32 %v305, %v694
  %v696 = vpop.f32.mrf.mxu0
  %v697 = vadd.f32 %v307, %v696
  %v698 = vpop.f32.mrf.mxu0
  %v699 = vadd.f32 %v309, %v698
  %700 = vmatprep.mubr.bf16.mxu0 0
  %701 = vmatmul.mubr.bf16.gmra.mxu0 %v558
  %v702 = vpop.f32.mrf.mxu0
  %v703 = vadd.f32 %v313, %v702
  %v704 = vpop.f32.mrf.mxu0
  %v705 = vadd.f32 %v315, %v704
  %v706 = vpop.f32.mrf.mxu0
  %v707 = vadd.f32 %v317, %v706
  %v708 = vpop.f32.mrf.mxu0
  %v709 = vadd.f32 %v319, %v708
  %710 = vmatprep.mubr.bf16.mxu0 0
  %711 = vmatmul.mubr.bf16.gmra.mxu0 %v561
  %v712 = vpop.f32.mrf.mxu0
  %v713 = vadd.f32 %v323, %v712
  %v714 = vpop.f32.mrf.mxu0
  %v715 = vadd.f32 %v325, %v714
  %v716 = vpop.f32.mrf.mxu0
  %v717 = vadd.f32 %v327, %v716
  %v718 = vpop.f32.mrf.mxu0
  %v719 = vadd.f32 %v329, %v718
  %720 = vmatprep.mubr.bf16.mxu0 0
  %721 = vmatmul.mubr.bf16.gmra.mxu0 %v564
  %v722 = vpop.f32.mrf.mxu0
  %v723 = vadd.f32 %v333, %v722
  %v724 = vpop.f32.mrf.mxu0
  %v725 = vadd.f32 %v335, %v724
  %v726 = vpop.f32.mrf.mxu0
  %v727 = vadd.f32 %v337, %v726
  %v728 = vpop.f32.mrf.mxu0
  %v729 = vadd.f32 %v339, %v728
  %730 = vdwg.mxu0
  %731 = vmatprep.subr.bf16.mxu0 0
  %732 = vmatpush1.bf16.msra.mxu0 0
  %733 = vmatprep.subr.bf16.mxu0 0
  %734 = vmatpush1.bf16.msra.mxu0 0
  %735 = vmatprep.subr.bf16.mxu0 0
  %736 = vmatpush1.bf16.msra.mxu0 0
  %737 = vmatprep.subr.bf16.mxu0 0
  %738 = vmatpush1.bf16.msra.mxu0 0
  %739 = vmatprep.subr.bf16.mxu0 0
  %740 = vmatpush1.bf16.msra.mxu0 0
  %741 = vmatprep.subr.bf16.mxu0 0
  %742 = vmatpush1.bf16.msra.mxu0 0
  %743 = vmatprep.subr.bf16.mxu0 %v576
  %744 = vmatpush1.bf16.msra.mxu0 %v573
  %745 = vmatprep.subr.bf16.mxu0 %v521
  %746 = vmatpush1.bf16.msra.mxu0 %v520
  %747 = vmatprep.subr.bf16.mxu0 0
  %748 = vmatpush2.bf16.msra.mxu0 0
  %749 = vmatprep.subr.bf16.mxu0 0
  %750 = vmatpush2.bf16.msra.mxu0 0
  %751 = vmatprep.subr.bf16.mxu0 0
  %752 = vmatpush2.bf16.msra.mxu0 0
  %753 = vmatprep.subr.bf16.mxu0 0
  %754 = vmatpush2.bf16.msra.mxu0 0
  %755 = vmatprep.subr.bf16.mxu0 0
  %756 = vmatpush2.bf16.msra.mxu0 0
  %757 = vmatprep.subr.bf16.mxu0 0
  %758 = vmatpush2.bf16.msra.mxu0 0
  %759 = vmatprep.subr.bf16.mxu0 0
  %760 = vmatpush2.bf16.msra.mxu0 0
  %761 = vmatprep.subr.bf16.mxu0 0
  %762 = vmatpush2.bf16.msra.mxu0 0
  %763 = vmatprep.mubr.bf16.mxu0 0
  %764 = vmatmul.mubr.bf16.gmra.mxu0 %v531
  %v765 = vpop.f32.mrf.mxu0
  %v766 = vadd.f32 %v376, %v765
  %v767 = vpop.f32.mrf.mxu0
  %v768 = vadd.f32 %v378, %v767
  %v769 = vpop.f32.mrf.mxu0
  %v770 = vadd.f32 %v380, %v769
  %v771 = vpop.f32.mrf.mxu0
  %v772 = vadd.f32 %v382, %v771
  %773 = vmatprep.mubr.bf16.mxu0 0
  %774 = vmatmul.mubr.bf16.gmra.mxu0 %v534
  %v775 = vpop.f32.mrf.mxu0
  %v776 = vadd.f32 %v386, %v775
  %v777 = vpop.f32.mrf.mxu0
  %v778 = vadd.f32 %v388, %v777
  %v779 = vpop.f32.mrf.mxu0
  %v780 = vadd.f32 %v390, %v779
  %v781 = vpop.f32.mrf.mxu0
  %v782 = vadd.f32 %v392, %v781
  %783 = vmatprep.mubr.bf16.mxu0 0
  %784 = vmatmul.mubr.bf16.gmra.mxu0 %v537
  %v785 = vpop.f32.mrf.mxu0
  %v786 = vadd.f32 %v396, %v785
  %v787 = vpop.f32.mrf.mxu0
  %v788 = vadd.f32 %v398, %v787
  %v789 = vpop.f32.mrf.mxu0
  %v790 = vadd.f32 %v400, %v789
  %v791 = vpop.f32.mrf.mxu0
  %v792 = vadd.f32 %v402, %v791
  %793 = vmatprep.mubr.bf16.mxu0 0
  %794 = vmatmul.mubr.bf16.gmra.mxu0 %v540
  %v795 = vpop.f32.mrf.mxu0
  %v796 = vadd.f32 %v406, %v795
  %v797 = vpop.f32.mrf.mxu0
  %v798 = vadd.f32 %v408, %v797
  %v799 = vpop.f32.mrf.mxu0
  %v800 = vadd.f32 %v410, %v799
  %v801 = vpop.f32.mrf.mxu0
  %v802 = vadd.f32 %v412, %v801
  %803 = vmatprep.mubr.bf16.mxu0 0
  %804 = vmatmul.mubr.bf16.gmra.mxu0 %v543
  %v805 = vpop.f32.mrf.mxu0
  %v806 = vadd.f32 %v416, %v805
  %v807 = vpop.f32.mrf.mxu0
  %v808 = vadd.f32 %v418, %v807
  %v809 = vpop.f32.mrf.mxu0
  %v810 = vadd.f32 %v420, %v809
  %v811 = vpop.f32.mrf.mxu0
  %v812 = vadd.f32 %v422, %v811
  %813 = vmatprep.mubr.bf16.mxu0 0
  %814 = vmatmul.mubr.bf16.gmra.mxu0 %v546
  %v815 = vpop.f32.mrf.mxu0
  %v816 = vadd.f32 %v426, %v815
  %v817 = vpop.f32.mrf.mxu0
  %v818 = vadd.f32 %v428, %v817
  %v819 = vpop.f32.mrf.mxu0
  %v820 = vadd.f32 %v430, %v819
  %v821 = vpop.f32.mrf.mxu0
  %v822 = vadd.f32 %v432, %v821
  %823 = vmatprep.mubr.bf16.mxu0 0
  %824 = vmatmul.mubr.bf16.gmra.mxu0 %v549
  %v825 = vpop.f32.mrf.mxu0
  %v826 = vadd.f32 %v436, %v825
  %v827 = vpop.f32.mrf.mxu0
  %v828 = vadd.f32 %v438, %v827
  %v829 = vpop.f32.mrf.mxu0
  %v830 = vadd.f32 %v440, %v829
  %v831 = vpop.f32.mrf.mxu0
  %v832 = vadd.f32 %v442, %v831
  %833 = vmatprep.mubr.bf16.mxu0 0
  %834 = vmatmul.mubr.bf16.gmra.mxu0 %v552
  %v835 = vpop.f32.mrf.mxu0
  %v836 = vadd.f32 %v446, %v835
  %v837 = vpop.f32.mrf.mxu0
  %v838 = vadd.f32 %v448, %v837
  %v839 = vpop.f32.mrf.mxu0
  %v840 = vadd.f32 %v450, %v839
  %v841 = vpop.f32.mrf.mxu0
  %v842 = vadd.f32 %v452, %v841
  %843 = vmatprep.mubr.bf16.mxu0 0
  %844 = vmatmul.mubr.bf16.gmra.mxu0 %v555
  %v845 = vpop.f32.mrf.mxu0
  %v846 = vadd.f32 %v456, %v845
  %v847 = vpop.f32.mrf.mxu0
  %v848 = vadd.f32 %v458, %v847
  %v849 = vpop.f32.mrf.mxu0
  %v850 = vadd.f32 %v460, %v849
  %v851 = vpop.f32.mrf.mxu0
  %v852 = vadd.f32 %v462, %v851
  %853 = vmatprep.mubr.bf16.mxu0 0
  %854 = vmatmul.mubr.bf16.gmra.mxu0 %v558
  %v855 = vpop.f32.mrf.mxu0
  %v856 = vadd.f32 %v466, %v855
  %v857 = vpop.f32.mrf.mxu0
  %v858 = vadd.f32 %v468, %v857
  %v859 = vpop.f32.mrf.mxu0
  %v860 = vadd.f32 %v470, %v859
  %v861 = vpop.f32.mrf.mxu0
  %v862 = vadd.f32 %v472, %v861
  %863 = vmatprep.mubr.bf16.mxu0 0
  %864 = vmatmul.mubr.bf16.gmra.mxu0 %v561
  %v865 = vpop.f32.mrf.mxu0
  %v866 = vadd.f32 %v476, %v865
  %v867 = vpop.f32.mrf.mxu0
  %v868 = vadd.f32 %v478, %v867
  %v869 = vpop.f32.mrf.mxu0
  %v870 = vadd.f32 %v480, %v869
  %v871 = vpop.f32.mrf.mxu0
  %v872 = vadd.f32 %v482, %v871
  %873 = vmatprep.mubr.bf16.mxu0 0
  %874 = vmatmul.mubr.bf16.gmra.mxu0 %v564
  %v875 = vpop.f32.mrf.mxu0
  %v876 = vadd.f32 %v486, %v875
  %v877 = vpop.f32.mrf.mxu0
  %v878 = vadd.f32 %v488, %v877
  %v879 = vpop.f32.mrf.mxu0
  %v880 = vadd.f32 %v490, %v879
  %v881 = vpop.f32.mrf.mxu0
  %v882 = vadd.f32 %v492, %v881
  %883 = vdwg.mxu0
  %v884 = vpack.c.bf16 %v58, %v57
  %s885 = scalar_lea.vmem %s1, 128
  %v886 = vld [vmem:[%s885] sm:$0xff]
  %v887 = vld [vmem:[%s885 + $0x8] sm:$0xff]
  %v888 = vld [vmem:[%s885 + $0x10] sm:$0xff]
  %v889 = vld [vmem:[%s885 + $0x18] sm:$0xff]
  %v890 = vld [vmem:[%s885 + $0x20] sm:$0xff]
  %v891 = vld [vmem:[%s885 + $0x28] sm:$0xff]
  %v892 = vld [vmem:[%s885 + $0x30] sm:$0x33]
  %v893 = vld [vmem:[%s885 + $0x38] sm:$0x33]
  %v902 = vunpack.c.l.b16 %v886
  %v903 = vunpack.c.h.b16 %v886
  %v904 = vunpack.c.l.b16 %v887
  %v905 = vunpack.c.h.b16 %v887
  %v906 = vunpack.c.l.b16 %v888
  %v907 = vunpack.c.h.b16 %v888
  %v908 = vunpack.c.l.b16 %v889
  %v909 = vunpack.c.h.b16 %v889
  %v910 = vunpack.c.l.b16 %v890
  %v911 = vunpack.c.h.b16 %v890
  %v912 = vunpack.c.l.b16 %v891
  %v913 = vunpack.c.h.b16 %v891
  %v914 = vunpack.c.l.b16 %v892
  %v915 = vunpack.c.h.b16 %v892
  %v916 = vunpack.c.l.b16 %v893
  %v917 = vunpack.c.h.b16 %v893
  %v918 = vpack.c.b16 %v906, %v902
  %v919 = vpack.c.b16 %v907, %v903
  %v920 = vpack.c.b16 %v908, %v904
  %v921 = vpack.c.b16 %v909, %v905
  %v922 = vpack.c.b16 %v914, %v910
  %v923 = vpack.c.b16 %v915, %v911
  %v924 = vpack.c.b16 %v916, %v912
  %v925 = vpack.c.b16 %v917, %v913
  %v931 = vsel %vm138, %v884, 0
  %v934 = vsel %vm175, %v922, 0
  %v937 = vsel %vm175, %v923, 0
  %v940 = vsel %vm175, %v924, 0
  %v943 = vsel %vm175, %v925, 0
  %945 = vmatprep.subr.bf16.mxu0 0
  %946 = vmatpush1.bf16.msra.mxu0 0
  %947 = vmatprep.subr.bf16.mxu0 0
  %948 = vmatpush1.bf16.msra.mxu0 0
  %949 = vmatprep.subr.bf16.mxu0 0
  %950 = vmatpush1.bf16.msra.mxu0 0
  %951 = vmatprep.subr.bf16.mxu0 0
  %952 = vmatpush1.bf16.msra.mxu0 0
  %953 = vmatprep.subr.bf16.mxu0 0
  %954 = vmatpush1.bf16.msra.mxu0 0
  %955 = vmatprep.subr.bf16.mxu0 0
  %956 = vmatpush1.bf16.msra.mxu0 0
  %957 = vmatprep.subr.bf16.mxu0 %v937
  %958 = vmatpush1.bf16.msra.mxu0 %v934
  %959 = vmatprep.subr.bf16.mxu0 %v919
  %960 = vmatpush1.bf16.msra.mxu0 %v918
  %961 = vmatprep.subr.bf16.mxu0 0
  %962 = vmatpush2.bf16.msra.mxu0 0
  %963 = vmatprep.subr.bf16.mxu0 0
  %964 = vmatpush2.bf16.msra.mxu0 0
  %965 = vmatprep.subr.bf16.mxu0 0
  %966 = vmatpush2.bf16.msra.mxu0 0
  %967 = vmatprep.subr.bf16.mxu0 0
  %968 = vmatpush2.bf16.msra.mxu0 0
  %969 = vmatprep.subr.bf16.mxu0 0
  %970 = vmatpush2.bf16.msra.mxu0 0
  %971 = vmatprep.subr.bf16.mxu0 0
  %972 = vmatpush2.bf16.msra.mxu0 0
  %973 = vmatprep.subr.bf16.mxu0 0
  %974 = vmatpush2.bf16.msra.mxu0 0
  %975 = vmatprep.subr.bf16.mxu0 0
  %976 = vmatpush2.bf16.msra.mxu0 0
  %977 = vmatprep.mubr.bf16.mxu0 0
  %978 = vmatmul.mubr.bf16.gmra.mxu0 %v534
  %v979 = vpop.f32.mrf.mxu0
  %v980 = vadd.f32 0.0, %v979
  %v981 = vpop.f32.mrf.mxu0
  %v982 = vadd.f32 0.0, %v981
  %v983 = vpop.f32.mrf.mxu0
  %v984 = vadd.f32 0.0, %v983
  %v985 = vpop.f32.mrf.mxu0
  %v986 = vadd.f32 0.0, %v985
  %987 = vmatprep.mubr.bf16.mxu0 0
  %988 = vmatmul.mubr.bf16.gmra.mxu0 %v537
  %v989 = vpop.f32.mrf.mxu0
  %v990 = vadd.f32 0.0, %v989
  %v991 = vpop.f32.mrf.mxu0
  %v992 = vadd.f32 0.0, %v991
  %v993 = vpop.f32.mrf.mxu0
  %v994 = vadd.f32 0.0, %v993
  %v995 = vpop.f32.mrf.mxu0
  %v996 = vadd.f32 0.0, %v995
  %997 = vmatprep.mubr.bf16.mxu0 0
  %998 = vmatmul.mubr.bf16.gmra.mxu0 %v540
  %v999 = vpop.f32.mrf.mxu0
  %v1000 = vadd.f32 0.0, %v999
  %v1001 = vpop.f32.mrf.mxu0
  %v1002 = vadd.f32 0.0, %v1001
  %v1003 = vpop.f32.mrf.mxu0
  %v1004 = vadd.f32 0.0, %v1003
  %v1005 = vpop.f32.mrf.mxu0
  %v1006 = vadd.f32 0.0, %v1005
  %1007 = vmatprep.mubr.bf16.mxu0 0
  %1008 = vmatmul.mubr.bf16.gmra.mxu0 %v543
  %v1009 = vpop.f32.mrf.mxu0
  %v1010 = vadd.f32 0.0, %v1009
  %v1011 = vpop.f32.mrf.mxu0
  %v1012 = vadd.f32 0.0, %v1011
  %v1013 = vpop.f32.mrf.mxu0
  %v1014 = vadd.f32 0.0, %v1013
  %v1015 = vpop.f32.mrf.mxu0
  %v1016 = vadd.f32 0.0, %v1015
  %1017 = vmatprep.mubr.bf16.mxu0 0
  %1018 = vmatmul.mubr.bf16.gmra.mxu0 %v546
  %v1019 = vpop.f32.mrf.mxu0
  %v1020 = vadd.f32 0.0, %v1019
  %v1021 = vpop.f32.mrf.mxu0
  %v1022 = vadd.f32 0.0, %v1021
  %v1023 = vpop.f32.mrf.mxu0
  %v1024 = vadd.f32 0.0, %v1023
  %v1025 = vpop.f32.mrf.mxu0
  %v1026 = vadd.f32 0.0, %v1025
  %1027 = vmatprep.mubr.bf16.mxu0 0
  %1028 = vmatmul.mubr.bf16.gmra.mxu0 %v549
  %v1029 = vpop.f32.mrf.mxu0
  %v1030 = vadd.f32 0.0, %v1029
  %v1031 = vpop.f32.mrf.mxu0
  %v1032 = vadd.f32 0.0, %v1031
  %v1033 = vpop.f32.mrf.mxu0
  %v1034 = vadd.f32 0.0, %v1033
  %v1035 = vpop.f32.mrf.mxu0
  %v1036 = vadd.f32 0.0, %v1035
  %1037 = vmatprep.mubr.bf16.mxu0 0
  %1038 = vmatmul.mubr.bf16.gmra.mxu0 %v552
  %v1039 = vpop.f32.mrf.mxu0
  %v1040 = vadd.f32 0.0, %v1039
  %v1041 = vpop.f32.mrf.mxu0
  %v1042 = vadd.f32 0.0, %v1041
  %v1043 = vpop.f32.mrf.mxu0
  %v1044 = vadd.f32 0.0, %v1043
  %v1045 = vpop.f32.mrf.mxu0
  %v1046 = vadd.f32 0.0, %v1045
  %1047 = vmatprep.mubr.bf16.mxu0 0
  %1048 = vmatmul.mubr.bf16.gmra.mxu0 %v555
  %v1049 = vpop.f32.mrf.mxu0
  %v1050 = vadd.f32 0.0, %v1049
  %v1051 = vpop.f32.mrf.mxu0
  %v1052 = vadd.f32 0.0, %v1051
  %v1053 = vpop.f32.mrf.mxu0
  %v1054 = vadd.f32 0.0, %v1053
  %v1055 = vpop.f32.mrf.mxu0
  %v1056 = vadd.f32 0.0, %v1055
  %1057 = vmatprep.mubr.bf16.mxu0 0
  %1058 = vmatmul.mubr.bf16.gmra.mxu0 %v558
  %v1059 = vpop.f32.mrf.mxu0
  %v1060 = vadd.f32 0.0, %v1059
  %v1061 = vpop.f32.mrf.mxu0
  %v1062 = vadd.f32 0.0, %v1061
  %v1063 = vpop.f32.mrf.mxu0
  %v1064 = vadd.f32 0.0, %v1063
  %v1065 = vpop.f32.mrf.mxu0
  %v1066 = vadd.f32 0.0, %v1065
  %1067 = vmatprep.mubr.bf16.mxu0 0
  %1068 = vmatmul.mubr.bf16.gmra.mxu0 %v561
  %v1069 = vpop.f32.mrf.mxu0
  %v1070 = vadd.f32 0.0, %v1069
  %v1071 = vpop.f32.mrf.mxu0
  %v1072 = vadd.f32 0.0, %v1071
  %v1073 = vpop.f32.mrf.mxu0
  %v1074 = vadd.f32 0.0, %v1073
  %v1075 = vpop.f32.mrf.mxu0
  %v1076 = vadd.f32 0.0, %v1075
  %1077 = vmatprep.mubr.bf16.mxu0 0
  %1078 = vmatmul.mubr.bf16.gmra.mxu0 %v564
  %v1079 = vpop.f32.mrf.mxu0
  %v1080 = vadd.f32 0.0, %v1079
  %v1081 = vpop.f32.mrf.mxu0
  %v1082 = vadd.f32 0.0, %v1081
  %v1083 = vpop.f32.mrf.mxu0
  %v1084 = vadd.f32 0.0, %v1083
  %v1085 = vpop.f32.mrf.mxu0
  %v1086 = vadd.f32 0.0, %v1085
  %1087 = vmatprep.mubr.bf16.mxu0 0
  %1088 = vmatmul.mubr.bf16.gmra.mxu0 %v931
  %v1089 = vpop.f32.mrf.mxu0
  %v1090 = vadd.f32 0.0, %v1089
  %v1091 = vpop.f32.mrf.mxu0
  %v1092 = vadd.f32 0.0, %v1091
  %v1093 = vpop.f32.mrf.mxu0
  %v1094 = vadd.f32 0.0, %v1093
  %v1095 = vpop.f32.mrf.mxu0
  %v1096 = vadd.f32 0.0, %v1095
  %1097 = vdwg.mxu0
  %1098 = vmatprep.subr.bf16.mxu0 0
  %1099 = vmatpush1.bf16.msra.mxu0 0
  %1100 = vmatprep.subr.bf16.mxu0 0
  %1101 = vmatpush1.bf16.msra.mxu0 0
  %1102 = vmatprep.subr.bf16.mxu0 0
  %1103 = vmatpush1.bf16.msra.mxu0 0
  %1104 = vmatprep.subr.bf16.mxu0 0
  %1105 = vmatpush1.bf16.msra.mxu0 0
  %1106 = vmatprep.subr.bf16.mxu0 0
  %1107 = vmatpush1.bf16.msra.mxu0 0
  %1108 = vmatprep.subr.bf16.mxu0 0
  %1109 = vmatpush1.bf16.msra.mxu0 0
  %1110 = vmatprep.subr.bf16.mxu0 %v943
  %1111 = vmatpush1.bf16.msra.mxu0 %v940
  %1112 = vmatprep.subr.bf16.mxu0 %v921
  %1113 = vmatpush1.bf16.msra.mxu0 %v920
  %1114 = vmatprep.subr.bf16.mxu0 0
  %1115 = vmatpush2.bf16.msra.mxu0 0
  %1116 = vmatprep.subr.bf16.mxu0 0
  %1117 = vmatpush2.bf16.msra.mxu0 0
  %1118 = vmatprep.subr.bf16.mxu0 0
  %1119 = vmatpush2.bf16.msra.mxu0 0
  %1120 = vmatprep.subr.bf16.mxu0 0
  %1121 = vmatpush2.bf16.msra.mxu0 0
  %1122 = vmatprep.subr.bf16.mxu0 0
  %1123 = vmatpush2.bf16.msra.mxu0 0
  %1124 = vmatprep.subr.bf16.mxu0 0
  %1125 = vmatpush2.bf16.msra.mxu0 0
  %1126 = vmatprep.subr.bf16.mxu0 0
  %1127 = vmatpush2.bf16.msra.mxu0 0
  %1128 = vmatprep.subr.bf16.mxu0 0
  %1129 = vmatpush2.bf16.msra.mxu0 0
  %1130 = vmatprep.mubr.bf16.mxu0 0
  %1131 = vmatmul.mubr.bf16.gmra.mxu0 %v534
  %v1132 = vpop.f32.mrf.mxu0
  %v1133 = vadd.f32 0.0, %v1132
  %v1134 = vpop.f32.mrf.mxu0
  %v1135 = vadd.f32 0.0, %v1134
  %v1136 = vpop.f32.mrf.mxu0
  %v1137 = vadd.f32 0.0, %v1136
  %v1138 = vpop.f32.mrf.mxu0
  %v1139 = vadd.f32 0.0, %v1138
  %1140 = vmatprep.mubr.bf16.mxu0 0
  %1141 = vmatmul.mubr.bf16.gmra.mxu0 %v537
  %v1142 = vpop.f32.mrf.mxu0
  %v1143 = vadd.f32 0.0, %v1142
  %v1144 = vpop.f32.mrf.mxu0
  %v1145 = vadd.f32 0.0, %v1144
  %v1146 = vpop.f32.mrf.mxu0
  %v1147 = vadd.f32 0.0, %v1146
  %v1148 = vpop.f32.mrf.mxu0
  %v1149 = vadd.f32 0.0, %v1148
  %1150 = vmatprep.mubr.bf16.mxu0 0
  %1151 = vmatmul.mubr.bf16.gmra.mxu0 %v540
  %v1152 = vpop.f32.mrf.mxu0
  %v1153 = vadd.f32 0.0, %v1152
  %v1154 = vpop.f32.mrf.mxu0
  %v1155 = vadd.f32 0.0, %v1154
  %v1156 = vpop.f32.mrf.mxu0
  %v1157 = vadd.f32 0.0, %v1156
  %v1158 = vpop.f32.mrf.mxu0
  %v1159 = vadd.f32 0.0, %v1158
  %1160 = vmatprep.mubr.bf16.mxu0 0
  %1161 = vmatmul.mubr.bf16.gmra.mxu0 %v543
  %v1162 = vpop.f32.mrf.mxu0
  %v1163 = vadd.f32 0.0, %v1162
  %v1164 = vpop.f32.mrf.mxu0
  %v1165 = vadd.f32 0.0, %v1164
  %v1166 = vpop.f32.mrf.mxu0
  %v1167 = vadd.f32 0.0, %v1166
  %v1168 = vpop.f32.mrf.mxu0
  %v1169 = vadd.f32 0.0, %v1168
  %1170 = vmatprep.mubr.bf16.mxu0 0
  %1171 = vmatmul.mubr.bf16.gmra.mxu0 %v546
  %v1172 = vpop.f32.mrf.mxu0
  %v1173 = vadd.f32 0.0, %v1172
  %v1174 = vpop.f32.mrf.mxu0
  %v1175 = vadd.f32 0.0, %v1174
  %v1176 = vpop.f32.mrf.mxu0
  %v1177 = vadd.f32 0.0, %v1176
  %v1178 = vpop.f32.mrf.mxu0
  %v1179 = vadd.f32 0.0, %v1178
  %1180 = vmatprep.mubr.bf16.mxu0 0
  %1181 = vmatmul.mubr.bf16.gmra.mxu0 %v549
  %v1182 = vpop.f32.mrf.mxu0
  %v1183 = vadd.f32 0.0, %v1182
  %v1184 = vpop.f32.mrf.mxu0
  %v1185 = vadd.f32 0.0, %v1184
  %v1186 = vpop.f32.mrf.mxu0
  %v1187 = vadd.f32 0.0, %v1186
  %v1188 = vpop.f32.mrf.mxu0
  %v1189 = vadd.f32 0.0, %v1188
  %1190 = vmatprep.mubr.bf16.mxu0 0
  %1191 = vmatmul.mubr.bf16.gmra.mxu0 %v552
  %v1192 = vpop.f32.mrf.mxu0
  %v1193 = vadd.f32 0.0, %v1192
  %v1194 = vpop.f32.mrf.mxu0
  %v1195 = vadd.f32 0.0, %v1194
  %v1196 = vpop.f32.mrf.mxu0
  %v1197 = vadd.f32 0.0, %v1196
  %v1198 = vpop.f32.mrf.mxu0
  %v1199 = vadd.f32 0.0, %v1198
  %1200 = vmatprep.mubr.bf16.mxu0 0
  %1201 = vmatmul.mubr.bf16.gmra.mxu0 %v555
  %v1202 = vpop.f32.mrf.mxu0
  %v1203 = vadd.f32 0.0, %v1202
  %v1204 = vpop.f32.mrf.mxu0
  %v1205 = vadd.f32 0.0, %v1204
  %v1206 = vpop.f32.mrf.mxu0
  %v1207 = vadd.f32 0.0, %v1206
  %v1208 = vpop.f32.mrf.mxu0
  %v1209 = vadd.f32 0.0, %v1208
  %1210 = vmatprep.mubr.bf16.mxu0 0
  %1211 = vmatmul.mubr.bf16.gmra.mxu0 %v558
  %v1212 = vpop.f32.mrf.mxu0
  %v1213 = vadd.f32 0.0, %v1212
  %v1214 = vpop.f32.mrf.mxu0
  %v1215 = vadd.f32 0.0, %v1214
  %v1216 = vpop.f32.mrf.mxu0
  %v1217 = vadd.f32 0.0, %v1216
  %v1218 = vpop.f32.mrf.mxu0
  %v1219 = vadd.f32 0.0, %v1218
  %1220 = vmatprep.mubr.bf16.mxu0 0
  %1221 = vmatmul.mubr.bf16.gmra.mxu0 %v561
  %v1222 = vpop.f32.mrf.mxu0
  %v1223 = vadd.f32 0.0, %v1222
  %v1224 = vpop.f32.mrf.mxu0
  %v1225 = vadd.f32 0.0, %v1224
  %v1226 = vpop.f32.mrf.mxu0
  %v1227 = vadd.f32 0.0, %v1226
  %v1228 = vpop.f32.mrf.mxu0
  %v1229 = vadd.f32 0.0, %v1228
  %1230 = vmatprep.mubr.bf16.mxu0 0
  %1231 = vmatmul.mubr.bf16.gmra.mxu0 %v564
  %v1232 = vpop.f32.mrf.mxu0
  %v1233 = vadd.f32 0.0, %v1232
  %v1234 = vpop.f32.mrf.mxu0
  %v1235 = vadd.f32 0.0, %v1234
  %v1236 = vpop.f32.mrf.mxu0
  %v1237 = vadd.f32 0.0, %v1236
  %v1238 = vpop.f32.mrf.mxu0
  %v1239 = vadd.f32 0.0, %v1238
  %1240 = vmatprep.mubr.bf16.mxu0 0
  %1241 = vmatmul.mubr.bf16.gmra.mxu0 %v931
  %v1242 = vpop.f32.mrf.mxu0
  %v1243 = vadd.f32 0.0, %v1242
  %v1244 = vpop.f32.mrf.mxu0
  %v1245 = vadd.f32 0.0, %v1244
  %v1246 = vpop.f32.mrf.mxu0
  %v1247 = vadd.f32 0.0, %v1246
  %v1248 = vpop.f32.mrf.mxu0
  %v1249 = vadd.f32 0.0, %v1248
  %1250 = vdwg.mxu0
  %v1251 = vadd.f32 %v613, %v980
  %v1252 = vadd.f32 %v615, %v982
  %v1253 = vadd.f32 %v766, %v1133
  %v1254 = vadd.f32 %v768, %v1135
  %v1255 = vadd.f32 %v617, %v984
  %v1256 = vadd.f32 %v619, %v986
  %v1257 = vadd.f32 %v770, %v1137
  %v1258 = vadd.f32 %v772, %v1139
  %v1259 = vadd.f32 %v623, %v990
  %v1260 = vadd.f32 %v625, %v992
  %v1261 = vadd.f32 %v776, %v1143
  %v1262 = vadd.f32 %v778, %v1145
  %v1263 = vadd.f32 %v627, %v994
  %v1264 = vadd.f32 %v629, %v996
  %v1265 = vadd.f32 %v780, %v1147
  %v1266 = vadd.f32 %v782, %v1149
  %v1267 = vadd.f32 %v633, %v1000
  %v1268 = vadd.f32 %v635, %v1002
  %v1269 = vadd.f32 %v786, %v1153
  %v1270 = vadd.f32 %v788, %v1155
  %v1271 = vadd.f32 %v637, %v1004
  %v1272 = vadd.f32 %v639, %v1006
  %v1273 = vadd.f32 %v790, %v1157
  %v1274 = vadd.f32 %v792, %v1159
  %v1275 = vadd.f32 %v643, %v1010
  %v1276 = vadd.f32 %v645, %v1012
  %v1277 = vadd.f32 %v796, %v1163
  %v1278 = vadd.f32 %v798, %v1165
  %v1279 = vadd.f32 %v647, %v1014
  %v1280 = vadd.f32 %v649, %v1016
  %v1281 = vadd.f32 %v800, %v1167
  %v1282 = vadd.f32 %v802, %v1169
  %v1283 = vadd.f32 %v653, %v1020
  %v1284 = vadd.f32 %v655, %v1022
  %v1285 = vadd.f32 %v806, %v1173
  %v1286 = vadd.f32 %v808, %v1175
  %v1287 = vadd.f32 %v657, %v1024
  %v1288 = vadd.f32 %v659, %v1026
  %v1289 = vadd.f32 %v810, %v1177
  %v1290 = vadd.f32 %v812, %v1179
  %v1291 = vadd.f32 %v663, %v1030
  %v1292 = vadd.f32 %v665, %v1032
  %v1293 = vadd.f32 %v816, %v1183
  %v1294 = vadd.f32 %v818, %v1185
  %v1295 = vadd.f32 %v667, %v1034
  %v1296 = vadd.f32 %v669, %v1036
  %v1297 = vadd.f32 %v820, %v1187
  %v1298 = vadd.f32 %v822, %v1189
  %v1299 = vadd.f32 %v673, %v1040
  %v1300 = vadd.f32 %v675, %v1042
  %v1301 = vadd.f32 %v826, %v1193
  %v1302 = vadd.f32 %v828, %v1195
  %v1303 = vadd.f32 %v677, %v1044
  %v1304 = vadd.f32 %v679, %v1046
  %v1305 = vadd.f32 %v830, %v1197
  %v1306 = vadd.f32 %v832, %v1199
  %v1307 = vadd.f32 %v683, %v1050
  %v1308 = vadd.f32 %v685, %v1052
  %v1309 = vadd.f32 %v836, %v1203
  %v1310 = vadd.f32 %v838, %v1205
  %v1311 = vadd.f32 %v687, %v1054
  %v1312 = vadd.f32 %v689, %v1056
  %v1313 = vadd.f32 %v840, %v1207
  %v1314 = vadd.f32 %v842, %v1209
  %v1315 = vadd.f32 %v693, %v1060
  %v1316 = vadd.f32 %v695, %v1062
  %v1317 = vadd.f32 %v846, %v1213
  %v1318 = vadd.f32 %v848, %v1215
  %v1319 = vadd.f32 %v697, %v1064
  %v1320 = vadd.f32 %v699, %v1066
  %v1321 = vadd.f32 %v850, %v1217
  %v1322 = vadd.f32 %v852, %v1219
  %v1323 = vadd.f32 %v703, %v1070
  %v1324 = vadd.f32 %v705, %v1072
  %v1325 = vadd.f32 %v856, %v1223
  %v1326 = vadd.f32 %v858, %v1225
  %v1327 = vadd.f32 %v707, %v1074
  %v1328 = vadd.f32 %v709, %v1076
  %v1329 = vadd.f32 %v860, %v1227
  %v1330 = vadd.f32 %v862, %v1229
  %v1331 = vadd.f32 %v713, %v1080
  %v1332 = vadd.f32 %v715, %v1082
  %v1333 = vadd.f32 %v866, %v1233
  %v1334 = vadd.f32 %v868, %v1235
  %v1335 = vadd.f32 %v717, %v1084
  %v1336 = vadd.f32 %v719, %v1086
  %v1337 = vadd.f32 %v870, %v1237
  %v1338 = vadd.f32 %v872, %v1239
  %v1339 = vadd.f32 %v723, %v1090
  %v1340 = vadd.f32 %v725, %v1092
  %v1341 = vadd.f32 %v876, %v1243
  %v1342 = vadd.f32 %v878, %v1245
  %v1343 = vadd.f32 %v727, %v1094
  %v1344 = vadd.f32 %v729, %v1096
  %v1345 = vadd.f32 %v880, %v1247
  %v1346 = vadd.f32 %v882, %v1249
  %v1347 = vpack.c.bf16 %v59, %v58
  %s1348 = scalar_lea.vmem %s1, 192
  %v1349 = vld [vmem:[%s1348] sm:$0xff]
  %v1350 = vld [vmem:[%s1348 + $0x8] sm:$0xff]
  %v1351 = vld [vmem:[%s1348 + $0x10] sm:$0xff]
  %v1352 = vld [vmem:[%s1348 + $0x18] sm:$0xff]
  %v1353 = vld [vmem:[%s1348 + $0x20] sm:$0xff]
  %v1354 = vld [vmem:[%s1348 + $0x28] sm:$0xff]
  %v1355 = vld [vmem:[%s1348 + $0x30] sm:$0x33]
  %v1356 = vld [vmem:[%s1348 + $0x38] sm:$0x33]
  %v1365 = vunpack.c.l.b16 %v1349
  %v1366 = vunpack.c.h.b16 %v1349
  %v1367 = vunpack.c.l.b16 %v1350
  %v1368 = vunpack.c.h.b16 %v1350
  %v1369 = vunpack.c.l.b16 %v1351
  %v1370 = vunpack.c.h.b16 %v1351
  %v1371 = vunpack.c.l.b16 %v1352
  %v1372 = vunpack.c.h.b16 %v1352
  %v1373 = vunpack.c.l.b16 %v1353
  %v1374 = vunpack.c.h.b16 %v1353
  %v1375 = vunpack.c.l.b16 %v1354
  %v1376 = vunpack.c.h.b16 %v1354
  %v1377 = vunpack.c.l.b16 %v1355
  %v1378 = vunpack.c.h.b16 %v1355
  %v1379 = vunpack.c.l.b16 %v1356
  %v1380 = vunpack.c.h.b16 %v1356
  %v1381 = vpack.c.b16 %v1369, %v1365
  %v1382 = vpack.c.b16 %v1370, %v1366
  %v1383 = vpack.c.b16 %v1371, %v1367
  %v1384 = vpack.c.b16 %v1372, %v1368
  %v1385 = vpack.c.b16 %v1377, %v1373
  %v1386 = vpack.c.b16 %v1378, %v1374
  %v1387 = vpack.c.b16 %v1379, %v1375
  %v1388 = vpack.c.b16 %v1380, %v1376
  %v1394 = vsel %vm138, %v1347, 0
  %v1397 = vsel %vm175, %v1385, 0
  %v1400 = vsel %vm175, %v1386, 0
  %v1403 = vsel %vm175, %v1387, 0
  %v1406 = vsel %vm175, %v1388, 0
  %1408 = vmatprep.subr.bf16.mxu0 0
  %1409 = vmatpush1.bf16.msra.mxu0 0
  %1410 = vmatprep.subr.bf16.mxu0 0
  %1411 = vmatpush1.bf16.msra.mxu0 0
  %1412 = vmatprep.subr.bf16.mxu0 0
  %1413 = vmatpush1.bf16.msra.mxu0 0
  %1414 = vmatprep.subr.bf16.mxu0 0
  %1415 = vmatpush1.bf16.msra.mxu0 0
  %1416 = vmatprep.subr.bf16.mxu0 0
  %1417 = vmatpush1.bf16.msra.mxu0 0
  %1418 = vmatprep.subr.bf16.mxu0 0
  %1419 = vmatpush1.bf16.msra.mxu0 0
  %1420 = vmatprep.subr.bf16.mxu0 %v1400
  %1421 = vmatpush1.bf16.msra.mxu0 %v1397
  %1422 = vmatprep.subr.bf16.mxu0 %v1382
  %1423 = vmatpush1.bf16.msra.mxu0 %v1381
  %1424 = vmatprep.subr.bf16.mxu0 0
  %1425 = vmatpush2.bf16.msra.mxu0 0
  %1426 = vmatprep.subr.bf16.mxu0 0
  %1427 = vmatpush2.bf16.msra.mxu0 0
  %1428 = vmatprep.subr.bf16.mxu0 0
  %1429 = vmatpush2.bf16.msra.mxu0 0
  %1430 = vmatprep.subr.bf16.mxu0 0
  %1431 = vmatpush2.bf16.msra.mxu0 0
  %1432 = vmatprep.subr.bf16.mxu0 0
  %1433 = vmatpush2.bf16.msra.mxu0 0
  %1434 = vmatprep.subr.bf16.mxu0 0
  %1435 = vmatpush2.bf16.msra.mxu0 0
  %1436 = vmatprep.subr.bf16.mxu0 0
  %1437 = vmatpush2.bf16.msra.mxu0 0
  %1438 = vmatprep.subr.bf16.mxu0 0
  %1439 = vmatpush2.bf16.msra.mxu0 0
  %1440 = vmatprep.mubr.bf16.mxu0 0
  %1441 = vmatmul.mubr.bf16.gmra.mxu0 %v143
  %v1442 = vpop.f32.mrf.mxu0
  %v1443 = vadd.f32 0.0, %v1442
  %v1444 = vpop.f32.mrf.mxu0
  %v1445 = vadd.f32 0.0, %v1444
  %v1446 = vpop.f32.mrf.mxu0
  %v1447 = vadd.f32 0.0, %v1446
  %v1448 = vpop.f32.mrf.mxu0
  %v1449 = vadd.f32 0.0, %v1448
  %1450 = vmatprep.mubr.bf16.mxu0 0
  %1451 = vmatmul.mubr.bf16.gmra.mxu0 %v146
  %v1452 = vpop.f32.mrf.mxu0
  %v1453 = vadd.f32 0.0, %v1452
  %v1454 = vpop.f32.mrf.mxu0
  %v1455 = vadd.f32 0.0, %v1454
  %v1456 = vpop.f32.mrf.mxu0
  %v1457 = vadd.f32 0.0, %v1456
  %v1458 = vpop.f32.mrf.mxu0
  %v1459 = vadd.f32 0.0, %v1458
  %1460 = vmatprep.mubr.bf16.mxu0 0
  %1461 = vmatmul.mubr.bf16.gmra.mxu0 %v149
  %v1462 = vpop.f32.mrf.mxu0
  %v1463 = vadd.f32 0.0, %v1462
  %v1464 = vpop.f32.mrf.mxu0
  %v1465 = vadd.f32 0.0, %v1464
  %v1466 = vpop.f32.mrf.mxu0
  %v1467 = vadd.f32 0.0, %v1466
  %v1468 = vpop.f32.mrf.mxu0
  %v1469 = vadd.f32 0.0, %v1468
  %1470 = vmatprep.mubr.bf16.mxu0 0
  %1471 = vmatmul.mubr.bf16.gmra.mxu0 %v152
  %v1472 = vpop.f32.mrf.mxu0
  %v1473 = vadd.f32 0.0, %v1472
  %v1474 = vpop.f32.mrf.mxu0
  %v1475 = vadd.f32 0.0, %v1474
  %v1476 = vpop.f32.mrf.mxu0
  %v1477 = vadd.f32 0.0, %v1476
  %v1478 = vpop.f32.mrf.mxu0
  %v1479 = vadd.f32 0.0, %v1478
  %1480 = vmatprep.mubr.bf16.mxu0 0
  %1481 = vmatmul.mubr.bf16.gmra.mxu0 %v155
  %v1482 = vpop.f32.mrf.mxu0
  %v1483 = vadd.f32 0.0, %v1482
  %v1484 = vpop.f32.mrf.mxu0
  %v1485 = vadd.f32 0.0, %v1484
  %v1486 = vpop.f32.mrf.mxu0
  %v1487 = vadd.f32 0.0, %v1486
  %v1488 = vpop.f32.mrf.mxu0
  %v1489 = vadd.f32 0.0, %v1488
  %1490 = vmatprep.mubr.bf16.mxu0 0
  %1491 = vmatmul.mubr.bf16.gmra.mxu0 %v158
  %v1492 = vpop.f32.mrf.mxu0
  %v1493 = vadd.f32 0.0, %v1492
  %v1494 = vpop.f32.mrf.mxu0
  %v1495 = vadd.f32 0.0, %v1494
  %v1496 = vpop.f32.mrf.mxu0
  %v1497 = vadd.f32 0.0, %v1496
  %v1498 = vpop.f32.mrf.mxu0
  %v1499 = vadd.f32 0.0, %v1498
  %1500 = vmatprep.mubr.bf16.mxu0 0
  %1501 = vmatmul.mubr.bf16.gmra.mxu0 %v161
  %v1502 = vpop.f32.mrf.mxu0
  %v1503 = vadd.f32 0.0, %v1502
  %v1504 = vpop.f32.mrf.mxu0
  %v1505 = vadd.f32 0.0, %v1504
  %v1506 = vpop.f32.mrf.mxu0
  %v1507 = vadd.f32 0.0, %v1506
  %v1508 = vpop.f32.mrf.mxu0
  %v1509 = vadd.f32 0.0, %v1508
  %1510 = vmatprep.mubr.bf16.mxu0 0
  %1511 = vmatmul.mubr.bf16.gmra.mxu0 %v164
  %v1512 = vpop.f32.mrf.mxu0
  %v1513 = vadd.f32 0.0, %v1512
  %v1514 = vpop.f32.mrf.mxu0
  %v1515 = vadd.f32 0.0, %v1514
  %v1516 = vpop.f32.mrf.mxu0
  %v1517 = vadd.f32 0.0, %v1516
  %v1518 = vpop.f32.mrf.mxu0
  %v1519 = vadd.f32 0.0, %v1518
  %1520 = vmatprep.mubr.bf16.mxu0 0
  %1521 = vmatmul.mubr.bf16.gmra.mxu0 %v167
  %v1522 = vpop.f32.mrf.mxu0
  %v1523 = vadd.f32 0.0, %v1522
  %v1524 = vpop.f32.mrf.mxu0
  %v1525 = vadd.f32 0.0, %v1524
  %v1526 = vpop.f32.mrf.mxu0
  %v1527 = vadd.f32 0.0, %v1526
  %v1528 = vpop.f32.mrf.mxu0
  %v1529 = vadd.f32 0.0, %v1528
  %1530 = vmatprep.mubr.bf16.mxu0 0
  %1531 = vmatmul.mubr.bf16.gmra.mxu0 %v170
  %v1532 = vpop.f32.mrf.mxu0
  %v1533 = vadd.f32 0.0, %v1532
  %v1534 = vpop.f32.mrf.mxu0
  %v1535 = vadd.f32 0.0, %v1534
  %v1536 = vpop.f32.mrf.mxu0
  %v1537 = vadd.f32 0.0, %v1536
  %v1538 = vpop.f32.mrf.mxu0
  %v1539 = vadd.f32 0.0, %v1538
  %1540 = vmatprep.mubr.bf16.mxu0 0
  %1541 = vmatmul.mubr.bf16.gmra.mxu0 %v173
  %v1542 = vpop.f32.mrf.mxu0
  %v1543 = vadd.f32 0.0, %v1542
  %v1544 = vpop.f32.mrf.mxu0
  %v1545 = vadd.f32 0.0, %v1544
  %v1546 = vpop.f32.mrf.mxu0
  %v1547 = vadd.f32 0.0, %v1546
  %v1548 = vpop.f32.mrf.mxu0
  %v1549 = vadd.f32 0.0, %v1548
  %1550 = vmatprep.mubr.bf16.mxu0 0
  %1551 = vmatmul.mubr.bf16.gmra.mxu0 %v1394
  %v1552 = vpop.f32.mrf.mxu0
  %v1553 = vadd.f32 0.0, %v1552
  %v1554 = vpop.f32.mrf.mxu0
  %v1555 = vadd.f32 0.0, %v1554
  %v1556 = vpop.f32.mrf.mxu0
  %v1557 = vadd.f32 0.0, %v1556
  %v1558 = vpop.f32.mrf.mxu0
  %v1559 = vadd.f32 0.0, %v1558
  %1560 = vdwg.mxu0
  %1561 = vmatprep.subr.bf16.mxu0 0
  %1562 = vmatpush1.bf16.msra.mxu0 0
  %1563 = vmatprep.subr.bf16.mxu0 0
  %1564 = vmatpush1.bf16.msra.mxu0 0
  %1565 = vmatprep.subr.bf16.mxu0 0
  %1566 = vmatpush1.bf16.msra.mxu0 0
  %1567 = vmatprep.subr.bf16.mxu0 0
  %1568 = vmatpush1.bf16.msra.mxu0 0
  %1569 = vmatprep.subr.bf16.mxu0 0
  %1570 = vmatpush1.bf16.msra.mxu0 0
  %1571 = vmatprep.subr.bf16.mxu0 0
  %1572 = vmatpush1.bf16.msra.mxu0 0
  %1573 = vmatprep.subr.bf16.mxu0 %v1406
  %1574 = vmatpush1.bf16.msra.mxu0 %v1403
  %1575 = vmatprep.subr.bf16.mxu0 %v1384
  %1576 = vmatpush1.bf16.msra.mxu0 %v1383
  %1577 = vmatprep.subr.bf16.mxu0 0
  %1578 = vmatpush2.bf16.msra.mxu0 0
  %1579 = vmatprep.subr.bf16.mxu0 0
  %1580 = vmatpush2.bf16.msra.mxu0 0
  %1581 = vmatprep.subr.bf16.mxu0 0
  %1582 = vmatpush2.bf16.msra.mxu0 0
  %1583 = vmatprep.subr.bf16.mxu0 0
  %1584 = vmatpush2.bf16.msra.mxu0 0
  %1585 = vmatprep.subr.bf16.mxu0 0
  %1586 = vmatpush2.bf16.msra.mxu0 0
  %1587 = vmatprep.subr.bf16.mxu0 0
  %1588 = vmatpush2.bf16.msra.mxu0 0
  %1589 = vmatprep.subr.bf16.mxu0 0
  %1590 = vmatpush2.bf16.msra.mxu0 0
  %1591 = vmatprep.subr.bf16.mxu0 0
  %1592 = vmatpush2.bf16.msra.mxu0 0
  %1593 = vmatprep.mubr.bf16.mxu0 0
  %1594 = vmatmul.mubr.bf16.gmra.mxu0 %v143
  %v1595 = vpop.f32.mrf.mxu0
  %v1596 = vadd.f32 0.0, %v1595
  %v1597 = vpop.f32.mrf.mxu0
  %v1598 = vadd.f32 0.0, %v1597
  %v1599 = vpop.f32.mrf.mxu0
  %v1600 = vadd.f32 0.0, %v1599
  %v1601 = vpop.f32.mrf.mxu0
  %v1602 = vadd.f32 0.0, %v1601
  %1603 = vmatprep.mubr.bf16.mxu0 0
  %1604 = vmatmul.mubr.bf16.gmra.mxu0 %v146
  %v1605 = vpop.f32.mrf.mxu0
  %v1606 = vadd.f32 0.0, %v1605
  %v1607 = vpop.f32.mrf.mxu0
  %v1608 = vadd.f32 0.0, %v1607
  %v1609 = vpop.f32.mrf.mxu0
  %v1610 = vadd.f32 0.0, %v1609
  %v1611 = vpop.f32.mrf.mxu0
  %v1612 = vadd.f32 0.0, %v1611
  %1613 = vmatprep.mubr.bf16.mxu0 0
  %1614 = vmatmul.mubr.bf16.gmra.mxu0 %v149
  %v1615 = vpop.f32.mrf.mxu0
  %v1616 = vadd.f32 0.0, %v1615
  %v1617 = vpop.f32.mrf.mxu0
  %v1618 = vadd.f32 0.0, %v1617
  %v1619 = vpop.f32.mrf.mxu0
  %v1620 = vadd.f32 0.0, %v1619
  %v1621 = vpop.f32.mrf.mxu0
  %v1622 = vadd.f32 0.0, %v1621
  %1623 = vmatprep.mubr.bf16.mxu0 0
  %1624 = vmatmul.mubr.bf16.gmra.mxu0 %v152
  %v1625 = vpop.f32.mrf.mxu0
  %v1626 = vadd.f32 0.0, %v1625
  %v1627 = vpop.f32.mrf.mxu0
  %v1628 = vadd.f32 0.0, %v1627
  %v1629 = vpop.f32.mrf.mxu0
  %v1630 = vadd.f32 0.0, %v1629
  %v1631 = vpop.f32.mrf.mxu0
  %v1632 = vadd.f32 0.0, %v1631
  %1633 = vmatprep.mubr.bf16.mxu0 0
  %1634 = vmatmul.mubr.bf16.gmra.mxu0 %v155
  %v1635 = vpop.f32.mrf.mxu0
  %v1636 = vadd.f32 0.0, %v1635
  %v1637 = vpop.f32.mrf.mxu0
  %v1638 = vadd.f32 0.0, %v1637
  %v1639 = vpop.f32.mrf.mxu0
  %v1640 = vadd.f32 0.0, %v1639
  %v1641 = vpop.f32.mrf.mxu0
  %v1642 = vadd.f32 0.0, %v1641
  %1643 = vmatprep.mubr.bf16.mxu0 0
  %1644 = vmatmul.mubr.bf16.gmra.mxu0 %v158
  %v1645 = vpop.f32.mrf.mxu0
  %v1646 = vadd.f32 0.0, %v1645
  %v1647 = vpop.f32.mrf.mxu0
  %v1648 = vadd.f32 0.0, %v1647
  %v1649 = vpop.f32.mrf.mxu0
  %v1650 = vadd.f32 0.0, %v1649
  %v1651 = vpop.f32.mrf.mxu0
  %v1652 = vadd.f32 0.0, %v1651
  %1653 = vmatprep.mubr.bf16.mxu0 0
  %1654 = vmatmul.mubr.bf16.gmra.mxu0 %v161
  %v1655 = vpop.f32.mrf.mxu0
  %v1656 = vadd.f32 0.0, %v1655
  %v1657 = vpop.f32.mrf.mxu0
  %v1658 = vadd.f32 0.0, %v1657
  %v1659 = vpop.f32.mrf.mxu0
  %v1660 = vadd.f32 0.0, %v1659
  %v1661 = vpop.f32.mrf.mxu0
  %v1662 = vadd.f32 0.0, %v1661
  %1663 = vmatprep.mubr.bf16.mxu0 0
  %1664 = vmatmul.mubr.bf16.gmra.mxu0 %v164
  %v1665 = vpop.f32.mrf.mxu0
  %v1666 = vadd.f32 0.0, %v1665
  %v1667 = vpop.f32.mrf.mxu0
  %v1668 = vadd.f32 0.0, %v1667
  %v1669 = vpop.f32.mrf.mxu0
  %v1670 = vadd.f32 0.0, %v1669
  %v1671 = vpop.f32.mrf.mxu0
  %v1672 = vadd.f32 0.0, %v1671
  %1673 = vmatprep.mubr.bf16.mxu0 0
  %1674 = vmatmul.mubr.bf16.gmra.mxu0 %v167
  %v1675 = vpop.f32.mrf.mxu0
  %v1676 = vadd.f32 0.0, %v1675
  %v1677 = vpop.f32.mrf.mxu0
  %v1678 = vadd.f32 0.0, %v1677
  %v1679 = vpop.f32.mrf.mxu0
  %v1680 = vadd.f32 0.0, %v1679
  %v1681 = vpop.f32.mrf.mxu0
  %v1682 = vadd.f32 0.0, %v1681
  %1683 = vmatprep.mubr.bf16.mxu0 0
  %1684 = vmatmul.mubr.bf16.gmra.mxu0 %v170
  %v1685 = vpop.f32.mrf.mxu0
  %v1686 = vadd.f32 0.0, %v1685
  %v1687 = vpop.f32.mrf.mxu0
  %v1688 = vadd.f32 0.0, %v1687
  %v1689 = vpop.f32.mrf.mxu0
  %v1690 = vadd.f32 0.0, %v1689
  %v1691 = vpop.f32.mrf.mxu0
  %v1692 = vadd.f32 0.0, %v1691
  %1693 = vmatprep.mubr.bf16.mxu0 0
  %1694 = vmatmul.mubr.bf16.gmra.mxu0 %v173
  %v1695 = vpop.f32.mrf.mxu0
  %v1696 = vadd.f32 0.0, %v1695
  %v1697 = vpop.f32.mrf.mxu0
  %v1698 = vadd.f32 0.0, %v1697
  %v1699 = vpop.f32.mrf.mxu0
  %v1700 = vadd.f32 0.0, %v1699
  %v1701 = vpop.f32.mrf.mxu0
  %v1702 = vadd.f32 0.0, %v1701
  %1703 = vmatprep.mubr.bf16.mxu0 0
  %1704 = vmatmul.mubr.bf16.gmra.mxu0 %v1394
  %v1705 = vpop.f32.mrf.mxu0
  %v1706 = vadd.f32 0.0, %v1705
  %v1707 = vpop.f32.mrf.mxu0
  %v1708 = vadd.f32 0.0, %v1707
  %v1709 = vpop.f32.mrf.mxu0
  %v1710 = vadd.f32 0.0, %v1709
  %v1711 = vpop.f32.mrf.mxu0
  %v1712 = vadd.f32 0.0, %v1711
  %1713 = vdwg.mxu0
  %v1714 = vadd.f32 %v1251, %v1443
  %v1715 = vadd.f32 %v1252, %v1445
  %v1716 = vadd.f32 %v1253, %v1596
  %v1717 = vadd.f32 %v1254, %v1598
  %v1718 = vadd.f32 %v1255, %v1447
  %v1719 = vadd.f32 %v1256, %v1449
  %v1720 = vadd.f32 %v1257, %v1600
  %v1721 = vadd.f32 %v1258, %v1602
  %v1722 = vadd.f32 %v1259, %v1453
  %v1723 = vadd.f32 %v1260, %v1455
  %v1724 = vadd.f32 %v1261, %v1606
  %v1725 = vadd.f32 %v1262, %v1608
  %v1726 = vadd.f32 %v1263, %v1457
  %v1727 = vadd.f32 %v1264, %v1459
  %v1728 = vadd.f32 %v1265, %v1610
  %v1729 = vadd.f32 %v1266, %v1612
  %v1730 = vadd.f32 %v1267, %v1463
  %v1731 = vadd.f32 %v1268, %v1465
  %v1732 = vadd.f32 %v1269, %v1616
  %v1733 = vadd.f32 %v1270, %v1618
  %v1734 = vadd.f32 %v1271, %v1467
  %v1735 = vadd.f32 %v1272, %v1469
  %v1736 = vadd.f32 %v1273, %v1620
  %v1737 = vadd.f32 %v1274, %v1622
  %v1738 = vadd.f32 %v1275, %v1473
  %v1739 = vadd.f32 %v1276, %v1475
  %v1740 = vadd.f32 %v1277, %v1626
  %v1741 = vadd.f32 %v1278, %v1628
  %v1742 = vadd.f32 %v1279, %v1477
  %v1743 = vadd.f32 %v1280, %v1479
  %v1744 = vadd.f32 %v1281, %v1630
  %v1745 = vadd.f32 %v1282, %v1632
  %v1746 = vadd.f32 %v1283, %v1483
  %v1747 = vadd.f32 %v1284, %v1485
  %v1748 = vadd.f32 %v1285, %v1636
  %v1749 = vadd.f32 %v1286, %v1638
  %v1750 = vadd.f32 %v1287, %v1487
  %v1751 = vadd.f32 %v1288, %v1489
  %v1752 = vadd.f32 %v1289, %v1640
  %v1753 = vadd.f32 %v1290, %v1642
  %v1754 = vadd.f32 %v1291, %v1493
  %v1755 = vadd.f32 %v1292, %v1495
  %v1756 = vadd.f32 %v1293, %v1646
  %v1757 = vadd.f32 %v1294, %v1648
  %v1758 = vadd.f32 %v1295, %v1497
  %v1759 = vadd.f32 %v1296, %v1499
  %v1760 = vadd.f32 %v1297, %v1650
  %v1761 = vadd.f32 %v1298, %v1652
  %v1762 = vadd.f32 %v1299, %v1503
  %v1763 = vadd.f32 %v1300, %v1505
  %v1764 = vadd.f32 %v1301, %v1656
  %v1765 = vadd.f32 %v1302, %v1658
  %v1766 = vadd.f32 %v1303, %v1507
  %v1767 = vadd.f32 %v1304, %v1509
  %v1768 = vadd.f32 %v1305, %v1660
  %v1769 = vadd.f32 %v1306, %v1662
  %v1770 = vadd.f32 %v1307, %v1513
  %v1771 = vadd.f32 %v1308, %v1515
  %v1772 = vadd.f32 %v1309, %v1666
  %v1773 = vadd.f32 %v1310, %v1668
  %v1774 = vadd.f32 %v1311, %v1517
  %v1775 = vadd.f32 %v1312, %v1519
  %v1776 = vadd.f32 %v1313, %v1670
  %v1777 = vadd.f32 %v1314, %v1672
  %v1778 = vadd.f32 %v1315, %v1523
  %v1779 = vadd.f32 %v1316, %v1525
  %v1780 = vadd.f32 %v1317, %v1676
  %v1781 = vadd.f32 %v1318, %v1678
  %v1782 = vadd.f32 %v1319, %v1527
  %v1783 = vadd.f32 %v1320, %v1529
  %v1784 = vadd.f32 %v1321, %v1680
  %v1785 = vadd.f32 %v1322, %v1682
  %v1786 = vadd.f32 %v1323, %v1533
  %v1787 = vadd.f32 %v1324, %v1535
  %v1788 = vadd.f32 %v1325, %v1686
  %v1789 = vadd.f32 %v1326, %v1688
  %v1790 = vadd.f32 %v1327, %v1537
  %v1791 = vadd.f32 %v1328, %v1539
  %v1792 = vadd.f32 %v1329, %v1690
  %v1793 = vadd.f32 %v1330, %v1692
  %v1794 = vadd.f32 %v1331, %v1543
  %v1795 = vadd.f32 %v1332, %v1545
  %v1796 = vadd.f32 %v1333, %v1696
  %v1797 = vadd.f32 %v1334, %v1698
  %v1798 = vadd.f32 %v1335, %v1547
  %v1799 = vadd.f32 %v1336, %v1549
  %v1800 = vadd.f32 %v1337, %v1700
  %v1801 = vadd.f32 %v1338, %v1702
  %v1802 = vadd.f32 %v1339, %v1553
  %v1803 = vadd.f32 %v1340, %v1555
  %v1804 = vadd.f32 %v1341, %v1706
  %v1805 = vadd.f32 %v1342, %v1708
  %v1806 = vadd.f32 %v1343, %v1557
  %v1807 = vadd.f32 %v1344, %v1559
  %v1808 = vadd.f32 %v1345, %v1710
  %v1809 = vadd.f32 %v1346, %v1712
  %v1810 = vpack.c.bf16 %v60, %v59
  %s1811 = scalar_lea.vmem %s1, 256
  %v1812 = vld [vmem:[%s1811] sm:$0xff]
  %v1813 = vld [vmem:[%s1811 + $0x8] sm:$0xff]
  %v1814 = vld [vmem:[%s1811 + $0x10] sm:$0xff]
  %v1815 = vld [vmem:[%s1811 + $0x18] sm:$0xff]
  %v1816 = vld [vmem:[%s1811 + $0x20] sm:$0xff]
  %v1817 = vld [vmem:[%s1811 + $0x28] sm:$0xff]
  %v1818 = vld [vmem:[%s1811 + $0x30] sm:$0x33]
  %v1819 = vld [vmem:[%s1811 + $0x38] sm:$0x33]
  %v1828 = vunpack.c.l.b16 %v1812
  %v1829 = vunpack.c.h.b16 %v1812
  %v1830 = vunpack.c.l.b16 %v1813
  %v1831 = vunpack.c.h.b16 %v1813
  %v1832 = vunpack.c.l.b16 %v1814
  %v1833 = vunpack.c.h.b16 %v1814
  %v1834 = vunpack.c.l.b16 %v1815
  %v1835 = vunpack.c.h.b16 %v1815
  %v1836 = vunpack.c.l.b16 %v1816
  %v1837 = vunpack.c.h.b16 %v1816
  %v1838 = vunpack.c.l.b16 %v1817
  %v1839 = vunpack.c.h.b16 %v1817
  %v1840 = vunpack.c.l.b16 %v1818
  %v1841 = vunpack.c.h.b16 %v1818
  %v1842 = vunpack.c.l.b16 %v1819
  %v1843 = vunpack.c.h.b16 %v1819
  %v1844 = vpack.c.b16 %v1832, %v1828
  %v1845 = vpack.c.b16 %v1833, %v1829
  %v1846 = vpack.c.b16 %v1834, %v1830
  %v1847 = vpack.c.b16 %v1835, %v1831
  %v1848 = vpack.c.b16 %v1840, %v1836
  %v1849 = vpack.c.b16 %v1841, %v1837
  %v1850 = vpack.c.b16 %v1842, %v1838
  %v1851 = vpack.c.b16 %v1843, %v1839
  %v1857 = vsel %vm138, %v1810, 0
  %v1860 = vsel %vm175, %v1848, 0
  %v1863 = vsel %vm175, %v1849, 0
  %v1866 = vsel %vm175, %v1850, 0
  %v1869 = vsel %vm175, %v1851, 0
  %1871 = vmatprep.subr.bf16.mxu0 0
  %1872 = vmatpush1.bf16.msra.mxu0 0
  %1873 = vmatprep.subr.bf16.mxu0 0
  %1874 = vmatpush1.bf16.msra.mxu0 0
  %1875 = vmatprep.subr.bf16.mxu0 0
  %1876 = vmatpush1.bf16.msra.mxu0 0
  %1877 = vmatprep.subr.bf16.mxu0 0
  %1878 = vmatpush1.bf16.msra.mxu0 0
  %1879 = vmatprep.subr.bf16.mxu0 0
  %1880 = vmatpush1.bf16.msra.mxu0 0
  %1881 = vmatprep.subr.bf16.mxu0 0
  %1882 = vmatpush1.bf16.msra.mxu0 0
  %1883 = vmatprep.subr.bf16.mxu0 %v1863
  %1884 = vmatpush1.bf16.msra.mxu0 %v1860
  %1885 = vmatprep.subr.bf16.mxu0 %v1845
  %1886 = vmatpush1.bf16.msra.mxu0 %v1844
  %1887 = vmatprep.subr.bf16.mxu0 0
  %1888 = vmatpush2.bf16.msra.mxu0 0
  %1889 = vmatprep.subr.bf16.mxu0 0
  %1890 = vmatpush2.bf16.msra.mxu0 0
  %1891 = vmatprep.subr.bf16.mxu0 0
  %1892 = vmatpush2.bf16.msra.mxu0 0
  %1893 = vmatprep.subr.bf16.mxu0 0
  %1894 = vmatpush2.bf16.msra.mxu0 0
  %1895 = vmatprep.subr.bf16.mxu0 0
  %1896 = vmatpush2.bf16.msra.mxu0 0
  %1897 = vmatprep.subr.bf16.mxu0 0
  %1898 = vmatpush2.bf16.msra.mxu0 0
  %1899 = vmatprep.subr.bf16.mxu0 0
  %1900 = vmatpush2.bf16.msra.mxu0 0
  %1901 = vmatprep.subr.bf16.mxu0 0
  %1902 = vmatpush2.bf16.msra.mxu0 0
  %1903 = vmatprep.mubr.bf16.mxu0 0
  %1904 = vmatmul.mubr.bf16.gmra.mxu0 %v537
  %v1905 = vpop.f32.mrf.mxu0
  %v1906 = vadd.f32 0.0, %v1905
  %v1907 = vpop.f32.mrf.mxu0
  %v1908 = vadd.f32 0.0, %v1907
  %v1909 = vpop.f32.mrf.mxu0
  %v1910 = vadd.f32 0.0, %v1909
  %v1911 = vpop.f32.mrf.mxu0
  %v1912 = vadd.f32 0.0, %v1911
  %1913 = vmatprep.mubr.bf16.mxu0 0
  %1914 = vmatmul.mubr.bf16.gmra.mxu0 %v540
  %v1915 = vpop.f32.mrf.mxu0
  %v1916 = vadd.f32 0.0, %v1915
  %v1917 = vpop.f32.mrf.mxu0
  %v1918 = vadd.f32 0.0, %v1917
  %v1919 = vpop.f32.mrf.mxu0
  %v1920 = vadd.f32 0.0, %v1919
  %v1921 = vpop.f32.mrf.mxu0
  %v1922 = vadd.f32 0.0, %v1921
  %1923 = vmatprep.mubr.bf16.mxu0 0
  %1924 = vmatmul.mubr.bf16.gmra.mxu0 %v543
  %v1925 = vpop.f32.mrf.mxu0
  %v1926 = vadd.f32 0.0, %v1925
  %v1927 = vpop.f32.mrf.mxu0
  %v1928 = vadd.f32 0.0, %v1927
  %v1929 = vpop.f32.mrf.mxu0
  %v1930 = vadd.f32 0.0, %v1929
  %v1931 = vpop.f32.mrf.mxu0
  %v1932 = vadd.f32 0.0, %v1931
  %1933 = vmatprep.mubr.bf16.mxu0 0
  %1934 = vmatmul.mubr.bf16.gmra.mxu0 %v546
  %v1935 = vpop.f32.mrf.mxu0
  %v1936 = vadd.f32 0.0, %v1935
  %v1937 = vpop.f32.mrf.mxu0
  %v1938 = vadd.f32 0.0, %v1937
  %v1939 = vpop.f32.mrf.mxu0
  %v1940 = vadd.f32 0.0, %v1939
  %v1941 = vpop.f32.mrf.mxu0
  %v1942 = vadd.f32 0.0, %v1941
  %1943 = vmatprep.mubr.bf16.mxu0 0
  %1944 = vmatmul.mubr.bf16.gmra.mxu0 %v549
  %v1945 = vpop.f32.mrf.mxu0
  %v1946 = vadd.f32 0.0, %v1945
  %v1947 = vpop.f32.mrf.mxu0
  %v1948 = vadd.f32 0.0, %v1947
  %v1949 = vpop.f32.mrf.mxu0
  %v1950 = vadd.f32 0.0, %v1949
  %v1951 = vpop.f32.mrf.mxu0
  %v1952 = vadd.f32 0.0, %v1951
  %1953 = vmatprep.mubr.bf16.mxu0 0
  %1954 = vmatmul.mubr.bf16.gmra.mxu0 %v552
  %v1955 = vpop.f32.mrf.mxu0
  %v1956 = vadd.f32 0.0, %v1955
  %v1957 = vpop.f32.mrf.mxu0
  %v1958 = vadd.f32 0.0, %v1957
  %v1959 = vpop.f32.mrf.mxu0
  %v1960 = vadd.f32 0.0, %v1959
  %v1961 = vpop.f32.mrf.mxu0
  %v1962 = vadd.f32 0.0, %v1961
  %1963 = vmatprep.mubr.bf16.mxu0 0
  %1964 = vmatmul.mubr.bf16.gmra.mxu0 %v555
  %v1965 = vpop.f32.mrf.mxu0
  %v1966 = vadd.f32 0.0, %v1965
  %v1967 = vpop.f32.mrf.mxu0
  %v1968 = vadd.f32 0.0, %v1967
  %v1969 = vpop.f32.mrf.mxu0
  %v1970 = vadd.f32 0.0, %v1969
  %v1971 = vpop.f32.mrf.mxu0
  %v1972 = vadd.f32 0.0, %v1971
  %1973 = vmatprep.mubr.bf16.mxu0 0
  %1974 = vmatmul.mubr.bf16.gmra.mxu0 %v558
  %v1975 = vpop.f32.mrf.mxu0
  %v1976 = vadd.f32 0.0, %v1975
  %v1977 = vpop.f32.mrf.mxu0
  %v1978 = vadd.f32 0.0, %v1977
  %v1979 = vpop.f32.mrf.mxu0
  %v1980 = vadd.f32 0.0, %v1979
  %v1981 = vpop.f32.mrf.mxu0
  %v1982 = vadd.f32 0.0, %v1981
  %1983 = vmatprep.mubr.bf16.mxu0 0
  %1984 = vmatmul.mubr.bf16.gmra.mxu0 %v561
  %v1985 = vpop.f32.mrf.mxu0
  %v1986 = vadd.f32 0.0, %v1985
  %v1987 = vpop.f32.mrf.mxu0
  %v1988 = vadd.f32 0.0, %v1987
  %v1989 = vpop.f32.mrf.mxu0
  %v1990 = vadd.f32 0.0, %v1989
  %v1991 = vpop.f32.mrf.mxu0
  %v1992 = vadd.f32 0.0, %v1991
  %1993 = vmatprep.mubr.bf16.mxu0 0
  %1994 = vmatmul.mubr.bf16.gmra.mxu0 %v564
  %v1995 = vpop.f32.mrf.mxu0
  %v1996 = vadd.f32 0.0, %v1995
  %v1997 = vpop.f32.mrf.mxu0
  %v1998 = vadd.f32 0.0, %v1997
  %v1999 = vpop.f32.mrf.mxu0
  %v2000 = vadd.f32 0.0, %v1999
  %v2001 = vpop.f32.mrf.mxu0
  %v2002 = vadd.f32 0.0, %v2001
  %2003 = vmatprep.mubr.bf16.mxu0 0
  %2004 = vmatmul.mubr.bf16.gmra.mxu0 %v931
  %v2005 = vpop.f32.mrf.mxu0
  %v2006 = vadd.f32 0.0, %v2005
  %v2007 = vpop.f32.mrf.mxu0
  %v2008 = vadd.f32 0.0, %v2007
  %v2009 = vpop.f32.mrf.mxu0
  %v2010 = vadd.f32 0.0, %v2009
  %v2011 = vpop.f32.mrf.mxu0
  %v2012 = vadd.f32 0.0, %v2011
  %2013 = vmatprep.mubr.bf16.mxu0 0
  %2014 = vmatmul.mubr.bf16.gmra.mxu0 %v1857
  %v2015 = vpop.f32.mrf.mxu0
  %v2016 = vadd.f32 0.0, %v2015
  %v2017 = vpop.f32.mrf.mxu0
  %v2018 = vadd.f32 0.0, %v2017
  %v2019 = vpop.f32.mrf.mxu0
  %v2020 = vadd.f32 0.0, %v2019
  %v2021 = vpop.f32.mrf.mxu0
  %v2022 = vadd.f32 0.0, %v2021
  %2023 = vdwg.mxu0
  %2024 = vmatprep.subr.bf16.mxu0 0
  %2025 = vmatpush1.bf16.msra.mxu0 0
  %2026 = vmatprep.subr.bf16.mxu0 0
  %2027 = vmatpush1.bf16.msra.mxu0 0
  %2028 = vmatprep.subr.bf16.mxu0 0
  %2029 = vmatpush1.bf16.msra.mxu0 0
  %2030 = vmatprep.subr.bf16.mxu0 0
  %2031 = vmatpush1.bf16.msra.mxu0 0
  %2032 = vmatprep.subr.bf16.mxu0 0
  %2033 = vmatpush1.bf16.msra.mxu0 0
  %2034 = vmatprep.subr.bf16.mxu0 0
  %2035 = vmatpush1.bf16.msra.mxu0 0
  %2036 = vmatprep.subr.bf16.mxu0 %v1869
  %2037 = vmatpush1.bf16.msra.mxu0 %v1866
  %2038 = vmatprep.subr.bf16.mxu0 %v1847
  %2039 = vmatpush1.bf16.msra.mxu0 %v1846
  %2040 = vmatprep.subr.bf16.mxu0 0
  %2041 = vmatpush2.bf16.msra.mxu0 0
  %2042 = vmatprep.subr.bf16.mxu0 0
  %2043 = vmatpush2.bf16.msra.mxu0 0
  %2044 = vmatprep.subr.bf16.mxu0 0
  %2045 = vmatpush2.bf16.msra.mxu0 0
  %2046 = vmatprep.subr.bf16.mxu0 0
  %2047 = vmatpush2.bf16.msra.mxu0 0
  %2048 = vmatprep.subr.bf16.mxu0 0
  %2049 = vmatpush2.bf16.msra.mxu0 0
  %2050 = vmatprep.subr.bf16.mxu0 0
  %2051 = vmatpush2.bf16.msra.mxu0 0
  %2052 = vmatprep.subr.bf16.mxu0 0
  %2053 = vmatpush2.bf16.msra.mxu0 0
  %2054 = vmatprep.subr.bf16.mxu0 0
  %2055 = vmatpush2.bf16.msra.mxu0 0
  %2056 = vmatprep.mubr.bf16.mxu0 0
  %2057 = vmatmul.mubr.bf16.gmra.mxu0 %v537
  %v2058 = vpop.f32.mrf.mxu0
  %v2059 = vadd.f32 0.0, %v2058
  %v2060 = vpop.f32.mrf.mxu0
  %v2061 = vadd.f32 0.0, %v2060
  %v2062 = vpop.f32.mrf.mxu0
  %v2063 = vadd.f32 0.0, %v2062
  %v2064 = vpop.f32.mrf.mxu0
  %v2065 = vadd.f32 0.0, %v2064
  %2066 = vmatprep.mubr.bf16.mxu0 0
  %2067 = vmatmul.mubr.bf16.gmra.mxu0 %v540
  %v2068 = vpop.f32.mrf.mxu0
  %v2069 = vadd.f32 0.0, %v2068
  %v2070 = vpop.f32.mrf.mxu0
  %v2071 = vadd.f32 0.0, %v2070
  %v2072 = vpop.f32.mrf.mxu0
  %v2073 = vadd.f32 0.0, %v2072
  %v2074 = vpop.f32.mrf.mxu0
  %v2075 = vadd.f32 0.0, %v2074
  %2076 = vmatprep.mubr.bf16.mxu0 0
  %2077 = vmatmul.mubr.bf16.gmra.mxu0 %v543
  %v2078 = vpop.f32.mrf.mxu0
  %v2079 = vadd.f32 0.0, %v2078
  %v2080 = vpop.f32.mrf.mxu0
  %v2081 = vadd.f32 0.0, %v2080
  %v2082 = vpop.f32.mrf.mxu0
  %v2083 = vadd.f32 0.0, %v2082
  %v2084 = vpop.f32.mrf.mxu0
  %v2085 = vadd.f32 0.0, %v2084
  %2086 = vmatprep.mubr.bf16.mxu0 0
  %2087 = vmatmul.mubr.bf16.gmra.mxu0 %v546
  %v2088 = vpop.f32.mrf.mxu0
  %v2089 = vadd.f32 0.0, %v2088
  %v2090 = vpop.f32.mrf.mxu0
  %v2091 = vadd.f32 0.0, %v2090
  %v2092 = vpop.f32.mrf.mxu0
  %v2093 = vadd.f32 0.0, %v2092
  %v2094 = vpop.f32.mrf.mxu0
  %v2095 = vadd.f32 0.0, %v2094
  %2096 = vmatprep.mubr.bf16.mxu0 0
  %2097 = vmatmul.mubr.bf16.gmra.mxu0 %v549
  %v2098 = vpop.f32.mrf.mxu0
  %v2099 = vadd.f32 0.0, %v2098
  %v2100 = vpop.f32.mrf.mxu0
  %v2101 = vadd.f32 0.0, %v2100
  %v2102 = vpop.f32.mrf.mxu0
  %v2103 = vadd.f32 0.0, %v2102
  %v2104 = vpop.f32.mrf.mxu0
  %v2105 = vadd.f32 0.0, %v2104
  %2106 = vmatprep.mubr.bf16.mxu0 0
  %2107 = vmatmul.mubr.bf16.gmra.mxu0 %v552
  %v2108 = vpop.f32.mrf.mxu0
  %v2109 = vadd.f32 0.0, %v2108
  %v2110 = vpop.f32.mrf.mxu0
  %v2111 = vadd.f32 0.0, %v2110
  %v2112 = vpop.f32.mrf.mxu0
  %v2113 = vadd.f32 0.0, %v2112
  %v2114 = vpop.f32.mrf.mxu0
  %v2115 = vadd.f32 0.0, %v2114
  %2116 = vmatprep.mubr.bf16.mxu0 0
  %2117 = vmatmul.mubr.bf16.gmra.mxu0 %v555
  %v2118 = vpop.f32.mrf.mxu0
  %v2119 = vadd.f32 0.0, %v2118
  %v2120 = vpop.f32.mrf.mxu0
  %v2121 = vadd.f32 0.0, %v2120
  %v2122 = vpop.f32.mrf.mxu0
  %v2123 = vadd.f32 0.0, %v2122
  %v2124 = vpop.f32.mrf.mxu0
  %v2125 = vadd.f32 0.0, %v2124
  %2126 = vmatprep.mubr.bf16.mxu0 0
  %2127 = vmatmul.mubr.bf16.gmra.mxu0 %v558
  %v2128 = vpop.f32.mrf.mxu0
  %v2129 = vadd.f32 0.0, %v2128
  %v2130 = vpop.f32.mrf.mxu0
  %v2131 = vadd.f32 0.0, %v2130
  %v2132 = vpop.f32.mrf.mxu0
  %v2133 = vadd.f32 0.0, %v2132
  %v2134 = vpop.f32.mrf.mxu0
  %v2135 = vadd.f32 0.0, %v2134
  %2136 = vmatprep.mubr.bf16.mxu0 0
  %2137 = vmatmul.mubr.bf16.gmra.mxu0 %v561
  %v2138 = vpop.f32.mrf.mxu0
  %v2139 = vadd.f32 0.0, %v2138
  %v2140 = vpop.f32.mrf.mxu0
  %v2141 = vadd.f32 0.0, %v2140
  %v2142 = vpop.f32.mrf.mxu0
  %v2143 = vadd.f32 0.0, %v2142
  %v2144 = vpop.f32.mrf.mxu0
  %v2145 = vadd.f32 0.0, %v2144
  %2146 = vmatprep.mubr.bf16.mxu0 0
  %2147 = vmatmul.mubr.bf16.gmra.mxu0 %v564
  %v2148 = vpop.f32.mrf.mxu0
  %v2149 = vadd.f32 0.0, %v2148
  %v2150 = vpop.f32.mrf.mxu0
  %v2151 = vadd.f32 0.0, %v2150
  %v2152 = vpop.f32.mrf.mxu0
  %v2153 = vadd.f32 0.0, %v2152
  %v2154 = vpop.f32.mrf.mxu0
  %v2155 = vadd.f32 0.0, %v2154
  %2156 = vmatprep.mubr.bf16.mxu0 0
  %2157 = vmatmul.mubr.bf16.gmra.mxu0 %v931
  %v2158 = vpop.f32.mrf.mxu0
  %v2159 = vadd.f32 0.0, %v2158
  %v2160 = vpop.f32.mrf.mxu0
  %v2161 = vadd.f32 0.0, %v2160
  %v2162 = vpop.f32.mrf.mxu0
  %v2163 = vadd.f32 0.0, %v2162
  %v2164 = vpop.f32.mrf.mxu0
  %v2165 = vadd.f32 0.0, %v2164
  %2166 = vmatprep.mubr.bf16.mxu0 0
  %2167 = vmatmul.mubr.bf16.gmra.mxu0 %v1857
  %v2168 = vpop.f32.mrf.mxu0
  %v2169 = vadd.f32 0.0, %v2168
  %v2170 = vpop.f32.mrf.mxu0
  %v2171 = vadd.f32 0.0, %v2170
  %v2172 = vpop.f32.mrf.mxu0
  %v2173 = vadd.f32 0.0, %v2172
  %v2174 = vpop.f32.mrf.mxu0
  %v2175 = vadd.f32 0.0, %v2174
  %2176 = vdwg.mxu0
  %v2177 = vadd.f32 %v1714, %v1906
  %v2178 = vadd.f32 %v1715, %v1908
  %v2179 = vadd.f32 %v1716, %v2059
  %v2180 = vadd.f32 %v1717, %v2061
  %v2181 = vadd.f32 %v1718, %v1910
  %v2182 = vadd.f32 %v1719, %v1912
  %v2183 = vadd.f32 %v1720, %v2063
  %v2184 = vadd.f32 %v1721, %v2065
  %v2185 = vadd.f32 %v1722, %v1916
  %v2186 = vadd.f32 %v1723, %v1918
  %v2187 = vadd.f32 %v1724, %v2069
  %v2188 = vadd.f32 %v1725, %v2071
  %v2189 = vadd.f32 %v1726, %v1920
  %v2190 = vadd.f32 %v1727, %v1922
  %v2191 = vadd.f32 %v1728, %v2073
  %v2192 = vadd.f32 %v1729, %v2075
  %v2193 = vadd.f32 %v1730, %v1926
  %v2194 = vadd.f32 %v1731, %v1928
  %v2195 = vadd.f32 %v1732, %v2079
  %v2196 = vadd.f32 %v1733, %v2081
  %v2197 = vadd.f32 %v1734, %v1930
  %v2198 = vadd.f32 %v1735, %v1932
  %v2199 = vadd.f32 %v1736, %v2083
  %v2200 = vadd.f32 %v1737, %v2085
  %v2201 = vadd.f32 %v1738, %v1936
  %v2202 = vadd.f32 %v1739, %v1938
  %v2203 = vadd.f32 %v1740, %v2089
  %v2204 = vadd.f32 %v1741, %v2091
  %v2205 = vadd.f32 %v1742, %v1940
  %v2206 = vadd.f32 %v1743, %v1942
  %v2207 = vadd.f32 %v1744, %v2093
  %v2208 = vadd.f32 %v1745, %v2095
  %v2209 = vadd.f32 %v1746, %v1946
  %v2210 = vadd.f32 %v1747, %v1948
  %v2211 = vadd.f32 %v1748, %v2099
  %v2212 = vadd.f32 %v1749, %v2101
  %v2213 = vadd.f32 %v1750, %v1950
  %v2214 = vadd.f32 %v1751, %v1952
  %v2215 = vadd.f32 %v1752, %v2103
  %v2216 = vadd.f32 %v1753, %v2105
  %v2217 = vadd.f32 %v1754, %v1956
  %v2218 = vadd.f32 %v1755, %v1958
  %v2219 = vadd.f32 %v1756, %v2109
  %v2220 = vadd.f32 %v1757, %v2111
  %v2221 = vadd.f32 %v1758, %v1960
  %v2222 = vadd.f32 %v1759, %v1962
  %v2223 = vadd.f32 %v1760, %v2113
  %v2224 = vadd.f32 %v1761, %v2115
  %v2225 = vadd.f32 %v1762, %v1966
  %v2226 = vadd.f32 %v1763, %v1968
  %v2227 = vadd.f32 %v1764, %v2119
  %v2228 = vadd.f32 %v1765, %v2121
  %v2229 = vadd.f32 %v1766, %v1970
  %v2230 = vadd.f32 %v1767, %v1972
  %v2231 = vadd.f32 %v1768, %v2123
  %v2232 = vadd.f32 %v1769, %v2125
  %v2233 = vadd.f32 %v1770, %v1976
  %v2234 = vadd.f32 %v1771, %v1978
  %v2235 = vadd.f32 %v1772, %v2129
  %v2236 = vadd.f32 %v1773, %v2131
  %v2237 = vadd.f32 %v1774, %v1980
  %v2238 = vadd.f32 %v1775, %v1982
  %v2239 = vadd.f32 %v1776, %v2133
  %v2240 = vadd.f32 %v1777, %v2135
  %v2241 = vadd.f32 %v1778, %v1986
  %v2242 = vadd.f32 %v1779, %v1988
  %v2243 = vadd.f32 %v1780, %v2139
  %v2244 = vadd.f32 %v1781, %v2141
  %v2245 = vadd.f32 %v1782, %v1990
  %v2246 = vadd.f32 %v1783, %v1992
  %v2247 = vadd.f32 %v1784, %v2143
  %v2248 = vadd.f32 %v1785, %v2145
  %v2249 = vadd.f32 %v1786, %v1996
  %v2250 = vadd.f32 %v1787, %v1998
  %v2251 = vadd.f32 %v1788, %v2149
  %v2252 = vadd.f32 %v1789, %v2151
  %v2253 = vadd.f32 %v1790, %v2000
  %v2254 = vadd.f32 %v1791, %v2002
  %v2255 = vadd.f32 %v1792, %v2153
  %v2256 = vadd.f32 %v1793, %v2155
  %v2257 = vadd.f32 %v1794, %v2006
  %v2258 = vadd.f32 %v1795, %v2008
  %v2259 = vadd.f32 %v1796, %v2159
  %v2260 = vadd.f32 %v1797, %v2161
  %v2261 = vadd.f32 %v1798, %v2010
  %v2262 = vadd.f32 %v1799, %v2012
  %v2263 = vadd.f32 %v1800, %v2163
  %v2264 = vadd.f32 %v1801, %v2165
  %v2265 = vadd.f32 %v1802, %v2016
  %v2266 = vadd.f32 %v1803, %v2018
  %v2267 = vadd.f32 %v1804, %v2169
  %v2268 = vadd.f32 %v1805, %v2171
  %v2269 = vadd.f32 %v1806, %v2020
  %v2270 = vadd.f32 %v1807, %v2022
  %v2271 = vadd.f32 %v1808, %v2173
  %v2272 = vadd.f32 %v1809, %v2175
  %2297 = vrot.lane.b32.xlu0 %v2177, 108
  %v2298 = vpop.permute.xlu0 %2297
  %2299 = vrot.lane.b32.xlu0 %v2181, 108
  %v2300 = vpop.permute.xlu0 %2299
  %2301 = vrot.lane.b32.xlu0 %v2185, 108
  %v2302 = vpop.permute.xlu0 %2301
  %2303 = vrot.lane.b32.xlu0 %v2189, 108
  %v2304 = vpop.permute.xlu0 %2303
  %2305 = vrot.lane.b32.xlu0 %v2193, 108
  %v2306 = vpop.permute.xlu0 %2305
  %2307 = vrot.lane.b32.xlu0 %v2197, 108
  %v2308 = vpop.permute.xlu0 %2307
  %2309 = vrot.lane.b32.xlu0 %v2201, 108
  %v2310 = vpop.permute.xlu0 %2309
  %2311 = vrot.lane.b32.xlu0 %v2205, 108
  %v2312 = vpop.permute.xlu0 %2311
  %2313 = vrot.lane.b32.xlu0 %v2209, 108
  %v2314 = vpop.permute.xlu0 %2313
  %2315 = vrot.lane.b32.xlu0 %v2213, 108
  %v2316 = vpop.permute.xlu0 %2315
  %2317 = vrot.lane.b32.xlu0 %v2217, 108
  %v2318 = vpop.permute.xlu0 %2317
  %2319 = vrot.lane.b32.xlu0 %v2221, 108
  %v2320 = vpop.permute.xlu0 %2319
  %2321 = vrot.lane.b32.xlu0 %v2225, 108
  %v2322 = vpop.permute.xlu0 %2321
  %2323 = vrot.lane.b32.xlu0 %v2229, 108
  %v2324 = vpop.permute.xlu0 %2323
  %2325 = vrot.lane.b32.xlu0 %v2233, 108
  %v2326 = vpop.permute.xlu0 %2325
  %2327 = vrot.lane.b32.xlu0 %v2237, 108
  %v2328 = vpop.permute.xlu0 %2327
  %2329 = vrot.lane.b32.xlu0 %v2241, 108
  %v2330 = vpop.permute.xlu0 %2329
  %2331 = vrot.lane.b32.xlu0 %v2245, 108
  %v2332 = vpop.permute.xlu0 %2331
  %2333 = vrot.lane.b32.xlu0 %v2249, 108
  %v2334 = vpop.permute.xlu0 %2333
  %2335 = vrot.lane.b32.xlu0 %v2253, 108
  %v2336 = vpop.permute.xlu0 %2335
  %2337 = vrot.lane.b32.xlu0 %v2257, 108
  %v2338 = vpop.permute.xlu0 %2337
  %2339 = vrot.lane.b32.xlu0 %v2261, 108
  %v2340 = vpop.permute.xlu0 %2339
  %2341 = vrot.lane.b32.xlu0 %v2265, 108
  %v2342 = vpop.permute.xlu0 %2341
  %2343 = vrot.lane.b32.xlu0 %v2269, 108
  %v2344 = vpop.permute.xlu0 %2343
  %v2369 = vmax.f32 %v2177, %v2298
  %v2370 = vmax.f32 %v2181, %v2300
  %v2371 = vmax.f32 %v2185, %v2302
  %v2372 = vmax.f32 %v2189, %v2304
  %v2373 = vmax.f32 %v2193, %v2306
  %v2374 = vmax.f32 %v2197, %v2308
  %v2375 = vmax.f32 %v2201, %v2310
  %v2376 = vmax.f32 %v2205, %v2312
  %v2377 = vmax.f32 %v2209, %v2314
  %v2378 = vmax.f32 %v2213, %v2316
  %v2379 = vmax.f32 %v2217, %v2318
  %v2380 = vmax.f32 %v2221, %v2320
  %v2381 = vmax.f32 %v2225, %v2322
  %v2382 = vmax.f32 %v2229, %v2324
  %v2383 = vmax.f32 %v2233, %v2326
  %v2384 = vmax.f32 %v2237, %v2328
  %v2385 = vmax.f32 %v2241, %v2330
  %v2386 = vmax.f32 %v2245, %v2332
  %v2387 = vmax.f32 %v2249, %v2334
  %v2388 = vmax.f32 %v2253, %v2336
  %v2389 = vmax.f32 %v2257, %v2338
  %v2390 = vmax.f32 %v2261, %v2340
  %v2391 = vmax.f32 %v2265, %v2342
  %v2392 = vmax.f32 %v2269, %v2344
  %vm2393 = vcmask 162816
  %2394 = vst.msk [vmem:[#allocation2] sm:$0xff] %vm2393, %v2369
  %2395 = vst.msk [vmem:[#allocation2 + $0x10] sm:$0xff] %vm2393, %v2370
  %2396 = vst.msk [vmem:[#allocation2 + $0x20] sm:$0xff] %vm2393, %v2371
  %2397 = vst.msk [vmem:[#allocation2 + $0x30] sm:$0xff] %vm2393, %v2372
  %2398 = vst.msk [vmem:[#allocation2 + $0x40] sm:$0xff] %vm2393, %v2373
  %2399 = vst.msk [vmem:[#allocation2 + $0x50] sm:$0xff] %vm2393, %v2374
  %2400 = vst.msk [vmem:[#allocation2 + $0x60] sm:$0xff] %vm2393, %v2375
  %2401 = vst.msk [vmem:[#allocation2 + $0x70] sm:$0xff] %vm2393, %v2376
  %2402 = vst.msk [vmem:[#allocation2 + $0x80] sm:$0xff] %vm2393, %v2377
  %2403 = vst.msk [vmem:[#allocation2 + $0x90] sm:$0xff] %vm2393, %v2378
  %2404 = vst.msk [vmem:[#allocation2 + $0xa0] sm:$0xff] %vm2393, %v2379
  %2405 = vst.msk [vmem:[#allocation2 + $0xb0] sm:$0xff] %vm2393, %v2380
  %2406 = vst.msk [vmem:[#allocation2 + $0xc0] sm:$0xff] %vm2393, %v2381
  %2407 = vst.msk [vmem:[#allocation2 + $0xd0] sm:$0xff] %vm2393, %v2382
  %2408 = vst.msk [vmem:[#allocation2 + $0xe0] sm:$0xff] %vm2393, %v2383
  %2409 = vst.msk [vmem:[#allocation2 + $0xf0] sm:$0xff] %vm2393, %v2384
  %2410 = vst.msk [vmem:[#allocation2 + $0x100] sm:$0xff] %vm2393, %v2385
  %2411 = vst.msk [vmem:[#allocation2 + $0x110] sm:$0xff] %vm2393, %v2386
  %2412 = vst.msk [vmem:[#allocation2 + $0x120] sm:$0xff] %vm2393, %v2387
  %2413 = vst.msk [vmem:[#allocation2 + $0x130] sm:$0xff] %vm2393, %v2388
  %2414 = vst.msk [vmem:[#allocation2 + $0x140] sm:$0xff] %vm2393, %v2389
  %2415 = vst.msk [vmem:[#allocation2 + $0x150] sm:$0xff] %vm2393, %v2390
  %2416 = vst.msk [vmem:[#allocation2 + $0x160] sm:$0xff] %vm2393, %v2391
  %2417 = vst.msk [vmem:[#allocation2 + $0x170] sm:$0xff] %vm2393, %v2392
  %2442 = vrot.lane.b32.xlu0 %v2369, 108
  %v2443 = vpop.permute.xlu0 %2442
  %2444 = vrot.lane.b32.xlu0 %v2370, 108
  %v2445 = vpop.permute.xlu0 %2444
  %2446 = vrot.lane.b32.xlu0 %v2371, 108
  %v2447 = vpop.permute.xlu0 %2446
  %2448 = vrot.lane.b32.xlu0 %v2372, 108
  %v2449 = vpop.permute.xlu0 %2448
  %2450 = vrot.lane.b32.xlu0 %v2373, 108
  %v2451 = vpop.permute.xlu0 %2450
  %2452 = vrot.lane.b32.xlu0 %v2374, 108
  %v2453 = vpop.permute.xlu0 %2452
  %2454 = vrot.lane.b32.xlu0 %v2375, 108
  %v2455 = vpop.permute.xlu0 %2454
  %2456 = vrot.lane.b32.xlu0 %v2376, 108
  %v2457 = vpop.permute.xlu0 %2456
  %2458 = vrot.lane.b32.xlu0 %v2377, 108
  %v2459 = vpop.permute.xlu0 %2458
  %2460 = vrot.lane.b32.xlu0 %v2378, 108
  %v2461 = vpop.permute.xlu0 %2460
  %2462 = vrot.lane.b32.xlu0 %v2379, 108
  %v2463 = vpop.permute.xlu0 %2462
  %2464 = vrot.lane.b32.xlu0 %v2380, 108
  %v2465 = vpop.permute.xlu0 %2464
  %2466 = vrot.lane.b32.xlu0 %v2381, 108
  %v2467 = vpop.permute.xlu0 %2466
  %2468 = vrot.lane.b32.xlu0 %v2382, 108
  %v2469 = vpop.permute.xlu0 %2468
  %2470 = vrot.lane.b32.xlu0 %v2383, 108
  %v2471 = vpop.permute.xlu0 %2470
  %2472 = vrot.lane.b32.xlu0 %v2384, 108
  %v2473 = vpop.permute.xlu0 %2472
  %2474 = vrot.lane.b32.xlu0 %v2385, 108
  %v2475 = vpop.permute.xlu0 %2474
  %2476 = vrot.lane.b32.xlu0 %v2386, 108
  %v2477 = vpop.permute.xlu0 %2476
  %2478 = vrot.lane.b32.xlu0 %v2387, 108
  %v2479 = vpop.permute.xlu0 %2478
  %2480 = vrot.lane.b32.xlu0 %v2388, 108
  %v2481 = vpop.permute.xlu0 %2480
  %2482 = vrot.lane.b32.xlu0 %v2389, 108
  %v2483 = vpop.permute.xlu0 %2482
  %2484 = vrot.lane.b32.xlu0 %v2390, 108
  %v2485 = vpop.permute.xlu0 %2484
  %2486 = vrot.lane.b32.xlu0 %v2391, 108
  %v2487 = vpop.permute.xlu0 %2486
  %2488 = vrot.lane.b32.xlu0 %v2392, 108
  %v2489 = vpop.permute.xlu0 %2488
  %vm2514 = vcmask 326816
  %2515 = vst.msk [vmem:[#allocation2] sm:$0xff] %vm2514, %v2443
  %2516 = vst.msk [vmem:[#allocation2 + $0x10] sm:$0xff] %vm2514, %v2445
  %2517 = vst.msk [vmem:[#allocation2 + $0x20] sm:$0xff] %vm2514, %v2447
  %2518 = vst.msk [vmem:[#allocation2 + $0x30] sm:$0xff] %vm2514, %v2449
  %2519 = vst.msk [vmem:[#allocation2 + $0x40] sm:$0xff] %vm2514, %v2451
  %2520 = vst.msk [vmem:[#allocation2 + $0x50] sm:$0xff] %vm2514, %v2453
  %2521 = vst.msk [vmem:[#allocation2 + $0x60] sm:$0xff] %vm2514, %v2455
  %2522 = vst.msk [vmem:[#allocation2 + $0x70] sm:$0xff] %vm2514, %v2457
  %2523 = vst.msk [vmem:[#allocation2 + $0x80] sm:$0xff] %vm2514, %v2459
  %2524 = vst.msk [vmem:[#allocation2 + $0x90] sm:$0xff] %vm2514, %v2461
  %2525 = vst.msk [vmem:[#allocation2 + $0xa0] sm:$0xff] %vm2514, %v2463
  %2526 = vst.msk [vmem:[#allocation2 + $0xb0] sm:$0xff] %vm2514, %v2465
  %2527 = vst.msk [vmem:[#allocation2 + $0xc0] sm:$0xff] %vm2514, %v2467
  %2528 = vst.msk [vmem:[#allocation2 + $0xd0] sm:$0xff] %vm2514, %v2469
  %2529 = vst.msk [vmem:[#allocation2 + $0xe0] sm:$0xff] %vm2514, %v2471
  %2530 = vst.msk [vmem:[#allocation2 + $0xf0] sm:$0xff] %vm2514, %v2473
  %2531 = vst.msk [vmem:[#allocation2 + $0x100] sm:$0xff] %vm2514, %v2475
  %2532 = vst.msk [vmem:[#allocation2 + $0x110] sm:$0xff] %vm2514, %v2477
  %2533 = vst.msk [vmem:[#allocation2 + $0x120] sm:$0xff] %vm2514, %v2479
  %2534 = vst.msk [vmem:[#allocation2 + $0x130] sm:$0xff] %vm2514, %v2481
  %2535 = vst.msk [vmem:[#allocation2 + $0x140] sm:$0xff] %vm2514, %v2483
  %2536 = vst.msk [vmem:[#allocation2 + $0x150] sm:$0xff] %vm2514, %v2485
  %2537 = vst.msk [vmem:[#allocation2 + $0x160] sm:$0xff] %vm2514, %v2487
  %2538 = vst.msk [vmem:[#allocation2 + $0x170] sm:$0xff] %vm2514, %v2489
  %2539 = vrot.lane.b32.xlu0 %v2369, 88
  %v2540 = vpop.permute.xlu0 %2539
  %2541 = vrot.lane.b32.xlu0 %v2370, 88
  %v2542 = vpop.permute.xlu0 %2541
  %2543 = vrot.lane.b32.xlu0 %v2371, 88
  %v2544 = vpop.permute.xlu0 %2543
  %2545 = vrot.lane.b32.xlu0 %v2372, 88
  %v2546 = vpop.permute.xlu0 %2545
  %2547 = vrot.lane.b32.xlu0 %v2373, 88
  %v2548 = vpop.permute.xlu0 %2547
  %2549 = vrot.lane.b32.xlu0 %v2374, 88
  %v2550 = vpop.permute.xlu0 %2549
  %2551 = vrot.lane.b32.xlu0 %v2375, 88
  %v2552 = vpop.permute.xlu0 %2551
  %2553 = vrot.lane.b32.xlu0 %v2376, 88
  %v2554 = vpop.permute.xlu0 %2553
  %2555 = vrot.lane.b32.xlu0 %v2377, 88
  %v2556 = vpop.permute.xlu0 %2555
  %2557 = vrot.lane.b32.xlu0 %v2378, 88
  %v2558 = vpop.permute.xlu0 %2557
  %2559 = vrot.lane.b32.xlu0 %v2379, 88
  %v2560 = vpop.permute.xlu0 %2559
  %2561 = vrot.lane.b32.xlu0 %v2380, 88
  %v2562 = vpop.permute.xlu0 %2561
  %2563 = vrot.lane.b32.xlu0 %v2381, 88
  %v2564 = vpop.permute.xlu0 %2563
  %2565 = vrot.lane.b32.xlu0 %v2382, 88
  %v2566 = vpop.permute.xlu0 %2565
  %2567 = vrot.lane.b32.xlu0 %v2383, 88
  %v2568 = vpop.permute.xlu0 %2567
  %2569 = vrot.lane.b32.xlu0 %v2384, 88
  %v2570 = vpop.permute.xlu0 %2569
  %2571 = vrot.lane.b32.xlu0 %v2385, 88
  %v2572 = vpop.permute.xlu0 %2571
  %2573 = vrot.lane.b32.xlu0 %v2386, 88
  %v2574 = vpop.permute.xlu0 %2573
  %2575 = vrot.lane.b32.xlu0 %v2387, 88
  %v2576 = vpop.permute.xlu0 %2575
  %2577 = vrot.lane.b32.xlu0 %v2388, 88
  %v2578 = vpop.permute.xlu0 %2577
  %2579 = vrot.lane.b32.xlu0 %v2389, 88
  %v2580 = vpop.permute.xlu0 %2579
  %2581 = vrot.lane.b32.xlu0 %v2390, 88
  %v2582 = vpop.permute.xlu0 %2581
  %2583 = vrot.lane.b32.xlu0 %v2391, 88
  %v2584 = vpop.permute.xlu0 %2583
  %2585 = vrot.lane.b32.xlu0 %v2392, 88
  %v2586 = vpop.permute.xlu0 %2585
  %vm2611 = vcmask 490816
  %2612 = vst.msk [vmem:[#allocation2] sm:$0xff] %vm2611, %v2540
  %2613 = vst.msk [vmem:[#allocation2 + $0x10] sm:$0xff] %vm2611, %v2542
  %2614 = vst.msk [vmem:[#allocation2 + $0x20] sm:$0xff] %vm2611, %v2544
  %2615 = vst.msk [vmem:[#allocation2 + $0x30] sm:$0xff] %vm2611, %v2546
  %2616 = vst.msk [vmem:[#allocation2 + $0x40] sm:$0xff] %vm2611, %v2548
  %2617 = vst.msk [vmem:[#allocation2 + $0x50] sm:$0xff] %vm2611, %v2550
  %2618 = vst.msk [vmem:[#allocation2 + $0x60] sm:$0xff] %vm2611, %v2552
  %2619 = vst.msk [vmem:[#allocation2 + $0x70] sm:$0xff] %vm2611, %v2554
  %2620 = vst.msk [vmem:[#allocation2 + $0x80] sm:$0xff] %vm2611, %v2556
  %2621 = vst.msk [vmem:[#allocation2 + $0x90] sm:$0xff] %vm2611, %v2558
  %2622 = vst.msk [vmem:[#allocation2 + $0xa0] sm:$0xff] %vm2611, %v2560
  %2623 = vst.msk [vmem:[#allocation2 + $0xb0] sm:$0xff] %vm2611, %v2562
  %2624 = vst.msk [vmem:[#allocation2 + $0xc0] sm:$0xff] %vm2611, %v2564
  %2625 = vst.msk [vmem:[#allocation2 + $0xd0] sm:$0xff] %vm2611, %v2566
  %2626 = vst.msk [vmem:[#allocation2 + $0xe0] sm:$0xff] %vm2611, %v2568
  %2627 = vst.msk [vmem:[#allocation2 + $0xf0] sm:$0xff] %vm2611, %v2570
  %2628 = vst.msk [vmem:[#allocation2 + $0x100] sm:$0xff] %vm2611, %v2572
  %2629 = vst.msk [vmem:[#allocation2 + $0x110] sm:$0xff] %vm2611, %v2574
  %2630 = vst.msk [vmem:[#allocation2 + $0x120] sm:$0xff] %vm2611, %v2576
  %2631 = vst.msk [vmem:[#allocation2 + $0x130] sm:$0xff] %vm2611, %v2578
  %2632 = vst.msk [vmem:[#allocation2 + $0x140] sm:$0xff] %vm2611, %v2580
  %2633 = vst.msk [vmem:[#allocation2 + $0x150] sm:$0xff] %vm2611, %v2582
  %2634 = vst.msk [vmem:[#allocation2 + $0x160] sm:$0xff] %vm2611, %v2584
  %2635 = vst.msk [vmem:[#allocation2 + $0x170] sm:$0xff] %vm2611, %v2586
  %2660 = vrot.lane.b32.xlu0 %v2178, 108
  %v2661 = vpop.permute.xlu0 %2660
  %2662 = vrot.lane.b32.xlu0 %v2182, 108
  %v2663 = vpop.permute.xlu0 %2662
  %2664 = vrot.lane.b32.xlu0 %v2186, 108
  %v2665 = vpop.permute.xlu0 %2664
  %2666 = vrot.lane.b32.xlu0 %v2190, 108
  %v2667 = vpop.permute.xlu0 %2666
  %2668 = vrot.lane.b32.xlu0 %v2194, 108
  %v2669 = vpop.permute.xlu0 %2668
  %2670 = vrot.lane.b32.xlu0 %v2198, 108
  %v2671 = vpop.permute.xlu0 %2670
  %2672 = vrot.lane.b32.xlu0 %v2202, 108
  %v2673 = vpop.permute.xlu0 %2672
  %2674 = vrot.lane.b32.xlu0 %v2206, 108
  %v2675 = vpop.permute.xlu0 %2674
  %2676 = vrot.lane.b32.xlu0 %v2210, 108
  %v2677 = vpop.permute.xlu0 %2676
  %2678 = vrot.lane.b32.xlu0 %v2214, 108
  %v2679 = vpop.permute.xlu0 %2678
  %2680 = vrot.lane.b32.xlu0 %v2218, 108
  %v2681 = vpop.permute.xlu0 %2680
  %2682 = vrot.lane.b32.xlu0 %v2222, 108
  %v2683 = vpop.permute.xlu0 %2682
  %2684 = vrot.lane.b32.xlu0 %v2226, 108
  %v2685 = vpop.permute.xlu0 %2684
  %2686 = vrot.lane.b32.xlu0 %v2230, 108
  %v2687 = vpop.permute.xlu0 %2686
  %2688 = vrot.lane.b32.xlu0 %v2234, 108
  %v2689 = vpop.permute.xlu0 %2688
  %2690 = vrot.lane.b32.xlu0 %v2238, 108
  %v2691 = vpop.permute.xlu0 %2690
  %2692 = vrot.lane.b32.xlu0 %v2242, 108
  %v2693 = vpop.permute.xlu0 %2692
  %2694 = vrot.lane.b32.xlu0 %v2246, 108
  %v2695 = vpop.permute.xlu0 %2694
  %2696 = vrot.lane.b32.xlu0 %v2250, 108
  %v2697 = vpop.permute.xlu0 %2696
  %2698 = vrot.lane.b32.xlu0 %v2254, 108
  %v2699 = vpop.permute.xlu0 %2698
  %2700 = vrot.lane.b32.xlu0 %v2258, 108
  %v2701 = vpop.permute.xlu0 %2700
  %2702 = vrot.lane.b32.xlu0 %v2262, 108
  %v2703 = vpop.permute.xlu0 %2702
  %2704 = vrot.lane.b32.xlu0 %v2266, 108
  %v2705 = vpop.permute.xlu0 %2704
  %2706 = vrot.lane.b32.xlu0 %v2270, 108
  %v2707 = vpop.permute.xlu0 %2706
  %v2732 = vmax.f32 %v2177, %v2661
  %v2733 = vmax.f32 %v2178, %v2661
  %v2734 = vmax.f32 %v2181, %v2663
  %v2735 = vmax.f32 %v2182, %v2663
  %v2736 = vmax.f32 %v2185, %v2665
  %v2737 = vmax.f32 %v2186, %v2665
  %v2738 = vmax.f32 %v2189, %v2667
  %v2739 = vmax.f32 %v2190, %v2667
  %v2740 = vmax.f32 %v2193, %v2669
  %v2741 = vmax.f32 %v2194, %v2669
  %v2742 = vmax.f32 %v2197, %v2671
  %v2743 = vmax.f32 %v2198, %v2671
  %v2744 = vmax.f32 %v2201, %v2673
  %v2745 = vmax.f32 %v2202, %v2673
  %v2746 = vmax.f32 %v2205, %v2675
  %v2747 = vmax.f32 %v2206, %v2675
  %v2748 = vmax.f32 %v2209, %v2677
  %v2749 = vmax.f32 %v2210, %v2677
  %v2750 = vmax.f32 %v2213, %v2679
  %v2751 = vmax.f32 %v2214, %v2679
  %v2752 = vmax.f32 %v2217, %v2681
  %v2753 = vmax.f32 %v2218, %v2681
  %v2754 = vmax.f32 %v2221, %v2683
  %v2755 = vmax.f32 %v2222, %v2683
  %v2756 = vmax.f32 %v2225, %v2685
  %v2757 = vmax.f32 %v2226, %v2685
  %v2758 = vmax.f32 %v2229, %v2687
  %v2759 = vmax.f32 %v2230, %v2687
  %v2760 = vmax.f32 %v2233, %v2689
  %v2761 = vmax.f32 %v2234, %v2689
  %v2762 = vmax.f32 %v2237, %v2691
  %v2763 = vmax.f32 %v2238, %v2691
  %v2764 = vmax.f32 %v2241, %v2693
  %v2765 = vmax.f32 %v2242, %v2693
  %v2766 = vmax.f32 %v2245, %v2695
  %v2767 = vmax.f32 %v2246, %v2695
  %v2768 = vmax.f32 %v2249, %v2697
  %v2769 = vmax.f32 %v2250, %v2697
  %v2770 = vmax.f32 %v2253, %v2699
  %v2771 = vmax.f32 %v2254, %v2699
  %v2772 = vmax.f32 %v2257, %v2701
  %v2773 = vmax.f32 %v2258, %v2701
  %v2774 = vmax.f32 %v2261, %v2703
  %v2775 = vmax.f32 %v2262, %v2703
  %v2776 = vmax.f32 %v2265, %v2705
  %v2777 = vmax.f32 %v2266, %v2705
  %v2778 = vmax.f32 %v2269, %v2707
  %v2779 = vmax.f32 %v2270, %v2707
  %2828 = vrot.lane.b32.xlu0 %v2732, 68
  %v2829 = vpop.permute.xlu0 %2828
  %2830 = vrot.lane.b32.xlu0 %v2733, 68
  %v2831 = vpop.permute.xlu0 %2830
  %2832 = vrot.lane.b32.xlu0 %v2734, 68
  %v2833 = vpop.permute.xlu0 %2832
  %2834 = vrot.lane.b32.xlu0 %v2735, 68
  %v2835 = vpop.permute.xlu0 %2834
  %2836 = vrot.lane.b32.xlu0 %v2736, 68
  %v2837 = vpop.permute.xlu0 %2836
  %2838 = vrot.lane.b32.xlu0 %v2737, 68
  %v2839 = vpop.permute.xlu0 %2838
  %2840 = vrot.lane.b32.xlu0 %v2738, 68
  %v2841 = vpop.permute.xlu0 %2840
  %2842 = vrot.lane.b32.xlu0 %v2739, 68
  %v2843 = vpop.permute.xlu0 %2842
  %2844 = vrot.lane.b32.xlu0 %v2740, 68
  %v2845 = vpop.permute.xlu0 %2844
  %2846 = vrot.lane.b32.xlu0 %v2741, 68
  %v2847 = vpop.permute.xlu0 %2846
  %2848 = vrot.lane.b32.xlu0 %v2742, 68
  %v2849 = vpop.permute.xlu0 %2848
  %2850 = vrot.lane.b32.xlu0 %v2743, 68
  %v2851 = vpop.permute.xlu0 %2850
  %2852 = vrot.lane.b32.xlu0 %v2744, 68
  %v2853 = vpop.permute.xlu0 %2852
  %2854 = vrot.lane.b32.xlu0 %v2745, 68
  %v2855 = vpop.permute.xlu0 %2854
  %2856 = vrot.lane.b32.xlu0 %v2746, 68
  %v2857 = vpop.permute.xlu0 %2856
  %2858 = vrot.lane.b32.xlu0 %v2747, 68
  %v2859 = vpop.permute.xlu0 %2858
  %2860 = vrot.lane.b32.xlu0 %v2748, 68
  %v2861 = vpop.permute.xlu0 %2860
  %2862 = vrot.lane.b32.xlu0 %v2749, 68
  %v2863 = vpop.permute.xlu0 %2862
  %2864 = vrot.lane.b32.xlu0 %v2750, 68
  %v2865 = vpop.permute.xlu0 %2864
  %2866 = vrot.lane.b32.xlu0 %v2751, 68
  %v2867 = vpop.permute.xlu0 %2866
  %2868 = vrot.lane.b32.xlu0 %v2752, 68
  %v2869 = vpop.permute.xlu0 %2868
  %2870 = vrot.lane.b32.xlu0 %v2753, 68
  %v2871 = vpop.permute.xlu0 %2870
  %2872 = vrot.lane.b32.xlu0 %v2754, 68
  %v2873 = vpop.permute.xlu0 %2872
  %2874 = vrot.lane.b32.xlu0 %v2755, 68
  %v2875 = vpop.permute.xlu0 %2874
  %2876 = vrot.lane.b32.xlu0 %v2756, 68
  %v2877 = vpop.permute.xlu0 %2876
  %2878 = vrot.lane.b32.xlu0 %v2757, 68
  %v2879 = vpop.permute.xlu0 %2878
  %2880 = vrot.lane.b32.xlu0 %v2758, 68
  %v2881 = vpop.permute.xlu0 %2880
  %2882 = vrot.lane.b32.xlu0 %v2759, 68
  %v2883 = vpop.permute.xlu0 %2882
  %2884 = vrot.lane.b32.xlu0 %v2760, 68
  %v2885 = vpop.permute.xlu0 %2884
  %2886 = vrot.lane.b32.xlu0 %v2761, 68
  %v2887 = vpop.permute.xlu0 %2886
  %2888 = vrot.lane.b32.xlu0 %v2762, 68
  %v2889 = vpop.permute.xlu0 %2888
  %2890 = vrot.lane.b32.xlu0 %v2763, 68
  %v2891 = vpop.permute.xlu0 %2890
  %2892 = vrot.lane.b32.xlu0 %v2764, 68
  %v2893 = vpop.permute.xlu0 %2892
  %2894 = vrot.lane.b32.xlu0 %v2765, 68
  %v2895 = vpop.permute.xlu0 %2894
  %2896 = vrot.lane.b32.xlu0 %v2766, 68
  %v2897 = vpop.permute.xlu0 %2896
  %2898 = vrot.lane.b32.xlu0 %v2767, 68
  %v2899 = vpop.permute.xlu0 %2898
  %2900 = vrot.lane.b32.xlu0 %v2768, 68
  %v2901 = vpop.permute.xlu0 %2900
  %2902 = vrot.lane.b32.xlu0 %v2769, 68
  %v2903 = vpop.permute.xlu0 %2902
  %2904 = vrot.lane.b32.xlu0 %v2770, 68
  %v2905 = vpop.permute.xlu0 %2904
  %2906 = vrot.lane.b32.xlu0 %v2771, 68
  %v2907 = vpop.permute.xlu0 %2906
  %2908 = vrot.lane.b32.xlu0 %v2772, 68
  %v2909 = vpop.permute.xlu0 %2908
  %2910 = vrot.lane.b32.xlu0 %v2773, 68
  %v2911 = vpop.permute.xlu0 %2910
  %2912 = vrot.lane.b32.xlu0 %v2774, 68
  %v2913 = vpop.permute.xlu0 %2912
  %2914 = vrot.lane.b32.xlu0 %v2775, 68
  %v2915 = vpop.permute.xlu0 %2914
  %2916 = vrot.lane.b32.xlu0 %v2776, 68
  %v2917 = vpop.permute.xlu0 %2916
  %2918 = vrot.lane.b32.xlu0 %v2777, 68
  %v2919 = vpop.permute.xlu0 %2918
  %2920 = vrot.lane.b32.xlu0 %v2778, 68
  %v2921 = vpop.permute.xlu0 %2920
  %2922 = vrot.lane.b32.xlu0 %v2779, 68
  %v2923 = vpop.permute.xlu0 %2922
  %vm2924 = vcmask 556032
  %v2925 = vsel %vm2924, %v2829, %v2831
  %v2926 = vsel %vm2924, %v2833, %v2835
  %v2927 = vsel %vm2924, %v2837, %v2839
  %v2928 = vsel %vm2924, %v2841, %v2843
  %v2929 = vsel %vm2924, %v2845, %v2847
  %v2930 = vsel %vm2924, %v2849, %v2851
  %v2931 = vsel %vm2924, %v2853, %v2855
  %v2932 = vsel %vm2924, %v2857, %v2859
  %v2933 = vsel %vm2924, %v2861, %v2863
  %v2934 = vsel %vm2924, %v2865, %v2867
  %v2935 = vsel %vm2924, %v2869, %v2871
  %v2936 = vsel %vm2924, %v2873, %v2875
  %v2937 = vsel %vm2924, %v2877, %v2879
  %v2938 = vsel %vm2924, %v2881, %v2883
  %v2939 = vsel %vm2924, %v2885, %v2887
  %v2940 = vsel %vm2924, %v2889, %v2891
  %v2941 = vsel %vm2924, %v2893, %v2895
  %v2942 = vsel %vm2924, %v2897, %v2899
  %v2943 = vsel %vm2924, %v2901, %v2903
  %v2944 = vsel %vm2924, %v2905, %v2907
  %v2945 = vsel %vm2924, %v2909, %v2911
  %v2946 = vsel %vm2924, %v2913, %v2915
  %v2947 = vsel %vm2924, %v2917, %v2919
  %v2948 = vsel %vm2924, %v2921, %v2923
  %vm2973 = vcmask 654816
  %2974 = vst.msk [vmem:[#allocation2] sm:$0xff] %vm2973, %v2925
  %2975 = vst.msk [vmem:[#allocation2 + $0x10] sm:$0xff] %vm2973, %v2926
  %2976 = vst.msk [vmem:[#allocation2 + $0x20] sm:$0xff] %vm2973, %v2927
  %2977 = vst.msk [vmem:[#allocation2 + $0x30] sm:$0xff] %vm2973, %v2928
  %2978 = vst.msk [vmem:[#allocation2 + $0x40] sm:$0xff] %vm2973, %v2929
  %2979 = vst.msk [vmem:[#allocation2 + $0x50] sm:$0xff] %vm2973, %v2930
  %2980 = vst.msk [vmem:[#allocation2 + $0x60] sm:$0xff] %vm2973, %v2931
  %2981 = vst.msk [vmem:[#allocation2 + $0x70] sm:$0xff] %vm2973, %v2932
  %2982 = vst.msk [vmem:[#allocation2 + $0x80] sm:$0xff] %vm2973, %v2933
  %2983 = vst.msk [vmem:[#allocation2 + $0x90] sm:$0xff] %vm2973, %v2934
  %2984 = vst.msk [vmem:[#allocation2 + $0xa0] sm:$0xff] %vm2973, %v2935
  %2985 = vst.msk [vmem:[#allocation2 + $0xb0] sm:$0xff] %vm2973, %v2936
  %2986 = vst.msk [vmem:[#allocation2 + $0xc0] sm:$0xff] %vm2973, %v2937
  %2987 = vst.msk [vmem:[#allocation2 + $0xd0] sm:$0xff] %vm2973, %v2938
  %2988 = vst.msk [vmem:[#allocation2 + $0xe0] sm:$0xff] %vm2973, %v2939
  %2989 = vst.msk [vmem:[#allocation2 + $0xf0] sm:$0xff] %vm2973, %v2940
  %2990 = vst.msk [vmem:[#allocation2 + $0x100] sm:$0xff] %vm2973, %v2941
  %2991 = vst.msk [vmem:[#allocation2 + $0x110] sm:$0xff] %vm2973, %v2942
  %2992 = vst.msk [vmem:[#allocation2 + $0x120] sm:$0xff] %vm2973, %v2943
  %2993 = vst.msk [vmem:[#allocation2 + $0x130] sm:$0xff] %vm2973, %v2944
  %2994 = vst.msk [vmem:[#allocation2 + $0x140] sm:$0xff] %vm2973, %v2945
  %2995 = vst.msk [vmem:[#allocation2 + $0x150] sm:$0xff] %vm2973, %v2946
  %2996 = vst.msk [vmem:[#allocation2 + $0x160] sm:$0xff] %vm2973, %v2947
  %2997 = vst.msk [vmem:[#allocation2 + $0x170] sm:$0xff] %vm2973, %v2948
  %2998 = vrot.lane.b32.xlu0 %v2733, 48
  %v2999 = vpop.permute.xlu0 %2998
  %3000 = vrot.lane.b32.xlu0 %v2735, 48
  %v3001 = vpop.permute.xlu0 %3000
  %3002 = vrot.lane.b32.xlu0 %v2737, 48
  %v3003 = vpop.permute.xlu0 %3002
  %3004 = vrot.lane.b32.xlu0 %v2739, 48
  %v3005 = vpop.permute.xlu0 %3004
  %3006 = vrot.lane.b32.xlu0 %v2741, 48
  %v3007 = vpop.permute.xlu0 %3006
  %3008 = vrot.lane.b32.xlu0 %v2743, 48
  %v3009 = vpop.permute.xlu0 %3008
  %3010 = vrot.lane.b32.xlu0 %v2745, 48
  %v3011 = vpop.permute.xlu0 %3010
  %3012 = vrot.lane.b32.xlu0 %v2747, 48
  %v3013 = vpop.permute.xlu0 %3012
  %3014 = vrot.lane.b32.xlu0 %v2749, 48
  %v3015 = vpop.permute.xlu0 %3014
  %3016 = vrot.lane.b32.xlu0 %v2751, 48
  %v3017 = vpop.permute.xlu0 %3016
  %3018 = vrot.lane.b32.xlu0 %v2753, 48
  %v3019 = vpop.permute.xlu0 %3018
  %3020 = vrot.lane.b32.xlu0 %v2755, 48
  %v3021 = vpop.permute.xlu0 %3020
  %3022 = vrot.lane.b32.xlu0 %v2757, 48
  %v3023 = vpop.permute.xlu0 %3022
  %3024 = vrot.lane.b32.xlu0 %v2759, 48
  %v3025 = vpop.permute.xlu0 %3024
  %3026 = vrot.lane.b32.xlu0 %v2761, 48
  %v3027 = vpop.permute.xlu0 %3026
  %3028 = vrot.lane.b32.xlu0 %v2763, 48
  %v3029 = vpop.permute.xlu0 %3028
  %3030 = vrot.lane.b32.xlu0 %v2765, 48
  %v3031 = vpop.permute.xlu0 %3030
  %3032 = vrot.lane.b32.xlu0 %v2767, 48
  %v3033 = vpop.permute.xlu0 %3032
  %3034 = vrot.lane.b32.xlu0 %v2769, 48
  %v3035 = vpop.permute.xlu0 %3034
  %3036 = vrot.lane.b32.xlu0 %v2771, 48
  %v3037 = vpop.permute.xlu0 %3036
  %3038 = vrot.lane.b32.xlu0 %v2773, 48
  %v3039 = vpop.permute.xlu0 %3038
  %3040 = vrot.lane.b32.xlu0 %v2775, 48
  %v3041 = vpop.permute.xlu0 %3040
  %3042 = vrot.lane.b32.xlu0 %v2777, 48
  %v3043 = vpop.permute.xlu0 %3042
  %3044 = vrot.lane.b32.xlu0 %v2779, 48
  %v3045 = vpop.permute.xlu0 %3044
  %vm3070 = vcmask 818816
  %3071 = vst.msk [vmem:[#allocation2] sm:$0xff] %vm3070, %v2999
  %3072 = vst.msk [vmem:[#allocation2 + $0x10] sm:$0xff] %vm3070, %v3001
  %3073 = vst.msk [vmem:[#allocation2 + $0x20] sm:$0xff] %vm3070, %v3003
  %3074 = vst.msk [vmem:[#allocation2 + $0x30] sm:$0xff] %vm3070, %v3005
  %3075 = vst.msk [vmem:[#allocation2 + $0x40] sm:$0xff] %vm3070, %v3007
  %3076 = vst.msk [vmem:[#allocation2 + $0x50] sm:$0xff] %vm3070, %v3009
  %3077 = vst.msk [vmem:[#allocation2 + $0x60] sm:$0xff] %vm3070, %v3011
  %3078 = vst.msk [vmem:[#allocation2 + $0x70] sm:$0xff] %vm3070, %v3013
  %3079 = vst.msk [vmem:[#allocation2 + $0x80] sm:$0xff] %vm3070, %v3015
  %3080 = vst.msk [vmem:[#allocation2 + $0x90] sm:$0xff] %vm3070, %v3017
  %3081 = vst.msk [vmem:[#allocation2 + $0xa0] sm:$0xff] %vm3070, %v3019
  %3082 = vst.msk [vmem:[#allocation2 + $0xb0] sm:$0xff] %vm3070, %v3021
  %3083 = vst.msk [vmem:[#allocation2 + $0xc0] sm:$0xff] %vm3070, %v3023
  %3084 = vst.msk [vmem:[#allocation2 + $0xd0] sm:$0xff] %vm3070, %v3025
  %3085 = vst.msk [vmem:[#allocation2 + $0xe0] sm:$0xff] %vm3070, %v3027
  %3086 = vst.msk [vmem:[#allocation2 + $0xf0] sm:$0xff] %vm3070, %v3029
  %3087 = vst.msk [vmem:[#allocation2 + $0x100] sm:$0xff] %vm3070, %v3031
  %3088 = vst.msk [vmem:[#allocation2 + $0x110] sm:$0xff] %vm3070, %v3033
  %3089 = vst.msk [vmem:[#allocation2 + $0x120] sm:$0xff] %vm3070, %v3035
  %3090 = vst.msk [vmem:[#allocation2 + $0x130] sm:$0xff] %vm3070, %v3037
  %3091 = vst.msk [vmem:[#allocation2 + $0x140] sm:$0xff] %vm3070, %v3039
  %3092 = vst.msk [vmem:[#allocation2 + $0x150] sm:$0xff] %vm3070, %v3041
  %3093 = vst.msk [vmem:[#allocation2 + $0x160] sm:$0xff] %vm3070, %v3043
  %3094 = vst.msk [vmem:[#allocation2 + $0x170] sm:$0xff] %vm3070, %v3045
  %3095 = vrot.lane.b32.xlu0 %v2733, 28
  %v3096 = vpop.permute.xlu0 %3095
  %3097 = vrot.lane.b32.xlu0 %v2735, 28
  %v3098 = vpop.permute.xlu0 %3097
  %3099 = vrot.lane.b32.xlu0 %v2737, 28
  %v3100 = vpop.permute.xlu0 %3099
  %3101 = vrot.lane.b32.xlu0 %v2739, 28
  %v3102 = vpop.permute.xlu0 %3101
  %3103 = vrot.lane.b32.xlu0 %v2741, 28
  %v3104 = vpop.permute.xlu0 %3103
  %3105 = vrot.lane.b32.xlu0 %v2743, 28
  %v3106 = vpop.permute.xlu0 %3105
  %3107 = vrot.lane.b32.xlu0 %v2745, 28
  %v3108 = vpop.permute.xlu0 %3107
  %3109 = vrot.lane.b32.xlu0 %v2747, 28
  %v3110 = vpop.permute.xlu0 %3109
  %3111 = vrot.lane.b32.xlu0 %v2749, 28
  %v3112 = vpop.permute.xlu0 %3111
  %3113 = vrot.lane.b32.xlu0 %v2751, 28
  %v3114 = vpop.permute.xlu0 %3113
  %3115 = vrot.lane.b32.xlu0 %v2753, 28
  %v3116 = vpop.permute.xlu0 %3115
  %3117 = vrot.lane.b32.xlu0 %v2755, 28
  %v3118 = vpop.permute.xlu0 %3117
  %3119 = vrot.lane.b32.xlu0 %v2757, 28
  %v3120 = vpop.permute.xlu0 %3119
  %3121 = vrot.lane.b32.xlu0 %v2759, 28
  %v3122 = vpop.permute.xlu0 %3121
  %3123 = vrot.lane.b32.xlu0 %v2761, 28
  %v3124 = vpop.permute.xlu0 %3123
  %3125 = vrot.lane.b32.xlu0 %v2763, 28
  %v3126 = vpop.permute.xlu0 %3125
  %3127 = vrot.lane.b32.xlu0 %v2765, 28
  %v3128 = vpop.permute.xlu0 %3127
  %3129 = vrot.lane.b32.xlu0 %v2767, 28
  %v3130 = vpop.permute.xlu0 %3129
  %3131 = vrot.lane.b32.xlu0 %v2769, 28
  %v3132 = vpop.permute.xlu0 %3131
  %3133 = vrot.lane.b32.xlu0 %v2771, 28
  %v3134 = vpop.permute.xlu0 %3133
  %3135 = vrot.lane.b32.xlu0 %v2773, 28
  %v3136 = vpop.permute.xlu0 %3135
  %3137 = vrot.lane.b32.xlu0 %v2775, 28
  %v3138 = vpop.permute.xlu0 %3137
  %3139 = vrot.lane.b32.xlu0 %v2777, 28
  %v3140 = vpop.permute.xlu0 %3139
  %3141 = vrot.lane.b32.xlu0 %v2779, 28
  %v3142 = vpop.permute.xlu0 %3141
  %vm3167 = vcmask 982816
  %3168 = vst.msk [vmem:[#allocation2] sm:$0xff] %vm3167, %v3096
  %3169 = vst.msk [vmem:[#allocation2 + $0x10] sm:$0xff] %vm3167, %v3098
  %3170 = vst.msk [vmem:[#allocation2 + $0x20] sm:$0xff] %vm3167, %v3100
  %3171 = vst.msk [vmem:[#allocation2 + $0x30] sm:$0xff] %vm3167, %v3102
  %3172 = vst.msk [vmem:[#allocation2 + $0x40] sm:$0xff] %vm3167, %v3104
  %3173 = vst.msk [vmem:[#allocation2 + $0x50] sm:$0xff] %vm3167, %v3106
  %3174 = vst.msk [vmem:[#allocation2 + $0x60] sm:$0xff] %vm3167, %v3108
  %3175 = vst.msk [vmem:[#allocation2 + $0x70] sm:$0xff] %vm3167, %v3110
  %3176 = vst.msk [vmem:[#allocation2 + $0x80] sm:$0xff] %vm3167, %v3112
  %3177 = vst.msk [vmem:[#allocation2 + $0x90] sm:$0xff] %vm3167, %v3114
  %3178 = vst.msk [vmem:[#allocation2 + $0xa0] sm:$0xff] %vm3167, %v3116
  %3179 = vst.msk [vmem:[#allocation2 + $0xb0] sm:$0xff] %vm3167, %v3118
  %3180 = vst.msk [vmem:[#allocation2 + $0xc0] sm:$0xff] %vm3167, %v3120
  %3181 = vst.msk [vmem:[#allocation2 + $0xd0] sm:$0xff] %vm3167, %v3122
  %3182 = vst.msk [vmem:[#allocation2 + $0xe0] sm:$0xff] %vm3167, %v3124
  %3183 = vst.msk [vmem:[#allocation2 + $0xf0] sm:$0xff] %vm3167, %v3126
  %3184 = vst.msk [vmem:[#allocation2 + $0x100] sm:$0xff] %vm3167, %v3128
  %3185 = vst.msk [vmem:[#allocation2 + $0x110] sm:$0xff] %vm3167, %v3130
  %3186 = vst.msk [vmem:[#allocation2 + $0x120] sm:$0xff] %vm3167, %v3132
  %3187 = vst.msk [vmem:[#allocation2 + $0x130] sm:$0xff] %vm3167, %v3134
  %3188 = vst.msk [vmem:[#allocation2 + $0x140] sm:$0xff] %vm3167, %v3136
  %3189 = vst.msk [vmem:[#allocation2 + $0x150] sm:$0xff] %vm3167, %v3138
  %3190 = vst.msk [vmem:[#allocation2 + $0x160] sm:$0xff] %vm3167, %v3140
  %3191 = vst.msk [vmem:[#allocation2 + $0x170] sm:$0xff] %vm3167, %v3142
  %3216 = vrot.lane.b32.xlu0 %v2179, 108
  %v3217 = vpop.permute.xlu0 %3216
  %3218 = vrot.lane.b32.xlu0 %v2183, 108
  %v3219 = vpop.permute.xlu0 %3218
  %3220 = vrot.lane.b32.xlu0 %v2187, 108
  %v3221 = vpop.permute.xlu0 %3220
  %3222 = vrot.lane.b32.xlu0 %v2191, 108
  %v3223 = vpop.permute.xlu0 %3222
  %3224 = vrot.lane.b32.xlu0 %v2195, 108
  %v3225 = vpop.permute.xlu0 %3224
  %3226 = vrot.lane.b32.xlu0 %v2199, 108
  %v3227 = vpop.permute.xlu0 %3226
  %3228 = vrot.lane.b32.xlu0 %v2203, 108
  %v3229 = vpop.permute.xlu0 %3228
  %3230 = vrot.lane.b32.xlu0 %v2207, 108
  %v3231 = vpop.permute.xlu0 %3230
  %3232 = vrot.lane.b32.xlu0 %v2211, 108
  %v3233 = vpop.permute.xlu0 %3232
  %3234 = vrot.lane.b32.xlu0 %v2215, 108
  %v3235 = vpop.permute.xlu0 %3234
  %3236 = vrot.lane.b32.xlu0 %v2219, 108
  %v3237 = vpop.permute.xlu0 %3236
  %3238 = vrot.lane.b32.xlu0 %v2223, 108
  %v3239 = vpop.permute.xlu0 %3238
  %3240 = vrot.lane.b32.xlu0 %v2227, 108
  %v3241 = vpop.permute.xlu0 %3240
  %3242 = vrot.lane.b32.xlu0 %v2231, 108
  %v3243 = vpop.permute.xlu0 %3242
  %3244 = vrot.lane.b32.xlu0 %v2235, 108
  %v3245 = vpop.permute.xlu0 %3244
  %3246 = vrot.lane.b32.xlu0 %v2239, 108
  %v3247 = vpop.permute.xlu0 %3246
  %3248 = vrot.lane.b32.xlu0 %v2243, 108
  %v3249 = vpop.permute.xlu0 %3248
  %3250 = vrot.lane.b32.xlu0 %v2247, 108
  %v3251 = vpop.permute.xlu0 %3250
  %3252 = vrot.lane.b32.xlu0 %v2251, 108
  %v3253 = vpop.permute.xlu0 %3252
  %3254 = vrot.lane.b32.xlu0 %v2255, 108
  %v3255 = vpop.permute.xlu0 %3254
  %3256 = vrot.lane.b32.xlu0 %v2259, 108
  %v3257 = vpop.permute.xlu0 %3256
  %3258 = vrot.lane.b32.xlu0 %v2263, 108
  %v3259 = vpop.permute.xlu0 %3258
  %3260 = vrot.lane.b32.xlu0 %v2267, 108
  %v3261 = vpop.permute.xlu0 %3260
  %3262 = vrot.lane.b32.xlu0 %v2271, 108
  %v3263 = vpop.permute.xlu0 %3262
  %v3288 = vmax.f32 %v2178, %v3217
  %v3289 = vmax.f32 %v2179, %v3217
  %v3290 = vmax.f32 %v2182, %v3219
  %v3291 = vmax.f32 %v2183, %v3219
  %v3292 = vmax.f32 %v2186, %v3221
  %v3293 = vmax.f32 %v2187, %v3221
  %v3294 = vmax.f32 %v2190, %v3223
  %v3295 = vmax.f32 %v2191, %v3223
  %v3296 = vmax.f32 %v2194, %v3225
  %v3297 = vmax.f32 %v2195, %v3225
  %v3298 = vmax.f32 %v2198, %v3227
  %v3299 = vmax.f32 %v2199, %v3227
  %v3300 = vmax.f32 %v2202, %v3229
  %v3301 = vmax.f32 %v2203, %v3229
  %v3302 = vmax.f32 %v2206, %v3231
  %v3303 = vmax.f32 %v2207, %v3231
  %v3304 = vmax.f32 %v2210, %v3233
  %v3305 = vmax.f32 %v2211, %v3233
  %v3306 = vmax.f32 %v2214, %v3235
  %v3307 = vmax.f32 %v2215, %v3235
  %v3308 = vmax.f32 %v2218, %v3237
  %v3309 = vmax.f32 %v2219, %v3237
  %v3310 = vmax.f32 %v2222, %v3239
  %v3311 = vmax.f32 %v2223, %v3239
  %v3312 = vmax.f32 %v2226, %v3241
  %v3313 = vmax.f32 %v2227, %v3241
  %v3314 = vmax.f32 %v2230, %v3243
  %v3315 = vmax.f32 %v2231, %v3243
  %v3316 = vmax.f32 %v2234, %v3245
  %v3317 = vmax.f32 %v2235, %v3245
  %v3318 = vmax.f32 %v2238, %v3247
  %v3319 = vmax.f32 %v2239, %v3247
  %v3320 = vmax.f32 %v2242, %v3249
  %v3321 = vmax.f32 %v2243, %v3249
  %v3322 = vmax.f32 %v2246, %v3251
  %v3323 = vmax.f32 %v2247, %v3251
  %v3324 = vmax.f32 %v2250, %v3253
  %v3325 = vmax.f32 %v2251, %v3253
  %v3326 = vmax.f32 %v2254, %v3255
  %v3327 = vmax.f32 %v2255, %v3255
  %v3328 = vmax.f32 %v2258, %v3257
  %v3329 = vmax.f32 %v2259, %v3257
  %v3330 = vmax.f32 %v2262, %v3259
  %v3331 = vmax.f32 %v2263, %v3259
  %v3332 = vmax.f32 %v2266, %v3261
  %v3333 = vmax.f32 %v2267, %v3261
  %v3334 = vmax.f32 %v2270, %v3263
  %v3335 = vmax.f32 %v2271, %v3263
  %3384 = vrot.lane.b32.xlu0 %v3288, 8
  %v3385 = vpop.permute.xlu0 %3384
  %3386 = vrot.lane.b32.xlu0 %v3289, 8
  %v3387 = vpop.permute.xlu0 %3386
  %3388 = vrot.lane.b32.xlu0 %v3290, 8
  %v3389 = vpop.permute.xlu0 %3388
  %3390 = vrot.lane.b32.xlu0 %v3291, 8
  %v3391 = vpop.permute.xlu0 %3390
  %3392 = vrot.lane.b32.xlu0 %v3292, 8
  %v3393 = vpop.permute.xlu0 %3392
  %3394 = vrot.lane.b32.xlu0 %v3293, 8
  %v3395 = vpop.permute.xlu0 %3394
  %3396 = vrot.lane.b32.xlu0 %v3294, 8
  %v3397 = vpop.permute.xlu0 %3396
  %3398 = vrot.lane.b32.xlu0 %v3295, 8
  %v3399 = vpop.permute.xlu0 %3398
  %3400 = vrot.lane.b32.xlu0 %v3296, 8
  %v3401 = vpop.permute.xlu0 %3400
  %3402 = vrot.lane.b32.xlu0 %v3297, 8
  %v3403 = vpop.permute.xlu0 %3402
  %3404 = vrot.lane.b32.xlu0 %v3298, 8
  %v3405 = vpop.permute.xlu0 %3404
  %3406 = vrot.lane.b32.xlu0 %v3299, 8
  %v3407 = vpop.permute.xlu0 %3406
  %3408 = vrot.lane.b32.xlu0 %v3300, 8
  %v3409 = vpop.permute.xlu0 %3408
  %3410 = vrot.lane.b32.xlu0 %v3301, 8
  %v3411 = vpop.permute.xlu0 %3410
  %3412 = vrot.lane.b32.xlu0 %v3302, 8
  %v3413 = vpop.permute.xlu0 %3412
  %3414 = vrot.lane.b32.xlu0 %v3303, 8
  %v3415 = vpop.permute.xlu0 %3414
  %3416 = vrot.lane.b32.xlu0 %v3304, 8
  %v3417 = vpop.permute.xlu0 %3416
  %3418 = vrot.lane.b32.xlu0 %v3305, 8
  %v3419 = vpop.permute.xlu0 %3418
  %3420 = vrot.lane.b32.xlu0 %v3306, 8
  %v3421 = vpop.permute.xlu0 %3420
  %3422 = vrot.lane.b32.xlu0 %v3307, 8
  %v3423 = vpop.permute.xlu0 %3422
  %3424 = vrot.lane.b32.xlu0 %v3308, 8
  %v3425 = vpop.permute.xlu0 %3424
  %3426 = vrot.lane.b32.xlu0 %v3309, 8
  %v3427 = vpop.permute.xlu0 %3426
  %3428 = vrot.lane.b32.xlu0 %v3310, 8
  %v3429 = vpop.permute.xlu0 %3428
  %3430 = vrot.lane.b32.xlu0 %v3311, 8
  %v3431 = vpop.permute.xlu0 %3430
  %3432 = vrot.lane.b32.xlu0 %v3312, 8
  %v3433 = vpop.permute.xlu0 %3432
  %3434 = vrot.lane.b32.xlu0 %v3313, 8
  %v3435 = vpop.permute.xlu0 %3434
  %3436 = vrot.lane.b32.xlu0 %v3314, 8
  %v3437 = vpop.permute.xlu0 %3436
  %3438 = vrot.lane.b32.xlu0 %v3315, 8
  %v3439 = vpop.permute.xlu0 %3438
  %3440 = vrot.lane.b32.xlu0 %v3316, 8
  %v3441 = vpop.permute.xlu0 %3440
  %3442 = vrot.lane.b32.xlu0 %v3317, 8
  %v3443 = vpop.permute.xlu0 %3442
  %3444 = vrot.lane.b32.xlu0 %v3318, 8
  %v3445 = vpop.permute.xlu0 %3444
  %3446 = vrot.lane.b32.xlu0 %v3319, 8
  %v3447 = vpop.permute.xlu0 %3446
  %3448 = vrot.lane.b32.xlu0 %v3320, 8
  %v3449 = vpop.permute.xlu0 %3448
  %3450 = vrot.lane.b32.xlu0 %v3321, 8
  %v3451 = vpop.permute.xlu0 %3450
  %3452 = vrot.lane.b32.xlu0 %v3322, 8
  %v3453 = vpop.permute.xlu0 %3452
  %3454 = vrot.lane.b32.xlu0 %v3323, 8
  %v3455 = vpop.permute.xlu0 %3454
  %3456 = vrot.lane.b32.xlu0 %v3324, 8
  %v3457 = vpop.permute.xlu0 %3456
  %3458 = vrot.lane.b32.xlu0 %v3325, 8
  %v3459 = vpop.permute.xlu0 %3458
  %3460 = vrot.lane.b32.xlu0 %v3326, 8
  %v3461 = vpop.permute.xlu0 %3460
  %3462 = vrot.lane.b32.xlu0 %v3327, 8
  %v3463 = vpop.permute.xlu0 %3462
  %3464 = vrot.lane.b32.xlu0 %v3328, 8
  %v3465 = vpop.permute.xlu0 %3464
  %3466 = vrot.lane.b32.xlu0 %v3329, 8
  %v3467 = vpop.permute.xlu0 %3466
  %3468 = vrot.lane.b32.xlu0 %v3330, 8
  %v3469 = vpop.permute.xlu0 %3468
  %3470 = vrot.lane.b32.xlu0 %v3331, 8
  %v3471 = vpop.permute.xlu0 %3470
  %3472 = vrot.lane.b32.xlu0 %v3332, 8
  %v3473 = vpop.permute.xlu0 %3472
  %3474 = vrot.lane.b32.xlu0 %v3333, 8
  %v3475 = vpop.permute.xlu0 %3474
  %3476 = vrot.lane.b32.xlu0 %v3334, 8
  %v3477 = vpop.permute.xlu0 %3476
  %3478 = vrot.lane.b32.xlu0 %v3335, 8
  %v3479 = vpop.permute.xlu0 %3478
  %vm3480 = vcmask 64512
  %v3481 = vsel %vm3480, %v3385, %v3387
  %v3482 = vsel %vm3480, %v3389, %v3391
  %v3483 = vsel %vm3480, %v3393, %v3395
  %v3484 = vsel %vm3480, %v3397, %v3399
  %v3485 = vsel %vm3480, %v3401, %v3403
  %v3486 = vsel %vm3480, %v3405, %v3407
  %v3487 = vsel %vm3480, %v3409, %v3411
  %v3488 = vsel %vm3480, %v3413, %v3415
  %v3489 = vsel %vm3480, %v3417, %v3419
  %v3490 = vsel %vm3480, %v3421, %v3423
  %v3491 = vsel %vm3480, %v3425, %v3427
  %v3492 = vsel %vm3480, %v3429, %v3431
  %v3493 = vsel %vm3480, %v3433, %v3435
  %v3494 = vsel %vm3480, %v3437, %v3439
  %v3495 = vsel %vm3480, %v3441, %v3443
  %v3496 = vsel %vm3480, %v3445, %v3447
  %v3497 = vsel %vm3480, %v3449, %v3451
  %v3498 = vsel %vm3480, %v3453, %v3455
  %v3499 = vsel %vm3480, %v3457, %v3459
  %v3500 = vsel %vm3480, %v3461, %v3463
  %v3501 = vsel %vm3480, %v3465, %v3467
  %v3502 = vsel %vm3480, %v3469, %v3471
  %v3503 = vsel %vm3480, %v3473, %v3475
  %v3504 = vsel %vm3480, %v3477, %v3479
  %vm3553 = vcmask 1048512
  %3554 = vst.msk [vmem:[#allocation2] sm:$0xff] %vm3553, %v3385
  %vm3555 = vcmask 97280
  %3556 = vst.msk [vmem:[#allocation2 + $0x8] sm:$0xff] %vm3555, %v3481
  %3557 = vst.msk [vmem:[#allocation2 + $0x10] sm:$0xff] %vm3553, %v3389
  %3558 = vst.msk [vmem:[#allocation2 + $0x18] sm:$0xff] %vm3555, %v3482
  %3559 = vst.msk [vmem:[#allocation2 + $0x20] sm:$0xff] %vm3553, %v3393
  %3560 = vst.msk [vmem:[#allocation2 + $0x28] sm:$0xff] %vm3555, %v3483
  %3561 = vst.msk [vmem:[#allocation2 + $0x30] sm:$0xff] %vm3553, %v3397
  %3562 = vst.msk [vmem:[#allocation2 + $0x38] sm:$0xff] %vm3555, %v3484
  %3563 = vst.msk [vmem:[#allocation2 + $0x40] sm:$0xff] %vm3553, %v3401
  %3564 = vst.msk [vmem:[#allocation2 + $0x48] sm:$0xff] %vm3555, %v3485
  %3565 = vst.msk [vmem:[#allocation2 + $0x50] sm:$0xff] %vm3553, %v3405
  %3566 = vst.msk [vmem:[#allocation2 + $0x58] sm:$0xff] %vm3555, %v3486
  %3567 = vst.msk [vmem:[#allocation2 + $0x60] sm:$0xff] %vm3553, %v3409
  %3568 = vst.msk [vmem:[#allocation2 + $0x68] sm:$0xff] %vm3555, %v3487
  %3569 = vst.msk [vmem:[#allocation2 + $0x70] sm:$0xff] %vm3553, %v3413
  %3570 = vst.msk [vmem:[#allocation2 + $0x78] sm:$0xff] %vm3555, %v3488
  %3571 = vst.msk [vmem:[#allocation2 + $0x80] sm:$0xff] %vm3553, %v3417
  %3572 = vst.msk [vmem:[#allocation2 + $0x88] sm:$0xff] %vm3555, %v3489
  %3573 = vst.msk [vmem:[#allocation2 + $0x90] sm:$0xff] %vm3553, %v3421
  %3574 = vst.msk [vmem:[#allocation2 + $0x98] sm:$0xff] %vm3555, %v3490
  %3575 = vst.msk [vmem:[#allocation2 + $0xa0] sm:$0xff] %vm3553, %v3425
  %3576 = vst.msk [vmem:[#allocation2 + $0xa8] sm:$0xff] %vm3555, %v3491
  %3577 = vst.msk [vmem:[#allocation2 + $0xb0] sm:$0xff] %vm3553, %v3429
  %3578 = vst.msk [vmem:[#allocation2 + $0xb8] sm:$0xff] %vm3555, %v3492
  %3579 = vst.msk [vmem:[#allocation2 + $0xc0] sm:$0xff] %vm3553, %v3433
  %3580 = vst.msk [vmem:[#allocation2 + $0xc8] sm:$0xff] %vm3555, %v3493
  %3581 = vst.msk [vmem:[#allocation2 + $0xd0] sm:$0xff] %vm3553, %v3437
  %3582 = vst.msk [vmem:[#allocation2 + $0xd8] sm:$0xff] %vm3555, %v3494
  %3583 = vst.msk [vmem:[#allocation2 + $0xe0] sm:$0xff] %vm3553, %v3441
  %3584 = vst.msk [vmem:[#allocation2 + $0xe8] sm:$0xff] %vm3555, %v3495
  %3585 = vst.msk [vmem:[#allocation2 + $0xf0] sm:$0xff] %vm3553, %v3445
  %3586 = vst.msk [vmem:[#allocation2 + $0xf8] sm:$0xff] %vm3555, %v3496
  %3587 = vst.msk [vmem:[#allocation2 + $0x100] sm:$0xff] %vm3553, %v3449
  %3588 = vst.msk [vmem:[#allocation2 + $0x108] sm:$0xff] %vm3555, %v3497
  %3589 = vst.msk [vmem:[#allocation2 + $0x110] sm:$0xff] %vm3553, %v3453
  %3590 = vst.msk [vmem:[#allocation2 + $0x118] sm:$0xff] %vm3555, %v3498
  %3591 = vst.msk [vmem:[#allocation2 + $0x120] sm:$0xff] %vm3553, %v3457
  %3592 = vst.msk [vmem:[#allocation2 + $0x128] sm:$0xff] %vm3555, %v3499
  %3593 = vst.msk [vmem:[#allocation2 + $0x130] sm:$0xff] %vm3553, %v3461
  %3594 = vst.msk [vmem:[#allocation2 + $0x138] sm:$0xff] %vm3555, %v3500
  %3595 = vst.msk [vmem:[#allocation2 + $0x140] sm:$0xff] %vm3553, %v3465
  %3596 = vst.msk [vmem:[#allocation2 + $0x148] sm:$0xff] %vm3555, %v3501
  %3597 = vst.msk [vmem:[#allocation2 + $0x150] sm:$0xff] %vm3553, %v3469
  %3598 = vst.msk [vmem:[#allocation2 + $0x158] sm:$0xff] %vm3555, %v3502
  %3599 = vst.msk [vmem:[#allocation2 + $0x160] sm:$0xff] %vm3553, %v3473
  %3600 = vst.msk [vmem:[#allocation2 + $0x168] sm:$0xff] %vm3555, %v3503
  %3601 = vst.msk [vmem:[#allocation2 + $0x170] sm:$0xff] %vm3553, %v3477
  %3602 = vst.msk [vmem:[#allocation2 + $0x178] sm:$0xff] %vm3555, %v3504
  %3603 = vrot.lane.b32.xlu0 %v3289, 116
  %v3604 = vpop.permute.xlu0 %3603
  %3605 = vrot.lane.b32.xlu0 %v3291, 116
  %v3606 = vpop.permute.xlu0 %3605
  %3607 = vrot.lane.b32.xlu0 %v3293, 116
  %v3608 = vpop.permute.xlu0 %3607
  %3609 = vrot.lane.b32.xlu0 %v3295, 116
  %v3610 = vpop.permute.xlu0 %3609
  %3611 = vrot.lane.b32.xlu0 %v3297, 116
  %v3612 = vpop.permute.xlu0 %3611
  %3613 = vrot.lane.b32.xlu0 %v3299, 116
  %v3614 = vpop.permute.xlu0 %3613
  %3615 = vrot.lane.b32.xlu0 %v3301, 116
  %v3616 = vpop.permute.xlu0 %3615
  %3617 = vrot.lane.b32.xlu0 %v3303, 116
  %v3618 = vpop.permute.xlu0 %3617
  %3619 = vrot.lane.b32.xlu0 %v3305, 116
  %v3620 = vpop.permute.xlu0 %3619
  %3621 = vrot.lane.b32.xlu0 %v3307, 116
  %v3622 = vpop.permute.xlu0 %3621
  %3623 = vrot.lane.b32.xlu0 %v3309, 116
  %v3624 = vpop.permute.xlu0 %3623
  %3625 = vrot.lane.b32.xlu0 %v3311, 116
  %v3626 = vpop.permute.xlu0 %3625
  %3627 = vrot.lane.b32.xlu0 %v3313, 116
  %v3628 = vpop.permute.xlu0 %3627
  %3629 = vrot.lane.b32.xlu0 %v3315, 116
  %v3630 = vpop.permute.xlu0 %3629
  %3631 = vrot.lane.b32.xlu0 %v3317, 116
  %v3632 = vpop.permute.xlu0 %3631
  %3633 = vrot.lane.b32.xlu0 %v3319, 116
  %v3634 = vpop.permute.xlu0 %3633
  %3635 = vrot.lane.b32.xlu0 %v3321, 116
  %v3636 = vpop.permute.xlu0 %3635
  %3637 = vrot.lane.b32.xlu0 %v3323, 116
  %v3638 = vpop.permute.xlu0 %3637
  %3639 = vrot.lane.b32.xlu0 %v3325, 116
  %v3640 = vpop.permute.xlu0 %3639
  %3641 = vrot.lane.b32.xlu0 %v3327, 116
  %v3642 = vpop.permute.xlu0 %3641
  %3643 = vrot.lane.b32.xlu0 %v3329, 116
  %v3644 = vpop.permute.xlu0 %3643
  %3645 = vrot.lane.b32.xlu0 %v3331, 116
  %v3646 = vpop.permute.xlu0 %3645
  %3647 = vrot.lane.b32.xlu0 %v3333, 116
  %v3648 = vpop.permute.xlu0 %3647
  %3649 = vrot.lane.b32.xlu0 %v3335, 116
  %v3650 = vpop.permute.xlu0 %3649
  %vm3675 = vcmask 261216
  %3676 = vst.msk [vmem:[#allocation2 + $0x8] sm:$0xff] %vm3675, %v3604
  %3677 = vst.msk [vmem:[#allocation2 + $0x18] sm:$0xff] %vm3675, %v3606
  %3678 = vst.msk [vmem:[#allocation2 + $0x28] sm:$0xff] %vm3675, %v3608
  %3679 = vst.msk [vmem:[#allocation2 + $0x38] sm:$0xff] %vm3675, %v3610
  %3680 = vst.msk [vmem:[#allocation2 + $0x48] sm:$0xff] %vm3675, %v3612
  %3681 = vst.msk [vmem:[#allocation2 + $0x58] sm:$0xff] %vm3675, %v3614
  %3682 = vst.msk [vmem:[#allocation2 + $0x68] sm:$0xff] %vm3675, %v3616
  %3683 = vst.msk [vmem:[#allocation2 + $0x78] sm:$0xff] %vm3675, %v3618
  %3684 = vst.msk [vmem:[#allocation2 + $0x88] sm:$0xff] %vm3675, %v3620
  %3685 = vst.msk [vmem:[#allocation2 + $0x98] sm:$0xff] %vm3675, %v3622
  %3686 = vst.msk [vmem:[#allocation2 + $0xa8] sm:$0xff] %vm3675, %v3624
  %3687 = vst.msk [vmem:[#allocation2 + $0xb8] sm:$0xff] %vm3675, %v3626
  %3688 = vst.msk [vmem:[#allocation2 + $0xc8] sm:$0xff] %vm3675, %v3628
  %3689 = vst.msk [vmem:[#allocation2 + $0xd8] sm:$0xff] %vm3675, %v3630
  %3690 = vst.msk [vmem:[#allocation2 + $0xe8] sm:$0xff] %vm3675, %v3632
  %3691 = vst.msk [vmem:[#allocation2 + $0xf8] sm:$0xff] %vm3675, %v3634
  %3692 = vst.msk [vmem:[#allocation2 + $0x108] sm:$0xff] %vm3675, %v3636
  %3693 = vst.msk [vmem:[#allocation2 + $0x118] sm:$0xff] %vm3675, %v3638
  %3694 = vst.msk [vmem:[#allocation2 + $0x128] sm:$0xff] %vm3675, %v3640
  %3695 = vst.msk [vmem:[#allocation2 + $0x138] sm:$0xff] %vm3675, %v3642
  %3696 = vst.msk [vmem:[#allocation2 + $0x148] sm:$0xff] %vm3675, %v3644
  %3697 = vst.msk [vmem:[#allocation2 + $0x158] sm:$0xff] %vm3675, %v3646
  %3698 = vst.msk [vmem:[#allocation2 + $0x168] sm:$0xff] %vm3675, %v3648
  %3699 = vst.msk [vmem:[#allocation2 + $0x178] sm:$0xff] %vm3675, %v3650
  %3700 = vrot.lane.b32.xlu0 %v3289, 96
  %v3701 = vpop.permute.xlu0 %3700
  %3702 = vrot.lane.b32.xlu0 %v3291, 96
  %v3703 = vpop.permute.xlu0 %3702
  %3704 = vrot.lane.b32.xlu0 %v3293, 96
  %v3705 = vpop.permute.xlu0 %3704
  %3706 = vrot.lane.b32.xlu0 %v3295, 96
  %v3707 = vpop.permute.xlu0 %3706
  %3708 = vrot.lane.b32.xlu0 %v3297, 96
  %v3709 = vpop.permute.xlu0 %3708
  %3710 = vrot.lane.b32.xlu0 %v3299, 96
  %v3711 = vpop.permute.xlu0 %3710
  %3712 = vrot.lane.b32.xlu0 %v3301, 96
  %v3713 = vpop.permute.xlu0 %3712
  %3714 = vrot.lane.b32.xlu0 %v3303, 96
  %v3715 = vpop.permute.xlu0 %3714
  %3716 = vrot.lane.b32.xlu0 %v3305, 96
  %v3717 = vpop.permute.xlu0 %3716
  %3718 = vrot.lane.b32.xlu0 %v3307, 96
  %v3719 = vpop.permute.xlu0 %3718
  %3720 = vrot.lane.b32.xlu0 %v3309, 96
  %v3721 = vpop.permute.xlu0 %3720
  %3722 = vrot.lane.b32.xlu0 %v3311, 96
  %v3723 = vpop.permute.xlu0 %3722
  %3724 = vrot.lane.b32.xlu0 %v3313, 96
  %v3725 = vpop.permute.xlu0 %3724
  %3726 = vrot.lane.b32.xlu0 %v3315, 96
  %v3727 = vpop.permute.xlu0 %3726
  %3728 = vrot.lane.b32.xlu0 %v3317, 96
  %v3729 = vpop.permute.xlu0 %3728
  %3730 = vrot.lane.b32.xlu0 %v3319, 96
  %v3731 = vpop.permute.xlu0 %3730
  %3732 = vrot.lane.b32.xlu0 %v3321, 96
  %v3733 = vpop.permute.xlu0 %3732
  %3734 = vrot.lane.b32.xlu0 %v3323, 96
  %v3735 = vpop.permute.xlu0 %3734
  %3736 = vrot.lane.b32.xlu0 %v3325, 96
  %v3737 = vpop.permute.xlu0 %3736
  %3738 = vrot.lane.b32.xlu0 %v3327, 96
  %v3739 = vpop.permute.xlu0 %3738
  %3740 = vrot.lane.b32.xlu0 %v3329, 96
  %v3741 = vpop.permute.xlu0 %3740
  %3742 = vrot.lane.b32.xlu0 %v3331, 96
  %v3743 = vpop.permute.xlu0 %3742
  %3744 = vrot.lane.b32.xlu0 %v3333, 96
  %v3745 = vpop.permute.xlu0 %3744
  %3746 = vrot.lane.b32.xlu0 %v3335, 96
  %v3747 = vpop.permute.xlu0 %3746
  %vm3772 = vcmask 425216
  %3773 = vst.msk [vmem:[#allocation2 + $0x8] sm:$0xff] %vm3772, %v3701
  %3774 = vst.msk [vmem:[#allocation2 + $0x18] sm:$0xff] %vm3772, %v3703
  %3775 = vst.msk [vmem:[#allocation2 + $0x28] sm:$0xff] %vm3772, %v3705
  %3776 = vst.msk [vmem:[#allocation2 + $0x38] sm:$0xff] %vm3772, %v3707
  %3777 = vst.msk [vmem:[#allocation2 + $0x48] sm:$0xff] %vm3772, %v3709
  %3778 = vst.msk [vmem:[#allocation2 + $0x58] sm:$0xff] %vm3772, %v3711
  %3779 = vst.msk [vmem:[#allocation2 + $0x68] sm:$0xff] %vm3772, %v3713
  %3780 = vst.msk [vmem:[#allocation2 + $0x78] sm:$0xff] %vm3772, %v3715
  %3781 = vst.msk [vmem:[#allocation2 + $0x88] sm:$0xff] %vm3772, %v3717
  %3782 = vst.msk [vmem:[#allocation2 + $0x98] sm:$0xff] %vm3772, %v3719
  %3783 = vst.msk [vmem:[#allocation2 + $0xa8] sm:$0xff] %vm3772, %v3721
  %3784 = vst.msk [vmem:[#allocation2 + $0xb8] sm:$0xff] %vm3772, %v3723
  %3785 = vst.msk [vmem:[#allocation2 + $0xc8] sm:$0xff] %vm3772, %v3725
  %3786 = vst.msk [vmem:[#allocation2 + $0xd8] sm:$0xff] %vm3772, %v3727
  %3787 = vst.msk [vmem:[#allocation2 + $0xe8] sm:$0xff] %vm3772, %v3729
  %3788 = vst.msk [vmem:[#allocation2 + $0xf8] sm:$0xff] %vm3772, %v3731
  %3789 = vst.msk [vmem:[#allocation2 + $0x108] sm:$0xff] %vm3772, %v3733
  %3790 = vst.msk [vmem:[#allocation2 + $0x118] sm:$0xff] %vm3772, %v3735
  %3791 = vst.msk [vmem:[#allocation2 + $0x128] sm:$0xff] %vm3772, %v3737
  %3792 = vst.msk [vmem:[#allocation2 + $0x138] sm:$0xff] %vm3772, %v3739
  %3793 = vst.msk [vmem:[#allocation2 + $0x148] sm:$0xff] %vm3772, %v3741
  %3794 = vst.msk [vmem:[#allocation2 + $0x158] sm:$0xff] %vm3772, %v3743
  %3795 = vst.msk [vmem:[#allocation2 + $0x168] sm:$0xff] %vm3772, %v3745
  %3796 = vst.msk [vmem:[#allocation2 + $0x178] sm:$0xff] %vm3772, %v3747
  %3821 = vrot.lane.b32.xlu0 %v2180, 108
  %v3822 = vpop.permute.xlu0 %3821
  %3823 = vrot.lane.b32.xlu0 %v2184, 108
  %v3824 = vpop.permute.xlu0 %3823
  %3825 = vrot.lane.b32.xlu0 %v2188, 108
  %v3826 = vpop.permute.xlu0 %3825
  %3827 = vrot.lane.b32.xlu0 %v2192, 108
  %v3828 = vpop.permute.xlu0 %3827
  %3829 = vrot.lane.b32.xlu0 %v2196, 108
  %v3830 = vpop.permute.xlu0 %3829
  %3831 = vrot.lane.b32.xlu0 %v2200, 108
  %v3832 = vpop.permute.xlu0 %3831
  %3833 = vrot.lane.b32.xlu0 %v2204, 108
  %v3834 = vpop.permute.xlu0 %3833
  %3835 = vrot.lane.b32.xlu0 %v2208, 108
  %v3836 = vpop.permute.xlu0 %3835
  %3837 = vrot.lane.b32.xlu0 %v2212, 108
  %v3838 = vpop.permute.xlu0 %3837
  %3839 = vrot.lane.b32.xlu0 %v2216, 108
  %v3840 = vpop.permute.xlu0 %3839
  %3841 = vrot.lane.b32.xlu0 %v2220, 108
  %v3842 = vpop.permute.xlu0 %3841
  %3843 = vrot.lane.b32.xlu0 %v2224, 108
  %v3844 = vpop.permute.xlu0 %3843
  %3845 = vrot.lane.b32.xlu0 %v2228, 108
  %v3846 = vpop.permute.xlu0 %3845
  %3847 = vrot.lane.b32.xlu0 %v2232, 108
  %v3848 = vpop.permute.xlu0 %3847
  %3849 = vrot.lane.b32.xlu0 %v2236, 108
  %v3850 = vpop.permute.xlu0 %3849
  %3851 = vrot.lane.b32.xlu0 %v2240, 108
  %v3852 = vpop.permute.xlu0 %3851
  %3853 = vrot.lane.b32.xlu0 %v2244, 108
  %v3854 = vpop.permute.xlu0 %3853
  %3855 = vrot.lane.b32.xlu0 %v2248, 108
  %v3856 = vpop.permute.xlu0 %3855
  %3857 = vrot.lane.b32.xlu0 %v2252, 108
  %v3858 = vpop.permute.xlu0 %3857
  %3859 = vrot.lane.b32.xlu0 %v2256, 108
  %v3860 = vpop.permute.xlu0 %3859
  %3861 = vrot.lane.b32.xlu0 %v2260, 108
  %v3862 = vpop.permute.xlu0 %3861
  %3863 = vrot.lane.b32.xlu0 %v2264, 108
  %v3864 = vpop.permute.xlu0 %3863
  %3865 = vrot.lane.b32.xlu0 %v2268, 108
  %v3866 = vpop.permute.xlu0 %3865
  %3867 = vrot.lane.b32.xlu0 %v2272, 108
  %v3868 = vpop.permute.xlu0 %3867
  %vm3869 = vcmask 883712
  %v3870 = vsel %vm3869, %v3217, %v3822
  %v3871 = vsel %vm3869, %v3219, %v3824
  %v3872 = vsel %vm3869, %v3221, %v3826
  %v3873 = vsel %vm3869, %v3223, %v3828
  %v3874 = vsel %vm3869, %v3225, %v3830
  %v3875 = vsel %vm3869, %v3227, %v3832
  %v3876 = vsel %vm3869, %v3229, %v3834
  %v3877 = vsel %vm3869, %v3231, %v3836
  %v3878 = vsel %vm3869, %v3233, %v3838
  %v3879 = vsel %vm3869, %v3235, %v3840
  %v3880 = vsel %vm3869, %v3237, %v3842
  %v3881 = vsel %vm3869, %v3239, %v3844
  %v3882 = vsel %vm3869, %v3241, %v3846
  %v3883 = vsel %vm3869, %v3243, %v3848
  %v3884 = vsel %vm3869, %v3245, %v3850
  %v3885 = vsel %vm3869, %v3247, %v3852
  %v3886 = vsel %vm3869, %v3249, %v3854
  %v3887 = vsel %vm3869, %v3251, %v3856
  %v3888 = vsel %vm3869, %v3253, %v3858
  %v3889 = vsel %vm3869, %v3255, %v3860
  %v3890 = vsel %vm3869, %v3257, %v3862
  %v3891 = vsel %vm3869, %v3259, %v3864
  %v3892 = vsel %vm3869, %v3261, %v3866
  %v3893 = vsel %vm3869, %v3263, %v3868
  %v3918 = vmax.f32 %v2179, %v3870
  %v3919 = vmax.f32 %v2183, %v3871
  %v3920 = vmax.f32 %v2187, %v3872
  %v3921 = vmax.f32 %v2191, %v3873
  %v3922 = vmax.f32 %v2195, %v3874
  %v3923 = vmax.f32 %v2199, %v3875
  %v3924 = vmax.f32 %v2203, %v3876
  %v3925 = vmax.f32 %v2207, %v3877
  %v3926 = vmax.f32 %v2211, %v3878
  %v3927 = vmax.f32 %v2215, %v3879
  %v3928 = vmax.f32 %v2219, %v3880
  %v3929 = vmax.f32 %v2223, %v3881
  %v3930 = vmax.f32 %v2227, %v3882
  %v3931 = vmax.f32 %v2231, %v3883
  %v3932 = vmax.f32 %v2235, %v3884
  %v3933 = vmax.f32 %v2239, %v3885
  %v3934 = vmax.f32 %v2243, %v3886
  %v3935 = vmax.f32 %v2247, %v3887
  %v3936 = vmax.f32 %v2251, %v3888
  %v3937 = vmax.f32 %v2255, %v3889
  %v3938 = vmax.f32 %v2259, %v3890
  %v3939 = vmax.f32 %v2263, %v3891
  %v3940 = vmax.f32 %v2267, %v3892
  %v3941 = vmax.f32 %v2271, %v3893
  %3966 = vrot.lane.b32.xlu0 %v3918, 76
  %v3967 = vpop.permute.xlu0 %3966
  %3968 = vrot.lane.b32.xlu0 %v3919, 76
  %v3969 = vpop.permute.xlu0 %3968
  %3970 = vrot.lane.b32.xlu0 %v3920, 76
  %v3971 = vpop.permute.xlu0 %3970
  %3972 = vrot.lane.b32.xlu0 %v3921, 76
  %v3973 = vpop.permute.xlu0 %3972
  %3974 = vrot.lane.b32.xlu0 %v3922, 76
  %v3975 = vpop.permute.xlu0 %3974
  %3976 = vrot.lane.b32.xlu0 %v3923, 76
  %v3977 = vpop.permute.xlu0 %3976
  %3978 = vrot.lane.b32.xlu0 %v3924, 76
  %v3979 = vpop.permute.xlu0 %3978
  %3980 = vrot.lane.b32.xlu0 %v3925, 76
  %v3981 = vpop.permute.xlu0 %3980
  %3982 = vrot.lane.b32.xlu0 %v3926, 76
  %v3983 = vpop.permute.xlu0 %3982
  %3984 = vrot.lane.b32.xlu0 %v3927, 76
  %v3985 = vpop.permute.xlu0 %3984
  %3986 = vrot.lane.b32.xlu0 %v3928, 76
  %v3987 = vpop.permute.xlu0 %3986
  %3988 = vrot.lane.b32.xlu0 %v3929, 76
  %v3989 = vpop.permute.xlu0 %3988
  %3990 = vrot.lane.b32.xlu0 %v3930, 76
  %v3991 = vpop.permute.xlu0 %3990
  %3992 = vrot.lane.b32.xlu0 %v3931, 76
  %v3993 = vpop.permute.xlu0 %3992
  %3994 = vrot.lane.b32.xlu0 %v3932, 76
  %v3995 = vpop.permute.xlu0 %3994
  %3996 = vrot.lane.b32.xlu0 %v3933, 76
  %v3997 = vpop.permute.xlu0 %3996
  %3998 = vrot.lane.b32.xlu0 %v3934, 76
  %v3999 = vpop.permute.xlu0 %3998
  %4000 = vrot.lane.b32.xlu0 %v3935, 76
  %v4001 = vpop.permute.xlu0 %4000
  %4002 = vrot.lane.b32.xlu0 %v3936, 76
  %v4003 = vpop.permute.xlu0 %4002
  %4004 = vrot.lane.b32.xlu0 %v3937, 76
  %v4005 = vpop.permute.xlu0 %4004
  %4006 = vrot.lane.b32.xlu0 %v3938, 76
  %v4007 = vpop.permute.xlu0 %4006
  %4008 = vrot.lane.b32.xlu0 %v3939, 76
  %v4009 = vpop.permute.xlu0 %4008
  %4010 = vrot.lane.b32.xlu0 %v3940, 76
  %v4011 = vpop.permute.xlu0 %4010
  %4012 = vrot.lane.b32.xlu0 %v3941, 76
  %v4013 = vpop.permute.xlu0 %4012
  %vm4038 = vcmask 589216
  %4039 = vst.msk [vmem:[#allocation2 + $0x8] sm:$0xff] %vm4038, %v3967
  %4040 = vst.msk [vmem:[#allocation2 + $0x18] sm:$0xff] %vm4038, %v3969
  %4041 = vst.msk [vmem:[#allocation2 + $0x28] sm:$0xff] %vm4038, %v3971
  %4042 = vst.msk [vmem:[#allocation2 + $0x38] sm:$0xff] %vm4038, %v3973
  %4043 = vst.msk [vmem:[#allocation2 + $0x48] sm:$0xff] %vm4038, %v3975
  %4044 = vst.msk [vmem:[#allocation2 + $0x58] sm:$0xff] %vm4038, %v3977
  %4045 = vst.msk [vmem:[#allocation2 + $0x68] sm:$0xff] %vm4038, %v3979
  %4046 = vst.msk [vmem:[#allocation2 + $0x78] sm:$0xff] %vm4038, %v3981
  %4047 = vst.msk [vmem:[#allocation2 + $0x88] sm:$0xff] %vm4038, %v3983
  %4048 = vst.msk [vmem:[#allocation2 + $0x98] sm:$0xff] %vm4038, %v3985
  %4049 = vst.msk [vmem:[#allocation2 + $0xa8] sm:$0xff] %vm4038, %v3987
  %4050 = vst.msk [vmem:[#allocation2 + $0xb8] sm:$0xff] %vm4038, %v3989
  %4051 = vst.msk [vmem:[#allocation2 + $0xc8] sm:$0xff] %vm4038, %v3991
  %4052 = vst.msk [vmem:[#allocation2 + $0xd8] sm:$0xff] %vm4038, %v3993
  %4053 = vst.msk [vmem:[#allocation2 + $0xe8] sm:$0xff] %vm4038, %v3995
  %4054 = vst.msk [vmem:[#allocation2 + $0xf8] sm:$0xff] %vm4038, %v3997
  %4055 = vst.msk [vmem:[#allocation2 + $0x108] sm:$0xff] %vm4038, %v3999
  %4056 = vst.msk [vmem:[#allocation2 + $0x118] sm:$0xff] %vm4038, %v4001
  %4057 = vst.msk [vmem:[#allocation2 + $0x128] sm:$0xff] %vm4038, %v4003
  %4058 = vst.msk [vmem:[#allocation2 + $0x138] sm:$0xff] %vm4038, %v4005
  %4059 = vst.msk [vmem:[#allocation2 + $0x148] sm:$0xff] %vm4038, %v4007
  %4060 = vst.msk [vmem:[#allocation2 + $0x158] sm:$0xff] %vm4038, %v4009
  %4061 = vst.msk [vmem:[#allocation2 + $0x168] sm:$0xff] %vm4038, %v4011
  %4062 = vst.msk [vmem:[#allocation2 + $0x178] sm:$0xff] %vm4038, %v4013
  %v4087 = vmax.f32 %v2180, %v3822
  %v4088 = vmax.f32 %v2184, %v3824
  %v4089 = vmax.f32 %v2188, %v3826
  %v4090 = vmax.f32 %v2192, %v3828
  %v4091 = vmax.f32 %v2196, %v3830
  %v4092 = vmax.f32 %v2200, %v3832
  %v4093 = vmax.f32 %v2204, %v3834
  %v4094 = vmax.f32 %v2208, %v3836
  %v4095 = vmax.f32 %v2212, %v3838
  %v4096 = vmax.f32 %v2216, %v3840
  %v4097 = vmax.f32 %v2220, %v3842
  %v4098 = vmax.f32 %v2224, %v3844
  %v4099 = vmax.f32 %v2228, %v3846
  %v4100 = vmax.f32 %v2232, %v3848
  %v4101 = vmax.f32 %v2236, %v3850
  %v4102 = vmax.f32 %v2240, %v3852
  %v4103 = vmax.f32 %v2244, %v3854
  %v4104 = vmax.f32 %v2248, %v3856
  %v4105 = vmax.f32 %v2252, %v3858
  %v4106 = vmax.f32 %v2256, %v3860
  %v4107 = vmax.f32 %v2260, %v3862
  %v4108 = vmax.f32 %v2264, %v3864
  %v4109 = vmax.f32 %v2268, %v3866
  %v4110 = vmax.f32 %v2272, %v3868
  %4135 = vrot.lane.b32.xlu0 %v4087, 56
  %v4136 = vpop.permute.xlu0 %4135
  %4137 = vrot.lane.b32.xlu0 %v4088, 56
  %v4138 = vpop.permute.xlu0 %4137
  %4139 = vrot.lane.b32.xlu0 %v4089, 56
  %v4140 = vpop.permute.xlu0 %4139
  %4141 = vrot.lane.b32.xlu0 %v4090, 56
  %v4142 = vpop.permute.xlu0 %4141
  %4143 = vrot.lane.b32.xlu0 %v4091, 56
  %v4144 = vpop.permute.xlu0 %4143
  %4145 = vrot.lane.b32.xlu0 %v4092, 56
  %v4146 = vpop.permute.xlu0 %4145
  %4147 = vrot.lane.b32.xlu0 %v4093, 56
  %v4148 = vpop.permute.xlu0 %4147
  %4149 = vrot.lane.b32.xlu0 %v4094, 56
  %v4150 = vpop.permute.xlu0 %4149
  %4151 = vrot.lane.b32.xlu0 %v4095, 56
  %v4152 = vpop.permute.xlu0 %4151
  %4153 = vrot.lane.b32.xlu0 %v4096, 56
  %v4154 = vpop.permute.xlu0 %4153
  %4155 = vrot.lane.b32.xlu0 %v4097, 56
  %v4156 = vpop.permute.xlu0 %4155
  %4157 = vrot.lane.b32.xlu0 %v4098, 56
  %v4158 = vpop.permute.xlu0 %4157
  %4159 = vrot.lane.b32.xlu0 %v4099, 56
  %v4160 = vpop.permute.xlu0 %4159
  %4161 = vrot.lane.b32.xlu0 %v4100, 56
  %v4162 = vpop.permute.xlu0 %4161
  %4163 = vrot.lane.b32.xlu0 %v4101, 56
  %v4164 = vpop.permute.xlu0 %4163
  %4165 = vrot.lane.b32.xlu0 %v4102, 56
  %v4166 = vpop.permute.xlu0 %4165
  %4167 = vrot.lane.b32.xlu0 %v4103, 56
  %v4168 = vpop.permute.xlu0 %4167
  %4169 = vrot.lane.b32.xlu0 %v4104, 56
  %v4170 = vpop.permute.xlu0 %4169
  %4171 = vrot.lane.b32.xlu0 %v4105, 56
  %v4172 = vpop.permute.xlu0 %4171
  %4173 = vrot.lane.b32.xlu0 %v4106, 56
  %v4174 = vpop.permute.xlu0 %4173
  %4175 = vrot.lane.b32.xlu0 %v4107, 56
  %v4176 = vpop.permute.xlu0 %4175
  %4177 = vrot.lane.b32.xlu0 %v4108, 56
  %v4178 = vpop.permute.xlu0 %4177
  %4179 = vrot.lane.b32.xlu0 %v4109, 56
  %v4180 = vpop.permute.xlu0 %4179
  %4181 = vrot.lane.b32.xlu0 %v4110, 56
  %v4182 = vpop.permute.xlu0 %4181
  %vm4207 = vcmask 753216
  %4208 = vst.msk [vmem:[#allocation2 + $0x8] sm:$0xff] %vm4207, %v4136
  %4209 = vst.msk [vmem:[#allocation2 + $0x18] sm:$0xff] %vm4207, %v4138
  %4210 = vst.msk [vmem:[#allocation2 + $0x28] sm:$0xff] %vm4207, %v4140
  %4211 = vst.msk [vmem:[#allocation2 + $0x38] sm:$0xff] %vm4207, %v4142
  %4212 = vst.msk [vmem:[#allocation2 + $0x48] sm:$0xff] %vm4207, %v4144
  %4213 = vst.msk [vmem:[#allocation2 + $0x58] sm:$0xff] %vm4207, %v4146
  %4214 = vst.msk [vmem:[#allocation2 + $0x68] sm:$0xff] %vm4207, %v4148
  %4215 = vst.msk [vmem:[#allocation2 + $0x78] sm:$0xff] %vm4207, %v4150
  %4216 = vst.msk [vmem:[#allocation2 + $0x88] sm:$0xff] %vm4207, %v4152
  %4217 = vst.msk [vmem:[#allocation2 + $0x98] sm:$0xff] %vm4207, %v4154
  %4218 = vst.msk [vmem:[#allocation2 + $0xa8] sm:$0xff] %vm4207, %v4156
  %4219 = vst.msk [vmem:[#allocation2 + $0xb8] sm:$0xff] %vm4207, %v4158
  %4220 = vst.msk [vmem:[#allocation2 + $0xc8] sm:$0xff] %vm4207, %v4160
  %4221 = vst.msk [vmem:[#allocation2 + $0xd8] sm:$0xff] %vm4207, %v4162
  %4222 = vst.msk [vmem:[#allocation2 + $0xe8] sm:$0xff] %vm4207, %v4164
  %4223 = vst.msk [vmem:[#allocation2 + $0xf8] sm:$0xff] %vm4207, %v4166
  %4224 = vst.msk [vmem:[#allocation2 + $0x108] sm:$0xff] %vm4207, %v4168
  %4225 = vst.msk [vmem:[#allocation2 + $0x118] sm:$0xff] %vm4207, %v4170
  %4226 = vst.msk [vmem:[#allocation2 + $0x128] sm:$0xff] %vm4207, %v4172
  %4227 = vst.msk [vmem:[#allocation2 + $0x138] sm:$0xff] %vm4207, %v4174
  %4228 = vst.msk [vmem:[#allocation2 + $0x148] sm:$0xff] %vm4207, %v4176
  %4229 = vst.msk [vmem:[#allocation2 + $0x158] sm:$0xff] %vm4207, %v4178
  %4230 = vst.msk [vmem:[#allocation2 + $0x168] sm:$0xff] %vm4207, %v4180
  %4231 = vst.msk [vmem:[#allocation2 + $0x178] sm:$0xff] %vm4207, %v4182
  %4232 = vrot.lane.b32.xlu0 %v4087, 36
  %v4233 = vpop.permute.xlu0 %4232
  %4234 = vrot.lane.b32.xlu0 %v4088, 36
  %v4235 = vpop.permute.xlu0 %4234
  %4236 = vrot.lane.b32.xlu0 %v4089, 36
  %v4237 = vpop.permute.xlu0 %4236
  %4238 = vrot.lane.b32.xlu0 %v4090, 36
  %v4239 = vpop.permute.xlu0 %4238
  %4240 = vrot.lane.b32.xlu0 %v4091, 36
  %v4241 = vpop.permute.xlu0 %4240
  %4242 = vrot.lane.b32.xlu0 %v4092, 36
  %v4243 = vpop.permute.xlu0 %4242
  %4244 = vrot.lane.b32.xlu0 %v4093, 36
  %v4245 = vpop.permute.xlu0 %4244
  %4246 = vrot.lane.b32.xlu0 %v4094, 36
  %v4247 = vpop.permute.xlu0 %4246
  %4248 = vrot.lane.b32.xlu0 %v4095, 36
  %v4249 = vpop.permute.xlu0 %4248
  %4250 = vrot.lane.b32.xlu0 %v4096, 36
  %v4251 = vpop.permute.xlu0 %4250
  %4252 = vrot.lane.b32.xlu0 %v4097, 36
  %v4253 = vpop.permute.xlu0 %4252
  %4254 = vrot.lane.b32.xlu0 %v4098, 36
  %v4255 = vpop.permute.xlu0 %4254
  %4256 = vrot.lane.b32.xlu0 %v4099, 36
  %v4257 = vpop.permute.xlu0 %4256
  %4258 = vrot.lane.b32.xlu0 %v4100, 36
  %v4259 = vpop.permute.xlu0 %4258
  %4260 = vrot.lane.b32.xlu0 %v4101, 36
  %v4261 = vpop.permute.xlu0 %4260
  %4262 = vrot.lane.b32.xlu0 %v4102, 36
  %v4263 = vpop.permute.xlu0 %4262
  %4264 = vrot.lane.b32.xlu0 %v4103, 36
  %v4265 = vpop.permute.xlu0 %4264
  %4266 = vrot.lane.b32.xlu0 %v4104, 36
  %v4267 = vpop.permute.xlu0 %4266
  %4268 = vrot.lane.b32.xlu0 %v4105, 36
  %v4269 = vpop.permute.xlu0 %4268
  %4270 = vrot.lane.b32.xlu0 %v4106, 36
  %v4271 = vpop.permute.xlu0 %4270
  %4272 = vrot.lane.b32.xlu0 %v4107, 36
  %v4273 = vpop.permute.xlu0 %4272
  %4274 = vrot.lane.b32.xlu0 %v4108, 36
  %v4275 = vpop.permute.xlu0 %4274
  %4276 = vrot.lane.b32.xlu0 %v4109, 36
  %v4277 = vpop.permute.xlu0 %4276
  %4278 = vrot.lane.b32.xlu0 %v4110, 36
  %v4279 = vpop.permute.xlu0 %4278
  %vm4304 = vcmask 917216
  %4305 = vst.msk [vmem:[#allocation2 + $0x8] sm:$0xff] %vm4304, %v4233
  %4306 = vst.msk [vmem:[#allocation2 + $0x18] sm:$0xff] %vm4304, %v4235
  %4307 = vst.msk [vmem:[#allocation2 + $0x28] sm:$0xff] %vm4304, %v4237
  %4308 = vst.msk [vmem:[#allocation2 + $0x38] sm:$0xff] %vm4304, %v4239
  %4309 = vst.msk [vmem:[#allocation2 + $0x48] sm:$0xff] %vm4304, %v4241
  %4310 = vst.msk [vmem:[#allocation2 + $0x58] sm:$0xff] %vm4304, %v4243
  %4311 = vst.msk [vmem:[#allocation2 + $0x68] sm:$0xff] %vm4304, %v4245
  %4312 = vst.msk [vmem:[#allocation2 + $0x78] sm:$0xff] %vm4304, %v4247
  %4313 = vst.msk [vmem:[#allocation2 + $0x88] sm:$0xff] %vm4304, %v4249
  %4314 = vst.msk [vmem:[#allocation2 + $0x98] sm:$0xff] %vm4304, %v4251
  %4315 = vst.msk [vmem:[#allocation2 + $0xa8] sm:$0xff] %vm4304, %v4253
  %4316 = vst.msk [vmem:[#allocation2 + $0xb8] sm:$0xff] %vm4304, %v4255
  %4317 = vst.msk [vmem:[#allocation2 + $0xc8] sm:$0xff] %vm4304, %v4257
  %4318 = vst.msk [vmem:[#allocation2 + $0xd8] sm:$0xff] %vm4304, %v4259
  %4319 = vst.msk [vmem:[#allocation2 + $0xe8] sm:$0xff] %vm4304, %v4261
  %4320 = vst.msk [vmem:[#allocation2 + $0xf8] sm:$0xff] %vm4304, %v4263
  %4321 = vst.msk [vmem:[#allocation2 + $0x108] sm:$0xff] %vm4304, %v4265
  %4322 = vst.msk [vmem:[#allocation2 + $0x118] sm:$0xff] %vm4304, %v4267
  %4323 = vst.msk [vmem:[#allocation2 + $0x128] sm:$0xff] %vm4304, %v4269
  %4324 = vst.msk [vmem:[#allocation2 + $0x138] sm:$0xff] %vm4304, %v4271
  %4325 = vst.msk [vmem:[#allocation2 + $0x148] sm:$0xff] %vm4304, %v4273
  %4326 = vst.msk [vmem:[#allocation2 + $0x158] sm:$0xff] %vm4304, %v4275
  %4327 = vst.msk [vmem:[#allocation2 + $0x168] sm:$0xff] %vm4304, %v4277
  %4328 = vst.msk [vmem:[#allocation2 + $0x178] sm:$0xff] %vm4304, %v4279
  %v4329 = vld [vmem:[#allocation2] sm:$0xff]
  %v4330 = vld [vmem:[#allocation2 + $0x8] sm:$0xff]
  %v4331 = vld [vmem:[#allocation2 + $0x10] sm:$0xff]
  %v4332 = vld [vmem:[#allocation2 + $0x18] sm:$0xff]
  %v4333 = vmax.f32 %v4329, %v4331
  %v4334 = vmax.f32 %v4330, %v4332
  %v4335 = vld [vmem:[%s2] sm:$0x3]
  %v4337 = vlaneseq
  %v4338 = vshrl.u32 %v4337, 7
  %v4339 = vsub.s32 0, %v4338
  %v4340 = vrot.slane %v4335, %v4339
  %v4341 = vlaneseq
  %v4342 = vshrl.u32 %v4341, 7
  %v4343 = vsub.s32 1, %v4342
  %v4344 = vrot.slane %v4335, %v4343
  %v4347 = vadd.f32 %v4333, %v4340
  %v4348 = vadd.f32 %v4334, %v4344
  %v4349 = vmax.f32 %v4347, 0.0
  %v4350 = vmax.f32 %v4348, 0.0
  %4351 = vst [vmem:[#allocation3] sm:$0xff] %v4349
  %vm4352 = vcmask 916480
  %4353 = vst.msk [vmem:[#allocation3 + $0x8] sm:$0xff] %vm4352, %v4350
  %v4354 = vld [vmem:[#allocation2 + $0x20] sm:$0xff]
  %v4355 = vld [vmem:[#allocation2 + $0x28] sm:$0xff]
  %v4356 = vld [vmem:[#allocation2 + $0x30] sm:$0xff]
  %v4357 = vld [vmem:[#allocation2 + $0x38] sm:$0xff]
  %v4358 = vmax.f32 %v4354, %v4356
  %v4359 = vmax.f32 %v4355, %v4357
  %v4360 = vld [vmem:[%s2] sm:$0x3]
  %v4362 = vlaneseq
  %v4363 = vshrl.u32 %v4362, 7
  %v4364 = vsub.s32 0, %v4363
  %v4365 = vrot.slane %v4360, %v4364
  %v4366 = vlaneseq
  %v4367 = vshrl.u32 %v4366, 7
  %v4368 = vsub.s32 1, %v4367
  %v4369 = vrot.slane %v4360, %v4368
  %v4372 = vadd.f32 %v4358, %v4365
  %v4373 = vadd.f32 %v4359, %v4369
  %v4374 = vmax.f32 %v4372, 0.0
  %v4375 = vmax.f32 %v4373, 0.0
  %4376 = vst [vmem:[#allocation3 + $0x10] sm:$0xff] %v4374
  %4377 = vst.msk [vmem:[#allocation3 + $0x18] sm:$0xff] %vm4352, %v4375
  %v4378 = vld [vmem:[#allocation2 + $0x40] sm:$0xff]
  %v4379 = vld [vmem:[#allocation2 + $0x48] sm:$0xff]
  %v4380 = vld [vmem:[#allocation2 + $0x50] sm:$0xff]
  %v4381 = vld [vmem:[#allocation2 + $0x58] sm:$0xff]
  %v4382 = vmax.f32 %v4378, %v4380
  %v4383 = vmax.f32 %v4379, %v4381
  %v4384 = vld [vmem:[%s2] sm:$0x3]
  %v4386 = vlaneseq
  %v4387 = vshrl.u32 %v4386, 7
  %v4388 = vsub.s32 0, %v4387
  %v4389 = vrot.slane %v4384, %v4388
  %v4390 = vlaneseq
  %v4391 = vshrl.u32 %v4390, 7
  %v4392 = vsub.s32 1, %v4391
  %v4393 = vrot.slane %v4384, %v4392
  %v4396 = vadd.f32 %v4382, %v4389
  %v4397 = vadd.f32 %v4383, %v4393
  %v4398 = vmax.f32 %v4396, 0.0
  %v4399 = vmax.f32 %v4397, 0.0
  %4400 = vst [vmem:[#allocation3 + $0x20] sm:$0xff] %v4398
  %4401 = vst.msk [vmem:[#allocation3 + $0x28] sm:$0xff] %vm4352, %v4399
  %v4402 = vld [vmem:[#allocation2 + $0x60] sm:$0xff]
  %v4403 = vld [vmem:[#allocation2 + $0x68] sm:$0xff]
  %v4404 = vld [vmem:[#allocation2 + $0x70] sm:$0xff]
  %v4405 = vld [vmem:[#allocation2 + $0x78] sm:$0xff]
  %v4406 = vmax.f32 %v4402, %v4404
  %v4407 = vmax.f32 %v4403, %v4405
  %v4408 = vld [vmem:[%s2] sm:$0x3]
  %v4410 = vlaneseq
  %v4411 = vshrl.u32 %v4410, 7
  %v4412 = vsub.s32 0, %v4411
  %v4413 = vrot.slane %v4408, %v4412
  %v4414 = vlaneseq
  %v4415 = vshrl.u32 %v4414, 7
  %v4416 = vsub.s32 1, %v4415
  %v4417 = vrot.slane %v4408, %v4416
  %v4420 = vadd.f32 %v4406, %v4413
  %v4421 = vadd.f32 %v4407, %v4417
  %v4422 = vmax.f32 %v4420, 0.0
  %v4423 = vmax.f32 %v4421, 0.0
  %4424 = vst [vmem:[#allocation3 + $0x30] sm:$0xff] %v4422
  %4425 = vst.msk [vmem:[#allocation3 + $0x38] sm:$0xff] %vm4352, %v4423
  %v4426 = vld [vmem:[#allocation2 + $0x80] sm:$0xff]
  %v4427 = vld [vmem:[#allocation2 + $0x88] sm:$0xff]
  %v4428 = vld [vmem:[#allocation2 + $0x90] sm:$0xff]
  %v4429 = vld [vmem:[#allocation2 + $0x98] sm:$0xff]
  %v4430 = vmax.f32 %v4426, %v4428
  %v4431 = vmax.f32 %v4427, %v4429
  %v4432 = vld [vmem:[%s2] sm:$0x3]
  %v4434 = vlaneseq
  %v4435 = vshrl.u32 %v4434, 7
  %v4436 = vsub.s32 0, %v4435
  %v4437 = vrot.slane %v4432, %v4436
  %v4438 = vlaneseq
  %v4439 = vshrl.u32 %v4438, 7
  %v4440 = vsub.s32 1, %v4439
  %v4441 = vrot.slane %v4432, %v4440
  %v4444 = vadd.f32 %v4430, %v4437
  %v4445 = vadd.f32 %v4431, %v4441
  %v4446 = vmax.f32 %v4444, 0.0
  %v4447 = vmax.f32 %v4445, 0.0
  %4448 = vst [vmem:[#allocation3 + $0x40] sm:$0xff] %v4446
  %4449 = vst.msk [vmem:[#allocation3 + $0x48] sm:$0xff] %vm4352, %v4447
  %v4450 = vld [vmem:[#allocation2 + $0xa0] sm:$0xff]
  %v4451 = vld [vmem:[#allocation2 + $0xa8] sm:$0xff]
  %v4452 = vld [vmem:[#allocation2 + $0xb0] sm:$0xff]
  %v4453 = vld [vmem:[#allocation2 + $0xb8] sm:$0xff]
  %v4454 = vmax.f32 %v4450, %v4452
  %v4455 = vmax.f32 %v4451, %v4453
  %v4456 = vld [vmem:[%s2] sm:$0x3]
  %v4458 = vlaneseq
  %v4459 = vshrl.u32 %v4458, 7
  %v4460 = vsub.s32 0, %v4459
  %v4461 = vrot.slane %v4456, %v4460
  %v4462 = vlaneseq
  %v4463 = vshrl.u32 %v4462, 7
  %v4464 = vsub.s32 1, %v4463
  %v4465 = vrot.slane %v4456, %v4464
  %v4468 = vadd.f32 %v4454, %v4461
  %v4469 = vadd.f32 %v4455, %v4465
  %v4470 = vmax.f32 %v4468, 0.0
  %v4471 = vmax.f32 %v4469, 0.0
  %4472 = vst [vmem:[#allocation3 + $0x50] sm:$0xff] %v4470
  %4473 = vst.msk [vmem:[#allocation3 + $0x58] sm:$0xff] %vm4352, %v4471
  %v4474 = vld [vmem:[#allocation2 + $0xc0] sm:$0xff]
  %v4475 = vld [vmem:[#allocation2 + $0xc8] sm:$0xff]
  %v4476 = vld [vmem:[#allocation2 + $0xd0] sm:$0xff]
  %v4477 = vld [vmem:[#allocation2 + $0xd8] sm:$0xff]
  %v4478 = vmax.f32 %v4474, %v4476
  %v4479 = vmax.f32 %v4475, %v4477
  %v4480 = vld [vmem:[%s2] sm:$0x3]
  %v4482 = vlaneseq
  %v4483 = vshrl.u32 %v4482, 7
  %v4484 = vsub.s32 0, %v4483
  %v4485 = vrot.slane %v4480, %v4484
  %v4486 = vlaneseq
  %v4487 = vshrl.u32 %v4486, 7
  %v4488 = vsub.s32 1, %v4487
  %v4489 = vrot.slane %v4480, %v4488
  %v4492 = vadd.f32 %v4478, %v4485
  %v4493 = vadd.f32 %v4479, %v4489
  %v4494 = vmax.f32 %v4492, 0.0
  %v4495 = vmax.f32 %v4493, 0.0
  %4496 = vst [vmem:[#allocation3 + $0x60] sm:$0xff] %v4494
  %4497 = vst.msk [vmem:[#allocation3 + $0x68] sm:$0xff] %vm4352, %v4495
  %v4498 = vld [vmem:[#allocation2 + $0xe0] sm:$0xff]
  %v4499 = vld [vmem:[#allocation2 + $0xe8] sm:$0xff]
  %v4500 = vld [vmem:[#allocation2 + $0xf0] sm:$0xff]
  %v4501 = vld [vmem:[#allocation2 + $0xf8] sm:$0xff]
  %v4502 = vmax.f32 %v4498, %v4500
  %v4503 = vmax.f32 %v4499, %v4501
  %v4504 = vld [vmem:[%s2] sm:$0x3]
  %v4506 = vlaneseq
  %v4507 = vshrl.u32 %v4506, 7
  %v4508 = vsub.s32 0, %v4507
  %v4509 = vrot.slane %v4504, %v4508
  %v4510 = vlaneseq
  %v4511 = vshrl.u32 %v4510, 7
  %v4512 = vsub.s32 1, %v4511
  %v4513 = vrot.slane %v4504, %v4512
  %v4516 = vadd.f32 %v4502, %v4509
  %v4517 = vadd.f32 %v4503, %v4513
  %v4518 = vmax.f32 %v4516, 0.0
  %v4519 = vmax.f32 %v4517, 0.0
  %4520 = vst [vmem:[#allocation3 + $0x70] sm:$0xff] %v4518
  %4521 = vst.msk [vmem:[#allocation3 + $0x78] sm:$0xff] %vm4352, %v4519
  %v4522 = vld [vmem:[#allocation2 + $0x100] sm:$0xff]
  %v4523 = vld [vmem:[#allocation2 + $0x108] sm:$0xff]
  %v4524 = vld [vmem:[#allocation2 + $0x110] sm:$0xff]
  %v4525 = vld [vmem:[#allocation2 + $0x118] sm:$0xff]
  %v4526 = vmax.f32 %v4522, %v4524
  %v4527 = vmax.f32 %v4523, %v4525
  %v4528 = vld [vmem:[%s2] sm:$0x3]
  %v4530 = vlaneseq
  %v4531 = vshrl.u32 %v4530, 7
  %v4532 = vsub.s32 0, %v4531
  %v4533 = vrot.slane %v4528, %v4532
  %v4534 = vlaneseq
  %v4535 = vshrl.u32 %v4534, 7
  %v4536 = vsub.s32 1, %v4535
  %v4537 = vrot.slane %v4528, %v4536
  %v4540 = vadd.f32 %v4526, %v4533
  %v4541 = vadd.f32 %v4527, %v4537
  %v4542 = vmax.f32 %v4540, 0.0
  %v4543 = vmax.f32 %v4541, 0.0
  %4544 = vst [vmem:[#allocation3 + $0x80] sm:$0xff] %v4542
  %4545 = vst.msk [vmem:[#allocation3 + $0x88] sm:$0xff] %vm4352, %v4543
  %v4546 = vld [vmem:[#allocation2 + $0x120] sm:$0xff]
  %v4547 = vld [vmem:[#allocation2 + $0x128] sm:$0xff]
  %v4548 = vld [vmem:[#allocation2 + $0x130] sm:$0xff]
  %v4549 = vld [vmem:[#allocation2 + $0x138] sm:$0xff]
  %v4550 = vmax.f32 %v4546, %v4548
  %v4551 = vmax.f32 %v4547, %v4549
  %v4552 = vld [vmem:[%s2] sm:$0x3]
  %v4554 = vlaneseq
  %v4555 = vshrl.u32 %v4554, 7
  %v4556 = vsub.s32 0, %v4555
  %v4557 = vrot.slane %v4552, %v4556
  %v4558 = vlaneseq
  %v4559 = vshrl.u32 %v4558, 7
  %v4560 = vsub.s32 1, %v4559
  %v4561 = vrot.slane %v4552, %v4560
  %v4564 = vadd.f32 %v4550, %v4557
  %v4565 = vadd.f32 %v4551, %v4561
  %v4566 = vmax.f32 %v4564, 0.0
  %v4567 = vmax.f32 %v4565, 0.0
  %4568 = vst [vmem:[#allocation3 + $0x90] sm:$0xff] %v4566
  %4569 = vst.msk [vmem:[#allocation3 + $0x98] sm:$0xff] %vm4352, %v4567
  %v4570 = vld [vmem:[#allocation2 + $0x140] sm:$0xff]
  %v4571 = vld [vmem:[#allocation2 + $0x148] sm:$0xff]
  %v4572 = vld [vmem:[#allocation2 + $0x150] sm:$0xff]
  %v4573 = vld [vmem:[#allocation2 + $0x158] sm:$0xff]
  %v4574 = vmax.f32 %v4570, %v4572
  %v4575 = vmax.f32 %v4571, %v4573
  %v4576 = vld [vmem:[%s2] sm:$0x3]
  %v4578 = vlaneseq
  %v4579 = vshrl.u32 %v4578, 7
  %v4580 = vsub.s32 0, %v4579
  %v4581 = vrot.slane %v4576, %v4580
  %v4582 = vlaneseq
  %v4583 = vshrl.u32 %v4582, 7
  %v4584 = vsub.s32 1, %v4583
  %v4585 = vrot.slane %v4576, %v4584
  %v4588 = vadd.f32 %v4574, %v4581
  %v4589 = vadd.f32 %v4575, %v4585
  %v4590 = vmax.f32 %v4588, 0.0
  %v4591 = vmax.f32 %v4589, 0.0
  %4592 = vst [vmem:[#allocation3 + $0xa0] sm:$0xff] %v4590
  %4593 = vst.msk [vmem:[#allocation3 + $0xa8] sm:$0xff] %vm4352, %v4591
  %v4594 = vld [vmem:[#allocation2 + $0x160] sm:$0xff]
  %v4595 = vld [vmem:[#allocation2 + $0x168] sm:$0xff]
  %v4596 = vld [vmem:[#allocation2 + $0x170] sm:$0xff]
  %v4597 = vld [vmem:[#allocation2 + $0x178] sm:$0xff]
  %v4598 = vmax.f32 %v4594, %v4596
  %v4599 = vmax.f32 %v4595, %v4597
  %v4600 = vld [vmem:[%s2] sm:$0x3]
  %v4602 = vlaneseq
  %v4603 = vshrl.u32 %v4602, 7
  %v4604 = vsub.s32 0, %v4603
  %v4605 = vrot.slane %v4600, %v4604
  %v4606 = vlaneseq
  %v4607 = vshrl.u32 %v4606, 7
  %v4608 = vsub.s32 1, %v4607
  %v4609 = vrot.slane %v4600, %v4608
  %v4612 = vadd.f32 %v4598, %v4605
  %v4613 = vadd.f32 %v4599, %v4609
  %v4614 = vmax.f32 %v4612, 0.0
  %v4615 = vmax.f32 %v4613, 0.0
  %4616 = vst [vmem:[#allocation3 + $0xb0] sm:$0xff] %v4614
  %4617 = vst.msk [vmem:[#allocation3 + $0xb8] sm:$0xff] %vm4352, %v4615
  %v4618 = vld [vmem:[#allocation3] sm:$0xff]
  %v4619 = vld [vmem:[#allocation3 + $0x8] sm:$0xff]
  %v4620 = vld [vmem:[#allocation3 + $0x10] sm:$0xff]
  %v4621 = vld [vmem:[#allocation3 + $0x18] sm:$0xff]
  %v4622 = vld [vmem:[#allocation3 + $0x20] sm:$0xff]
  %v4623 = vld [vmem:[#allocation3 + $0x28] sm:$0xff]
  %v4624 = vld [vmem:[#allocation3 + $0x30] sm:$0xff]
  %v4625 = vld [vmem:[#allocation3 + $0x38] sm:$0xff]
  %v4626 = vld [vmem:[#allocation3 + $0x40] sm:$0xff]
  %v4627 = vld [vmem:[#allocation3 + $0x48] sm:$0xff]
  %v4628 = vld [vmem:[#allocation3 + $0x50] sm:$0xff]
  %v4629 = vld [vmem:[#allocation3 + $0x58] sm:$0xff]
  %v4630 = vld [vmem:[#allocation3 + $0x60] sm:$0xff]
  %v4631 = vld [vmem:[#allocation3 + $0x68] sm:$0xff]
  %v4632 = vld [vmem:[#allocation3 + $0x70] sm:$0xff]
  %v4633 = vld [vmem:[#allocation3 + $0x78] sm:$0xff]
  %v4634 = vpack.c.bf16 %v4620, %v4618
  %v4635 = vpack.c.bf16 %v4621, %v4619
  %v4636 = vpack.c.bf16 %v4624, %v4622
  %v4637 = vpack.c.bf16 %v4625, %v4623
  %v4638 = vpack.c.bf16 %v4628, %v4626
  %v4639 = vpack.c.bf16 %v4629, %v4627
  %v4640 = vpack.c.bf16 %v4632, %v4630
  %v4641 = vpack.c.bf16 %v4633, %v4631
  %v4642 = vld [vmem:[%s3] sm:$0xff]
  %v4643 = vld [vmem:[%s3 + $0x8] sm:$0xff]
  %v4644 = vld [vmem:[%s3 + $0x10] sm:$0xff]
  %v4645 = vld [vmem:[%s3 + $0x18] sm:$0xff]
  %v4646 = vld [vmem:[%s3 + $0x20] sm:$0xff]
  %v4647 = vld [vmem:[%s3 + $0x28] sm:$0xff]
  %v4648 = vld [vmem:[%s3 + $0x30] sm:$0xff]
  %v4649 = vld [vmem:[%s3 + $0x38] sm:$0xff]
  %v4650 = vld [vmem:[%s3 + $0x40] sm:$0xff]
  %v4651 = vld [vmem:[%s3 + $0x48] sm:$0xff]
  %v4652 = vld [vmem:[%s3 + $0x50] sm:$0xff]
  %v4653 = vld [vmem:[%s3 + $0x58] sm:$0xff]
  %v4654 = vld [vmem:[%s3 + $0x60] sm:$0xff]
  %v4655 = vld [vmem:[%s3 + $0x68] sm:$0xff]
  %v4656 = vld [vmem:[%s3 + $0x70] sm:$0xff]
  %v4657 = vld [vmem:[%s3 + $0x78] sm:$0xff]
  %v4658 = vld [vmem:[%s3 + $0x80] sm:$0xff]
  %v4659 = vld [vmem:[%s3 + $0x88] sm:$0xff]
  %v4660 = vld [vmem:[%s3 + $0x90] sm:$0xff]
  %v4661 = vld [vmem:[%s3 + $0x98] sm:$0xff]
  %v4662 = vld [vmem:[%s3 + $0xa0] sm:$0xff]
  %v4663 = vld [vmem:[%s3 + $0xa8] sm:$0xff]
  %v4664 = vld [vmem:[%s3 + $0xb0] sm:$0xff]
  %v4665 = vld [vmem:[%s3 + $0xb8] sm:$0xff]
  %v4666 = vld [vmem:[%s3 + $0xc0] sm:$0xff]
  %v4667 = vld [vmem:[%s3 + $0xc8] sm:$0xff]
  %v4668 = vld [vmem:[%s3 + $0xd0] sm:$0xff]
  %v4669 = vld [vmem:[%s3 + $0xd8] sm:$0xff]
  %v4670 = vld [vmem:[%s3 + $0xe0] sm:$0xff]
  %v4671 = vld [vmem:[%s3 + $0xe8] sm:$0xff]
  %v4672 = vld [vmem:[%s3 + $0xf0] sm:$0xff]
  %v4673 = vld [vmem:[%s3 + $0xf8] sm:$0xff]
  %v4674 = vld [vmem:[%s3 + $0x100] sm:$0xff]
  %v4675 = vld [vmem:[%s3 + $0x108] sm:$0xff]
  %v4676 = vld [vmem:[%s3 + $0x110] sm:$0xff]
  %v4677 = vld [vmem:[%s3 + $0x118] sm:$0xff]
  %v4678 = vld [vmem:[%s3 + $0x120] sm:$0xff]
  %v4679 = vld [vmem:[%s3 + $0x128] sm:$0xff]
  %v4680 = vld [vmem:[%s3 + $0x130] sm:$0xff]
  %v4681 = vld [vmem:[%s3 + $0x138] sm:$0xff]
  %v4682 = vld [vmem:[%s3 + $0x140] sm:$0xff]
  %v4683 = vld [vmem:[%s3 + $0x148] sm:$0xff]
  %v4684 = vld [vmem:[%s3 + $0x150] sm:$0xff]
  %v4685 = vld [vmem:[%s3 + $0x158] sm:$0xff]
  %v4686 = vld [vmem:[%s3 + $0x160] sm:$0xff]
  %v4687 = vld [vmem:[%s3 + $0x168] sm:$0xff]
  %v4688 = vld [vmem:[%s3 + $0x170] sm:$0xff]
  %v4689 = vld [vmem:[%s3 + $0x178] sm:$0xff]
  %v4690 = vld [vmem:[%s3 + $0x180] sm:$0xff]
  %v4691 = vld [vmem:[%s3 + $0x188] sm:$0xff]
  %v4692 = vld [vmem:[%s3 + $0x190] sm:$0xff]
  %v4693 = vld [vmem:[%s3 + $0x198] sm:$0xff]
  %v4694 = vld [vmem:[%s3 + $0x1a0] sm:$0xff]
  %v4695 = vld [vmem:[%s3 + $0x1a8] sm:$0xff]
  %v4696 = vld [vmem:[%s3 + $0x1b0] sm:$0xff]
  %v4697 = vld [vmem:[%s3 + $0x1b8] sm:$0xff]
  %v4698 = vld [vmem:[%s3 + $0x1c0] sm:$0xff]
  %v4699 = vld [vmem:[%s3 + $0x1c8] sm:$0xff]
  %v4700 = vld [vmem:[%s3 + $0x1d0] sm:$0xff]
  %v4701 = vld [vmem:[%s3 + $0x1d8] sm:$0xff]
  %v4702 = vld [vmem:[#allocation3 + $0x80] sm:$0xff]
  %v4703 = vld [vmem:[#allocation3 + $0x88] sm:$0xff]
  %v4704 = vpack.c.bf16 %v4622, %v4620
  %v4705 = vpack.c.bf16 %v4623, %v4621
  %v4706 = vpack.c.bf16 %v4626, %v4624
  %v4707 = vpack.c.bf16 %v4627, %v4625
  %v4708 = vpack.c.bf16 %v4630, %v4628
  %v4709 = vpack.c.bf16 %v4631, %v4629
  %v4710 = vpack.c.bf16 %v4702, %v4632
  %v4711 = vpack.c.bf16 %v4703, %v4633
  %s4712 = scalar_lea.vmem %s3, 480
  %v4713 = vld [vmem:[%s4712] sm:$0xff]
  %v4714 = vld [vmem:[%s4712 + $0x8] sm:$0xff]
  %v4715 = vld [vmem:[%s4712 + $0x10] sm:$0xff]
  %v4716 = vld [vmem:[%s4712 + $0x18] sm:$0xff]
  %v4717 = vld [vmem:[%s4712 + $0x20] sm:$0xff]
  %v4718 = vld [vmem:[%s4712 + $0x28] sm:$0xff]
  %v4719 = vld [vmem:[%s4712 + $0x30] sm:$0xff]
  %v4720 = vld [vmem:[%s4712 + $0x38] sm:$0xff]
  %v4721 = vld [vmem:[%s4712 + $0x40] sm:$0xff]
  %v4722 = vld [vmem:[%s4712 + $0x48] sm:$0xff]
  %v4723 = vld [vmem:[%s4712 + $0x50] sm:$0xff]
  %v4724 = vld [vmem:[%s4712 + $0x58] sm:$0xff]
  %v4725 = vld [vmem:[%s4712 + $0x60] sm:$0xff]
  %v4726 = vld [vmem:[%s4712 + $0x68] sm:$0xff]
  %v4727 = vld [vmem:[%s4712 + $0x70] sm:$0xff]
  %v4728 = vld [vmem:[%s4712 + $0x78] sm:$0xff]
  %v4729 = vld [vmem:[%s4712 + $0x80] sm:$0xff]
  %v4730 = vld [vmem:[%s4712 + $0x88] sm:$0xff]
  %v4731 = vld [vmem:[%s4712 + $0x90] sm:$0xff]
  %v4732 = vld [vmem:[%s4712 + $0x98] sm:$0xff]
  %v4733 = vld [vmem:[%s4712 + $0xa0] sm:$0xff]
  %v4734 = vld [vmem:[%s4712 + $0xa8] sm:$0xff]
  %v4735 = vld [vmem:[%s4712 + $0xb0] sm:$0xff]
  %v4736 = vld [vmem:[%s4712 + $0xb8] sm:$0xff]
  %v4737 = vld [vmem:[%s4712 + $0xc0] sm:$0xff]
  %v4738 = vld [vmem:[%s4712 + $0xc8] sm:$0xff]
  %v4739 = vld [vmem:[%s4712 + $0xd0] sm:$0xff]
  %v4740 = vld [vmem:[%s4712 + $0xd8] sm:$0xff]
  %v4741 = vld [vmem:[%s4712 + $0xe0] sm:$0xff]
  %v4742 = vld [vmem:[%s4712 + $0xe8] sm:$0xff]
  %v4743 = vld [vmem:[%s4712 + $0xf0] sm:$0xff]
  %v4744 = vld [vmem:[%s4712 + $0xf8] sm:$0xff]
  %v4745 = vld [vmem:[%s4712 + $0x100] sm:$0xff]
  %v4746 = vld [vmem:[%s4712 + $0x108] sm:$0xff]
  %v4747 = vld [vmem:[%s4712 + $0x110] sm:$0xff]
  %v4748 = vld [vmem:[%s4712 + $0x118] sm:$0xff]
  %v4749 = vld [vmem:[%s4712 + $0x120] sm:$0xff]
  %v4750 = vld [vmem:[%s4712 + $0x128] sm:$0xff]
  %v4751 = vld [vmem:[%s4712 + $0x130] sm:$0xff]
  %v4752 = vld [vmem:[%s4712 + $0x138] sm:$0xff]
  %v4753 = vld [vmem:[%s4712 + $0x140] sm:$0xff]
  %v4754 = vld [vmem:[%s4712 + $0x148] sm:$0xff]
  %v4755 = vld [vmem:[%s4712 + $0x150] sm:$0xff]
  %v4756 = vld [vmem:[%s4712 + $0x158] sm:$0xff]
  %v4757 = vld [vmem:[%s4712 + $0x160] sm:$0xff]
  %v4758 = vld [vmem:[%s4712 + $0x168] sm:$0xff]
  %v4759 = vld [vmem:[%s4712 + $0x170] sm:$0xff]
  %v4760 = vld [vmem:[%s4712 + $0x178] sm:$0xff]
  %v4761 = vld [vmem:[%s4712 + $0x180] sm:$0xff]
  %v4762 = vld [vmem:[%s4712 + $0x188] sm:$0xff]
  %v4763 = vld [vmem:[%s4712 + $0x190] sm:$0xff]
  %v4764 = vld [vmem:[%s4712 + $0x198] sm:$0xff]
  %v4765 = vld [vmem:[%s4712 + $0x1a0] sm:$0xff]
  %v4766 = vld [vmem:[%s4712 + $0x1a8] sm:$0xff]
  %v4767 = vld [vmem:[%s4712 + $0x1b0] sm:$0xff]
  %v4768 = vld [vmem:[%s4712 + $0x1b8] sm:$0xff]
  %v4769 = vld [vmem:[%s4712 + $0x1c0] sm:$0xff]
  %v4770 = vld [vmem:[%s4712 + $0x1c8] sm:$0xff]
  %v4771 = vld [vmem:[%s4712 + $0x1d0] sm:$0xff]
  %v4772 = vld [vmem:[%s4712 + $0x1d8] sm:$0xff]
  %v4833 = vunpack.c.l.b16 %v4713
  %v4834 = vunpack.c.h.b16 %v4713
  %v4835 = vunpack.c.l.b16 %v4714
  %v4836 = vunpack.c.h.b16 %v4714
  %v4837 = vunpack.c.l.b16 %v4715
  %v4838 = vunpack.c.h.b16 %v4715
  %v4839 = vunpack.c.l.b16 %v4716
  %v4840 = vunpack.c.h.b16 %v4716
  %v4841 = vunpack.c.l.b16 %v4717
  %v4842 = vunpack.c.h.b16 %v4717
  %v4843 = vunpack.c.l.b16 %v4718
  %v4844 = vunpack.c.h.b16 %v4718
  %v4845 = vunpack.c.l.b16 %v4719
  %v4846 = vunpack.c.h.b16 %v4719
  %v4847 = vunpack.c.l.b16 %v4720
  %v4848 = vunpack.c.h.b16 %v4720
  %v4849 = vunpack.c.l.b16 %v4721
  %v4850 = vunpack.c.h.b16 %v4721
  %v4851 = vunpack.c.l.b16 %v4722
  %v4852 = vunpack.c.h.b16 %v4722
  %v4853 = vunpack.c.l.b16 %v4723
  %v4854 = vunpack.c.h.b16 %v4723
  %v4855 = vunpack.c.l.b16 %v4724
  %v4856 = vunpack.c.h.b16 %v4724
  %v4857 = vunpack.c.l.b16 %v4725
  %v4858 = vunpack.c.h.b16 %v4725
  %v4859 = vunpack.c.l.b16 %v4726
  %v4860 = vunpack.c.h.b16 %v4726
  %v4861 = vunpack.c.l.b16 %v4727
  %v4862 = vunpack.c.h.b16 %v4727
  %v4863 = vunpack.c.l.b16 %v4728
  %v4864 = vunpack.c.h.b16 %v4728
  %v4865 = vunpack.c.l.b16 %v4729
  %v4866 = vunpack.c.h.b16 %v4729
  %v4867 = vunpack.c.l.b16 %v4730
  %v4868 = vunpack.c.h.b16 %v4730
  %v4869 = vunpack.c.l.b16 %v4731
  %v4870 = vunpack.c.h.b16 %v4731
  %v4871 = vunpack.c.l.b16 %v4732
  %v4872 = vunpack.c.h.b16 %v4732
  %v4873 = vunpack.c.l.b16 %v4733
  %v4874 = vunpack.c.h.b16 %v4733
  %v4875 = vunpack.c.l.b16 %v4734
  %v4876 = vunpack.c.h.b16 %v4734
  %v4877 = vunpack.c.l.b16 %v4735
  %v4878 = vunpack.c.h.b16 %v4735
  %v4879 = vunpack.c.l.b16 %v4736
  %v4880 = vunpack.c.h.b16 %v4736
  %v4881 = vunpack.c.l.b16 %v4737
  %v4882 = vunpack.c.h.b16 %v4737
  %v4883 = vunpack.c.l.b16 %v4738
  %v4884 = vunpack.c.h.b16 %v4738
  %v4885 = vunpack.c.l.b16 %v4739
  %v4886 = vunpack.c.h.b16 %v4739
  %v4887 = vunpack.c.l.b16 %v4740
  %v4888 = vunpack.c.h.b16 %v4740
  %v4889 = vunpack.c.l.b16 %v4741
  %v4890 = vunpack.c.h.b16 %v4741
  %v4891 = vunpack.c.l.b16 %v4742
  %v4892 = vunpack.c.h.b16 %v4742
  %v4893 = vunpack.c.l.b16 %v4743
  %v4894 = vunpack.c.h.b16 %v4743
  %v4895 = vunpack.c.l.b16 %v4744
  %v4896 = vunpack.c.h.b16 %v4744
  %v4897 = vunpack.c.l.b16 %v4745
  %v4898 = vunpack.c.h.b16 %v4745
  %v4899 = vunpack.c.l.b16 %v4746
  %v4900 = vunpack.c.h.b16 %v4746
  %v4901 = vunpack.c.l.b16 %v4747
  %v4902 = vunpack.c.h.b16 %v4747
  %v4903 = vunpack.c.l.b16 %v4748
  %v4904 = vunpack.c.h.b16 %v4748
  %v4905 = vunpack.c.l.b16 %v4749
  %v4906 = vunpack.c.h.b16 %v4749
  %v4907 = vunpack.c.l.b16 %v4750
  %v4908 = vunpack.c.h.b16 %v4750
  %v4909 = vunpack.c.l.b16 %v4751
  %v4910 = vunpack.c.h.b16 %v4751
  %v4911 = vunpack.c.l.b16 %v4752
  %v4912 = vunpack.c.h.b16 %v4752
  %v4913 = vunpack.c.l.b16 %v4753
  %v4914 = vunpack.c.h.b16 %v4753
  %v4915 = vunpack.c.l.b16 %v4754
  %v4916 = vunpack.c.h.b16 %v4754
  %v4917 = vunpack.c.l.b16 %v4755
  %v4918 = vunpack.c.h.b16 %v4755
  %v4919 = vunpack.c.l.b16 %v4756
  %v4920 = vunpack.c.h.b16 %v4756
  %v4921 = vunpack.c.l.b16 %v4757
  %v4922 = vunpack.c.h.b16 %v4757
  %v4923 = vunpack.c.l.b16 %v4758
  %v4924 = vunpack.c.h.b16 %v4758
  %v4925 = vunpack.c.l.b16 %v4759
  %v4926 = vunpack.c.h.b16 %v4759
  %v4927 = vunpack.c.l.b16 %v4760
  %v4928 = vunpack.c.h.b16 %v4760
  %v4929 = vunpack.c.l.b16 %v4761
  %v4930 = vunpack.c.h.b16 %v4761
  %v4931 = vunpack.c.l.b16 %v4762
  %v4932 = vunpack.c.h.b16 %v4762
  %v4933 = vunpack.c.l.b16 %v4763
  %v4934 = vunpack.c.h.b16 %v4763
  %v4935 = vunpack.c.l.b16 %v4764
  %v4936 = vunpack.c.h.b16 %v4764
  %v4937 = vunpack.c.l.b16 %v4765
  %v4938 = vunpack.c.h.b16 %v4765
  %v4939 = vunpack.c.l.b16 %v4766
  %v4940 = vunpack.c.h.b16 %v4766
  %v4941 = vunpack.c.l.b16 %v4767
  %v4942 = vunpack.c.h.b16 %v4767
  %v4943 = vunpack.c.l.b16 %v4768
  %v4944 = vunpack.c.h.b16 %v4768
  %v4945 = vunpack.c.l.b16 %v4769
  %v4946 = vunpack.c.h.b16 %v4769
  %v4947 = vunpack.c.l.b16 %v4770
  %v4948 = vunpack.c.h.b16 %v4770
  %v4949 = vunpack.c.l.b16 %v4771
  %v4950 = vunpack.c.h.b16 %v4771
  %v4951 = vunpack.c.l.b16 %v4772
  %v4952 = vunpack.c.h.b16 %v4772
  %v4953 = vpack.c.b16 %v4837, %v4833
  %v4954 = vpack.c.b16 %v4838, %v4834
  %v4955 = vpack.c.b16 %v4839, %v4835
  %v4956 = vpack.c.b16 %v4840, %v4836
  %v4957 = vpack.c.b16 %v4845, %v4841
  %v4958 = vpack.c.b16 %v4846, %v4842
  %v4959 = vpack.c.b16 %v4847, %v4843
  %v4960 = vpack.c.b16 %v4848, %v4844
  %v4961 = vpack.c.b16 %v4853, %v4849
  %v4962 = vpack.c.b16 %v4854, %v4850
  %v4963 = vpack.c.b16 %v4855, %v4851
  %v4964 = vpack.c.b16 %v4856, %v4852
  %v4965 = vpack.c.b16 %v4861, %v4857
  %v4966 = vpack.c.b16 %v4862, %v4858
  %v4967 = vpack.c.b16 %v4863, %v4859
  %v4968 = vpack.c.b16 %v4864, %v4860
  %v4969 = vpack.c.b16 %v4869, %v4865
  %v4970 = vpack.c.b16 %v4870, %v4866
  %v4971 = vpack.c.b16 %v4871, %v4867
  %v4972 = vpack.c.b16 %v4872, %v4868
  %v4973 = vpack.c.b16 %v4877, %v4873
  %v4974 = vpack.c.b16 %v4878, %v4874
  %v4975 = vpack.c.b16 %v4879, %v4875
  %v4976 = vpack.c.b16 %v4880, %v4876
  %v4977 = vpack.c.b16 %v4885, %v4881
  %v4978 = vpack.c.b16 %v4886, %v4882
  %v4979 = vpack.c.b16 %v4887, %v4883
  %v4980 = vpack.c.b16 %v4888, %v4884
  %v4981 = vpack.c.b16 %v4893, %v4889
  %v4982 = vpack.c.b16 %v4894, %v4890
  %v4983 = vpack.c.b16 %v4895, %v4891
  %v4984 = vpack.c.b16 %v4896, %v4892
  %v4985 = vpack.c.b16 %v4901, %v4897
  %v4986 = vpack.c.b16 %v4902, %v4898
  %v4987 = vpack.c.b16 %v4903, %v4899
  %v4988 = vpack.c.b16 %v4904, %v4900
  %v4989 = vpack.c.b16 %v4909, %v4905
  %v4990 = vpack.c.b16 %v4910, %v4906
  %v4991 = vpack.c.b16 %v4911, %v4907
  %v4992 = vpack.c.b16 %v4912, %v4908
  %v4993 = vpack.c.b16 %v4917, %v4913
  %v4994 = vpack.c.b16 %v4918, %v4914
  %v4995 = vpack.c.b16 %v4919, %v4915
  %v4996 = vpack.c.b16 %v4920, %v4916
  %v4997 = vpack.c.b16 %v4925, %v4921
  %v4998 = vpack.c.b16 %v4926, %v4922
  %v4999 = vpack.c.b16 %v4927, %v4923
  %v5000 = vpack.c.b16 %v4928, %v4924
  %v5001 = vpack.c.b16 %v4933, %v4929
  %v5002 = vpack.c.b16 %v4934, %v4930
  %v5003 = vpack.c.b16 %v4935, %v4931
  %v5004 = vpack.c.b16 %v4936, %v4932
  %v5005 = vpack.c.b16 %v4941, %v4937
  %v5006 = vpack.c.b16 %v4942, %v4938
  %v5007 = vpack.c.b16 %v4943, %v4939
  %v5008 = vpack.c.b16 %v4944, %v4940
  %v5009 = vpack.c.b16 %v4949, %v4945
  %v5010 = vpack.c.b16 %v4950, %v4946
  %v5011 = vpack.c.b16 %v4951, %v4947
  %v5012 = vpack.c.b16 %v4952, %v4948
  %v5074 = vsel %vm4352, %v4705, 0
  %v5077 = vsel %vm4352, %v4707, 0
  %v5080 = vsel %vm4352, %v4709, 0
  %v5083 = vsel %vm4352, %v4711, 0
  %5085 = vmatprep.subr.bf16.mxu0 %v4982
  %5086 = vmatpush1.bf16.msra.mxu0 %v4981
  %5087 = vmatprep.subr.bf16.mxu0 %v4978
  %5088 = vmatpush1.bf16.msra.mxu0 %v4977
  %5089 = vmatprep.subr.bf16.mxu0 %v4974
  %5090 = vmatpush1.bf16.msra.mxu0 %v4973
  %5091 = vmatprep.subr.bf16.mxu0 %v4970
  %5092 = vmatpush1.bf16.msra.mxu0 %v4969
  %5093 = vmatprep.subr.bf16.mxu0 %v4966
  %5094 = vmatpush1.bf16.msra.mxu0 %v4965
  %5095 = vmatprep.subr.bf16.mxu0 %v4962
  %5096 = vmatpush1.bf16.msra.mxu0 %v4961
  %5097 = vmatprep.subr.bf16.mxu0 %v4958
  %5098 = vmatpush1.bf16.msra.mxu0 %v4957
  %5099 = vmatprep.subr.bf16.mxu0 %v4954
  %5100 = vmatpush1.bf16.msra.mxu0 %v4953
  %5101 = vmatprep.subr.bf16.mxu0 0
  %5102 = vmatpush2.bf16.msra.mxu0 0
  %5103 = vmatprep.subr.bf16.mxu0 %v5010
  %5104 = vmatpush2.bf16.msra.mxu0 %v5009
  %5105 = vmatprep.subr.bf16.mxu0 %v5006
  %5106 = vmatpush2.bf16.msra.mxu0 %v5005
  %5107 = vmatprep.subr.bf16.mxu0 %v5002
  %5108 = vmatpush2.bf16.msra.mxu0 %v5001
  %5109 = vmatprep.subr.bf16.mxu0 %v4998
  %5110 = vmatpush2.bf16.msra.mxu0 %v4997
  %5111 = vmatprep.subr.bf16.mxu0 %v4994
  %5112 = vmatpush2.bf16.msra.mxu0 %v4993
  %5113 = vmatprep.subr.bf16.mxu0 %v4990
  %5114 = vmatpush2.bf16.msra.mxu0 %v4989
  %5115 = vmatprep.subr.bf16.mxu0 %v4986
  %5116 = vmatpush2.bf16.msra.mxu0 %v4985
  %5117 = vmatprep.mubr.bf16.mxu0 %v5074
  %5118 = vmatmul.mubr.bf16.gmra.mxu0 %v4704
  %v5119 = vpop.f32.mrf.mxu0
  %v5120 = vadd.f32 0.0, %v5119
  %v5121 = vpop.f32.mrf.mxu0
  %v5122 = vadd.f32 0.0, %v5121
  %v5123 = vpop.f32.mrf.mxu0
  %v5124 = vadd.f32 0.0, %v5123
  %v5125 = vpop.f32.mrf.mxu0
  %v5126 = vadd.f32 0.0, %v5125
  %5127 = vmatprep.mubr.bf16.mxu0 %v5077
  %5128 = vmatmul.mubr.bf16.gmra.mxu0 %v4706
  %v5129 = vpop.f32.mrf.mxu0
  %v5130 = vadd.f32 0.0, %v5129
  %v5131 = vpop.f32.mrf.mxu0
  %v5132 = vadd.f32 0.0, %v5131
  %v5133 = vpop.f32.mrf.mxu0
  %v5134 = vadd.f32 0.0, %v5133
  %v5135 = vpop.f32.mrf.mxu0
  %v5136 = vadd.f32 0.0, %v5135
  %5137 = vmatprep.mubr.bf16.mxu0 %v5080
  %5138 = vmatmul.mubr.bf16.gmra.mxu0 %v4708
  %v5139 = vpop.f32.mrf.mxu0
  %v5140 = vadd.f32 0.0, %v5139
  %v5141 = vpop.f32.mrf.mxu0
  %v5142 = vadd.f32 0.0, %v5141
  %v5143 = vpop.f32.mrf.mxu0
  %v5144 = vadd.f32 0.0, %v5143
  %v5145 = vpop.f32.mrf.mxu0
  %v5146 = vadd.f32 0.0, %v5145
  %5147 = vmatprep.mubr.bf16.mxu0 %v5083
  %5148 = vmatmul.mubr.bf16.gmra.mxu0 %v4710
  %v5149 = vpop.f32.mrf.mxu0
  %v5150 = vadd.f32 0.0, %v5149
  %v5151 = vpop.f32.mrf.mxu0
  %v5152 = vadd.f32 0.0, %v5151
  %v5153 = vpop.f32.mrf.mxu0
  %v5154 = vadd.f32 0.0, %v5153
  %v5155 = vpop.f32.mrf.mxu0
  %v5156 = vadd.f32 0.0, %v5155
  %5157 = vdwg.mxu0
  %5158 = vmatprep.subr.bf16.mxu0 %v4984
  %5159 = vmatpush1.bf16.msra.mxu0 %v4983
  %5160 = vmatprep.subr.bf16.mxu0 %v4980
  %5161 = vmatpush1.bf16.msra.mxu0 %v4979
  %5162 = vmatprep.subr.bf16.mxu0 %v4976
  %5163 = vmatpush1.bf16.msra.mxu0 %v4975
  %5164 = vmatprep.subr.bf16.mxu0 %v4972
  %5165 = vmatpush1.bf16.msra.mxu0 %v4971
  %5166 = vmatprep.subr.bf16.mxu0 %v4968
  %5167 = vmatpush1.bf16.msra.mxu0 %v4967
  %5168 = vmatprep.subr.bf16.mxu0 %v4964
  %5169 = vmatpush1.bf16.msra.mxu0 %v4963
  %5170 = vmatprep.subr.bf16.mxu0 %v4960
  %5171 = vmatpush1.bf16.msra.mxu0 %v4959
  %5172 = vmatprep.subr.bf16.mxu0 %v4956
  %5173 = vmatpush1.bf16.msra.mxu0 %v4955
  %5174 = vmatprep.subr.bf16.mxu0 0
  %5175 = vmatpush2.bf16.msra.mxu0 0
  %5176 = vmatprep.subr.bf16.mxu0 %v5012
  %5177 = vmatpush2.bf16.msra.mxu0 %v5011
  %5178 = vmatprep.subr.bf16.mxu0 %v5008
  %5179 = vmatpush2.bf16.msra.mxu0 %v5007
  %5180 = vmatprep.subr.bf16.mxu0 %v5004
  %5181 = vmatpush2.bf16.msra.mxu0 %v5003
  %5182 = vmatprep.subr.bf16.mxu0 %v5000
  %5183 = vmatpush2.bf16.msra.mxu0 %v4999
  %5184 = vmatprep.subr.bf16.mxu0 %v4996
  %5185 = vmatpush2.bf16.msra.mxu0 %v4995
  %5186 = vmatprep.subr.bf16.mxu0 %v4992
  %5187 = vmatpush2.bf16.msra.mxu0 %v4991
  %5188 = vmatprep.subr.bf16.mxu0 %v4988
  %5189 = vmatpush2.bf16.msra.mxu0 %v4987
  %5190 = vmatprep.mubr.bf16.mxu0 %v5074
  %5191 = vmatmul.mubr.bf16.gmra.mxu0 %v4704
  %v5192 = vpop.f32.mrf.mxu0
  %v5193 = vadd.f32 0.0, %v5192
  %v5194 = vpop.f32.mrf.mxu0
  %v5195 = vadd.f32 0.0, %v5194
  %v5196 = vpop.f32.mrf.mxu0
  %v5197 = vadd.f32 0.0, %v5196
  %v5198 = vpop.f32.mrf.mxu0
  %v5199 = vadd.f32 0.0, %v5198
  %5200 = vmatprep.mubr.bf16.mxu0 %v5077
  %5201 = vmatmul.mubr.bf16.gmra.mxu0 %v4706
  %v5202 = vpop.f32.mrf.mxu0
  %v5203 = vadd.f32 0.0, %v5202
  %v5204 = vpop.f32.mrf.mxu0
  %v5205 = vadd.f32 0.0, %v5204
  %v5206 = vpop.f32.mrf.mxu0
  %v5207 = vadd.f32 0.0, %v5206
  %v5208 = vpop.f32.mrf.mxu0
  %v5209 = vadd.f32 0.0, %v5208
  %5210 = vmatprep.mubr.bf16.mxu0 %v5080
  %5211 = vmatmul.mubr.bf16.gmra.mxu0 %v4708
  %v5212 = vpop.f32.mrf.mxu0
  %v5213 = vadd.f32 0.0, %v5212
  %v5214 = vpop.f32.mrf.mxu0
  %v5215 = vadd.f32 0.0, %v5214
  %v5216 = vpop.f32.mrf.mxu0
  %v5217 = vadd.f32 0.0, %v5216
  %v5218 = vpop.f32.mrf.mxu0
  %v5219 = vadd.f32 0.0, %v5218
  %5220 = vmatprep.mubr.bf16.mxu0 %v5083
  %5221 = vmatmul.mubr.bf16.gmra.mxu0 %v4710
  %v5222 = vpop.f32.mrf.mxu0
  %v5223 = vadd.f32 0.0, %v5222
  %v5224 = vpop.f32.mrf.mxu0
  %v5225 = vadd.f32 0.0, %v5224
  %v5226 = vpop.f32.mrf.mxu0
  %v5227 = vadd.f32 0.0, %v5226
  %v5228 = vpop.f32.mrf.mxu0
  %v5229 = vadd.f32 0.0, %v5228
  %5230 = vdwg.mxu0
  %v5291 = vunpack.c.l.b16 %v4642
  %v5292 = vunpack.c.h.b16 %v4642
  %v5293 = vunpack.c.l.b16 %v4643
  %v5294 = vunpack.c.h.b16 %v4643
  %v5295 = vunpack.c.l.b16 %v4644
  %v5296 = vunpack.c.h.b16 %v4644
  %v5297 = vunpack.c.l.b16 %v4645
  %v5298 = vunpack.c.h.b16 %v4645
  %v5299 = vunpack.c.l.b16 %v4646
  %v5300 = vunpack.c.h.b16 %v4646
  %v5301 = vunpack.c.l.b16 %v4647
  %v5302 = vunpack.c.h.b16 %v4647
  %v5303 = vunpack.c.l.b16 %v4648
  %v5304 = vunpack.c.h.b16 %v4648
  %v5305 = vunpack.c.l.b16 %v4649
  %v5306 = vunpack.c.h.b16 %v4649
  %v5307 = vunpack.c.l.b16 %v4650
  %v5308 = vunpack.c.h.b16 %v4650
  %v5309 = vunpack.c.l.b16 %v4651
  %v5310 = vunpack.c.h.b16 %v4651
  %v5311 = vunpack.c.l.b16 %v4652
  %v5312 = vunpack.c.h.b16 %v4652
  %v5313 = vunpack.c.l.b16 %v4653
  %v5314 = vunpack.c.h.b16 %v4653
  %v5315 = vunpack.c.l.b16 %v4654
  %v5316 = vunpack.c.h.b16 %v4654
  %v5317 = vunpack.c.l.b16 %v4655
  %v5318 = vunpack.c.h.b16 %v4655
  %v5319 = vunpack.c.l.b16 %v4656
  %v5320 = vunpack.c.h.b16 %v4656
  %v5321 = vunpack.c.l.b16 %v4657
  %v5322 = vunpack.c.h.b16 %v4657
  %v5323 = vunpack.c.l.b16 %v4658
  %v5324 = vunpack.c.h.b16 %v4658
  %v5325 = vunpack.c.l.b16 %v4659
  %v5326 = vunpack.c.h.b16 %v4659
  %v5327 = vunpack.c.l.b16 %v4660
  %v5328 = vunpack.c.h.b16 %v4660
  %v5329 = vunpack.c.l.b16 %v4661
  %v5330 = vunpack.c.h.b16 %v4661
  %v5331 = vunpack.c.l.b16 %v4662
  %v5332 = vunpack.c.h.b16 %v4662
  %v5333 = vunpack.c.l.b16 %v4663
  %v5334 = vunpack.c.h.b16 %v4663
  %v5335 = vunpack.c.l.b16 %v4664
  %v5336 = vunpack.c.h.b16 %v4664
  %v5337 = vunpack.c.l.b16 %v4665
  %v5338 = vunpack.c.h.b16 %v4665
  %v5339 = vunpack.c.l.b16 %v4666
  %v5340 = vunpack.c.h.b16 %v4666
  %v5341 = vunpack.c.l.b16 %v4667
  %v5342 = vunpack.c.h.b16 %v4667
  %v5343 = vunpack.c.l.b16 %v4668
  %v5344 = vunpack.c.h.b16 %v4668
  %v5345 = vunpack.c.l.b16 %v4669
  %v5346 = vunpack.c.h.b16 %v4669
  %v5347 = vunpack.c.l.b16 %v4670
  %v5348 = vunpack.c.h.b16 %v4670
  %v5349 = vunpack.c.l.b16 %v4671
  %v5350 = vunpack.c.h.b16 %v4671
  %v5351 = vunpack.c.l.b16 %v4672
  %v5352 = vunpack.c.h.b16 %v4672
  %v5353 = vunpack.c.l.b16 %v4673
  %v5354 = vunpack.c.h.b16 %v4673
  %v5355 = vunpack.c.l.b16 %v4674
  %v5356 = vunpack.c.h.b16 %v4674
  %v5357 = vunpack.c.l.b16 %v4675
  %v5358 = vunpack.c.h.b16 %v4675
  %v5359 = vunpack.c.l.b16 %v4676
  %v5360 = vunpack.c.h.b16 %v4676
  %v5361 = vunpack.c.l.b16 %v4677
  %v5362 = vunpack.c.h.b16 %v4677
  %v5363 = vunpack.c.l.b16 %v4678
  %v5364 = vunpack.c.h.b16 %v4678
  %v5365 = vunpack.c.l.b16 %v4679
  %v5366 = vunpack.c.h.b16 %v4679
  %v5367 = vunpack.c.l.b16 %v4680
  %v5368 = vunpack.c.h.b16 %v4680
  %v5369 = vunpack.c.l.b16 %v4681
  %v5370 = vunpack.c.h.b16 %v4681
  %v5371 = vunpack.c.l.b16 %v4682
  %v5372 = vunpack.c.h.b16 %v4682
  %v5373 = vunpack.c.l.b16 %v4683
  %v5374 = vunpack.c.h.b16 %v4683
  %v5375 = vunpack.c.l.b16 %v4684
  %v5376 = vunpack.c.h.b16 %v4684
  %v5377 = vunpack.c.l.b16 %v4685
  %v5378 = vunpack.c.h.b16 %v4685
  %v5379 = vunpack.c.l.b16 %v4686
  %v5380 = vunpack.c.h.b16 %v4686
  %v5381 = vunpack.c.l.b16 %v4687
  %v5382 = vunpack.c.h.b16 %v4687
  %v5383 = vunpack.c.l.b16 %v4688
  %v5384 = vunpack.c.h.b16 %v4688
  %v5385 = vunpack.c.l.b16 %v4689
  %v5386 = vunpack.c.h.b16 %v4689
  %v5387 = vunpack.c.l.b16 %v4690
  %v5388 = vunpack.c.h.b16 %v4690
  %v5389 = vunpack.c.l.b16 %v4691
  %v5390 = vunpack.c.h.b16 %v4691
  %v5391 = vunpack.c.l.b16 %v4692
  %v5392 = vunpack.c.h.b16 %v4692
  %v5393 = vunpack.c.l.b16 %v4693
  %v5394 = vunpack.c.h.b16 %v4693
  %v5395 = vunpack.c.l.b16 %v4694
  %v5396 = vunpack.c.h.b16 %v4694
  %v5397 = vunpack.c.l.b16 %v4695
  %v5398 = vunpack.c.h.b16 %v4695
  %v5399 = vunpack.c.l.b16 %v4696
  %v5400 = vunpack.c.h.b16 %v4696
  %v5401 = vunpack.c.l.b16 %v4697
  %v5402 = vunpack.c.h.b16 %v4697
  %v5403 = vunpack.c.l.b16 %v4698
  %v5404 = vunpack.c.h.b16 %v4698
  %v5405 = vunpack.c.l.b16 %v4699
  %v5406 = vunpack.c.h.b16 %v4699
  %v5407 = vunpack.c.l.b16 %v4700
  %v5408 = vunpack.c.h.b16 %v4700
  %v5409 = vunpack.c.l.b16 %v4701
  %v5410 = vunpack.c.h.b16 %v4701
  %v5411 = vpack.c.b16 %v5295, %v5291
  %v5412 = vpack.c.b16 %v5296, %v5292
  %v5413 = vpack.c.b16 %v5297, %v5293
  %v5414 = vpack.c.b16 %v5298, %v5294
  %v5415 = vpack.c.b16 %v5303, %v5299
  %v5416 = vpack.c.b16 %v5304, %v5300
  %v5417 = vpack.c.b16 %v5305, %v5301
  %v5418 = vpack.c.b16 %v5306, %v5302
  %v5419 = vpack.c.b16 %v5311, %v5307
  %v5420 = vpack.c.b16 %v5312, %v5308
  %v5421 = vpack.c.b16 %v5313, %v5309
  %v5422 = vpack.c.b16 %v5314, %v5310
  %v5423 = vpack.c.b16 %v5319, %v5315
  %v5424 = vpack.c.b16 %v5320, %v5316
  %v5425 = vpack.c.b16 %v5321, %v5317
  %v5426 = vpack.c.b16 %v5322, %v5318
  %v5427 = vpack.c.b16 %v5327, %v5323
  %v5428 = vpack.c.b16 %v5328, %v5324
  %v5429 = vpack.c.b16 %v5329, %v5325
  %v5430 = vpack.c.b16 %v5330, %v5326
  %v5431 = vpack.c.b16 %v5335, %v5331
  %v5432 = vpack.c.b16 %v5336, %v5332
  %v5433 = vpack.c.b16 %v5337, %v5333
  %v5434 = vpack.c.b16 %v5338, %v5334
  %v5435 = vpack.c.b16 %v5343, %v5339
  %v5436 = vpack.c.b16 %v5344, %v5340
  %v5437 = vpack.c.b16 %v5345, %v5341
  %v5438 = vpack.c.b16 %v5346, %v5342
  %v5439 = vpack.c.b16 %v5351, %v5347
  %v5440 = vpack.c.b16 %v5352, %v5348
  %v5441 = vpack.c.b16 %v5353, %v5349
  %v5442 = vpack.c.b16 %v5354, %v5350
  %v5443 = vpack.c.b16 %v5359, %v5355
  %v5444 = vpack.c.b16 %v5360, %v5356
  %v5445 = vpack.c.b16 %v5361, %v5357
  %v5446 = vpack.c.b16 %v5362, %v5358
  %v5447 = vpack.c.b16 %v5367, %v5363
  %v5448 = vpack.c.b16 %v5368, %v5364
  %v5449 = vpack.c.b16 %v5369, %v5365
  %v5450 = vpack.c.b16 %v5370, %v5366
  %v5451 = vpack.c.b16 %v5375, %v5371
  %v5452 = vpack.c.b16 %v5376, %v5372
  %v5453 = vpack.c.b16 %v5377, %v5373
  %v5454 = vpack.c.b16 %v5378, %v5374
  %v5455 = vpack.c.b16 %v5383, %v5379
  %v5456 = vpack.c.b16 %v5384, %v5380
  %v5457 = vpack.c.b16 %v5385, %v5381
  %v5458 = vpack.c.b16 %v5386, %v5382
  %v5459 = vpack.c.b16 %v5391, %v5387
  %v5460 = vpack.c.b16 %v5392, %v5388
  %v5461 = vpack.c.b16 %v5393, %v5389
  %v5462 = vpack.c.b16 %v5394, %v5390
  %v5463 = vpack.c.b16 %v5399, %v5395
  %v5464 = vpack.c.b16 %v5400, %v5396
  %v5465 = vpack.c.b16 %v5401, %v5397
  %v5466 = vpack.c.b16 %v5402, %v5398
  %v5467 = vpack.c.b16 %v5407, %v5403
  %v5468 = vpack.c.b16 %v5408, %v5404
  %v5469 = vpack.c.b16 %v5409, %v5405
  %v5470 = vpack.c.b16 %v5410, %v5406
  %v5532 = vsel %vm4352, %v4635, 0
  %v5535 = vsel %vm4352, %v4637, 0
  %v5538 = vsel %vm4352, %v4639, 0
  %v5541 = vsel %vm4352, %v4641, 0
  %5543 = vmatprep.subr.bf16.mxu0 %v5440
  %5544 = vmatpush1.bf16.msra.mxu0 %v5439
  %5545 = vmatprep.subr.bf16.mxu0 %v5436
  %5546 = vmatpush1.bf16.msra.mxu0 %v5435
  %5547 = vmatprep.subr.bf16.mxu0 %v5432
  %5548 = vmatpush1.bf16.msra.mxu0 %v5431
  %5549 = vmatprep.subr.bf16.mxu0 %v5428
  %5550 = vmatpush1.bf16.msra.mxu0 %v5427
  %5551 = vmatprep.subr.bf16.mxu0 %v5424
  %5552 = vmatpush1.bf16.msra.mxu0 %v5423
  %5553 = vmatprep.subr.bf16.mxu0 %v5420
  %5554 = vmatpush1.bf16.msra.mxu0 %v5419
  %5555 = vmatprep.subr.bf16.mxu0 %v5416
  %5556 = vmatpush1.bf16.msra.mxu0 %v5415
  %5557 = vmatprep.subr.bf16.mxu0 %v5412
  %5558 = vmatpush1.bf16.msra.mxu0 %v5411
  %5559 = vmatprep.subr.bf16.mxu0 0
  %5560 = vmatpush2.bf16.msra.mxu0 0
  %5561 = vmatprep.subr.bf16.mxu0 %v5468
  %5562 = vmatpush2.bf16.msra.mxu0 %v5467
  %5563 = vmatprep.subr.bf16.mxu0 %v5464
  %5564 = vmatpush2.bf16.msra.mxu0 %v5463
  %5565 = vmatprep.subr.bf16.mxu0 %v5460
  %5566 = vmatpush2.bf16.msra.mxu0 %v5459
  %5567 = vmatprep.subr.bf16.mxu0 %v5456
  %5568 = vmatpush2.bf16.msra.mxu0 %v5455
  %5569 = vmatprep.subr.bf16.mxu0 %v5452
  %5570 = vmatpush2.bf16.msra.mxu0 %v5451
  %5571 = vmatprep.subr.bf16.mxu0 %v5448
  %5572 = vmatpush2.bf16.msra.mxu0 %v5447
  %5573 = vmatprep.subr.bf16.mxu0 %v5444
  %5574 = vmatpush2.bf16.msra.mxu0 %v5443
  %5575 = vmatprep.mubr.bf16.mxu0 %v5532
  %5576 = vmatmul.mubr.bf16.gmra.mxu0 %v4634
  %v5577 = vpop.f32.mrf.mxu0
  %v5578 = vadd.f32 %v5120, %v5577
  %v5579 = vpop.f32.mrf.mxu0
  %v5580 = vadd.f32 %v5122, %v5579
  %v5581 = vpop.f32.mrf.mxu0
  %v5582 = vadd.f32 %v5124, %v5581
  %v5583 = vpop.f32.mrf.mxu0
  %v5584 = vadd.f32 %v5126, %v5583
  %5585 = vmatprep.mubr.bf16.mxu0 %v5535
  %5586 = vmatmul.mubr.bf16.gmra.mxu0 %v4636
  %v5587 = vpop.f32.mrf.mxu0
  %v5588 = vadd.f32 %v5130, %v5587
  %v5589 = vpop.f32.mrf.mxu0
  %v5590 = vadd.f32 %v5132, %v5589
  %v5591 = vpop.f32.mrf.mxu0
  %v5592 = vadd.f32 %v5134, %v5591
  %v5593 = vpop.f32.mrf.mxu0
  %v5594 = vadd.f32 %v5136, %v5593
  %5595 = vmatprep.mubr.bf16.mxu0 %v5538
  %5596 = vmatmul.mubr.bf16.gmra.mxu0 %v4638
  %v5597 = vpop.f32.mrf.mxu0
  %v5598 = vadd.f32 %v5140, %v5597
  %v5599 = vpop.f32.mrf.mxu0
  %v5600 = vadd.f32 %v5142, %v5599
  %v5601 = vpop.f32.mrf.mxu0
  %v5602 = vadd.f32 %v5144, %v5601
  %v5603 = vpop.f32.mrf.mxu0
  %v5604 = vadd.f32 %v5146, %v5603
  %5605 = vmatprep.mubr.bf16.mxu0 %v5541
  %5606 = vmatmul.mubr.bf16.gmra.mxu0 %v4640
  %v5607 = vpop.f32.mrf.mxu0
  %v5608 = vadd.f32 %v5150, %v5607
  %v5609 = vpop.f32.mrf.mxu0
  %v5610 = vadd.f32 %v5152, %v5609
  %v5611 = vpop.f32.mrf.mxu0
  %v5612 = vadd.f32 %v5154, %v5611
  %v5613 = vpop.f32.mrf.mxu0
  %v5614 = vadd.f32 %v5156, %v5613
  %5615 = vdwg.mxu0
  %5616 = vmatprep.subr.bf16.mxu0 %v5442
  %5617 = vmatpush1.bf16.msra.mxu0 %v5441
  %5618 = vmatprep.subr.bf16.mxu0 %v5438
  %5619 = vmatpush1.bf16.msra.mxu0 %v5437
  %5620 = vmatprep.subr.bf16.mxu0 %v5434
  %5621 = vmatpush1.bf16.msra.mxu0 %v5433
  %5622 = vmatprep.subr.bf16.mxu0 %v5430
  %5623 = vmatpush1.bf16.msra.mxu0 %v5429
  %5624 = vmatprep.subr.bf16.mxu0 %v5426
  %5625 = vmatpush1.bf16.msra.mxu0 %v5425
  %5626 = vmatprep.subr.bf16.mxu0 %v5422
  %5627 = vmatpush1.bf16.msra.mxu0 %v5421
  %5628 = vmatprep.subr.bf16.mxu0 %v5418
  %5629 = vmatpush1.bf16.msra.mxu0 %v5417
  %5630 = vmatprep.subr.bf16.mxu0 %v5414
  %5631 = vmatpush1.bf16.msra.mxu0 %v5413
  %5632 = vmatprep.subr.bf16.mxu0 0
  %5633 = vmatpush2.bf16.msra.mxu0 0
  %5634 = vmatprep.subr.bf16.mxu0 %v5470
  %5635 = vmatpush2.bf16.msra.mxu0 %v5469
  %5636 = vmatprep.subr.bf16.mxu0 %v5466
  %5637 = vmatpush2.bf16.msra.mxu0 %v5465
  %5638 = vmatprep.subr.bf16.mxu0 %v5462
  %5639 = vmatpush2.bf16.msra.mxu0 %v5461
  %5640 = vmatprep.subr.bf16.mxu0 %v5458
  %5641 = vmatpush2.bf16.msra.mxu0 %v5457
  %5642 = vmatprep.subr.bf16.mxu0 %v5454
  %5643 = vmatpush2.bf16.msra.mxu0 %v5453
  %5644 = vmatprep.subr.bf16.mxu0 %v5450
  %5645 = vmatpush2.bf16.msra.mxu0 %v5449
  %5646 = vmatprep.subr.bf16.mxu0 %v5446
  %5647 = vmatpush2.bf16.msra.mxu0 %v5445
  %5648 = vmatprep.mubr.bf16.mxu0 %v5532
  %5649 = vmatmul.mubr.bf16.gmra.mxu0 %v4634
  %v5650 = vpop.f32.mrf.mxu0
  %v5651 = vadd.f32 %v5193, %v5650
  %v5652 = vpop.f32.mrf.mxu0
  %v5653 = vadd.f32 %v5195, %v5652
  %v5654 = vpop.f32.mrf.mxu0
  %v5655 = vadd.f32 %v5197, %v5654
  %v5656 = vpop.f32.mrf.mxu0
  %v5657 = vadd.f32 %v5199, %v5656
  %5658 = vmatprep.mubr.bf16.mxu0 %v5535
  %5659 = vmatmul.mubr.bf16.gmra.mxu0 %v4636
  %v5660 = vpop.f32.mrf.mxu0
  %v5661 = vadd.f32 %v5203, %v5660
  %v5662 = vpop.f32.mrf.mxu0
  %v5663 = vadd.f32 %v5205, %v5662
  %v5664 = vpop.f32.mrf.mxu0
  %v5665 = vadd.f32 %v5207, %v5664
  %v5666 = vpop.f32.mrf.mxu0
  %v5667 = vadd.f32 %v5209, %v5666
  %5668 = vmatprep.mubr.bf16.mxu0 %v5538
  %5669 = vmatmul.mubr.bf16.gmra.mxu0 %v4638
  %v5670 = vpop.f32.mrf.mxu0
  %v5671 = vadd.f32 %v5213, %v5670
  %v5672 = vpop.f32.mrf.mxu0
  %v5673 = vadd.f32 %v5215, %v5672
  %v5674 = vpop.f32.mrf.mxu0
  %v5675 = vadd.f32 %v5217, %v5674
  %v5676 = vpop.f32.mrf.mxu0
  %v5677 = vadd.f32 %v5219, %v5676
  %5678 = vmatprep.mubr.bf16.mxu0 %v5541
  %5679 = vmatmul.mubr.bf16.gmra.mxu0 %v4640
  %v5680 = vpop.f32.mrf.mxu0
  %v5681 = vadd.f32 %v5223, %v5680
  %v5682 = vpop.f32.mrf.mxu0
  %v5683 = vadd.f32 %v5225, %v5682
  %v5684 = vpop.f32.mrf.mxu0
  %v5685 = vadd.f32 %v5227, %v5684
  %v5686 = vpop.f32.mrf.mxu0
  %v5687 = vadd.f32 %v5229, %v5686
  %5688 = vdwg.mxu0
  %v5689 = vld [vmem:[#allocation3 + $0x20] sm:$0xff]
  %v5690 = vld [vmem:[#allocation3 + $0x28] sm:$0xff]
  %v5691 = vld [vmem:[#allocation3 + $0x30] sm:$0xff]
  %v5692 = vld [vmem:[#allocation3 + $0x38] sm:$0xff]
  %v5693 = vld [vmem:[#allocation3 + $0x40] sm:$0xff]
  %v5694 = vld [vmem:[#allocation3 + $0x48] sm:$0xff]
  %v5695 = vld [vmem:[#allocation3 + $0x50] sm:$0xff]
  %v5696 = vld [vmem:[#allocation3 + $0x58] sm:$0xff]
  %v5697 = vld [vmem:[#allocation3 + $0x60] sm:$0xff]
  %v5698 = vld [vmem:[#allocation3 + $0x68] sm:$0xff]
  %v5699 = vld [vmem:[#allocation3 + $0x70] sm:$0xff]
  %v5700 = vld [vmem:[#allocation3 + $0x78] sm:$0xff]
  %v5701 = vld [vmem:[#allocation3 + $0x80] sm:$0xff]
  %v5702 = vld [vmem:[#allocation3 + $0x88] sm:$0xff]
  %v5703 = vld [vmem:[#allocation3 + $0x90] sm:$0xff]
  %v5704 = vld [vmem:[#allocation3 + $0x98] sm:$0xff]
  %v5705 = vpack.c.bf16 %v5691, %v5689
  %v5706 = vpack.c.bf16 %v5692, %v5690
  %v5707 = vpack.c.bf16 %v5695, %v5693
  %v5708 = vpack.c.bf16 %v5696, %v5694
  %v5709 = vpack.c.bf16 %v5699, %v5697
  %v5710 = vpack.c.bf16 %v5700, %v5698
  %v5711 = vpack.c.bf16 %v5703, %v5701
  %v5712 = vpack.c.bf16 %v5704, %v5702
  %s5713 = scalar_lea.vmem %s3, 960
  %v5714 = vld [vmem:[%s5713] sm:$0xff]
  %v5715 = vld [vmem:[%s5713 + $0x8] sm:$0xff]
  %v5716 = vld [vmem:[%s5713 + $0x10] sm:$0xff]
  %v5717 = vld [vmem:[%s5713 + $0x18] sm:$0xff]
  %v5718 = vld [vmem:[%s5713 + $0x20] sm:$0xff]
  %v5719 = vld [vmem:[%s5713 + $0x28] sm:$0xff]
  %v5720 = vld [vmem:[%s5713 + $0x30] sm:$0xff]
  %v5721 = vld [vmem:[%s5713 + $0x38] sm:$0xff]
  %v5722 = vld [vmem:[%s5713 + $0x40] sm:$0xff]
  %v5723 = vld [vmem:[%s5713 + $0x48] sm:$0xff]
  %v5724 = vld [vmem:[%s5713 + $0x50] sm:$0xff]
  %v5725 = vld [vmem:[%s5713 + $0x58] sm:$0xff]
  %v5726 = vld [vmem:[%s5713 + $0x60] sm:$0xff]
  %v5727 = vld [vmem:[%s5713 + $0x68] sm:$0xff]
  %v5728 = vld [vmem:[%s5713 + $0x70] sm:$0xff]
  %v5729 = vld [vmem:[%s5713 + $0x78] sm:$0xff]
  %v5730 = vld [vmem:[%s5713 + $0x80] sm:$0xff]
  %v5731 = vld [vmem:[%s5713 + $0x88] sm:$0xff]
  %v5732 = vld [vmem:[%s5713 + $0x90] sm:$0xff]
  %v5733 = vld [vmem:[%s5713 + $0x98] sm:$0xff]
  %v5734 = vld [vmem:[%s5713 + $0xa0] sm:$0xff]
  %v5735 = vld [vmem:[%s5713 + $0xa8] sm:$0xff]
  %v5736 = vld [vmem:[%s5713 + $0xb0] sm:$0xff]
  %v5737 = vld [vmem:[%s5713 + $0xb8] sm:$0xff]
  %v5738 = vld [vmem:[%s5713 + $0xc0] sm:$0xff]
  %v5739 = vld [vmem:[%s5713 + $0xc8] sm:$0xff]
  %v5740 = vld [vmem:[%s5713 + $0xd0] sm:$0xff]
  %v5741 = vld [vmem:[%s5713 + $0xd8] sm:$0xff]
  %v5742 = vld [vmem:[%s5713 + $0xe0] sm:$0xff]
  %v5743 = vld [vmem:[%s5713 + $0xe8] sm:$0xff]
  %v5744 = vld [vmem:[%s5713 + $0xf0] sm:$0xff]
  %v5745 = vld [vmem:[%s5713 + $0xf8] sm:$0xff]
  %v5746 = vld [vmem:[%s5713 + $0x100] sm:$0xff]
  %v5747 = vld [vmem:[%s5713 + $0x108] sm:$0xff]
  %v5748 = vld [vmem:[%s5713 + $0x110] sm:$0xff]
  %v5749 = vld [vmem:[%s5713 + $0x118] sm:$0xff]
  %v5750 = vld [vmem:[%s5713 + $0x120] sm:$0xff]
  %v5751 = vld [vmem:[%s5713 + $0x128] sm:$0xff]
  %v5752 = vld [vmem:[%s5713 + $0x130] sm:$0xff]
  %v5753 = vld [vmem:[%s5713 + $0x138] sm:$0xff]
  %v5754 = vld [vmem:[%s5713 + $0x140] sm:$0xff]
  %v5755 = vld [vmem:[%s5713 + $0x148] sm:$0xff]
  %v5756 = vld [vmem:[%s5713 + $0x150] sm:$0xff]
  %v5757 = vld [vmem:[%s5713 + $0x158] sm:$0xff]
  %v5758 = vld [vmem:[%s5713 + $0x160] sm:$0xff]
  %v5759 = vld [vmem:[%s5713 + $0x168] sm:$0xff]
  %v5760 = vld [vmem:[%s5713 + $0x170] sm:$0xff]
  %v5761 = vld [vmem:[%s5713 + $0x178] sm:$0xff]
  %v5762 = vld [vmem:[%s5713 + $0x180] sm:$0xff]
  %v5763 = vld [vmem:[%s5713 + $0x188] sm:$0xff]
  %v5764 = vld [vmem:[%s5713 + $0x190] sm:$0xff]
  %v5765 = vld [vmem:[%s5713 + $0x198] sm:$0xff]
  %v5766 = vld [vmem:[%s5713 + $0x1a0] sm:$0xff]
  %v5767 = vld [vmem:[%s5713 + $0x1a8] sm:$0xff]
  %v5768 = vld [vmem:[%s5713 + $0x1b0] sm:$0xff]
  %v5769 = vld [vmem:[%s5713 + $0x1b8] sm:$0xff]
  %v5770 = vld [vmem:[%s5713 + $0x1c0] sm:$0xff]
  %v5771 = vld [vmem:[%s5713 + $0x1c8] sm:$0xff]
  %v5772 = vld [vmem:[%s5713 + $0x1d0] sm:$0xff]
  %v5773 = vld [vmem:[%s5713 + $0x1d8] sm:$0xff]
  %v5834 = vunpack.c.l.b16 %v5714
  %v5835 = vunpack.c.h.b16 %v5714
  %v5836 = vunpack.c.l.b16 %v5715
  %v5837 = vunpack.c.h.b16 %v5715
  %v5838 = vunpack.c.l.b16 %v5716
  %v5839 = vunpack.c.h.b16 %v5716
  %v5840 = vunpack.c.l.b16 %v5717
  %v5841 = vunpack.c.h.b16 %v5717
  %v5842 = vunpack.c.l.b16 %v5718
  %v5843 = vunpack.c.h.b16 %v5718
  %v5844 = vunpack.c.l.b16 %v5719
  %v5845 = vunpack.c.h.b16 %v5719
  %v5846 = vunpack.c.l.b16 %v5720
  %v5847 = vunpack.c.h.b16 %v5720
  %v5848 = vunpack.c.l.b16 %v5721
  %v5849 = vunpack.c.h.b16 %v5721
  %v5850 = vunpack.c.l.b16 %v5722
  %v5851 = vunpack.c.h.b16 %v5722
  %v5852 = vunpack.c.l.b16 %v5723
  %v5853 = vunpack.c.h.b16 %v5723
  %v5854 = vunpack.c.l.b16 %v5724
  %v5855 = vunpack.c.h.b16 %v5724
  %v5856 = vunpack.c.l.b16 %v5725
  %v5857 = vunpack.c.h.b16 %v5725
  %v5858 = vunpack.c.l.b16 %v5726
  %v5859 = vunpack.c.h.b16 %v5726
  %v5860 = vunpack.c.l.b16 %v5727
  %v5861 = vunpack.c.h.b16 %v5727
  %v5862 = vunpack.c.l.b16 %v5728
  %v5863 = vunpack.c.h.b16 %v5728
  %v5864 = vunpack.c.l.b16 %v5729
  %v5865 = vunpack.c.h.b16 %v5729
  %v5866 = vunpack.c.l.b16 %v5730
  %v5867 = vunpack.c.h.b16 %v5730
  %v5868 = vunpack.c.l.b16 %v5731
  %v5869 = vunpack.c.h.b16 %v5731
  %v5870 = vunpack.c.l.b16 %v5732
  %v5871 = vunpack.c.h.b16 %v5732
  %v5872 = vunpack.c.l.b16 %v5733
  %v5873 = vunpack.c.h.b16 %v5733
  %v5874 = vunpack.c.l.b16 %v5734
  %v5875 = vunpack.c.h.b16 %v5734
  %v5876 = vunpack.c.l.b16 %v5735
  %v5877 = vunpack.c.h.b16 %v5735
  %v5878 = vunpack.c.l.b16 %v5736
  %v5879 = vunpack.c.h.b16 %v5736
  %v5880 = vunpack.c.l.b16 %v5737
  %v5881 = vunpack.c.h.b16 %v5737
  %v5882 = vunpack.c.l.b16 %v5738
  %v5883 = vunpack.c.h.b16 %v5738
  %v5884 = vunpack.c.l.b16 %v5739
  %v5885 = vunpack.c.h.b16 %v5739
  %v5886 = vunpack.c.l.b16 %v5740
  %v5887 = vunpack.c.h.b16 %v5740
  %v5888 = vunpack.c.l.b16 %v5741
  %v5889 = vunpack.c.h.b16 %v5741
  %v5890 = vunpack.c.l.b16 %v5742
  %v5891 = vunpack.c.h.b16 %v5742
  %v5892 = vunpack.c.l.b16 %v5743
  %v5893 = vunpack.c.h.b16 %v5743
  %v5894 = vunpack.c.l.b16 %v5744
  %v5895 = vunpack.c.h.b16 %v5744
  %v5896 = vunpack.c.l.b16 %v5745
  %v5897 = vunpack.c.h.b16 %v5745
  %v5898 = vunpack.c.l.b16 %v5746
  %v5899 = vunpack.c.h.b16 %v5746
  %v5900 = vunpack.c.l.b16 %v5747
  %v5901 = vunpack.c.h.b16 %v5747
  %v5902 = vunpack.c.l.b16 %v5748
  %v5903 = vunpack.c.h.b16 %v5748
  %v5904 = vunpack.c.l.b16 %v5749
  %v5905 = vunpack.c.h.b16 %v5749
  %v5906 = vunpack.c.l.b16 %v5750
  %v5907 = vunpack.c.h.b16 %v5750
  %v5908 = vunpack.c.l.b16 %v5751
  %v5909 = vunpack.c.h.b16 %v5751
  %v5910 = vunpack.c.l.b16 %v5752
  %v5911 = vunpack.c.h.b16 %v5752
  %v5912 = vunpack.c.l.b16 %v5753
  %v5913 = vunpack.c.h.b16 %v5753
  %v5914 = vunpack.c.l.b16 %v5754
  %v5915 = vunpack.c.h.b16 %v5754
  %v5916 = vunpack.c.l.b16 %v5755
  %v5917 = vunpack.c.h.b16 %v5755
  %v5918 = vunpack.c.l.b16 %v5756
  %v5919 = vunpack.c.h.b16 %v5756
  %v5920 = vunpack.c.l.b16 %v5757
  %v5921 = vunpack.c.h.b16 %v5757
  %v5922 = vunpack.c.l.b16 %v5758
  %v5923 = vunpack.c.h.b16 %v5758
  %v5924 = vunpack.c.l.b16 %v5759
  %v5925 = vunpack.c.h.b16 %v5759
  %v5926 = vunpack.c.l.b16 %v5760
  %v5927 = vunpack.c.h.b16 %v5760
  %v5928 = vunpack.c.l.b16 %v5761
  %v5929 = vunpack.c.h.b16 %v5761
  %v5930 = vunpack.c.l.b16 %v5762
  %v5931 = vunpack.c.h.b16 %v5762
  %v5932 = vunpack.c.l.b16 %v5763
  %v5933 = vunpack.c.h.b16 %v5763
  %v5934 = vunpack.c.l.b16 %v5764
  %v5935 = vunpack.c.h.b16 %v5764
  %v5936 = vunpack.c.l.b16 %v5765
  %v5937 = vunpack.c.h.b16 %v5765
  %v5938 = vunpack.c.l.b16 %v5766
  %v5939 = vunpack.c.h.b16 %v5766
  %v5940 = vunpack.c.l.b16 %v5767
  %v5941 = vunpack.c.h.b16 %v5767
  %v5942 = vunpack.c.l.b16 %v5768
  %v5943 = vunpack.c.h.b16 %v5768
  %v5944 = vunpack.c.l.b16 %v5769
  %v5945 = vunpack.c.h.b16 %v5769
  %v5946 = vunpack.c.l.b16 %v5770
  %v5947 = vunpack.c.h.b16 %v5770
  %v5948 = vunpack.c.l.b16 %v5771
  %v5949 = vunpack.c.h.b16 %v5771
  %v5950 = vunpack.c.l.b16 %v5772
  %v5951 = vunpack.c.h.b16 %v5772
  %v5952 = vunpack.c.l.b16 %v5773
  %v5953 = vunpack.c.h.b16 %v5773
  %v5954 = vpack.c.b16 %v5838, %v5834
  %v5955 = vpack.c.b16 %v5839, %v5835
  %v5956 = vpack.c.b16 %v5840, %v5836
  %v5957 = vpack.c.b16 %v5841, %v5837
  %v5958 = vpack.c.b16 %v5846, %v5842
  %v5959 = vpack.c.b16 %v5847, %v5843
  %v5960 = vpack.c.b16 %v5848, %v5844
  %v5961 = vpack.c.b16 %v5849, %v5845
  %v5962 = vpack.c.b16 %v5854, %v5850
  %v5963 = vpack.c.b16 %v5855, %v5851
  %v5964 = vpack.c.b16 %v5856, %v5852
  %v5965 = vpack.c.b16 %v5857, %v5853
  %v5966 = vpack.c.b16 %v5862, %v5858
  %v5967 = vpack.c.b16 %v5863, %v5859
  %v5968 = vpack.c.b16 %v5864, %v5860
  %v5969 = vpack.c.b16 %v5865, %v5861
  %v5970 = vpack.c.b16 %v5870, %v5866
  %v5971 = vpack.c.b16 %v5871, %v5867
  %v5972 = vpack.c.b16 %v5872, %v5868
  %v5973 = vpack.c.b16 %v5873, %v5869
  %v5974 = vpack.c.b16 %v5878, %v5874
  %v5975 = vpack.c.b16 %v5879, %v5875
  %v5976 = vpack.c.b16 %v5880, %v5876
  %v5977 = vpack.c.b16 %v5881, %v5877
  %v5978 = vpack.c.b16 %v5886, %v5882
  %v5979 = vpack.c.b16 %v5887, %v5883
  %v5980 = vpack.c.b16 %v5888, %v5884
  %v5981 = vpack.c.b16 %v5889, %v5885
  %v5982 = vpack.c.b16 %v5894, %v5890
  %v5983 = vpack.c.b16 %v5895, %v5891
  %v5984 = vpack.c.b16 %v5896, %v5892
  %v5985 = vpack.c.b16 %v5897, %v5893
  %v5986 = vpack.c.b16 %v5902, %v5898
  %v5987 = vpack.c.b16 %v5903, %v5899
  %v5988 = vpack.c.b16 %v5904, %v5900
  %v5989 = vpack.c.b16 %v5905, %v5901
  %v5990 = vpack.c.b16 %v5910, %v5906
  %v5991 = vpack.c.b16 %v5911, %v5907
  %v5992 = vpack.c.b16 %v5912, %v5908
  %v5993 = vpack.c.b16 %v5913, %v5909
  %v5994 = vpack.c.b16 %v5918, %v5914
  %v5995 = vpack.c.b16 %v5919, %v5915
  %v5996 = vpack.c.b16 %v5920, %v5916
  %v5997 = vpack.c.b16 %v5921, %v5917
  %v5998 = vpack.c.b16 %v5926, %v5922
  %v5999 = vpack.c.b16 %v5927, %v5923
  %v6000 = vpack.c.b16 %v5928, %v5924
  %v6001 = vpack.c.b16 %v5929, %v5925
  %v6002 = vpack.c.b16 %v5934, %v5930
  %v6003 = vpack.c.b16 %v5935, %v5931
  %v6004 = vpack.c.b16 %v5936, %v5932
  %v6005 = vpack.c.b16 %v5937, %v5933
  %v6006 = vpack.c.b16 %v5942, %v5938
  %v6007 = vpack.c.b16 %v5943, %v5939
  %v6008 = vpack.c.b16 %v5944, %v5940
  %v6009 = vpack.c.b16 %v5945, %v5941
  %v6010 = vpack.c.b16 %v5950, %v5946
  %v6011 = vpack.c.b16 %v5951, %v5947
  %v6012 = vpack.c.b16 %v5952, %v5948
  %v6013 = vpack.c.b16 %v5953, %v5949
  %v6075 = vsel %vm4352, %v5706, 0
  %v6078 = vsel %vm4352, %v5708, 0
  %v6081 = vsel %vm4352, %v5710, 0
  %v6084 = vsel %vm4352, %v5712, 0
  %6086 = vmatprep.subr.bf16.mxu0 %v5983
  %6087 = vmatpush1.bf16.msra.mxu0 %v5982
  %6088 = vmatprep.subr.bf16.mxu0 %v5979
  %6089 = vmatpush1.bf16.msra.mxu0 %v5978
  %6090 = vmatprep.subr.bf16.mxu0 %v5975
  %6091 = vmatpush1.bf16.msra.mxu0 %v5974
  %6092 = vmatprep.subr.bf16.mxu0 %v5971
  %6093 = vmatpush1.bf16.msra.mxu0 %v5970
  %6094 = vmatprep.subr.bf16.mxu0 %v5967
  %6095 = vmatpush1.bf16.msra.mxu0 %v5966
  %6096 = vmatprep.subr.bf16.mxu0 %v5963
  %6097 = vmatpush1.bf16.msra.mxu0 %v5962
  %6098 = vmatprep.subr.bf16.mxu0 %v5959
  %6099 = vmatpush1.bf16.msra.mxu0 %v5958
  %6100 = vmatprep.subr.bf16.mxu0 %v5955
  %6101 = vmatpush1.bf16.msra.mxu0 %v5954
  %6102 = vmatprep.subr.bf16.mxu0 0
  %6103 = vmatpush2.bf16.msra.mxu0 0
  %6104 = vmatprep.subr.bf16.mxu0 %v6011
  %6105 = vmatpush2.bf16.msra.mxu0 %v6010
  %6106 = vmatprep.subr.bf16.mxu0 %v6007
  %6107 = vmatpush2.bf16.msra.mxu0 %v6006
  %6108 = vmatprep.subr.bf16.mxu0 %v6003
  %6109 = vmatpush2.bf16.msra.mxu0 %v6002
  %6110 = vmatprep.subr.bf16.mxu0 %v5999
  %6111 = vmatpush2.bf16.msra.mxu0 %v5998
  %6112 = vmatprep.subr.bf16.mxu0 %v5995
  %6113 = vmatpush2.bf16.msra.mxu0 %v5994
  %6114 = vmatprep.subr.bf16.mxu0 %v5991
  %6115 = vmatpush2.bf16.msra.mxu0 %v5990
  %6116 = vmatprep.subr.bf16.mxu0 %v5987
  %6117 = vmatpush2.bf16.msra.mxu0 %v5986
  %6118 = vmatprep.mubr.bf16.mxu0 %v6075
  %6119 = vmatmul.mubr.bf16.gmra.mxu0 %v5705
  %v6120 = vpop.f32.mrf.mxu0
  %v6121 = vadd.f32 0.0, %v6120
  %v6122 = vpop.f32.mrf.mxu0
  %v6123 = vadd.f32 0.0, %v6122
  %v6124 = vpop.f32.mrf.mxu0
  %v6125 = vadd.f32 0.0, %v6124
  %v6126 = vpop.f32.mrf.mxu0
  %v6127 = vadd.f32 0.0, %v6126
  %6128 = vmatprep.mubr.bf16.mxu0 %v6078
  %6129 = vmatmul.mubr.bf16.gmra.mxu0 %v5707
  %v6130 = vpop.f32.mrf.mxu0
  %v6131 = vadd.f32 0.0, %v6130
  %v6132 = vpop.f32.mrf.mxu0
  %v6133 = vadd.f32 0.0, %v6132
  %v6134 = vpop.f32.mrf.mxu0
  %v6135 = vadd.f32 0.0, %v6134
  %v6136 = vpop.f32.mrf.mxu0
  %v6137 = vadd.f32 0.0, %v6136
  %6138 = vmatprep.mubr.bf16.mxu0 %v6081
  %6139 = vmatmul.mubr.bf16.gmra.mxu0 %v5709
  %v6140 = vpop.f32.mrf.mxu0
  %v6141 = vadd.f32 0.0, %v6140
  %v6142 = vpop.f32.mrf.mxu0
  %v6143 = vadd.f32 0.0, %v6142
  %v6144 = vpop.f32.mrf.mxu0
  %v6145 = vadd.f32 0.0, %v6144
  %v6146 = vpop.f32.mrf.mxu0
  %v6147 = vadd.f32 0.0, %v6146
  %6148 = vmatprep.mubr.bf16.mxu0 %v6084
  %6149 = vmatmul.mubr.bf16.gmra.mxu0 %v5711
  %v6150 = vpop.f32.mrf.mxu0
  %v6151 = vadd.f32 0.0, %v6150
  %v6152 = vpop.f32.mrf.mxu0
  %v6153 = vadd.f32 0.0, %v6152
  %v6154 = vpop.f32.mrf.mxu0
  %v6155 = vadd.f32 0.0, %v6154
  %v6156 = vpop.f32.mrf.mxu0
  %v6157 = vadd.f32 0.0, %v6156
  %6158 = vdwg.mxu0
  %6159 = vmatprep.subr.bf16.mxu0 %v5985
  %6160 = vmatpush1.bf16.msra.mxu0 %v5984
  %6161 = vmatprep.subr.bf16.mxu0 %v5981
  %6162 = vmatpush1.bf16.msra.mxu0 %v5980
  %6163 = vmatprep.subr.bf16.mxu0 %v5977
  %6164 = vmatpush1.bf16.msra.mxu0 %v5976
  %6165 = vmatprep.subr.bf16.mxu0 %v5973
  %6166 = vmatpush1.bf16.msra.mxu0 %v5972
  %6167 = vmatprep.subr.bf16.mxu0 %v5969
  %6168 = vmatpush1.bf16.msra.mxu0 %v5968
  %6169 = vmatprep.subr.bf16.mxu0 %v5965
  %6170 = vmatpush1.bf16.msra.mxu0 %v5964
  %6171 = vmatprep.subr.bf16.mxu0 %v5961
  %6172 = vmatpush1.bf16.msra.mxu0 %v5960
  %6173 = vmatprep.subr.bf16.mxu0 %v5957
  %6174 = vmatpush1.bf16.msra.mxu0 %v5956
  %6175 = vmatprep.subr.bf16.mxu0 0
  %6176 = vmatpush2.bf16.msra.mxu0 0
  %6177 = vmatprep.subr.bf16.mxu0 %v6013
  %6178 = vmatpush2.bf16.msra.mxu0 %v6012
  %6179 = vmatprep.subr.bf16.mxu0 %v6009
  %6180 = vmatpush2.bf16.msra.mxu0 %v6008
  %6181 = vmatprep.subr.bf16.mxu0 %v6005
  %6182 = vmatpush2.bf16.msra.mxu0 %v6004
  %6183 = vmatprep.subr.bf16.mxu0 %v6001
  %6184 = vmatpush2.bf16.msra.mxu0 %v6000
  %6185 = vmatprep.subr.bf16.mxu0 %v5997
  %6186 = vmatpush2.bf16.msra.mxu0 %v5996
  %6187 = vmatprep.subr.bf16.mxu0 %v5993
  %6188 = vmatpush2.bf16.msra.mxu0 %v5992
  %6189 = vmatprep.subr.bf16.mxu0 %v5989
  %6190 = vmatpush2.bf16.msra.mxu0 %v5988
  %6191 = vmatprep.mubr.bf16.mxu0 %v6075
  %6192 = vmatmul.mubr.bf16.gmra.mxu0 %v5705
  %v6193 = vpop.f32.mrf.mxu0
  %v6194 = vadd.f32 0.0, %v6193
  %v6195 = vpop.f32.mrf.mxu0
  %v6196 = vadd.f32 0.0, %v6195
  %v6197 = vpop.f32.mrf.mxu0
  %v6198 = vadd.f32 0.0, %v6197
  %v6199 = vpop.f32.mrf.mxu0
  %v6200 = vadd.f32 0.0, %v6199
  %6201 = vmatprep.mubr.bf16.mxu0 %v6078
  %6202 = vmatmul.mubr.bf16.gmra.mxu0 %v5707
  %v6203 = vpop.f32.mrf.mxu0
  %v6204 = vadd.f32 0.0, %v6203
  %v6205 = vpop.f32.mrf.mxu0
  %v6206 = vadd.f32 0.0, %v6205
  %v6207 = vpop.f32.mrf.mxu0
  %v6208 = vadd.f32 0.0, %v6207
  %v6209 = vpop.f32.mrf.mxu0
  %v6210 = vadd.f32 0.0, %v6209
  %6211 = vmatprep.mubr.bf16.mxu0 %v6081
  %6212 = vmatmul.mubr.bf16.gmra.mxu0 %v5709
  %v6213 = vpop.f32.mrf.mxu0
  %v6214 = vadd.f32 0.0, %v6213
  %v6215 = vpop.f32.mrf.mxu0
  %v6216 = vadd.f32 0.0, %v6215
  %v6217 = vpop.f32.mrf.mxu0
  %v6218 = vadd.f32 0.0, %v6217
  %v6219 = vpop.f32.mrf.mxu0
  %v6220 = vadd.f32 0.0, %v6219
  %6221 = vmatprep.mubr.bf16.mxu0 %v6084
  %6222 = vmatmul.mubr.bf16.gmra.mxu0 %v5711
  %v6223 = vpop.f32.mrf.mxu0
  %v6224 = vadd.f32 0.0, %v6223
  %v6225 = vpop.f32.mrf.mxu0
  %v6226 = vadd.f32 0.0, %v6225
  %v6227 = vpop.f32.mrf.mxu0
  %v6228 = vadd.f32 0.0, %v6227
  %v6229 = vpop.f32.mrf.mxu0
  %v6230 = vadd.f32 0.0, %v6229
  %6231 = vdwg.mxu0
  %v6232 = vadd.f32 %v5578, %v6121
  %v6233 = vadd.f32 %v5580, %v6123
  %v6234 = vadd.f32 %v5651, %v6194
  %v6235 = vadd.f32 %v5653, %v6196
  %v6236 = vadd.f32 %v5582, %v6125
  %v6237 = vadd.f32 %v5584, %v6127
  %v6238 = vadd.f32 %v5655, %v6198
  %v6239 = vadd.f32 %v5657, %v6200
  %v6240 = vadd.f32 %v5588, %v6131
  %v6241 = vadd.f32 %v5590, %v6133
  %v6242 = vadd.f32 %v5661, %v6204
  %v6243 = vadd.f32 %v5663, %v6206
  %v6244 = vadd.f32 %v5592, %v6135
  %v6245 = vadd.f32 %v5594, %v6137
  %v6246 = vadd.f32 %v5665, %v6208
  %v6247 = vadd.f32 %v5667, %v6210
  %v6248 = vadd.f32 %v5598, %v6141
  %v6249 = vadd.f32 %v5600, %v6143
  %v6250 = vadd.f32 %v5671, %v6214
  %v6251 = vadd.f32 %v5673, %v6216
  %v6252 = vadd.f32 %v5602, %v6145
  %v6253 = vadd.f32 %v5604, %v6147
  %v6254 = vadd.f32 %v5675, %v6218
  %v6255 = vadd.f32 %v5677, %v6220
  %v6256 = vadd.f32 %v5608, %v6151
  %v6257 = vadd.f32 %v5610, %v6153
  %v6258 = vadd.f32 %v5681, %v6224
  %v6259 = vadd.f32 %v5683, %v6226
  %v6260 = vadd.f32 %v5612, %v6155
  %v6261 = vadd.f32 %v5614, %v6157
  %v6262 = vadd.f32 %v5685, %v6228
  %v6263 = vadd.f32 %v5687, %v6230
  %v6264 = vld [vmem:[#allocation3 + $0x30] sm:$0xff]
  %v6265 = vld [vmem:[#allocation3 + $0x38] sm:$0xff]
  %v6266 = vld [vmem:[#allocation3 + $0x40] sm:$0xff]
  %v6267 = vld [vmem:[#allocation3 + $0x48] sm:$0xff]
  %v6268 = vld [vmem:[#allocation3 + $0x50] sm:$0xff]
  %v6269 = vld [vmem:[#allocation3 + $0x58] sm:$0xff]
  %v6270 = vld [vmem:[#allocation3 + $0x60] sm:$0xff]
  %v6271 = vld [vmem:[#allocation3 + $0x68] sm:$0xff]
  %v6272 = vld [vmem:[#allocation3 + $0x70] sm:$0xff]
  %v6273 = vld [vmem:[#allocation3 + $0x78] sm:$0xff]
  %v6274 = vld [vmem:[#allocation3 + $0x80] sm:$0xff]
  %v6275 = vld [vmem:[#allocation3 + $0x88] sm:$0xff]
  %v6276 = vld [vmem:[#allocation3 + $0x90] sm:$0xff]
  %v6277 = vld [vmem:[#allocation3 + $0x98] sm:$0xff]
  %v6278 = vld [vmem:[#allocation3 + $0xa0] sm:$0xff]
  %v6279 = vld [vmem:[#allocation3 + $0xa8] sm:$0xff]
  %v6280 = vpack.c.bf16 %v6266, %v6264
  %v6281 = vpack.c.bf16 %v6267, %v6265
  %v6282 = vpack.c.bf16 %v6270, %v6268
  %v6283 = vpack.c.bf16 %v6271, %v6269
  %v6284 = vpack.c.bf16 %v6274, %v6272
  %v6285 = vpack.c.bf16 %v6275, %v6273
  %v6286 = vpack.c.bf16 %v6278, %v6276
  %v6287 = vpack.c.bf16 %v6279, %v6277
  %s6288 = scalar_lea.vmem %s3, 1440
  %v6289 = vld [vmem:[%s6288] sm:$0xff]
  %v6290 = vld [vmem:[%s6288 + $0x8] sm:$0xff]
  %v6291 = vld [vmem:[%s6288 + $0x10] sm:$0xff]
  %v6292 = vld [vmem:[%s6288 + $0x18] sm:$0xff]
  %v6293 = vld [vmem:[%s6288 + $0x20] sm:$0xff]
  %v6294 = vld [vmem:[%s6288 + $0x28] sm:$0xff]
  %v6295 = vld [vmem:[%s6288 + $0x30] sm:$0xff]
  %v6296 = vld [vmem:[%s6288 + $0x38] sm:$0xff]
  %v6297 = vld [vmem:[%s6288 + $0x40] sm:$0xff]
  %v6298 = vld [vmem:[%s6288 + $0x48] sm:$0xff]
  %v6299 = vld [vmem:[%s6288 + $0x50] sm:$0xff]
  %v6300 = vld [vmem:[%s6288 + $0x58] sm:$0xff]
  %v6301 = vld [vmem:[%s6288 + $0x60] sm:$0xff]
  %v6302 = vld [vmem:[%s6288 + $0x68] sm:$0xff]
  %v6303 = vld [vmem:[%s6288 + $0x70] sm:$0xff]
  %v6304 = vld [vmem:[%s6288 + $0x78] sm:$0xff]
  %v6305 = vld [vmem:[%s6288 + $0x80] sm:$0xff]
  %v6306 = vld [vmem:[%s6288 + $0x88] sm:$0xff]
  %v6307 = vld [vmem:[%s6288 + $0x90] sm:$0xff]
  %v6308 = vld [vmem:[%s6288 + $0x98] sm:$0xff]
  %v6309 = vld [vmem:[%s6288 + $0xa0] sm:$0xff]
  %v6310 = vld [vmem:[%s6288 + $0xa8] sm:$0xff]
  %v6311 = vld [vmem:[%s6288 + $0xb0] sm:$0xff]
  %v6312 = vld [vmem:[%s6288 + $0xb8] sm:$0xff]
  %v6313 = vld [vmem:[%s6288 + $0xc0] sm:$0xff]
  %v6314 = vld [vmem:[%s6288 + $0xc8] sm:$0xff]
  %v6315 = vld [vmem:[%s6288 + $0xd0] sm:$0xff]
  %v6316 = vld [vmem:[%s6288 + $0xd8] sm:$0xff]
  %v6317 = vld [vmem:[%s6288 + $0xe0] sm:$0xff]
  %v6318 = vld [vmem:[%s6288 + $0xe8] sm:$0xff]
  %v6319 = vld [vmem:[%s6288 + $0xf0] sm:$0xff]
  %v6320 = vld [vmem:[%s6288 + $0xf8] sm:$0xff]
  %v6321 = vld [vmem:[%s6288 + $0x100] sm:$0xff]
  %v6322 = vld [vmem:[%s6288 + $0x108] sm:$0xff]
  %v6323 = vld [vmem:[%s6288 + $0x110] sm:$0xff]
  %v6324 = vld [vmem:[%s6288 + $0x118] sm:$0xff]
  %v6325 = vld [vmem:[%s6288 + $0x120] sm:$0xff]
  %v6326 = vld [vmem:[%s6288 + $0x128] sm:$0xff]
  %v6327 = vld [vmem:[%s6288 + $0x130] sm:$0xff]
  %v6328 = vld [vmem:[%s6288 + $0x138] sm:$0xff]
  %v6329 = vld [vmem:[%s6288 + $0x140] sm:$0xff]
  %v6330 = vld [vmem:[%s6288 + $0x148] sm:$0xff]
  %v6331 = vld [vmem:[%s6288 + $0x150] sm:$0xff]
  %v6332 = vld [vmem:[%s6288 + $0x158] sm:$0xff]
  %v6333 = vld [vmem:[%s6288 + $0x160] sm:$0xff]
  %v6334 = vld [vmem:[%s6288 + $0x168] sm:$0xff]
  %v6335 = vld [vmem:[%s6288 + $0x170] sm:$0xff]
  %v6336 = vld [vmem:[%s6288 + $0x178] sm:$0xff]
  %v6337 = vld [vmem:[%s6288 + $0x180] sm:$0xff]
  %v6338 = vld [vmem:[%s6288 + $0x188] sm:$0xff]
  %v6339 = vld [vmem:[%s6288 + $0x190] sm:$0xff]
  %v6340 = vld [vmem:[%s6288 + $0x198] sm:$0xff]
  %v6341 = vld [vmem:[%s6288 + $0x1a0] sm:$0xff]
  %v6342 = vld [vmem:[%s6288 + $0x1a8] sm:$0xff]
  %v6343 = vld [vmem:[%s6288 + $0x1b0] sm:$0xff]
  %v6344 = vld [vmem:[%s6288 + $0x1b8] sm:$0xff]
  %v6345 = vld [vmem:[%s6288 + $0x1c0] sm:$0xff]
  %v6346 = vld [vmem:[%s6288 + $0x1c8] sm:$0xff]
  %v6347 = vld [vmem:[%s6288 + $0x1d0] sm:$0xff]
  %v6348 = vld [vmem:[%s6288 + $0x1d8] sm:$0xff]
  %v6409 = vunpack.c.l.b16 %v6289
  %v6410 = vunpack.c.h.b16 %v6289
  %v6411 = vunpack.c.l.b16 %v6290
  %v6412 = vunpack.c.h.b16 %v6290
  %v6413 = vunpack.c.l.b16 %v6291
  %v6414 = vunpack.c.h.b16 %v6291
  %v6415 = vunpack.c.l.b16 %v6292
  %v6416 = vunpack.c.h.b16 %v6292
  %v6417 = vunpack.c.l.b16 %v6293
  %v6418 = vunpack.c.h.b16 %v6293
  %v6419 = vunpack.c.l.b16 %v6294
  %v6420 = vunpack.c.h.b16 %v6294
  %v6421 = vunpack.c.l.b16 %v6295
  %v6422 = vunpack.c.h.b16 %v6295
  %v6423 = vunpack.c.l.b16 %v6296
  %v6424 = vunpack.c.h.b16 %v6296
  %v6425 = vunpack.c.l.b16 %v6297
  %v6426 = vunpack.c.h.b16 %v6297
  %v6427 = vunpack.c.l.b16 %v6298
  %v6428 = vunpack.c.h.b16 %v6298
  %v6429 = vunpack.c.l.b16 %v6299
  %v6430 = vunpack.c.h.b16 %v6299
  %v6431 = vunpack.c.l.b16 %v6300
  %v6432 = vunpack.c.h.b16 %v6300
  %v6433 = vunpack.c.l.b16 %v6301
  %v6434 = vunpack.c.h.b16 %v6301
  %v6435 = vunpack.c.l.b16 %v6302
  %v6436 = vunpack.c.h.b16 %v6302
  %v6437 = vunpack.c.l.b16 %v6303
  %v6438 = vunpack.c.h.b16 %v6303
  %v6439 = vunpack.c.l.b16 %v6304
  %v6440 = vunpack.c.h.b16 %v6304
  %v6441 = vunpack.c.l.b16 %v6305
  %v6442 = vunpack.c.h.b16 %v6305
  %v6443 = vunpack.c.l.b16 %v6306
  %v6444 = vunpack.c.h.b16 %v6306
  %v6445 = vunpack.c.l.b16 %v6307
  %v6446 = vunpack.c.h.b16 %v6307
  %v6447 = vunpack.c.l.b16 %v6308
  %v6448 = vunpack.c.h.b16 %v6308
  %v6449 = vunpack.c.l.b16 %v6309
  %v6450 = vunpack.c.h.b16 %v6309
  %v6451 = vunpack.c.l.b16 %v6310
  %v6452 = vunpack.c.h.b16 %v6310
  %v6453 = vunpack.c.l.b16 %v6311
  %v6454 = vunpack.c.h.b16 %v6311
  %v6455 = vunpack.c.l.b16 %v6312
  %v6456 = vunpack.c.h.b16 %v6312
  %v6457 = vunpack.c.l.b16 %v6313
  %v6458 = vunpack.c.h.b16 %v6313
  %v6459 = vunpack.c.l.b16 %v6314
  %v6460 = vunpack.c.h.b16 %v6314
  %v6461 = vunpack.c.l.b16 %v6315
  %v6462 = vunpack.c.h.b16 %v6315
  %v6463 = vunpack.c.l.b16 %v6316
  %v6464 = vunpack.c.h.b16 %v6316
  %v6465 = vunpack.c.l.b16 %v6317
  %v6466 = vunpack.c.h.b16 %v6317
  %v6467 = vunpack.c.l.b16 %v6318
  %v6468 = vunpack.c.h.b16 %v6318
  %v6469 = vunpack.c.l.b16 %v6319
  %v6470 = vunpack.c.h.b16 %v6319
  %v6471 = vunpack.c.l.b16 %v6320
  %v6472 = vunpack.c.h.b16 %v6320
  %v6473 = vunpack.c.l.b16 %v6321
  %v6474 = vunpack.c.h.b16 %v6321
  %v6475 = vunpack.c.l.b16 %v6322
  %v6476 = vunpack.c.h.b16 %v6322
  %v6477 = vunpack.c.l.b16 %v6323
  %v6478 = vunpack.c.h.b16 %v6323
  %v6479 = vunpack.c.l.b16 %v6324
  %v6480 = vunpack.c.h.b16 %v6324
  %v6481 = vunpack.c.l.b16 %v6325
  %v6482 = vunpack.c.h.b16 %v6325
  %v6483 = vunpack.c.l.b16 %v6326
  %v6484 = vunpack.c.h.b16 %v6326
  %v6485 = vunpack.c.l.b16 %v6327
  %v6486 = vunpack.c.h.b16 %v6327
  %v6487 = vunpack.c.l.b16 %v6328
  %v6488 = vunpack.c.h.b16 %v6328
  %v6489 = vunpack.c.l.b16 %v6329
  %v6490 = vunpack.c.h.b16 %v6329
  %v6491 = vunpack.c.l.b16 %v6330
  %v6492 = vunpack.c.h.b16 %v6330
  %v6493 = vunpack.c.l.b16 %v6331
  %v6494 = vunpack.c.h.b16 %v6331
  %v6495 = vunpack.c.l.b16 %v6332
  %v6496 = vunpack.c.h.b16 %v6332
  %v6497 = vunpack.c.l.b16 %v6333
  %v6498 = vunpack.c.h.b16 %v6333
  %v6499 = vunpack.c.l.b16 %v6334
  %v6500 = vunpack.c.h.b16 %v6334
  %v6501 = vunpack.c.l.b16 %v6335
  %v6502 = vunpack.c.h.b16 %v6335
  %v6503 = vunpack.c.l.b16 %v6336
  %v6504 = vunpack.c.h.b16 %v6336
  %v6505 = vunpack.c.l.b16 %v6337
  %v6506 = vunpack.c.h.b16 %v6337
  %v6507 = vunpack.c.l.b16 %v6338
  %v6508 = vunpack.c.h.b16 %v6338
  %v6509 = vunpack.c.l.b16 %v6339
  %v6510 = vunpack.c.h.b16 %v6339
  %v6511 = vunpack.c.l.b16 %v6340
  %v6512 = vunpack.c.h.b16 %v6340
  %v6513 = vunpack.c.l.b16 %v6341
  %v6514 = vunpack.c.h.b16 %v6341
  %v6515 = vunpack.c.l.b16 %v6342
  %v6516 = vunpack.c.h.b16 %v6342
  %v6517 = vunpack.c.l.b16 %v6343
  %v6518 = vunpack.c.h.b16 %v6343
  %v6519 = vunpack.c.l.b16 %v6344
  %v6520 = vunpack.c.h.b16 %v6344
  %v6521 = vunpack.c.l.b16 %v6345
  %v6522 = vunpack.c.h.b16 %v6345
  %v6523 = vunpack.c.l.b16 %v6346
  %v6524 = vunpack.c.h.b16 %v6346
  %v6525 = vunpack.c.l.b16 %v6347
  %v6526 = vunpack.c.h.b16 %v6347
  %v6527 = vunpack.c.l.b16 %v6348
  %v6528 = vunpack.c.h.b16 %v6348
  %v6529 = vpack.c.b16 %v6413, %v6409
  %v6530 = vpack.c.b16 %v6414, %v6410
  %v6531 = vpack.c.b16 %v6415, %v6411
  %v6532 = vpack.c.b16 %v6416, %v6412
  %v6533 = vpack.c.b16 %v6421, %v6417
  %v6534 = vpack.c.b16 %v6422, %v6418
  %v6535 = vpack.c.b16 %v6423, %v6419
  %v6536 = vpack.c.b16 %v6424, %v6420
  %v6537 = vpack.c.b16 %v6429, %v6425
  %v6538 = vpack.c.b16 %v6430, %v6426
  %v6539 = vpack.c.b16 %v6431, %v6427
  %v6540 = vpack.c.b16 %v6432, %v6428
  %v6541 = vpack.c.b16 %v6437, %v6433
  %v6542 = vpack.c.b16 %v6438, %v6434
  %v6543 = vpack.c.b16 %v6439, %v6435
  %v6544 = vpack.c.b16 %v6440, %v6436
  %v6545 = vpack.c.b16 %v6445, %v6441
  %v6546 = vpack.c.b16 %v6446, %v6442
  %v6547 = vpack.c.b16 %v6447, %v6443
  %v6548 = vpack.c.b16 %v6448, %v6444
  %v6549 = vpack.c.b16 %v6453, %v6449
  %v6550 = vpack.c.b16 %v6454, %v6450
  %v6551 = vpack.c.b16 %v6455, %v6451
  %v6552 = vpack.c.b16 %v6456, %v6452
  %v6553 = vpack.c.b16 %v6461, %v6457
  %v6554 = vpack.c.b16 %v6462, %v6458
  %v6555 = vpack.c.b16 %v6463, %v6459
  %v6556 = vpack.c.b16 %v6464, %v6460
  %v6557 = vpack.c.b16 %v6469, %v6465
  %v6558 = vpack.c.b16 %v6470, %v6466
  %v6559 = vpack.c.b16 %v6471, %v6467
  %v6560 = vpack.c.b16 %v6472, %v6468
  %v6561 = vpack.c.b16 %v6477, %v6473
  %v6562 = vpack.c.b16 %v6478, %v6474
  %v6563 = vpack.c.b16 %v6479, %v6475
  %v6564 = vpack.c.b16 %v6480, %v6476
  %v6565 = vpack.c.b16 %v6485, %v6481
  %v6566 = vpack.c.b16 %v6486, %v6482
  %v6567 = vpack.c.b16 %v6487, %v6483
  %v6568 = vpack.c.b16 %v6488, %v6484
  %v6569 = vpack.c.b16 %v6493, %v6489
  %v6570 = vpack.c.b16 %v6494, %v6490
  %v6571 = vpack.c.b16 %v6495, %v6491
  %v6572 = vpack.c.b16 %v6496, %v6492
  %v6573 = vpack.c.b16 %v6501, %v6497
  %v6574 = vpack.c.b16 %v6502, %v6498
  %v6575 = vpack.c.b16 %v6503, %v6499
  %v6576 = vpack.c.b16 %v6504, %v6500
  %v6577 = vpack.c.b16 %v6509, %v6505
  %v6578 = vpack.c.b16 %v6510, %v6506
  %v6579 = vpack.c.b16 %v6511, %v6507
  %v6580 = vpack.c.b16 %v6512, %v6508
  %v6581 = vpack.c.b16 %v6517, %v6513
  %v6582 = vpack.c.b16 %v6518, %v6514
  %v6583 = vpack.c.b16 %v6519, %v6515
  %v6584 = vpack.c.b16 %v6520, %v6516
  %v6585 = vpack.c.b16 %v6525, %v6521
  %v6586 = vpack.c.b16 %v6526, %v6522
  %v6587 = vpack.c.b16 %v6527, %v6523
  %v6588 = vpack.c.b16 %v6528, %v6524
  %v6650 = vsel %vm4352, %v6281, 0
  %v6653 = vsel %vm4352, %v6283, 0
  %v6656 = vsel %vm4352, %v6285, 0
  %v6659 = vsel %vm4352, %v6287, 0
  %6661 = vmatprep.subr.bf16.mxu0 %v6558
  %6662 = vmatpush1.bf16.msra.mxu0 %v6557
  %6663 = vmatprep.subr.bf16.mxu0 %v6554
  %6664 = vmatpush1.bf16.msra.mxu0 %v6553
  %6665 = vmatprep.subr.bf16.mxu0 %v6550
  %6666 = vmatpush1.bf16.msra.mxu0 %v6549
  %6667 = vmatprep.subr.bf16.mxu0 %v6546
  %6668 = vmatpush1.bf16.msra.mxu0 %v6545
  %6669 = vmatprep.subr.bf16.mxu0 %v6542
  %6670 = vmatpush1.bf16.msra.mxu0 %v6541
  %6671 = vmatprep.subr.bf16.mxu0 %v6538
  %6672 = vmatpush1.bf16.msra.mxu0 %v6537
  %6673 = vmatprep.subr.bf16.mxu0 %v6534
  %6674 = vmatpush1.bf16.msra.mxu0 %v6533
  %6675 = vmatprep.subr.bf16.mxu0 %v6530
  %6676 = vmatpush1.bf16.msra.mxu0 %v6529
  %6677 = vmatprep.subr.bf16.mxu0 0
  %6678 = vmatpush2.bf16.msra.mxu0 0
  %6679 = vmatprep.subr.bf16.mxu0 %v6586
  %6680 = vmatpush2.bf16.msra.mxu0 %v6585
  %6681 = vmatprep.subr.bf16.mxu0 %v6582
  %6682 = vmatpush2.bf16.msra.mxu0 %v6581
  %6683 = vmatprep.subr.bf16.mxu0 %v6578
  %6684 = vmatpush2.bf16.msra.mxu0 %v6577
  %6685 = vmatprep.subr.bf16.mxu0 %v6574
  %6686 = vmatpush2.bf16.msra.mxu0 %v6573
  %6687 = vmatprep.subr.bf16.mxu0 %v6570
  %6688 = vmatpush2.bf16.msra.mxu0 %v6569
  %6689 = vmatprep.subr.bf16.mxu0 %v6566
  %6690 = vmatpush2.bf16.msra.mxu0 %v6565
  %6691 = vmatprep.subr.bf16.mxu0 %v6562
  %6692 = vmatpush2.bf16.msra.mxu0 %v6561
  %6693 = vmatprep.mubr.bf16.mxu0 %v6650
  %6694 = vmatmul.mubr.bf16.gmra.mxu0 %v6280
  %v6695 = vpop.f32.mrf.mxu0
  %v6696 = vadd.f32 0.0, %v6695
  %v6697 = vpop.f32.mrf.mxu0
  %v6698 = vadd.f32 0.0, %v6697
  %v6699 = vpop.f32.mrf.mxu0
  %v6700 = vadd.f32 0.0, %v6699
  %v6701 = vpop.f32.mrf.mxu0
  %v6702 = vadd.f32 0.0, %v6701
  %6703 = vmatprep.mubr.bf16.mxu0 %v6653
  %6704 = vmatmul.mubr.bf16.gmra.mxu0 %v6282
  %v6705 = vpop.f32.mrf.mxu0
  %v6706 = vadd.f32 0.0, %v6705
  %v6707 = vpop.f32.mrf.mxu0
  %v6708 = vadd.f32 0.0, %v6707
  %v6709 = vpop.f32.mrf.mxu0
  %v6710 = vadd.f32 0.0, %v6709
  %v6711 = vpop.f32.mrf.mxu0
  %v6712 = vadd.f32 0.0, %v6711
  %6713 = vmatprep.mubr.bf16.mxu0 %v6656
  %6714 = vmatmul.mubr.bf16.gmra.mxu0 %v6284
  %v6715 = vpop.f32.mrf.mxu0
  %v6716 = vadd.f32 0.0, %v6715
  %v6717 = vpop.f32.mrf.mxu0
  %v6718 = vadd.f32 0.0, %v6717
  %v6719 = vpop.f32.mrf.mxu0
  %v6720 = vadd.f32 0.0, %v6719
  %v6721 = vpop.f32.mrf.mxu0
  %v6722 = vadd.f32 0.0, %v6721
  %6723 = vmatprep.mubr.bf16.mxu0 %v6659
  %6724 = vmatmul.mubr.bf16.gmra.mxu0 %v6286
  %v6725 = vpop.f32.mrf.mxu0
  %v6726 = vadd.f32 0.0, %v6725
  %v6727 = vpop.f32.mrf.mxu0
  %v6728 = vadd.f32 0.0, %v6727
  %v6729 = vpop.f32.mrf.mxu0
  %v6730 = vadd.f32 0.0, %v6729
  %v6731 = vpop.f32.mrf.mxu0
  %v6732 = vadd.f32 0.0, %v6731
  %6733 = vdwg.mxu0
  %6734 = vmatprep.subr.bf16.mxu0 %v6560
  %6735 = vmatpush1.bf16.msra.mxu0 %v6559
  %6736 = vmatprep.subr.bf16.mxu0 %v6556
  %6737 = vmatpush1.bf16.msra.mxu0 %v6555
  %6738 = vmatprep.subr.bf16.mxu0 %v6552
  %6739 = vmatpush1.bf16.msra.mxu0 %v6551
  %6740 = vmatprep.subr.bf16.mxu0 %v6548
  %6741 = vmatpush1.bf16.msra.mxu0 %v6547
  %6742 = vmatprep.subr.bf16.mxu0 %v6544
  %6743 = vmatpush1.bf16.msra.mxu0 %v6543
  %6744 = vmatprep.subr.bf16.mxu0 %v6540
  %6745 = vmatpush1.bf16.msra.mxu0 %v6539
  %6746 = vmatprep.subr.bf16.mxu0 %v6536
  %6747 = vmatpush1.bf16.msra.mxu0 %v6535
  %6748 = vmatprep.subr.bf16.mxu0 %v6532
  %6749 = vmatpush1.bf16.msra.mxu0 %v6531
  %6750 = vmatprep.subr.bf16.mxu0 0
  %6751 = vmatpush2.bf16.msra.mxu0 0
  %6752 = vmatprep.subr.bf16.mxu0 %v6588
  %6753 = vmatpush2.bf16.msra.mxu0 %v6587
  %6754 = vmatprep.subr.bf16.mxu0 %v6584
  %6755 = vmatpush2.bf16.msra.mxu0 %v6583
  %6756 = vmatprep.subr.bf16.mxu0 %v6580
  %6757 = vmatpush2.bf16.msra.mxu0 %v6579
  %6758 = vmatprep.subr.bf16.mxu0 %v6576
  %6759 = vmatpush2.bf16.msra.mxu0 %v6575
  %6760 = vmatprep.subr.bf16.mxu0 %v6572
  %6761 = vmatpush2.bf16.msra.mxu0 %v6571
  %6762 = vmatprep.subr.bf16.mxu0 %v6568
  %6763 = vmatpush2.bf16.msra.mxu0 %v6567
  %6764 = vmatprep.subr.bf16.mxu0 %v6564
  %6765 = vmatpush2.bf16.msra.mxu0 %v6563
  %6766 = vmatprep.mubr.bf16.mxu0 %v6650
  %6767 = vmatmul.mubr.bf16.gmra.mxu0 %v6280
  %v6768 = vpop.f32.mrf.mxu0
  %v6769 = vadd.f32 0.0, %v6768
  %v6770 = vpop.f32.mrf.mxu0
  %v6771 = vadd.f32 0.0, %v6770
  %v6772 = vpop.f32.mrf.mxu0
  %v6773 = vadd.f32 0.0, %v6772
  %v6774 = vpop.f32.mrf.mxu0
  %v6775 = vadd.f32 0.0, %v6774
  %6776 = vmatprep.mubr.bf16.mxu0 %v6653
  %6777 = vmatmul.mubr.bf16.gmra.mxu0 %v6282
  %v6778 = vpop.f32.mrf.mxu0
  %v6779 = vadd.f32 0.0, %v6778
  %v6780 = vpop.f32.mrf.mxu0
  %v6781 = vadd.f32 0.0, %v6780
  %v6782 = vpop.f32.mrf.mxu0
  %v6783 = vadd.f32 0.0, %v6782
  %v6784 = vpop.f32.mrf.mxu0
  %v6785 = vadd.f32 0.0, %v6784
  %6786 = vmatprep.mubr.bf16.mxu0 %v6656
  %6787 = vmatmul.mubr.bf16.gmra.mxu0 %v6284
  %v6788 = vpop.f32.mrf.mxu0
  %v6789 = vadd.f32 0.0, %v6788
  %v6790 = vpop.f32.mrf.mxu0
  %v6791 = vadd.f32 0.0, %v6790
  %v6792 = vpop.f32.mrf.mxu0
  %v6793 = vadd.f32 0.0, %v6792
  %v6794 = vpop.f32.mrf.mxu0
  %v6795 = vadd.f32 0.0, %v6794
  %6796 = vmatprep.mubr.bf16.mxu0 %v6659
  %6797 = vmatmul.mubr.bf16.gmra.mxu0 %v6286
  %v6798 = vpop.f32.mrf.mxu0
  %v6799 = vadd.f32 0.0, %v6798
  %v6800 = vpop.f32.mrf.mxu0
  %v6801 = vadd.f32 0.0, %v6800
  %v6802 = vpop.f32.mrf.mxu0
  %v6803 = vadd.f32 0.0, %v6802
  %v6804 = vpop.f32.mrf.mxu0
  %v6805 = vadd.f32 0.0, %v6804
  %6806 = vdwg.mxu0
  %v6807 = vadd.f32 %v6232, %v6696
  %v6808 = vadd.f32 %v6233, %v6698
  %v6809 = vadd.f32 %v6234, %v6769
  %v6810 = vadd.f32 %v6235, %v6771
  %v6811 = vadd.f32 %v6236, %v6700
  %v6812 = vadd.f32 %v6237, %v6702
  %v6813 = vadd.f32 %v6238, %v6773
  %v6814 = vadd.f32 %v6239, %v6775
  %v6815 = vadd.f32 %v6240, %v6706
  %v6816 = vadd.f32 %v6241, %v6708
  %v6817 = vadd.f32 %v6242, %v6779
  %v6818 = vadd.f32 %v6243, %v6781
  %v6819 = vadd.f32 %v6244, %v6710
  %v6820 = vadd.f32 %v6245, %v6712
  %v6821 = vadd.f32 %v6246, %v6783
  %v6822 = vadd.f32 %v6247, %v6785
  %v6823 = vadd.f32 %v6248, %v6716
  %v6824 = vadd.f32 %v6249, %v6718
  %v6825 = vadd.f32 %v6250, %v6789
  %v6826 = vadd.f32 %v6251, %v6791
  %v6827 = vadd.f32 %v6252, %v6720
  %v6828 = vadd.f32 %v6253, %v6722
  %v6829 = vadd.f32 %v6254, %v6793
  %v6830 = vadd.f32 %v6255, %v6795
  %v6831 = vadd.f32 %v6256, %v6726
  %v6832 = vadd.f32 %v6257, %v6728
  %v6833 = vadd.f32 %v6258, %v6799
  %v6834 = vadd.f32 %v6259, %v6801
  %v6835 = vadd.f32 %v6260, %v6730
  %v6836 = vadd.f32 %v6261, %v6732
  %v6837 = vadd.f32 %v6262, %v6803
  %v6838 = vadd.f32 %v6263, %v6805
  %v6839 = vld [vmem:[#allocation3 + $0x40] sm:$0xff]
  %v6840 = vld [vmem:[#allocation3 + $0x48] sm:$0xff]
  %v6841 = vld [vmem:[#allocation3 + $0x50] sm:$0xff]
  %v6842 = vld [vmem:[#allocation3 + $0x58] sm:$0xff]
  %v6843 = vld [vmem:[#allocation3 + $0x60] sm:$0xff]
  %v6844 = vld [vmem:[#allocation3 + $0x68] sm:$0xff]
  %v6845 = vld [vmem:[#allocation3 + $0x70] sm:$0xff]
  %v6846 = vld [vmem:[#allocation3 + $0x78] sm:$0xff]
  %v6847 = vld [vmem:[#allocation3 + $0x80] sm:$0xff]
  %v6848 = vld [vmem:[#allocation3 + $0x88] sm:$0xff]
  %v6849 = vld [vmem:[#allocation3 + $0x90] sm:$0xff]
  %v6850 = vld [vmem:[#allocation3 + $0x98] sm:$0xff]
  %v6851 = vld [vmem:[#allocation3 + $0xa0] sm:$0xff]
  %v6852 = vld [vmem:[#allocation3 + $0xa8] sm:$0xff]
  %v6853 = vld [vmem:[#allocation3 + $0xb0] sm:$0xff]
  %v6854 = vld [vmem:[#allocation3 + $0xb8] sm:$0xff]
  %v6855 = vpack.c.bf16 %v6841, %v6839
  %v6856 = vpack.c.bf16 %v6842, %v6840
  %v6857 = vpack.c.bf16 %v6845, %v6843
  %v6858 = vpack.c.bf16 %v6846, %v6844
  %v6859 = vpack.c.bf16 %v6849, %v6847
  %v6860 = vpack.c.bf16 %v6850, %v6848
  %v6861 = vpack.c.bf16 %v6853, %v6851
  %v6862 = vpack.c.bf16 %v6854, %v6852
  %s6863 = scalar_lea.vmem %s3, 1920
  %v6864 = vld [vmem:[%s6863] sm:$0xff]
  %v6865 = vld [vmem:[%s6863 + $0x8] sm:$0xff]
  %v6866 = vld [vmem:[%s6863 + $0x10] sm:$0xff]
  %v6867 = vld [vmem:[%s6863 + $0x18] sm:$0xff]
  %v6868 = vld [vmem:[%s6863 + $0x20] sm:$0xff]
  %v6869 = vld [vmem:[%s6863 + $0x28] sm:$0xff]
  %v6870 = vld [vmem:[%s6863 + $0x30] sm:$0xff]
  %v6871 = vld [vmem:[%s6863 + $0x38] sm:$0xff]
  %v6872 = vld [vmem:[%s6863 + $0x40] sm:$0xff]
  %v6873 = vld [vmem:[%s6863 + $0x48] sm:$0xff]
  %v6874 = vld [vmem:[%s6863 + $0x50] sm:$0xff]
  %v6875 = vld [vmem:[%s6863 + $0x58] sm:$0xff]
  %v6876 = vld [vmem:[%s6863 + $0x60] sm:$0xff]
  %v6877 = vld [vmem:[%s6863 + $0x68] sm:$0xff]
  %v6878 = vld [vmem:[%s6863 + $0x70] sm:$0xff]
  %v6879 = vld [vmem:[%s6863 + $0x78] sm:$0xff]
  %v6880 = vld [vmem:[%s6863 + $0x80] sm:$0xff]
  %v6881 = vld [vmem:[%s6863 + $0x88] sm:$0xff]
  %v6882 = vld [vmem:[%s6863 + $0x90] sm:$0xff]
  %v6883 = vld [vmem:[%s6863 + $0x98] sm:$0xff]
  %v6884 = vld [vmem:[%s6863 + $0xa0] sm:$0xff]
  %v6885 = vld [vmem:[%s6863 + $0xa8] sm:$0xff]
  %v6886 = vld [vmem:[%s6863 + $0xb0] sm:$0xff]
  %v6887 = vld [vmem:[%s6863 + $0xb8] sm:$0xff]
  %v6888 = vld [vmem:[%s6863 + $0xc0] sm:$0xff]
  %v6889 = vld [vmem:[%s6863 + $0xc8] sm:$0xff]
  %v6890 = vld [vmem:[%s6863 + $0xd0] sm:$0xff]
  %v6891 = vld [vmem:[%s6863 + $0xd8] sm:$0xff]
  %v6892 = vld [vmem:[%s6863 + $0xe0] sm:$0xff]
  %v6893 = vld [vmem:[%s6863 + $0xe8] sm:$0xff]
  %v6894 = vld [vmem:[%s6863 + $0xf0] sm:$0xff]
  %v6895 = vld [vmem:[%s6863 + $0xf8] sm:$0xff]
  %v6896 = vld [vmem:[%s6863 + $0x100] sm:$0xff]
  %v6897 = vld [vmem:[%s6863 + $0x108] sm:$0xff]
  %v6898 = vld [vmem:[%s6863 + $0x110] sm:$0xff]
  %v6899 = vld [vmem:[%s6863 + $0x118] sm:$0xff]
  %v6900 = vld [vmem:[%s6863 + $0x120] sm:$0xff]
  %v6901 = vld [vmem:[%s6863 + $0x128] sm:$0xff]
  %v6902 = vld [vmem:[%s6863 + $0x130] sm:$0xff]
  %v6903 = vld [vmem:[%s6863 + $0x138] sm:$0xff]
  %v6904 = vld [vmem:[%s6863 + $0x140] sm:$0xff]
  %v6905 = vld [vmem:[%s6863 + $0x148] sm:$0xff]
  %v6906 = vld [vmem:[%s6863 + $0x150] sm:$0xff]
  %v6907 = vld [vmem:[%s6863 + $0x158] sm:$0xff]
  %v6908 = vld [vmem:[%s6863 + $0x160] sm:$0xff]
  %v6909 = vld [vmem:[%s6863 + $0x168] sm:$0xff]
  %v6910 = vld [vmem:[%s6863 + $0x170] sm:$0xff]
  %v6911 = vld [vmem:[%s6863 + $0x178] sm:$0xff]
  %v6912 = vld [vmem:[%s6863 + $0x180] sm:$0xff]
  %v6913 = vld [vmem:[%s6863 + $0x188] sm:$0xff]
  %v6914 = vld [vmem:[%s6863 + $0x190] sm:$0xff]
  %v6915 = vld [vmem:[%s6863 + $0x198] sm:$0xff]
  %v6916 = vld [vmem:[%s6863 + $0x1a0] sm:$0xff]
  %v6917 = vld [vmem:[%s6863 + $0x1a8] sm:$0xff]
  %v6918 = vld [vmem:[%s6863 + $0x1b0] sm:$0xff]
  %v6919 = vld [vmem:[%s6863 + $0x1b8] sm:$0xff]
  %v6920 = vld [vmem:[%s6863 + $0x1c0] sm:$0xff]
  %v6921 = vld [vmem:[%s6863 + $0x1c8] sm:$0xff]
  %v6922 = vld [vmem:[%s6863 + $0x1d0] sm:$0xff]
  %v6923 = vld [vmem:[%s6863 + $0x1d8] sm:$0xff]
  %v6984 = vunpack.c.l.b16 %v6864
  %v6985 = vunpack.c.h.b16 %v6864
  %v6986 = vunpack.c.l.b16 %v6865
  %v6987 = vunpack.c.h.b16 %v6865
  %v6988 = vunpack.c.l.b16 %v6866
  %v6989 = vunpack.c.h.b16 %v6866
  %v6990 = vunpack.c.l.b16 %v6867
  %v6991 = vunpack.c.h.b16 %v6867
  %v6992 = vunpack.c.l.b16 %v6868
  %v6993 = vunpack.c.h.b16 %v6868
  %v6994 = vunpack.c.l.b16 %v6869
  %v6995 = vunpack.c.h.b16 %v6869
  %v6996 = vunpack.c.l.b16 %v6870
  %v6997 = vunpack.c.h.b16 %v6870
  %v6998 = vunpack.c.l.b16 %v6871
  %v6999 = vunpack.c.h.b16 %v6871
  %v7000 = vunpack.c.l.b16 %v6872
  %v7001 = vunpack.c.h.b16 %v6872
  %v7002 = vunpack.c.l.b16 %v6873
  %v7003 = vunpack.c.h.b16 %v6873
  %v7004 = vunpack.c.l.b16 %v6874
  %v7005 = vunpack.c.h.b16 %v6874
  %v7006 = vunpack.c.l.b16 %v6875
  %v7007 = vunpack.c.h.b16 %v6875
  %v7008 = vunpack.c.l.b16 %v6876
  %v7009 = vunpack.c.h.b16 %v6876
  %v7010 = vunpack.c.l.b16 %v6877
  %v7011 = vunpack.c.h.b16 %v6877
  %v7012 = vunpack.c.l.b16 %v6878
  %v7013 = vunpack.c.h.b16 %v6878
  %v7014 = vunpack.c.l.b16 %v6879
  %v7015 = vunpack.c.h.b16 %v6879
  %v7016 = vunpack.c.l.b16 %v6880
  %v7017 = vunpack.c.h.b16 %v6880
  %v7018 = vunpack.c.l.b16 %v6881
  %v7019 = vunpack.c.h.b16 %v6881
  %v7020 = vunpack.c.l.b16 %v6882
  %v7021 = vunpack.c.h.b16 %v6882
  %v7022 = vunpack.c.l.b16 %v6883
  %v7023 = vunpack.c.h.b16 %v6883
  %v7024 = vunpack.c.l.b16 %v6884
  %v7025 = vunpack.c.h.b16 %v6884
  %v7026 = vunpack.c.l.b16 %v6885
  %v7027 = vunpack.c.h.b16 %v6885
  %v7028 = vunpack.c.l.b16 %v6886
  %v7029 = vunpack.c.h.b16 %v6886
  %v7030 = vunpack.c.l.b16 %v6887
  %v7031 = vunpack.c.h.b16 %v6887
  %v7032 = vunpack.c.l.b16 %v6888
  %v7033 = vunpack.c.h.b16 %v6888
  %v7034 = vunpack.c.l.b16 %v6889
  %v7035 = vunpack.c.h.b16 %v6889
  %v7036 = vunpack.c.l.b16 %v6890
  %v7037 = vunpack.c.h.b16 %v6890
  %v7038 = vunpack.c.l.b16 %v6891
  %v7039 = vunpack.c.h.b16 %v6891
  %v7040 = vunpack.c.l.b16 %v6892
  %v7041 = vunpack.c.h.b16 %v6892
  %v7042 = vunpack.c.l.b16 %v6893
  %v7043 = vunpack.c.h.b16 %v6893
  %v7044 = vunpack.c.l.b16 %v6894
  %v7045 = vunpack.c.h.b16 %v6894
  %v7046 = vunpack.c.l.b16 %v6895
  %v7047 = vunpack.c.h.b16 %v6895
  %v7048 = vunpack.c.l.b16 %v6896
  %v7049 = vunpack.c.h.b16 %v6896
  %v7050 = vunpack.c.l.b16 %v6897
  %v7051 = vunpack.c.h.b16 %v6897
  %v7052 = vunpack.c.l.b16 %v6898
  %v7053 = vunpack.c.h.b16 %v6898
  %v7054 = vunpack.c.l.b16 %v6899
  %v7055 = vunpack.c.h.b16 %v6899
  %v7056 = vunpack.c.l.b16 %v6900
  %v7057 = vunpack.c.h.b16 %v6900
  %v7058 = vunpack.c.l.b16 %v6901
  %v7059 = vunpack.c.h.b16 %v6901
  %v7060 = vunpack.c.l.b16 %v6902
  %v7061 = vunpack.c.h.b16 %v6902
  %v7062 = vunpack.c.l.b16 %v6903
  %v7063 = vunpack.c.h.b16 %v6903
  %v7064 = vunpack.c.l.b16 %v6904
  %v7065 = vunpack.c.h.b16 %v6904
  %v7066 = vunpack.c.l.b16 %v6905
  %v7067 = vunpack.c.h.b16 %v6905
  %v7068 = vunpack.c.l.b16 %v6906
  %v7069 = vunpack.c.h.b16 %v6906
  %v7070 = vunpack.c.l.b16 %v6907
  %v7071 = vunpack.c.h.b16 %v6907
  %v7072 = vunpack.c.l.b16 %v6908
  %v7073 = vunpack.c.h.b16 %v6908
  %v7074 = vunpack.c.l.b16 %v6909
  %v7075 = vunpack.c.h.b16 %v6909
  %v7076 = vunpack.c.l.b16 %v6910
  %v7077 = vunpack.c.h.b16 %v6910
  %v7078 = vunpack.c.l.b16 %v6911
  %v7079 = vunpack.c.h.b16 %v6911
  %v7080 = vunpack.c.l.b16 %v6912
  %v7081 = vunpack.c.h.b16 %v6912
  %v7082 = vunpack.c.l.b16 %v6913
  %v7083 = vunpack.c.h.b16 %v6913
  %v7084 = vunpack.c.l.b16 %v6914
  %v7085 = vunpack.c.h.b16 %v6914
  %v7086 = vunpack.c.l.b16 %v6915
  %v7087 = vunpack.c.h.b16 %v6915
  %v7088 = vunpack.c.l.b16 %v6916
  %v7089 = vunpack.c.h.b16 %v6916
  %v7090 = vunpack.c.l.b16 %v6917
  %v7091 = vunpack.c.h.b16 %v6917
  %v7092 = vunpack.c.l.b16 %v6918
  %v7093 = vunpack.c.h.b16 %v6918
  %v7094 = vunpack.c.l.b16 %v6919
  %v7095 = vunpack.c.h.b16 %v6919
  %v7096 = vunpack.c.l.b16 %v6920
  %v7097 = vunpack.c.h.b16 %v6920
  %v7098 = vunpack.c.l.b16 %v6921
  %v7099 = vunpack.c.h.b16 %v6921
  %v7100 = vunpack.c.l.b16 %v6922
  %v7101 = vunpack.c.h.b16 %v6922
  %v7102 = vunpack.c.l.b16 %v6923
  %v7103 = vunpack.c.h.b16 %v6923
  %v7104 = vpack.c.b16 %v6988, %v6984
  %v7105 = vpack.c.b16 %v6989, %v6985
  %v7106 = vpack.c.b16 %v6990, %v6986
  %v7107 = vpack.c.b16 %v6991, %v6987
  %v7108 = vpack.c.b16 %v6996, %v6992
  %v7109 = vpack.c.b16 %v6997, %v6993
  %v7110 = vpack.c.b16 %v6998, %v6994
  %v7111 = vpack.c.b16 %v6999, %v6995
  %v7112 = vpack.c.b16 %v7004, %v7000
  %v7113 = vpack.c.b16 %v7005, %v7001
  %v7114 = vpack.c.b16 %v7006, %v7002
  %v7115 = vpack.c.b16 %v7007, %v7003
  %v7116 = vpack.c.b16 %v7012, %v7008
  %v7117 = vpack.c.b16 %v7013, %v7009
  %v7118 = vpack.c.b16 %v7014, %v7010
  %v7119 = vpack.c.b16 %v7015, %v7011
  %v7120 = vpack.c.b16 %v7020, %v7016
  %v7121 = vpack.c.b16 %v7021, %v7017
  %v7122 = vpack.c.b16 %v7022, %v7018
  %v7123 = vpack.c.b16 %v7023, %v7019
  %v7124 = vpack.c.b16 %v7028, %v7024
  %v7125 = vpack.c.b16 %v7029, %v7025
  %v7126 = vpack.c.b16 %v7030, %v7026
  %v7127 = vpack.c.b16 %v7031, %v7027
  %v7128 = vpack.c.b16 %v7036, %v7032
  %v7129 = vpack.c.b16 %v7037, %v7033
  %v7130 = vpack.c.b16 %v7038, %v7034
  %v7131 = vpack.c.b16 %v7039, %v7035
  %v7132 = vpack.c.b16 %v7044, %v7040
  %v7133 = vpack.c.b16 %v7045, %v7041
  %v7134 = vpack.c.b16 %v7046, %v7042
  %v7135 = vpack.c.b16 %v7047, %v7043
  %v7136 = vpack.c.b16 %v7052, %v7048
  %v7137 = vpack.c.b16 %v7053, %v7049
  %v7138 = vpack.c.b16 %v7054, %v7050
  %v7139 = vpack.c.b16 %v7055, %v7051
  %v7140 = vpack.c.b16 %v7060, %v7056
  %v7141 = vpack.c.b16 %v7061, %v7057
  %v7142 = vpack.c.b16 %v7062, %v7058
  %v7143 = vpack.c.b16 %v7063, %v7059
  %v7144 = vpack.c.b16 %v7068, %v7064
  %v7145 = vpack.c.b16 %v7069, %v7065
  %v7146 = vpack.c.b16 %v7070, %v7066
  %v7147 = vpack.c.b16 %v7071, %v7067
  %v7148 = vpack.c.b16 %v7076, %v7072
  %v7149 = vpack.c.b16 %v7077, %v7073
  %v7150 = vpack.c.b16 %v7078, %v7074
  %v7151 = vpack.c.b16 %v7079, %v7075
  %v7152 = vpack.c.b16 %v7084, %v7080
  %v7153 = vpack.c.b16 %v7085, %v7081
  %v7154 = vpack.c.b16 %v7086, %v7082
  %v7155 = vpack.c.b16 %v7087, %v7083
  %v7156 = vpack.c.b16 %v7092, %v7088
  %v7157 = vpack.c.b16 %v7093, %v7089
  %v7158 = vpack.c.b16 %v7094, %v7090
  %v7159 = vpack.c.b16 %v7095, %v7091
  %v7160 = vpack.c.b16 %v7100, %v7096
  %v7161 = vpack.c.b16 %v7101, %v7097
  %v7162 = vpack.c.b16 %v7102, %v7098
  %v7163 = vpack.c.b16 %v7103, %v7099
  %v7225 = vsel %vm4352, %v6856, 0
  %v7228 = vsel %vm4352, %v6858, 0
  %v7231 = vsel %vm4352, %v6860, 0
  %v7234 = vsel %vm4352, %v6862, 0
  %7236 = vmatprep.subr.bf16.mxu0 %v7133
  %7237 = vmatpush1.bf16.msra.mxu0 %v7132
  %7238 = vmatprep.subr.bf16.mxu0 %v7129
  %7239 = vmatpush1.bf16.msra.mxu0 %v7128
  %7240 = vmatprep.subr.bf16.mxu0 %v7125
  %7241 = vmatpush1.bf16.msra.mxu0 %v7124
  %7242 = vmatprep.subr.bf16.mxu0 %v7121
  %7243 = vmatpush1.bf16.msra.mxu0 %v7120
  %7244 = vmatprep.subr.bf16.mxu0 %v7117
  %7245 = vmatpush1.bf16.msra.mxu0 %v7116
  %7246 = vmatprep.subr.bf16.mxu0 %v7113
  %7247 = vmatpush1.bf16.msra.mxu0 %v7112
  %7248 = vmatprep.subr.bf16.mxu0 %v7109
  %7249 = vmatpush1.bf16.msra.mxu0 %v7108
  %7250 = vmatprep.subr.bf16.mxu0 %v7105
  %7251 = vmatpush1.bf16.msra.mxu0 %v7104
  %7252 = vmatprep.subr.bf16.mxu0 0
  %7253 = vmatpush2.bf16.msra.mxu0 0
  %7254 = vmatprep.subr.bf16.mxu0 %v7161
  %7255 = vmatpush2.bf16.msra.mxu0 %v7160
  %7256 = vmatprep.subr.bf16.mxu0 %v7157
  %7257 = vmatpush2.bf16.msra.mxu0 %v7156
  %7258 = vmatprep.subr.bf16.mxu0 %v7153
  %7259 = vmatpush2.bf16.msra.mxu0 %v7152
  %7260 = vmatprep.subr.bf16.mxu0 %v7149
  %7261 = vmatpush2.bf16.msra.mxu0 %v7148
  %7262 = vmatprep.subr.bf16.mxu0 %v7145
  %7263 = vmatpush2.bf16.msra.mxu0 %v7144
  %7264 = vmatprep.subr.bf16.mxu0 %v7141
  %7265 = vmatpush2.bf16.msra.mxu0 %v7140
  %7266 = vmatprep.subr.bf16.mxu0 %v7137
  %7267 = vmatpush2.bf16.msra.mxu0 %v7136
  %7268 = vmatprep.mubr.bf16.mxu0 %v7225
  %7269 = vmatmul.mubr.bf16.gmra.mxu0 %v6855
  %v7270 = vpop.f32.mrf.mxu0
  %v7271 = vadd.f32 0.0, %v7270
  %v7272 = vpop.f32.mrf.mxu0
  %v7273 = vadd.f32 0.0, %v7272
  %v7274 = vpop.f32.mrf.mxu0
  %v7275 = vadd.f32 0.0, %v7274
  %v7276 = vpop.f32.mrf.mxu0
  %v7277 = vadd.f32 0.0, %v7276
  %7278 = vmatprep.mubr.bf16.mxu0 %v7228
  %7279 = vmatmul.mubr.bf16.gmra.mxu0 %v6857
  %v7280 = vpop.f32.mrf.mxu0
  %v7281 = vadd.f32 0.0, %v7280
  %v7282 = vpop.f32.mrf.mxu0
  %v7283 = vadd.f32 0.0, %v7282
  %v7284 = vpop.f32.mrf.mxu0
  %v7285 = vadd.f32 0.0, %v7284
  %v7286 = vpop.f32.mrf.mxu0
  %v7287 = vadd.f32 0.0, %v7286
  %7288 = vmatprep.mubr.bf16.mxu0 %v7231
  %7289 = vmatmul.mubr.bf16.gmra.mxu0 %v6859
  %v7290 = vpop.f32.mrf.mxu0
  %v7291 = vadd.f32 0.0, %v7290
  %v7292 = vpop.f32.mrf.mxu0
  %v7293 = vadd.f32 0.0, %v7292
  %v7294 = vpop.f32.mrf.mxu0
  %v7295 = vadd.f32 0.0, %v7294
  %v7296 = vpop.f32.mrf.mxu0
  %v7297 = vadd.f32 0.0, %v7296
  %7298 = vmatprep.mubr.bf16.mxu0 %v7234
  %7299 = vmatmul.mubr.bf16.gmra.mxu0 %v6861
  %v7300 = vpop.f32.mrf.mxu0
  %v7301 = vadd.f32 0.0, %v7300
  %v7302 = vpop.f32.mrf.mxu0
  %v7303 = vadd.f32 0.0, %v7302
  %v7304 = vpop.f32.mrf.mxu0
  %v7305 = vadd.f32 0.0, %v7304
  %v7306 = vpop.f32.mrf.mxu0
  %v7307 = vadd.f32 0.0, %v7306
  %7308 = vdwg.mxu0
  %7309 = vmatprep.subr.bf16.mxu0 %v7135
  %7310 = vmatpush1.bf16.msra.mxu0 %v7134
  %7311 = vmatprep.subr.bf16.mxu0 %v7131
  %7312 = vmatpush1.bf16.msra.mxu0 %v7130
  %7313 = vmatprep.subr.bf16.mxu0 %v7127
  %7314 = vmatpush1.bf16.msra.mxu0 %v7126
  %7315 = vmatprep.subr.bf16.mxu0 %v7123
  %7316 = vmatpush1.bf16.msra.mxu0 %v7122
  %7317 = vmatprep.subr.bf16.mxu0 %v7119
  %7318 = vmatpush1.bf16.msra.mxu0 %v7118
  %7319 = vmatprep.subr.bf16.mxu0 %v7115
  %7320 = vmatpush1.bf16.msra.mxu0 %v7114
  %7321 = vmatprep.subr.bf16.mxu0 %v7111
  %7322 = vmatpush1.bf16.msra.mxu0 %v7110
  %7323 = vmatprep.subr.bf16.mxu0 %v7107
  %7324 = vmatpush1.bf16.msra.mxu0 %v7106
  %7325 = vmatprep.subr.bf16.mxu0 0
  %7326 = vmatpush2.bf16.msra.mxu0 0
  %7327 = vmatprep.subr.bf16.mxu0 %v7163
  %7328 = vmatpush2.bf16.msra.mxu0 %v7162
  %7329 = vmatprep.subr.bf16.mxu0 %v7159
  %7330 = vmatpush2.bf16.msra.mxu0 %v7158
  %7331 = vmatprep.subr.bf16.mxu0 %v7155
  %7332 = vmatpush2.bf16.msra.mxu0 %v7154
  %7333 = vmatprep.subr.bf16.mxu0 %v7151
  %7334 = vmatpush2.bf16.msra.mxu0 %v7150
  %7335 = vmatprep.subr.bf16.mxu0 %v7147
  %7336 = vmatpush2.bf16.msra.mxu0 %v7146
  %7337 = vmatprep.subr.bf16.mxu0 %v7143
  %7338 = vmatpush2.bf16.msra.mxu0 %v7142
  %7339 = vmatprep.subr.bf16.mxu0 %v7139
  %7340 = vmatpush2.bf16.msra.mxu0 %v7138
  %7341 = vmatprep.mubr.bf16.mxu0 %v7225
  %7342 = vmatmul.mubr.bf16.gmra.mxu0 %v6855
  %v7343 = vpop.f32.mrf.mxu0
  %v7344 = vadd.f32 0.0, %v7343
  %v7345 = vpop.f32.mrf.mxu0
  %v7346 = vadd.f32 0.0, %v7345
  %v7347 = vpop.f32.mrf.mxu0
  %v7348 = vadd.f32 0.0, %v7347
  %v7349 = vpop.f32.mrf.mxu0
  %v7350 = vadd.f32 0.0, %v7349
  %7351 = vmatprep.mubr.bf16.mxu0 %v7228
  %7352 = vmatmul.mubr.bf16.gmra.mxu0 %v6857
  %v7353 = vpop.f32.mrf.mxu0
  %v7354 = vadd.f32 0.0, %v7353
  %v7355 = vpop.f32.mrf.mxu0
  %v7356 = vadd.f32 0.0, %v7355
  %v7357 = vpop.f32.mrf.mxu0
  %v7358 = vadd.f32 0.0, %v7357
  %v7359 = vpop.f32.mrf.mxu0
  %v7360 = vadd.f32 0.0, %v7359
  %7361 = vmatprep.mubr.bf16.mxu0 %v7231
  %7362 = vmatmul.mubr.bf16.gmra.mxu0 %v6859
  %v7363 = vpop.f32.mrf.mxu0
  %v7364 = vadd.f32 0.0, %v7363
  %v7365 = vpop.f32.mrf.mxu0
  %v7366 = vadd.f32 0.0, %v7365
  %v7367 = vpop.f32.mrf.mxu0
  %v7368 = vadd.f32 0.0, %v7367
  %v7369 = vpop.f32.mrf.mxu0
  %v7370 = vadd.f32 0.0, %v7369
  %7371 = vmatprep.mubr.bf16.mxu0 %v7234
  %7372 = vmatmul.mubr.bf16.gmra.mxu0 %v6861
  %v7373 = vpop.f32.mrf.mxu0
  %v7374 = vadd.f32 0.0, %v7373
  %v7375 = vpop.f32.mrf.mxu0
  %v7376 = vadd.f32 0.0, %v7375
  %v7377 = vpop.f32.mrf.mxu0
  %v7378 = vadd.f32 0.0, %v7377
  %v7379 = vpop.f32.mrf.mxu0
  %v7380 = vadd.f32 0.0, %v7379
  %7381 = vdwg.mxu0
  %v7382 = vadd.f32 %v6807, %v7271
  %v7383 = vadd.f32 %v6808, %v7273
  %v7384 = vadd.f32 %v6809, %v7344
  %v7385 = vadd.f32 %v6810, %v7346
  %v7386 = vadd.f32 %v6811, %v7275
  %v7387 = vadd.f32 %v6812, %v7277
  %v7388 = vadd.f32 %v6813, %v7348
  %v7389 = vadd.f32 %v6814, %v7350
  %v7390 = vadd.f32 %v6815, %v7281
  %v7391 = vadd.f32 %v6816, %v7283
  %v7392 = vadd.f32 %v6817, %v7354
  %v7393 = vadd.f32 %v6818, %v7356
  %v7394 = vadd.f32 %v6819, %v7285
  %v7395 = vadd.f32 %v6820, %v7287
  %v7396 = vadd.f32 %v6821, %v7358
  %v7397 = vadd.f32 %v6822, %v7360
  %v7398 = vadd.f32 %v6823, %v7291
  %v7399 = vadd.f32 %v6824, %v7293
  %v7400 = vadd.f32 %v6825, %v7364
  %v7401 = vadd.f32 %v6826, %v7366
  %v7402 = vadd.f32 %v6827, %v7295
  %v7403 = vadd.f32 %v6828, %v7297
  %v7404 = vadd.f32 %v6829, %v7368
  %v7405 = vadd.f32 %v6830, %v7370
  %v7406 = vadd.f32 %v6831, %v7301
  %v7407 = vadd.f32 %v6832, %v7303
  %v7408 = vadd.f32 %v6833, %v7374
  %v7409 = vadd.f32 %v6834, %v7376
  %v7410 = vadd.f32 %v6835, %v7305
  %v7411 = vadd.f32 %v6836, %v7307
  %v7412 = vadd.f32 %v6837, %v7378
  %v7413 = vadd.f32 %v6838, %v7380
  %7422 = vrot.lane.b32.xlu0 %v7382, 78
  %v7423 = vpop.permute.xlu0 %7422
  %7424 = vrot.lane.b32.xlu0 %v7386, 78
  %v7425 = vpop.permute.xlu0 %7424
  %7426 = vrot.lane.b32.xlu0 %v7390, 78
  %v7427 = vpop.permute.xlu0 %7426
  %7428 = vrot.lane.b32.xlu0 %v7394, 78
  %v7429 = vpop.permute.xlu0 %7428
  %7430 = vrot.lane.b32.xlu0 %v7398, 78
  %v7431 = vpop.permute.xlu0 %7430
  %7432 = vrot.lane.b32.xlu0 %v7402, 78
  %v7433 = vpop.permute.xlu0 %7432
  %7434 = vrot.lane.b32.xlu0 %v7406, 78
  %v7435 = vpop.permute.xlu0 %7434
  %7436 = vrot.lane.b32.xlu0 %v7410, 78
  %v7437 = vpop.permute.xlu0 %7436
  %v7446 = vmax.f32 %v7382, %v7423
  %v7447 = vmax.f32 %v7386, %v7425
  %v7448 = vmax.f32 %v7390, %v7427
  %v7449 = vmax.f32 %v7394, %v7429
  %v7450 = vmax.f32 %v7398, %v7431
  %v7451 = vmax.f32 %v7402, %v7433
  %v7452 = vmax.f32 %v7406, %v7435
  %v7453 = vmax.f32 %v7410, %v7437
  %7462 = vrot.lane.b32.xlu0 %v7383, 78
  %v7463 = vpop.permute.xlu0 %7462
  %7464 = vrot.lane.b32.xlu0 %v7387, 78
  %v7465 = vpop.permute.xlu0 %7464
  %7466 = vrot.lane.b32.xlu0 %v7391, 78
  %v7467 = vpop.permute.xlu0 %7466
  %7468 = vrot.lane.b32.xlu0 %v7395, 78
  %v7469 = vpop.permute.xlu0 %7468
  %7470 = vrot.lane.b32.xlu0 %v7399, 78
  %v7471 = vpop.permute.xlu0 %7470
  %7472 = vrot.lane.b32.xlu0 %v7403, 78
  %v7473 = vpop.permute.xlu0 %7472
  %7474 = vrot.lane.b32.xlu0 %v7407, 78
  %v7475 = vpop.permute.xlu0 %7474
  %7476 = vrot.lane.b32.xlu0 %v7411, 78
  %v7477 = vpop.permute.xlu0 %7476
  %v7486 = vmax.f32 %v7382, %v7463
  %v7487 = vmax.f32 %v7383, %v7463
  %v7488 = vmax.f32 %v7386, %v7465
  %v7489 = vmax.f32 %v7387, %v7465
  %v7490 = vmax.f32 %v7390, %v7467
  %v7491 = vmax.f32 %v7391, %v7467
  %v7492 = vmax.f32 %v7394, %v7469
  %v7493 = vmax.f32 %v7395, %v7469
  %v7494 = vmax.f32 %v7398, %v7471
  %v7495 = vmax.f32 %v7399, %v7471
  %v7496 = vmax.f32 %v7402, %v7473
  %v7497 = vmax.f32 %v7403, %v7473
  %v7498 = vmax.f32 %v7406, %v7475
  %v7499 = vmax.f32 %v7407, %v7475
  %v7500 = vmax.f32 %v7410, %v7477
  %v7501 = vmax.f32 %v7411, %v7477
  %7510 = vrot.lane.b32.xlu0 %v7384, 78
  %v7511 = vpop.permute.xlu0 %7510
  %7512 = vrot.lane.b32.xlu0 %v7388, 78
  %v7513 = vpop.permute.xlu0 %7512
  %7514 = vrot.lane.b32.xlu0 %v7392, 78
  %v7515 = vpop.permute.xlu0 %7514
  %7516 = vrot.lane.b32.xlu0 %v7396, 78
  %v7517 = vpop.permute.xlu0 %7516
  %7518 = vrot.lane.b32.xlu0 %v7400, 78
  %v7519 = vpop.permute.xlu0 %7518
  %7520 = vrot.lane.b32.xlu0 %v7404, 78
  %v7521 = vpop.permute.xlu0 %7520
  %7522 = vrot.lane.b32.xlu0 %v7408, 78
  %v7523 = vpop.permute.xlu0 %7522
  %7524 = vrot.lane.b32.xlu0 %v7412, 78
  %v7525 = vpop.permute.xlu0 %7524
  %vm7526 = vcmask 637952
  %v7527 = vsel %vm7526, %v7463, %v7511
  %v7528 = vsel %vm7526, %v7465, %v7513
  %v7529 = vsel %vm7526, %v7467, %v7515
  %v7530 = vsel %vm7526, %v7469, %v7517
  %v7531 = vsel %vm7526, %v7471, %v7519
  %v7532 = vsel %vm7526, %v7473, %v7521
  %v7533 = vsel %vm7526, %v7475, %v7523
  %v7534 = vsel %vm7526, %v7477, %v7525
  %v7543 = vmax.f32 %v7383, %v7527
  %v7544 = vmax.f32 %v7387, %v7528
  %v7545 = vmax.f32 %v7391, %v7529
  %v7546 = vmax.f32 %v7395, %v7530
  %v7547 = vmax.f32 %v7399, %v7531
  %v7548 = vmax.f32 %v7403, %v7532
  %v7549 = vmax.f32 %v7407, %v7533
  %v7550 = vmax.f32 %v7411, %v7534
  %7559 = vrot.lane.b32.xlu0 %v7385, 78
  %v7560 = vpop.permute.xlu0 %7559
  %7561 = vrot.lane.b32.xlu0 %v7389, 78
  %v7562 = vpop.permute.xlu0 %7561
  %7563 = vrot.lane.b32.xlu0 %v7393, 78
  %v7564 = vpop.permute.xlu0 %7563
  %7565 = vrot.lane.b32.xlu0 %v7397, 78
  %v7566 = vpop.permute.xlu0 %7565
  %7567 = vrot.lane.b32.xlu0 %v7401, 78
  %v7568 = vpop.permute.xlu0 %7567
  %7569 = vrot.lane.b32.xlu0 %v7405, 78
  %v7570 = vpop.permute.xlu0 %7569
  %7571 = vrot.lane.b32.xlu0 %v7409, 78
  %v7572 = vpop.permute.xlu0 %7571
  %7573 = vrot.lane.b32.xlu0 %v7413, 78
  %v7574 = vpop.permute.xlu0 %7573
  %v7575 = vsel %vm7526, %v7511, %v7560
  %v7576 = vsel %vm7526, %v7513, %v7562
  %v7577 = vsel %vm7526, %v7515, %v7564
  %v7578 = vsel %vm7526, %v7517, %v7566
  %v7579 = vsel %vm7526, %v7519, %v7568
  %v7580 = vsel %vm7526, %v7521, %v7570
  %v7581 = vsel %vm7526, %v7523, %v7572
  %v7582 = vsel %vm7526, %v7525, %v7574
  %v7591 = vmax.f32 %v7384, %v7575
  %v7592 = vmax.f32 %v7388, %v7576
  %v7593 = vmax.f32 %v7392, %v7577
  %v7594 = vmax.f32 %v7396, %v7578
  %v7595 = vmax.f32 %v7400, %v7579
  %v7596 = vmax.f32 %v7404, %v7580
  %v7597 = vmax.f32 %v7408, %v7581
  %v7598 = vmax.f32 %v7412, %v7582
  %v7599 = vmax.f32 %v7446, %v7447
  %v7600 = vld [vmem:[%s4] sm:$0x1]
  %v7602 = vlaneseq
  %v7603 = vshrl.u32 %v7602, 7
  %v7604 = vsub.s32 0, %v7603
  %v7605 = vrot.slane %v7600, %v7604
  %v7607 = vadd.f32 %v7599, %v7605
  %v7608 = vmax.f32 %v7607, 0.0
  %v7609 = vpack.c.bf16 %v7608, %v7608
  %v7610 = vld [vmem:[%s5] sm:$0xff]
  %v7611 = vld [vmem:[%s5 + $0x8] sm:$0xff]
  %v7612 = vld [vmem:[%s5 + $0x10] sm:$0xff]
  %v7613 = vld [vmem:[%s5 + $0x18] sm:$0xff]
  %v7614 = vld [vmem:[%s5 + $0x20] sm:$0xff]
  %v7615 = vld [vmem:[%s5 + $0x28] sm:$0xff]
  %v7616 = vld [vmem:[%s5 + $0x30] sm:$0xff]
  %v7617 = vld [vmem:[%s5 + $0x38] sm:$0xff]
  %v7618 = vld [vmem:[%s5 + $0x40] sm:$0xff]
  %v7619 = vld [vmem:[%s5 + $0x48] sm:$0xff]
  %v7620 = vld [vmem:[%s5 + $0x50] sm:$0xff]
  %v7621 = vld [vmem:[%s5 + $0x58] sm:$0xff]
  %v7622 = vld [vmem:[%s5 + $0x60] sm:$0x11]
  %v7623 = vld [vmem:[%s5 + $0x68] sm:$0x11]
  %v7624 = vmax.f32 %v7486, %v7488
  %v7625 = vmax.f32 %v7487, %v7489
  %7626 = vrot.lane.b32.xlu0 %v7605, 100
  %v7627 = vpop.permute.xlu0 %7626
  %v7629 = vadd.f32 %v7624, %v7627
  %v7630 = vadd.f32 %v7625, %v7627
  %v7631 = vmax.f32 %v7629, 0.0
  %v7632 = vmax.f32 %v7630, 0.0
  %v7633 = vpack.c.bf16 %v7631, %v7631
  %v7634 = vpack.c.bf16 %v7632, %v7632
  %s7635 = scalar_lea.vmem %s5, 112
  %v7636 = vld [vmem:[%s7635] sm:$0xff]
  %v7637 = vld [vmem:[%s7635 + $0x8] sm:$0xff]
  %v7638 = vld [vmem:[%s7635 + $0x10] sm:$0xff]
  %v7639 = vld [vmem:[%s7635 + $0x18] sm:$0xff]
  %v7640 = vld [vmem:[%s7635 + $0x20] sm:$0xff]
  %v7641 = vld [vmem:[%s7635 + $0x28] sm:$0xff]
  %v7642 = vld [vmem:[%s7635 + $0x30] sm:$0xff]
  %v7643 = vld [vmem:[%s7635 + $0x38] sm:$0xff]
  %v7644 = vld [vmem:[%s7635 + $0x40] sm:$0xff]
  %v7645 = vld [vmem:[%s7635 + $0x48] sm:$0xff]
  %v7646 = vld [vmem:[%s7635 + $0x50] sm:$0xff]
  %v7647 = vld [vmem:[%s7635 + $0x58] sm:$0xff]
  %v7648 = vld [vmem:[%s7635 + $0x60] sm:$0x11]
  %v7649 = vld [vmem:[%s7635 + $0x68] sm:$0x11]
  %7652 = vrot.lane.b32.xlu0 %v7633, 28
  %v7653 = vpop.permute.xlu0 %7652
  %7654 = vrot.lane.b32.xlu0 %v7634, 28
  %v7655 = vpop.permute.xlu0 %7654
  %vm7656 = vcmask 228352
  %v7657 = vsel %vm7656, %v7653, %v7655
  %v7672 = vunpack.c.l.b16 %v7636
  %v7673 = vunpack.c.h.b16 %v7636
  %v7674 = vunpack.c.l.b16 %v7637
  %v7675 = vunpack.c.h.b16 %v7637
  %v7676 = vunpack.c.l.b16 %v7638
  %v7677 = vunpack.c.h.b16 %v7638
  %v7678 = vunpack.c.l.b16 %v7639
  %v7679 = vunpack.c.h.b16 %v7639
  %v7680 = vunpack.c.l.b16 %v7640
  %v7681 = vunpack.c.h.b16 %v7640
  %v7682 = vunpack.c.l.b16 %v7641
  %v7683 = vunpack.c.h.b16 %v7641
  %v7684 = vunpack.c.l.b16 %v7642
  %v7685 = vunpack.c.h.b16 %v7642
  %v7686 = vunpack.c.l.b16 %v7643
  %v7687 = vunpack.c.h.b16 %v7643
  %v7688 = vunpack.c.l.b16 %v7644
  %v7689 = vunpack.c.h.b16 %v7644
  %v7690 = vunpack.c.l.b16 %v7645
  %v7691 = vunpack.c.h.b16 %v7645
  %v7692 = vunpack.c.l.b16 %v7646
  %v7693 = vunpack.c.h.b16 %v7646
  %v7694 = vunpack.c.l.b16 %v7647
  %v7695 = vunpack.c.h.b16 %v7647
  %v7696 = vunpack.c.l.b16 %v7648
  %v7697 = vunpack.c.h.b16 %v7648
  %v7698 = vunpack.c.l.b16 %v7649
  %v7699 = vunpack.c.h.b16 %v7649
  %v7700 = vpack.c.b16 %v7676, %v7672
  %v7701 = vpack.c.b16 %v7677, %v7673
  %v7702 = vpack.c.b16 %v7678, %v7674
  %v7703 = vpack.c.b16 %v7679, %v7675
  %v7704 = vpack.c.b16 %v7684, %v7680
  %v7705 = vpack.c.b16 %v7685, %v7681
  %v7706 = vpack.c.b16 %v7686, %v7682
  %v7707 = vpack.c.b16 %v7687, %v7683
  %v7708 = vpack.c.b16 %v7692, %v7688
  %v7709 = vpack.c.b16 %v7693, %v7689
  %v7710 = vpack.c.b16 %v7694, %v7690
  %v7711 = vpack.c.b16 %v7695, %v7691
  %v7712 = vpack.c.b16 %v7696, %v7696
  %v7713 = vpack.c.b16 %v7697, %v7697
  %v7714 = vpack.c.b16 %v7698, %v7698
  %v7715 = vpack.c.b16 %v7699, %v7699
  %vm7728 = vcmask 408576
  %v7730 = vsel %vm7728, %v7657, 0
  %vm7732 = vcmask 1040384
  %v7734 = vsel %vm7732, %v7712, 0
  %v7737 = vsel %vm7732, %v7713, 0
  %v7740 = vsel %vm7732, %v7714, 0
  %v7743 = vsel %vm7732, %v7715, 0
  %7745 = vmatprep.subr.bf16.mxu0 0
  %7746 = vmatpush1.bf16.msra.mxu0 0
  %7747 = vmatprep.subr.bf16.mxu0 0
  %7748 = vmatpush1.bf16.msra.mxu0 0
  %7749 = vmatprep.subr.bf16.mxu0 0
  %7750 = vmatpush1.bf16.msra.mxu0 0
  %7751 = vmatprep.subr.bf16.mxu0 0
  %7752 = vmatpush1.bf16.msra.mxu0 0
  %7753 = vmatprep.subr.bf16.mxu0 %v7737
  %7754 = vmatpush1.bf16.msra.mxu0 %v7734
  %7755 = vmatprep.subr.bf16.mxu0 %v7709
  %7756 = vmatpush1.bf16.msra.mxu0 %v7708
  %7757 = vmatprep.subr.bf16.mxu0 %v7705
  %7758 = vmatpush1.bf16.msra.mxu0 %v7704
  %7759 = vmatprep.subr.bf16.mxu0 %v7701
  %7760 = vmatpush1.bf16.msra.mxu0 %v7700
  %7761 = vmatprep.subr.bf16.mxu0 0
  %7762 = vmatpush2.bf16.msra.mxu0 0
  %7763 = vmatprep.subr.bf16.mxu0 0
  %7764 = vmatpush2.bf16.msra.mxu0 0
  %7765 = vmatprep.subr.bf16.mxu0 0
  %7766 = vmatpush2.bf16.msra.mxu0 0
  %7767 = vmatprep.subr.bf16.mxu0 0
  %7768 = vmatpush2.bf16.msra.mxu0 0
  %7769 = vmatprep.subr.bf16.mxu0 0
  %7770 = vmatpush2.bf16.msra.mxu0 0
  %7771 = vmatprep.subr.bf16.mxu0 0
  %7772 = vmatpush2.bf16.msra.mxu0 0
  %7773 = vmatprep.subr.bf16.mxu0 0
  %7774 = vmatpush2.bf16.msra.mxu0 0
  %7775 = vmatprep.subr.bf16.mxu0 0
  %7776 = vmatpush2.bf16.msra.mxu0 0
  %7777 = vmatprep.mubr.bf16.mxu0 0
  %7778 = vmatmul.mubr.bf16.gmra.mxu0 %v7730
  %v7779 = vpop.f32.mrf.mxu0
  %v7780 = vadd.f32 0.0, %v7779
  %v7781 = vpop.f32.mrf.mxu0
  %v7782 = vadd.f32 0.0, %v7781
  %v7783 = vpop.f32.mrf.mxu0
  %v7784 = vpop.f32.mrf.mxu0
  %7785 = vdwg.mxu0
  %7786 = vmatprep.subr.bf16.mxu0 0
  %7787 = vmatpush1.bf16.msra.mxu0 0
  %7788 = vmatprep.subr.bf16.mxu0 0
  %7789 = vmatpush1.bf16.msra.mxu0 0
  %7790 = vmatprep.subr.bf16.mxu0 0
  %7791 = vmatpush1.bf16.msra.mxu0 0
  %7792 = vmatprep.subr.bf16.mxu0 0
  %7793 = vmatpush1.bf16.msra.mxu0 0
  %7794 = vmatprep.subr.bf16.mxu0 %v7743
  %7795 = vmatpush1.bf16.msra.mxu0 %v7740
  %7796 = vmatprep.subr.bf16.mxu0 %v7711
  %7797 = vmatpush1.bf16.msra.mxu0 %v7710
  %7798 = vmatprep.subr.bf16.mxu0 %v7707
  %7799 = vmatpush1.bf16.msra.mxu0 %v7706
  %7800 = vmatprep.subr.bf16.mxu0 %v7703
  %7801 = vmatpush1.bf16.msra.mxu0 %v7702
  %7802 = vmatprep.subr.bf16.mxu0 0
  %7803 = vmatpush2.bf16.msra.mxu0 0
  %7804 = vmatprep.subr.bf16.mxu0 0
  %7805 = vmatpush2.bf16.msra.mxu0 0
  %7806 = vmatprep.subr.bf16.mxu0 0
  %7807 = vmatpush2.bf16.msra.mxu0 0
  %7808 = vmatprep.subr.bf16.mxu0 0
  %7809 = vmatpush2.bf16.msra.mxu0 0
  %7810 = vmatprep.subr.bf16.mxu0 0
  %7811 = vmatpush2.bf16.msra.mxu0 0
  %7812 = vmatprep.subr.bf16.mxu0 0
  %7813 = vmatpush2.bf16.msra.mxu0 0
  %7814 = vmatprep.subr.bf16.mxu0 0
  %7815 = vmatpush2.bf16.msra.mxu0 0
  %7816 = vmatprep.subr.bf16.mxu0 0
  %7817 = vmatpush2.bf16.msra.mxu0 0
  %7818 = vmatprep.mubr.bf16.mxu0 0
  %7819 = vmatmul.mubr.bf16.gmra.mxu0 %v7730
  %v7820 = vpop.f32.mrf.mxu0
  %v7821 = vadd.f32 0.0, %v7820
  %v7822 = vpop.f32.mrf.mxu0
  %v7823 = vadd.f32 0.0, %v7822
  %v7824 = vpop.f32.mrf.mxu0
  %v7825 = vpop.f32.mrf.mxu0
  %7826 = vdwg.mxu0
  %v7841 = vunpack.c.l.b16 %v7610
  %v7842 = vunpack.c.h.b16 %v7610
  %v7843 = vunpack.c.l.b16 %v7611
  %v7844 = vunpack.c.h.b16 %v7611
  %v7845 = vunpack.c.l.b16 %v7612
  %v7846 = vunpack.c.h.b16 %v7612
  %v7847 = vunpack.c.l.b16 %v7613
  %v7848 = vunpack.c.h.b16 %v7613
  %v7849 = vunpack.c.l.b16 %v7614
  %v7850 = vunpack.c.h.b16 %v7614
  %v7851 = vunpack.c.l.b16 %v7615
  %v7852 = vunpack.c.h.b16 %v7615
  %v7853 = vunpack.c.l.b16 %v7616
  %v7854 = vunpack.c.h.b16 %v7616
  %v7855 = vunpack.c.l.b16 %v7617
  %v7856 = vunpack.c.h.b16 %v7617
  %v7857 = vunpack.c.l.b16 %v7618
  %v7858 = vunpack.c.h.b16 %v7618
  %v7859 = vunpack.c.l.b16 %v7619
  %v7860 = vunpack.c.h.b16 %v7619
  %v7861 = vunpack.c.l.b16 %v7620
  %v7862 = vunpack.c.h.b16 %v7620
  %v7863 = vunpack.c.l.b16 %v7621
  %v7864 = vunpack.c.h.b16 %v7621
  %v7865 = vunpack.c.l.b16 %v7622
  %v7866 = vunpack.c.h.b16 %v7622
  %v7867 = vunpack.c.l.b16 %v7623
  %v7868 = vunpack.c.h.b16 %v7623
  %v7869 = vpack.c.b16 %v7845, %v7841
  %v7870 = vpack.c.b16 %v7846, %v7842
  %v7871 = vpack.c.b16 %v7847, %v7843
  %v7872 = vpack.c.b16 %v7848, %v7844
  %v7873 = vpack.c.b16 %v7853, %v7849
  %v7874 = vpack.c.b16 %v7854, %v7850
  %v7875 = vpack.c.b16 %v7855, %v7851
  %v7876 = vpack.c.b16 %v7856, %v7852
  %v7877 = vpack.c.b16 %v7861, %v7857
  %v7878 = vpack.c.b16 %v7862, %v7858
  %v7879 = vpack.c.b16 %v7863, %v7859
  %v7880 = vpack.c.b16 %v7864, %v7860
  %v7881 = vpack.c.b16 %v7865, %v7865
  %v7882 = vpack.c.b16 %v7866, %v7866
  %v7883 = vpack.c.b16 %v7867, %v7867
  %v7884 = vpack.c.b16 %v7868, %v7868
  %v7898 = vsel %vm7728, %v7609, 0
  %v7901 = vsel %vm7732, %v7881, 0
  %v7904 = vsel %vm7732, %v7882, 0
  %v7907 = vsel %vm7732, %v7883, 0
  %v7910 = vsel %vm7732, %v7884, 0
  %7912 = vmatprep.subr.bf16.mxu0 0
  %7913 = vmatpush1.bf16.msra.mxu0 0
  %7914 = vmatprep.subr.bf16.mxu0 0
  %7915 = vmatpush1.bf16.msra.mxu0 0
  %7916 = vmatprep.subr.bf16.mxu0 0
  %7917 = vmatpush1.bf16.msra.mxu0 0
  %7918 = vmatprep.subr.bf16.mxu0 0
  %7919 = vmatpush1.bf16.msra.mxu0 0
  %7920 = vmatprep.subr.bf16.mxu0 %v7904
  %7921 = vmatpush1.bf16.msra.mxu0 %v7901
  %7922 = vmatprep.subr.bf16.mxu0 %v7878
  %7923 = vmatpush1.bf16.msra.mxu0 %v7877
  %7924 = vmatprep.subr.bf16.mxu0 %v7874
  %7925 = vmatpush1.bf16.msra.mxu0 %v7873
  %7926 = vmatprep.subr.bf16.mxu0 %v7870
  %7927 = vmatpush1.bf16.msra.mxu0 %v7869
  %7928 = vmatprep.subr.bf16.mxu0 0
  %7929 = vmatpush2.bf16.msra.mxu0 0
  %7930 = vmatprep.subr.bf16.mxu0 0
  %7931 = vmatpush2.bf16.msra.mxu0 0
  %7932 = vmatprep.subr.bf16.mxu0 0
  %7933 = vmatpush2.bf16.msra.mxu0 0
  %7934 = vmatprep.subr.bf16.mxu0 0
  %7935 = vmatpush2.bf16.msra.mxu0 0
  %7936 = vmatprep.subr.bf16.mxu0 0
  %7937 = vmatpush2.bf16.msra.mxu0 0
  %7938 = vmatprep.subr.bf16.mxu0 0
  %7939 = vmatpush2.bf16.msra.mxu0 0
  %7940 = vmatprep.subr.bf16.mxu0 0
  %7941 = vmatpush2.bf16.msra.mxu0 0
  %7942 = vmatprep.subr.bf16.mxu0 0
  %7943 = vmatpush2.bf16.msra.mxu0 0
  %7944 = vmatprep.mubr.bf16.mxu0 0
  %7945 = vmatmul.mubr.bf16.gmra.mxu0 %v7898
  %v7946 = vpop.f32.mrf.mxu0
  %v7947 = vadd.f32 %v7780, %v7946
  %v7948 = vpop.f32.mrf.mxu0
  %v7949 = vadd.f32 %v7782, %v7948
  %v7950 = vpop.f32.mrf.mxu0
  %v7951 = vpop.f32.mrf.mxu0
  %7952 = vdwg.mxu0
  %7953 = vmatprep.subr.bf16.mxu0 0
  %7954 = vmatpush1.bf16.msra.mxu0 0
  %7955 = vmatprep.subr.bf16.mxu0 0
  %7956 = vmatpush1.bf16.msra.mxu0 0
  %7957 = vmatprep.subr.bf16.mxu0 0
  %7958 = vmatpush1.bf16.msra.mxu0 0
  %7959 = vmatprep.subr.bf16.mxu0 0
  %7960 = vmatpush1.bf16.msra.mxu0 0
  %7961 = vmatprep.subr.bf16.mxu0 %v7910
  %7962 = vmatpush1.bf16.msra.mxu0 %v7907
  %7963 = vmatprep.subr.bf16.mxu0 %v7880
  %7964 = vmatpush1.bf16.msra.mxu0 %v7879
  %7965 = vmatprep.subr.bf16.mxu0 %v7876
  %7966 = vmatpush1.bf16.msra.mxu0 %v7875
  %7967 = vmatprep.subr.bf16.mxu0 %v7872
  %7968 = vmatpush1.bf16.msra.mxu0 %v7871
  %7969 = vmatprep.subr.bf16.mxu0 0
  %7970 = vmatpush2.bf16.msra.mxu0 0
  %7971 = vmatprep.subr.bf16.mxu0 0
  %7972 = vmatpush2.bf16.msra.mxu0 0
  %7973 = vmatprep.subr.bf16.mxu0 0
  %7974 = vmatpush2.bf16.msra.mxu0 0
  %7975 = vmatprep.subr.bf16.mxu0 0
  %7976 = vmatpush2.bf16.msra.mxu0 0
  %7977 = vmatprep.subr.bf16.mxu0 0
  %7978 = vmatpush2.bf16.msra.mxu0 0
  %7979 = vmatprep.subr.bf16.mxu0 0
  %7980 = vmatpush2.bf16.msra.mxu0 0
  %7981 = vmatprep.subr.bf16.mxu0 0
  %7982 = vmatpush2.bf16.msra.mxu0 0
  %7983 = vmatprep.subr.bf16.mxu0 0
  %7984 = vmatpush2.bf16.msra.mxu0 0
  %7985 = vmatprep.mubr.bf16.mxu0 0
  %7986 = vmatmul.mubr.bf16.gmra.mxu0 %v7898
  %v7987 = vpop.f32.mrf.mxu0
  %v7988 = vadd.f32 %v7821, %v7987
  %v7989 = vpop.f32.mrf.mxu0
  %v7990 = vadd.f32 %v7823, %v7989
  %v7991 = vpop.f32.mrf.mxu0
  %v7992 = vpop.f32.mrf.mxu0
  %7993 = vdwg.mxu0
  %v7994 = vmax.f32 %v7543, %v7544
  %7995 = vrot.lane.b32.xlu0 %v7605, 72
  %v7996 = vpop.permute.xlu0 %7995
  %v7998 = vadd.f32 %v7994, %v7996
  %v7999 = vmax.f32 %v7998, 0.0
  %v8000 = vpack.c.bf16 %v7999, %v7999
  %s8001 = scalar_lea.vmem %s5, 224
  %v8002 = vld [vmem:[%s8001] sm:$0xff]
  %v8003 = vld [vmem:[%s8001 + $0x8] sm:$0xff]
  %v8004 = vld [vmem:[%s8001 + $0x10] sm:$0xff]
  %v8005 = vld [vmem:[%s8001 + $0x18] sm:$0xff]
  %v8006 = vld [vmem:[%s8001 + $0x20] sm:$0xff]
  %v8007 = vld [vmem:[%s8001 + $0x28] sm:$0xff]
  %v8008 = vld [vmem:[%s8001 + $0x30] sm:$0xff]
  %v8009 = vld [vmem:[%s8001 + $0x38] sm:$0xff]
  %v8010 = vld [vmem:[%s8001 + $0x40] sm:$0xff]
  %v8011 = vld [vmem:[%s8001 + $0x48] sm:$0xff]
  %v8012 = vld [vmem:[%s8001 + $0x50] sm:$0xff]
  %v8013 = vld [vmem:[%s8001 + $0x58] sm:$0xff]
  %v8014 = vld [vmem:[%s8001 + $0x60] sm:$0x11]
  %v8015 = vld [vmem:[%s8001 + $0x68] sm:$0x11]
  %8017 = vrot.lane.b32.xlu0 %v8000, 56
  %v8018 = vpop.permute.xlu0 %8017
  %v8033 = vunpack.c.l.b16 %v8002
  %v8034 = vunpack.c.h.b16 %v8002
  %v8035 = vunpack.c.l.b16 %v8003
  %v8036 = vunpack.c.h.b16 %v8003
  %v8037 = vunpack.c.l.b16 %v8004
  %v8038 = vunpack.c.h.b16 %v8004
  %v8039 = vunpack.c.l.b16 %v8005
  %v8040 = vunpack.c.h.b16 %v8005
  %v8041 = vunpack.c.l.b16 %v8006
  %v8042 = vunpack.c.h.b16 %v8006
  %v8043 = vunpack.c.l.b16 %v8007
  %v8044 = vunpack.c.h.b16 %v8007
  %v8045 = vunpack.c.l.b16 %v8008
  %v8046 = vunpack.c.h.b16 %v8008
  %v8047 = vunpack.c.l.b16 %v8009
  %v8048 = vunpack.c.h.b16 %v8009
  %v8049 = vunpack.c.l.b16 %v8010
  %v8050 = vunpack.c.h.b16 %v8010
  %v8051 = vunpack.c.l.b16 %v8011
  %v8052 = vunpack.c.h.b16 %v8011
  %v8053 = vunpack.c.l.b16 %v8012
  %v8054 = vunpack.c.h.b16 %v8012
  %v8055 = vunpack.c.l.b16 %v8013
  %v8056 = vunpack.c.h.b16 %v8013
  %v8057 = vunpack.c.l.b16 %v8014
  %v8058 = vunpack.c.h.b16 %v8014
  %v8059 = vunpack.c.l.b16 %v8015
  %v8060 = vunpack.c.h.b16 %v8015
  %v8061 = vpack.c.b16 %v8037, %v8033
  %v8062 = vpack.c.b16 %v8038, %v8034
  %v8063 = vpack.c.b16 %v8039, %v8035
  %v8064 = vpack.c.b16 %v8040, %v8036
  %v8065 = vpack.c.b16 %v8045, %v8041
  %v8066 = vpack.c.b16 %v8046, %v8042
  %v8067 = vpack.c.b16 %v8047, %v8043
  %v8068 = vpack.c.b16 %v8048, %v8044
  %v8069 = vpack.c.b16 %v8053, %v8049
  %v8070 = vpack.c.b16 %v8054, %v8050
  %v8071 = vpack.c.b16 %v8055, %v8051
  %v8072 = vpack.c.b16 %v8056, %v8052
  %v8073 = vpack.c.b16 %v8057, %v8057
  %v8074 = vpack.c.b16 %v8058, %v8058
  %v8075 = vpack.c.b16 %v8059, %v8059
  %v8076 = vpack.c.b16 %v8060, %v8060
  %v8090 = vsel %vm7728, %v8018, 0
  %v8093 = vsel %vm7732, %v8073, 0
  %v8096 = vsel %vm7732, %v8074, 0
  %v8099 = vsel %vm7732, %v8075, 0
  %v8102 = vsel %vm7732, %v8076, 0
  %8104 = vmatprep.subr.bf16.mxu0 0
  %8105 = vmatpush1.bf16.msra.mxu0 0
  %8106 = vmatprep.subr.bf16.mxu0 0
  %8107 = vmatpush1.bf16.msra.mxu0 0
  %8108 = vmatprep.subr.bf16.mxu0 0
  %8109 = vmatpush1.bf16.msra.mxu0 0
  %8110 = vmatprep.subr.bf16.mxu0 0
  %8111 = vmatpush1.bf16.msra.mxu0 0
  %8112 = vmatprep.subr.bf16.mxu0 %v8096
  %8113 = vmatpush1.bf16.msra.mxu0 %v8093
  %8114 = vmatprep.subr.bf16.mxu0 %v8070
  %8115 = vmatpush1.bf16.msra.mxu0 %v8069
  %8116 = vmatprep.subr.bf16.mxu0 %v8066
  %8117 = vmatpush1.bf16.msra.mxu0 %v8065
  %8118 = vmatprep.subr.bf16.mxu0 %v8062
  %8119 = vmatpush1.bf16.msra.mxu0 %v8061
  %8120 = vmatprep.subr.bf16.mxu0 0
  %8121 = vmatpush2.bf16.msra.mxu0 0
  %8122 = vmatprep.subr.bf16.mxu0 0
  %8123 = vmatpush2.bf16.msra.mxu0 0
  %8124 = vmatprep.subr.bf16.mxu0 0
  %8125 = vmatpush2.bf16.msra.mxu0 0
  %8126 = vmatprep.subr.bf16.mxu0 0
  %8127 = vmatpush2.bf16.msra.mxu0 0
  %8128 = vmatprep.subr.bf16.mxu0 0
  %8129 = vmatpush2.bf16.msra.mxu0 0
  %8130 = vmatprep.subr.bf16.mxu0 0
  %8131 = vmatpush2.bf16.msra.mxu0 0
  %8132 = vmatprep.subr.bf16.mxu0 0
  %8133 = vmatpush2.bf16.msra.mxu0 0
  %8134 = vmatprep.subr.bf16.mxu0 0
  %8135 = vmatpush2.bf16.msra.mxu0 0
  %8136 = vmatprep.mubr.bf16.mxu0 0
  %8137 = vmatmul.mubr.bf16.gmra.mxu0 %v8090
  %v8138 = vpop.f32.mrf.mxu0
  %v8139 = vadd.f32 0.0, %v8138
  %v8140 = vpop.f32.mrf.mxu0
  %v8141 = vadd.f32 0.0, %v8140
  %v8142 = vpop.f32.mrf.mxu0
  %v8143 = vpop.f32.mrf.mxu0
  %8144 = vdwg.mxu0
  %8145 = vmatprep.subr.bf16.mxu0 0
  %8146 = vmatpush1.bf16.msra.mxu0 0
  %8147 = vmatprep.subr.bf16.mxu0 0
  %8148 = vmatpush1.bf16.msra.mxu0 0
  %8149 = vmatprep.subr.bf16.mxu0 0
  %8150 = vmatpush1.bf16.msra.mxu0 0
  %8151 = vmatprep.subr.bf16.mxu0 0
  %8152 = vmatpush1.bf16.msra.mxu0 0
  %8153 = vmatprep.subr.bf16.mxu0 %v8102
  %8154 = vmatpush1.bf16.msra.mxu0 %v8099
  %8155 = vmatprep.subr.bf16.mxu0 %v8072
  %8156 = vmatpush1.bf16.msra.mxu0 %v8071
  %8157 = vmatprep.subr.bf16.mxu0 %v8068
  %8158 = vmatpush1.bf16.msra.mxu0 %v8067
  %8159 = vmatprep.subr.bf16.mxu0 %v8064
  %8160 = vmatpush1.bf16.msra.mxu0 %v8063
  %8161 = vmatprep.subr.bf16.mxu0 0
  %8162 = vmatpush2.bf16.msra.mxu0 0
  %8163 = vmatprep.subr.bf16.mxu0 0
  %8164 = vmatpush2.bf16.msra.mxu0 0
  %8165 = vmatprep.subr.bf16.mxu0 0
  %8166 = vmatpush2.bf16.msra.mxu0 0
  %8167 = vmatprep.subr.bf16.mxu0 0
  %8168 = vmatpush2.bf16.msra.mxu0 0
  %8169 = vmatprep.subr.bf16.mxu0 0
  %8170 = vmatpush2.bf16.msra.mxu0 0
  %8171 = vmatprep.subr.bf16.mxu0 0
  %8172 = vmatpush2.bf16.msra.mxu0 0
  %8173 = vmatprep.subr.bf16.mxu0 0
  %8174 = vmatpush2.bf16.msra.mxu0 0
  %8175 = vmatprep.subr.bf16.mxu0 0
  %8176 = vmatpush2.bf16.msra.mxu0 0
  %8177 = vmatprep.mubr.bf16.mxu0 0
  %8178 = vmatmul.mubr.bf16.gmra.mxu0 %v8090
  %v8179 = vpop.f32.mrf.mxu0
  %v8180 = vadd.f32 0.0, %v8179
  %v8181 = vpop.f32.mrf.mxu0
  %v8182 = vadd.f32 0.0, %v8181
  %v8183 = vpop.f32.mrf.mxu0
  %v8184 = vpop.f32.mrf.mxu0
  %8185 = vdwg.mxu0
  %v8186 = vadd.f32 %v7947, %v8139
  %v8187 = vadd.f32 %v7949, %v8141
  %v8188 = vadd.f32 %v7988, %v8180
  %v8189 = vadd.f32 %v7990, %v8182
  %v8190 = vmax.f32 %v7591, %v7592
  %8191 = vrot.lane.b32.xlu0 %v7605, 44
  %v8192 = vpop.permute.xlu0 %8191
  %v8194 = vadd.f32 %v8190, %v8192
  %v8195 = vmax.f32 %v8194, 0.0
  %v8196 = vpack.c.bf16 %v8195, %v8195
  %s8197 = scalar_lea.vmem %s5, 336
  %v8198 = vld [vmem:[%s8197] sm:$0xff]
  %v8199 = vld [vmem:[%s8197 + $0x8] sm:$0xff]
  %v8200 = vld [vmem:[%s8197 + $0x10] sm:$0xff]
  %v8201 = vld [vmem:[%s8197 + $0x18] sm:$0xff]
  %v8202 = vld [vmem:[%s8197 + $0x20] sm:$0xff]
  %v8203 = vld [vmem:[%s8197 + $0x28] sm:$0xff]
  %v8204 = vld [vmem:[%s8197 + $0x30] sm:$0xff]
  %v8205 = vld [vmem:[%s8197 + $0x38] sm:$0xff]
  %v8206 = vld [vmem:[%s8197 + $0x40] sm:$0xff]
  %v8207 = vld [vmem:[%s8197 + $0x48] sm:$0xff]
  %v8208 = vld [vmem:[%s8197 + $0x50] sm:$0xff]
  %v8209 = vld [vmem:[%s8197 + $0x58] sm:$0xff]
  %v8210 = vld [vmem:[%s8197 + $0x60] sm:$0x11]
  %v8211 = vld [vmem:[%s8197 + $0x68] sm:$0x11]
  %8213 = vrot.lane.b32.xlu0 %v8196, 84
  %v8214 = vpop.permute.xlu0 %8213
  %v8229 = vunpack.c.l.b16 %v8198
  %v8230 = vunpack.c.h.b16 %v8198
  %v8231 = vunpack.c.l.b16 %v8199
  %v8232 = vunpack.c.h.b16 %v8199
  %v8233 = vunpack.c.l.b16 %v8200
  %v8234 = vunpack.c.h.b16 %v8200
  %v8235 = vunpack.c.l.b16 %v8201
  %v8236 = vunpack.c.h.b16 %v8201
  %v8237 = vunpack.c.l.b16 %v8202
  %v8238 = vunpack.c.h.b16 %v8202
  %v8239 = vunpack.c.l.b16 %v8203
  %v8240 = vunpack.c.h.b16 %v8203
  %v8241 = vunpack.c.l.b16 %v8204
  %v8242 = vunpack.c.h.b16 %v8204
  %v8243 = vunpack.c.l.b16 %v8205
  %v8244 = vunpack.c.h.b16 %v8205
  %v8245 = vunpack.c.l.b16 %v8206
  %v8246 = vunpack.c.h.b16 %v8206
  %v8247 = vunpack.c.l.b16 %v8207
  %v8248 = vunpack.c.h.b16 %v8207
  %v8249 = vunpack.c.l.b16 %v8208
  %v8250 = vunpack.c.h.b16 %v8208
  %v8251 = vunpack.c.l.b16 %v8209
  %v8252 = vunpack.c.h.b16 %v8209
  %v8253 = vunpack.c.l.b16 %v8210
  %v8254 = vunpack.c.h.b16 %v8210
  %v8255 = vunpack.c.l.b16 %v8211
  %v8256 = vunpack.c.h.b16 %v8211
  %v8257 = vpack.c.b16 %v8233, %v8229
  %v8258 = vpack.c.b16 %v8234, %v8230
  %v8259 = vpack.c.b16 %v8235, %v8231
  %v8260 = vpack.c.b16 %v8236, %v8232
  %v8261 = vpack.c.b16 %v8241, %v8237
  %v8262 = vpack.c.b16 %v8242, %v8238
  %v8263 = vpack.c.b16 %v8243, %v8239
  %v8264 = vpack.c.b16 %v8244, %v8240
  %v8265 = vpack.c.b16 %v8249, %v8245
  %v8266 = vpack.c.b16 %v8250, %v8246
  %v8267 = vpack.c.b16 %v8251, %v8247
  %v8268 = vpack.c.b16 %v8252, %v8248
  %v8269 = vpack.c.b16 %v8253, %v8253
  %v8270 = vpack.c.b16 %v8254, %v8254
  %v8271 = vpack.c.b16 %v8255, %v8255
  %v8272 = vpack.c.b16 %v8256, %v8256
  %v8286 = vsel %vm7728, %v8214, 0
  %v8289 = vsel %vm7732, %v8269, 0
  %v8292 = vsel %vm7732, %v8270, 0
  %v8295 = vsel %vm7732, %v8271, 0
  %v8298 = vsel %vm7732, %v8272, 0
  %8300 = vmatprep.subr.bf16.mxu0 0
  %8301 = vmatpush1.bf16.msra.mxu0 0
  %8302 = vmatprep.subr.bf16.mxu0 0
  %8303 = vmatpush1.bf16.msra.mxu0 0
  %8304 = vmatprep.subr.bf16.mxu0 0
  %8305 = vmatpush1.bf16.msra.mxu0 0
  %8306 = vmatprep.subr.bf16.mxu0 0
  %8307 = vmatpush1.bf16.msra.mxu0 0
  %8308 = vmatprep.subr.bf16.mxu0 %v8292
  %8309 = vmatpush1.bf16.msra.mxu0 %v8289
  %8310 = vmatprep.subr.bf16.mxu0 %v8266
  %8311 = vmatpush1.bf16.msra.mxu0 %v8265
  %8312 = vmatprep.subr.bf16.mxu0 %v8262
  %8313 = vmatpush1.bf16.msra.mxu0 %v8261
  %8314 = vmatprep.subr.bf16.mxu0 %v8258
  %8315 = vmatpush1.bf16.msra.mxu0 %v8257
  %8316 = vmatprep.subr.bf16.mxu0 0
  %8317 = vmatpush2.bf16.msra.mxu0 0
  %8318 = vmatprep.subr.bf16.mxu0 0
  %8319 = vmatpush2.bf16.msra.mxu0 0
  %8320 = vmatprep.subr.bf16.mxu0 0
  %8321 = vmatpush2.bf16.msra.mxu0 0
  %8322 = vmatprep.subr.bf16.mxu0 0
  %8323 = vmatpush2.bf16.msra.mxu0 0
  %8324 = vmatprep.subr.bf16.mxu0 0
  %8325 = vmatpush2.bf16.msra.mxu0 0
  %8326 = vmatprep.subr.bf16.mxu0 0
  %8327 = vmatpush2.bf16.msra.mxu0 0
  %8328 = vmatprep.subr.bf16.mxu0 0
  %8329 = vmatpush2.bf16.msra.mxu0 0
  %8330 = vmatprep.subr.bf16.mxu0 0
  %8331 = vmatpush2.bf16.msra.mxu0 0
  %8332 = vmatprep.mubr.bf16.mxu0 0
  %8333 = vmatmul.mubr.bf16.gmra.mxu0 %v8286
  %v8334 = vpop.f32.mrf.mxu0
  %v8335 = vadd.f32 0.0, %v8334
  %v8336 = vpop.f32.mrf.mxu0
  %v8337 = vadd.f32 0.0, %v8336
  %v8338 = vpop.f32.mrf.mxu0
  %v8339 = vpop.f32.mrf.mxu0
  %8340 = vdwg.mxu0
  %8341 = vmatprep.subr.bf16.mxu0 0
  %8342 = vmatpush1.bf16.msra.mxu0 0
  %8343 = vmatprep.subr.bf16.mxu0 0
  %8344 = vmatpush1.bf16.msra.mxu0 0
  %8345 = vmatprep.subr.bf16.mxu0 0
  %8346 = vmatpush1.bf16.msra.mxu0 0
  %8347 = vmatprep.subr.bf16.mxu0 0
  %8348 = vmatpush1.bf16.msra.mxu0 0
  %8349 = vmatprep.subr.bf16.mxu0 %v8298
  %8350 = vmatpush1.bf16.msra.mxu0 %v8295
  %8351 = vmatprep.subr.bf16.mxu0 %v8268
  %8352 = vmatpush1.bf16.msra.mxu0 %v8267
  %8353 = vmatprep.subr.bf16.mxu0 %v8264
  %8354 = vmatpush1.bf16.msra.mxu0 %v8263
  %8355 = vmatprep.subr.bf16.mxu0 %v8260
  %8356 = vmatpush1.bf16.msra.mxu0 %v8259
  %8357 = vmatprep.subr.bf16.mxu0 0
  %8358 = vmatpush2.bf16.msra.mxu0 0
  %8359 = vmatprep.subr.bf16.mxu0 0
  %8360 = vmatpush2.bf16.msra.mxu0 0
  %8361 = vmatprep.subr.bf16.mxu0 0
  %8362 = vmatpush2.bf16.msra.mxu0 0
  %8363 = vmatprep.subr.bf16.mxu0 0
  %8364 = vmatpush2.bf16.msra.mxu0 0
  %8365 = vmatprep.subr.bf16.mxu0 0
  %8366 = vmatpush2.bf16.msra.mxu0 0
  %8367 = vmatprep.subr.bf16.mxu0 0
  %8368 = vmatpush2.bf16.msra.mxu0 0
  %8369 = vmatprep.subr.bf16.mxu0 0
  %8370 = vmatpush2.bf16.msra.mxu0 0
  %8371 = vmatprep.subr.bf16.mxu0 0
  %8372 = vmatpush2.bf16.msra.mxu0 0
  %8373 = vmatprep.mubr.bf16.mxu0 0
  %8374 = vmatmul.mubr.bf16.gmra.mxu0 %v8286
  %v8375 = vpop.f32.mrf.mxu0
  %v8376 = vadd.f32 0.0, %v8375
  %v8377 = vpop.f32.mrf.mxu0
  %v8378 = vadd.f32 0.0, %v8377
  %v8379 = vpop.f32.mrf.mxu0
  %v8380 = vpop.f32.mrf.mxu0
  %8381 = vdwg.mxu0
  %v8382 = vadd.f32 %v8186, %v8335
  %v8383 = vadd.f32 %v8187, %v8337
  %v8384 = vadd.f32 %v8188, %v8376
  %v8385 = vadd.f32 %v8189, %v8378
  %v8386 = vmax.f32 %v7448, %v7449
  %v8387 = vadd.f32 %v8386, %v7605
  %v8388 = vmax.f32 %v8387, 0.0
  %v8389 = vpack.c.bf16 %v8388, %v8388
  %s8390 = scalar_lea.vmem %s5, 448
  %v8391 = vld [vmem:[%s8390] sm:$0xff]
  %v8392 = vld [vmem:[%s8390 + $0x8] sm:$0xff]
  %v8393 = vld [vmem:[%s8390 + $0x10] sm:$0xff]
  %v8394 = vld [vmem:[%s8390 + $0x18] sm:$0xff]
  %v8395 = vld [vmem:[%s8390 + $0x20] sm:$0xff]
  %v8396 = vld [vmem:[%s8390 + $0x28] sm:$0xff]
  %v8397 = vld [vmem:[%s8390 + $0x30] sm:$0xff]
  %v8398 = vld [vmem:[%s8390 + $0x38] sm:$0xff]
  %v8399 = vld [vmem:[%s8390 + $0x40] sm:$0xff]
  %v8400 = vld [vmem:[%s8390 + $0x48] sm:$0xff]
  %v8401 = vld [vmem:[%s8390 + $0x50] sm:$0xff]
  %v8402 = vld [vmem:[%s8390 + $0x58] sm:$0xff]
  %v8403 = vld [vmem:[%s8390 + $0x60] sm:$0x11]
  %v8404 = vld [vmem:[%s8390 + $0x68] sm:$0x11]
  %v8419 = vunpack.c.l.b16 %v8391
  %v8420 = vunpack.c.h.b16 %v8391
  %v8421 = vunpack.c.l.b16 %v8392
  %v8422 = vunpack.c.h.b16 %v8392
  %v8423 = vunpack.c.l.b16 %v8393
  %v8424 = vunpack.c.h.b16 %v8393
  %v8425 = vunpack.c.l.b16 %v8394
  %v8426 = vunpack.c.h.b16 %v8394
  %v8427 = vunpack.c.l.b16 %v8395
  %v8428 = vunpack.c.h.b16 %v8395
  %v8429 = vunpack.c.l.b16 %v8396
  %v8430 = vunpack.c.h.b16 %v8396
  %v8431 = vunpack.c.l.b16 %v8397
  %v8432 = vunpack.c.h.b16 %v8397
  %v8433 = vunpack.c.l.b16 %v8398
  %v8434 = vunpack.c.h.b16 %v8398
  %v8435 = vunpack.c.l.b16 %v8399
  %v8436 = vunpack.c.h.b16 %v8399
  %v8437 = vunpack.c.l.b16 %v8400
  %v8438 = vunpack.c.h.b16 %v8400
  %v8439 = vunpack.c.l.b16 %v8401
  %v8440 = vunpack.c.h.b16 %v8401
  %v8441 = vunpack.c.l.b16 %v8402
  %v8442 = vunpack.c.h.b16 %v8402
  %v8443 = vunpack.c.l.b16 %v8403
  %v8444 = vunpack.c.h.b16 %v8403
  %v8445 = vunpack.c.l.b16 %v8404
  %v8446 = vunpack.c.h.b16 %v8404
  %v8447 = vpack.c.b16 %v8423, %v8419
  %v8448 = vpack.c.b16 %v8424, %v8420
  %v8449 = vpack.c.b16 %v8425, %v8421
  %v8450 = vpack.c.b16 %v8426, %v8422
  %v8451 = vpack.c.b16 %v8431, %v8427
  %v8452 = vpack.c.b16 %v8432, %v8428
  %v8453 = vpack.c.b16 %v8433, %v8429
  %v8454 = vpack.c.b16 %v8434, %v8430
  %v8455 = vpack.c.b16 %v8439, %v8435
  %v8456 = vpack.c.b16 %v8440, %v8436
  %v8457 = vpack.c.b16 %v8441, %v8437
  %v8458 = vpack.c.b16 %v8442, %v8438
  %v8459 = vpack.c.b16 %v8443, %v8443
  %v8460 = vpack.c.b16 %v8444, %v8444
  %v8461 = vpack.c.b16 %v8445, %v8445
  %v8462 = vpack.c.b16 %v8446, %v8446
  %v8476 = vsel %vm7728, %v8389, 0
  %v8479 = vsel %vm7732, %v8459, 0
  %v8482 = vsel %vm7732, %v8460, 0
  %v8485 = vsel %vm7732, %v8461, 0
  %v8488 = vsel %vm7732, %v8462, 0
  %8490 = vmatprep.subr.bf16.mxu0 0
  %8491 = vmatpush1.bf16.msra.mxu0 0
  %8492 = vmatprep.subr.bf16.mxu0 0
  %8493 = vmatpush1.bf16.msra.mxu0 0
  %8494 = vmatprep.subr.bf16.mxu0 0
  %8495 = vmatpush1.bf16.msra.mxu0 0
  %8496 = vmatprep.subr.bf16.mxu0 0
  %8497 = vmatpush1.bf16.msra.mxu0 0
  %8498 = vmatprep.subr.bf16.mxu0 %v8482
  %8499 = vmatpush1.bf16.msra.mxu0 %v8479
  %8500 = vmatprep.subr.bf16.mxu0 %v8456
  %8501 = vmatpush1.bf16.msra.mxu0 %v8455
  %8502 = vmatprep.subr.bf16.mxu0 %v8452
  %8503 = vmatpush1.bf16.msra.mxu0 %v8451
  %8504 = vmatprep.subr.bf16.mxu0 %v8448
  %8505 = vmatpush1.bf16.msra.mxu0 %v8447
  %8506 = vmatprep.subr.bf16.mxu0 0
  %8507 = vmatpush2.bf16.msra.mxu0 0
  %8508 = vmatprep.subr.bf16.mxu0 0
  %8509 = vmatpush2.bf16.msra.mxu0 0
  %8510 = vmatprep.subr.bf16.mxu0 0
  %8511 = vmatpush2.bf16.msra.mxu0 0
  %8512 = vmatprep.subr.bf16.mxu0 0
  %8513 = vmatpush2.bf16.msra.mxu0 0
  %8514 = vmatprep.subr.bf16.mxu0 0
  %8515 = vmatpush2.bf16.msra.mxu0 0
  %8516 = vmatprep.subr.bf16.mxu0 0
  %8517 = vmatpush2.bf16.msra.mxu0 0
  %8518 = vmatprep.subr.bf16.mxu0 0
  %8519 = vmatpush2.bf16.msra.mxu0 0
  %8520 = vmatprep.subr.bf16.mxu0 0
  %8521 = vmatpush2.bf16.msra.mxu0 0
  %8522 = vmatprep.mubr.bf16.mxu0 0
  %8523 = vmatmul.mubr.bf16.gmra.mxu0 %v8476
  %v8524 = vpop.f32.mrf.mxu0
  %v8525 = vadd.f32 0.0, %v8524
  %v8526 = vpop.f32.mrf.mxu0
  %v8527 = vadd.f32 0.0, %v8526
  %v8528 = vpop.f32.mrf.mxu0
  %v8529 = vpop.f32.mrf.mxu0
  %8530 = vdwg.mxu0
  %8531 = vmatprep.subr.bf16.mxu0 0
  %8532 = vmatpush1.bf16.msra.mxu0 0
  %8533 = vmatprep.subr.bf16.mxu0 0
  %8534 = vmatpush1.bf16.msra.mxu0 0
  %8535 = vmatprep.subr.bf16.mxu0 0
  %8536 = vmatpush1.bf16.msra.mxu0 0
  %8537 = vmatprep.subr.bf16.mxu0 0
  %8538 = vmatpush1.bf16.msra.mxu0 0
  %8539 = vmatprep.subr.bf16.mxu0 %v8488
  %8540 = vmatpush1.bf16.msra.mxu0 %v8485
  %8541 = vmatprep.subr.bf16.mxu0 %v8458
  %8542 = vmatpush1.bf16.msra.mxu0 %v8457
  %8543 = vmatprep.subr.bf16.mxu0 %v8454
  %8544 = vmatpush1.bf16.msra.mxu0 %v8453
  %8545 = vmatprep.subr.bf16.mxu0 %v8450
  %8546 = vmatpush1.bf16.msra.mxu0 %v8449
  %8547 = vmatprep.subr.bf16.mxu0 0
  %8548 = vmatpush2.bf16.msra.mxu0 0
  %8549 = vmatprep.subr.bf16.mxu0 0
  %8550 = vmatpush2.bf16.msra.mxu0 0
  %8551 = vmatprep.subr.bf16.mxu0 0
  %8552 = vmatpush2.bf16.msra.mxu0 0
  %8553 = vmatprep.subr.bf16.mxu0 0
  %8554 = vmatpush2.bf16.msra.mxu0 0
  %8555 = vmatprep.subr.bf16.mxu0 0
  %8556 = vmatpush2.bf16.msra.mxu0 0
  %8557 = vmatprep.subr.bf16.mxu0 0
  %8558 = vmatpush2.bf16.msra.mxu0 0
  %8559 = vmatprep.subr.bf16.mxu0 0
  %8560 = vmatpush2.bf16.msra.mxu0 0
  %8561 = vmatprep.subr.bf16.mxu0 0
  %8562 = vmatpush2.bf16.msra.mxu0 0
  %8563 = vmatprep.mubr.bf16.mxu0 0
  %8564 = vmatmul.mubr.bf16.gmra.mxu0 %v8476
  %v8565 = vpop.f32.mrf.mxu0
  %v8566 = vadd.f32 0.0, %v8565
  %v8567 = vpop.f32.mrf.mxu0
  %v8568 = vadd.f32 0.0, %v8567
  %v8569 = vpop.f32.mrf.mxu0
  %v8570 = vpop.f32.mrf.mxu0
  %8571 = vdwg.mxu0
  %v8572 = vadd.f32 %v8382, %v8525
  %v8573 = vadd.f32 %v8383, %v8527
  %v8574 = vadd.f32 %v8384, %v8566
  %v8575 = vadd.f32 %v8385, %v8568
  %v8576 = vmax.f32 %v7490, %v7492
  %v8577 = vmax.f32 %v7491, %v7493
  %v8578 = vadd.f32 %v8576, %v7627
  %v8579 = vadd.f32 %v8577, %v7627
  %v8580 = vmax.f32 %v8578, 0.0
  %v8581 = vmax.f32 %v8579, 0.0
  %v8582 = vpack.c.bf16 %v8580, %v8580
  %v8583 = vpack.c.bf16 %v8581, %v8581
  %s8584 = scalar_lea.vmem %s5, 560
  %v8585 = vld [vmem:[%s8584] sm:$0xff]
  %v8586 = vld [vmem:[%s8584 + $0x8] sm:$0xff]
  %v8587 = vld [vmem:[%s8584 + $0x10] sm:$0xff]
  %v8588 = vld [vmem:[%s8584 + $0x18] sm:$0xff]
  %v8589 = vld [vmem:[%s8584 + $0x20] sm:$0xff]
  %v8590 = vld [vmem:[%s8584 + $0x28] sm:$0xff]
  %v8591 = vld [vmem:[%s8584 + $0x30] sm:$0xff]
  %v8592 = vld [vmem:[%s8584 + $0x38] sm:$0xff]
  %v8593 = vld [vmem:[%s8584 + $0x40] sm:$0xff]
  %v8594 = vld [vmem:[%s8584 + $0x48] sm:$0xff]
  %v8595 = vld [vmem:[%s8584 + $0x50] sm:$0xff]
  %v8596 = vld [vmem:[%s8584 + $0x58] sm:$0xff]
  %v8597 = vld [vmem:[%s8584 + $0x60] sm:$0x11]
  %v8598 = vld [vmem:[%s8584 + $0x68] sm:$0x11]
  %8601 = vrot.lane.b32.xlu0 %v8582, 28
  %v8602 = vpop.permute.xlu0 %8601
  %8603 = vrot.lane.b32.xlu0 %v8583, 28
  %v8604 = vpop.permute.xlu0 %8603
  %v8605 = vsel %vm7656, %v8602, %v8604
  %v8620 = vunpack.c.l.b16 %v8585
  %v8621 = vunpack.c.h.b16 %v8585
  %v8622 = vunpack.c.l.b16 %v8586
  %v8623 = vunpack.c.h.b16 %v8586
  %v8624 = vunpack.c.l.b16 %v8587
  %v8625 = vunpack.c.h.b16 %v8587
  %v8626 = vunpack.c.l.b16 %v8588
  %v8627 = vunpack.c.h.b16 %v8588
  %v8628 = vunpack.c.l.b16 %v8589
  %v8629 = vunpack.c.h.b16 %v8589
  %v8630 = vunpack.c.l.b16 %v8590
  %v8631 = vunpack.c.h.b16 %v8590
  %v8632 = vunpack.c.l.b16 %v8591
  %v8633 = vunpack.c.h.b16 %v8591
  %v8634 = vunpack.c.l.b16 %v8592
  %v8635 = vunpack.c.h.b16 %v8592
  %v8636 = vunpack.c.l.b16 %v8593
  %v8637 = vunpack.c.h.b16 %v8593
  %v8638 = vunpack.c.l.b16 %v8594
  %v8639 = vunpack.c.h.b16 %v8594
  %v8640 = vunpack.c.l.b16 %v8595
  %v8641 = vunpack.c.h.b16 %v8595
  %v8642 = vunpack.c.l.b16 %v8596
  %v8643 = vunpack.c.h.b16 %v8596
  %v8644 = vunpack.c.l.b16 %v8597
  %v8645 = vunpack.c.h.b16 %v8597
  %v8646 = vunpack.c.l.b16 %v8598
  %v8647 = vunpack.c.h.b16 %v8598
  %v8648 = vpack.c.b16 %v8624, %v8620
  %v8649 = vpack.c.b16 %v8625, %v8621
  %v8650 = vpack.c.b16 %v8626, %v8622
  %v8651 = vpack.c.b16 %v8627, %v8623
  %v8652 = vpack.c.b16 %v8632, %v8628
  %v8653 = vpack.c.b16 %v8633, %v8629
  %v8654 = vpack.c.b16 %v8634, %v8630
  %v8655 = vpack.c.b16 %v8635, %v8631
  %v8656 = vpack.c.b16 %v8640, %v8636
  %v8657 = vpack.c.b16 %v8641, %v8637
  %v8658 = vpack.c.b16 %v8642, %v8638
  %v8659 = vpack.c.b16 %v8643, %v8639
  %v8660 = vpack.c.b16 %v8644, %v8644
  %v8661 = vpack.c.b16 %v8645, %v8645
  %v8662 = vpack.c.b16 %v8646, %v8646
  %v8663 = vpack.c.b16 %v8647, %v8647
  %v8677 = vsel %vm7728, %v8605, 0
  %v8680 = vsel %vm7732, %v8660, 0
  %v8683 = vsel %vm7732, %v8661, 0
  %v8686 = vsel %vm7732, %v8662, 0
  %v8689 = vsel %vm7732, %v8663, 0
  %8691 = vmatprep.subr.bf16.mxu0 0
  %8692 = vmatpush1.bf16.msra.mxu0 0
  %8693 = vmatprep.subr.bf16.mxu0 0
  %8694 = vmatpush1.bf16.msra.mxu0 0
  %8695 = vmatprep.subr.bf16.mxu0 0
  %8696 = vmatpush1.bf16.msra.mxu0 0
  %8697 = vmatprep.subr.bf16.mxu0 0
  %8698 = vmatpush1.bf16.msra.mxu0 0
  %8699 = vmatprep.subr.bf16.mxu0 %v8683
  %8700 = vmatpush1.bf16.msra.mxu0 %v8680
  %8701 = vmatprep.subr.bf16.mxu0 %v8657
  %8702 = vmatpush1.bf16.msra.mxu0 %v8656
  %8703 = vmatprep.subr.bf16.mxu0 %v8653
  %8704 = vmatpush1.bf16.msra.mxu0 %v8652
  %8705 = vmatprep.subr.bf16.mxu0 %v8649
  %8706 = vmatpush1.bf16.msra.mxu0 %v8648
  %8707 = vmatprep.subr.bf16.mxu0 0
  %8708 = vmatpush2.bf16.msra.mxu0 0
  %8709 = vmatprep.subr.bf16.mxu0 0
  %8710 = vmatpush2.bf16.msra.mxu0 0
  %8711 = vmatprep.subr.bf16.mxu0 0
  %8712 = vmatpush2.bf16.msra.mxu0 0
  %8713 = vmatprep.subr.bf16.mxu0 0
  %8714 = vmatpush2.bf16.msra.mxu0 0
  %8715 = vmatprep.subr.bf16.mxu0 0
  %8716 = vmatpush2.bf16.msra.mxu0 0
  %8717 = vmatprep.subr.bf16.mxu0 0
  %8718 = vmatpush2.bf16.msra.mxu0 0
  %8719 = vmatprep.subr.bf16.mxu0 0
  %8720 = vmatpush2.bf16.msra.mxu0 0
  %8721 = vmatprep.subr.bf16.mxu0 0
  %8722 = vmatpush2.bf16.msra.mxu0 0
  %8723 = vmatprep.mubr.bf16.mxu0 0
  %8724 = vmatmul.mubr.bf16.gmra.mxu0 %v8677
  %v8725 = vpop.f32.mrf.mxu0
  %v8726 = vadd.f32 0.0, %v8725
  %v8727 = vpop.f32.mrf.mxu0
  %v8728 = vadd.f32 0.0, %v8727
  %v8729 = vpop.f32.mrf.mxu0
  %v8730 = vpop.f32.mrf.mxu0
  %8731 = vdwg.mxu0
  %8732 = vmatprep.subr.bf16.mxu0 0
  %8733 = vmatpush1.bf16.msra.mxu0 0
  %8734 = vmatprep.subr.bf16.mxu0 0
  %8735 = vmatpush1.bf16.msra.mxu0 0
  %8736 = vmatprep.subr.bf16.mxu0 0
  %8737 = vmatpush1.bf16.msra.mxu0 0
  %8738 = vmatprep.subr.bf16.mxu0 0
  %8739 = vmatpush1.bf16.msra.mxu0 0
  %8740 = vmatprep.subr.bf16.mxu0 %v8689
  %8741 = vmatpush1.bf16.msra.mxu0 %v8686
  %8742 = vmatprep.subr.bf16.mxu0 %v8659
  %8743 = vmatpush1.bf16.msra.mxu0 %v8658
  %8744 = vmatprep.subr.bf16.mxu0 %v8655
  %8745 = vmatpush1.bf16.msra.mxu0 %v8654
  %8746 = vmatprep.subr.bf16.mxu0 %v8651
  %8747 = vmatpush1.bf16.msra.mxu0 %v8650
  %8748 = vmatprep.subr.bf16.mxu0 0
  %8749 = vmatpush2.bf16.msra.mxu0 0
  %8750 = vmatprep.subr.bf16.mxu0 0
  %8751 = vmatpush2.bf16.msra.mxu0 0
  %8752 = vmatprep.subr.bf16.mxu0 0
  %8753 = vmatpush2.bf16.msra.mxu0 0
  %8754 = vmatprep.subr.bf16.mxu0 0
  %8755 = vmatpush2.bf16.msra.mxu0 0
  %8756 = vmatprep.subr.bf16.mxu0 0
  %8757 = vmatpush2.bf16.msra.mxu0 0
  %8758 = vmatprep.subr.bf16.mxu0 0
  %8759 = vmatpush2.bf16.msra.mxu0 0
  %8760 = vmatprep.subr.bf16.mxu0 0
  %8761 = vmatpush2.bf16.msra.mxu0 0
  %8762 = vmatprep.subr.bf16.mxu0 0
  %8763 = vmatpush2.bf16.msra.mxu0 0
  %8764 = vmatprep.mubr.bf16.mxu0 0
  %8765 = vmatmul.mubr.bf16.gmra.mxu0 %v8677
  %v8766 = vpop.f32.mrf.mxu0
  %v8767 = vadd.f32 0.0, %v8766
  %v8768 = vpop.f32.mrf.mxu0
  %v8769 = vadd.f32 0.0, %v8768
  %v8770 = vpop.f32.mrf.mxu0
  %v8771 = vpop.f32.mrf.mxu0
  %8772 = vdwg.mxu0
  %v8773 = vadd.f32 %v8572, %v8726
  %v8774 = vadd.f32 %v8573, %v8728
  %v8775 = vadd.f32 %v8574, %v8767
  %v8776 = vadd.f32 %v8575, %v8769
  %v8777 = vmax.f32 %v7545, %v7546
  %v8778 = vadd.f32 %v8777, %v7996
  %v8779 = vmax.f32 %v8778, 0.0
  %v8780 = vpack.c.bf16 %v8779, %v8779
  %s8781 = scalar_lea.vmem %s5, 672
  %v8782 = vld [vmem:[%s8781] sm:$0xff]
  %v8783 = vld [vmem:[%s8781 + $0x8] sm:$0xff]
  %v8784 = vld [vmem:[%s8781 + $0x10] sm:$0xff]
  %v8785 = vld [vmem:[%s8781 + $0x18] sm:$0xff]
  %v8786 = vld [vmem:[%s8781 + $0x20] sm:$0xff]
  %v8787 = vld [vmem:[%s8781 + $0x28] sm:$0xff]
  %v8788 = vld [vmem:[%s8781 + $0x30] sm:$0xff]
  %v8789 = vld [vmem:[%s8781 + $0x38] sm:$0xff]
  %v8790 = vld [vmem:[%s8781 + $0x40] sm:$0xff]
  %v8791 = vld [vmem:[%s8781 + $0x48] sm:$0xff]
  %v8792 = vld [vmem:[%s8781 + $0x50] sm:$0xff]
  %v8793 = vld [vmem:[%s8781 + $0x58] sm:$0xff]
  %v8794 = vld [vmem:[%s8781 + $0x60] sm:$0x11]
  %v8795 = vld [vmem:[%s8781 + $0x68] sm:$0x11]
  %8797 = vrot.lane.b32.xlu0 %v8780, 56
  %v8798 = vpop.permute.xlu0 %8797
  %v8813 = vunpack.c.l.b16 %v8782
  %v8814 = vunpack.c.h.b16 %v8782
  %v8815 = vunpack.c.l.b16 %v8783
  %v8816 = vunpack.c.h.b16 %v8783
  %v8817 = vunpack.c.l.b16 %v8784
  %v8818 = vunpack.c.h.b16 %v8784
  %v8819 = vunpack.c.l.b16 %v8785
  %v8820 = vunpack.c.h.b16 %v8785
  %v8821 = vunpack.c.l.b16 %v8786
  %v8822 = vunpack.c.h.b16 %v8786
  %v8823 = vunpack.c.l.b16 %v8787
  %v8824 = vunpack.c.h.b16 %v8787
  %v8825 = vunpack.c.l.b16 %v8788
  %v8826 = vunpack.c.h.b16 %v8788
  %v8827 = vunpack.c.l.b16 %v8789
  %v8828 = vunpack.c.h.b16 %v8789
  %v8829 = vunpack.c.l.b16 %v8790
  %v8830 = vunpack.c.h.b16 %v8790
  %v8831 = vunpack.c.l.b16 %v8791
  %v8832 = vunpack.c.h.b16 %v8791
  %v8833 = vunpack.c.l.b16 %v8792
  %v8834 = vunpack.c.h.b16 %v8792
  %v8835 = vunpack.c.l.b16 %v8793
  %v8836 = vunpack.c.h.b16 %v8793
  %v8837 = vunpack.c.l.b16 %v8794
  %v8838 = vunpack.c.h.b16 %v8794
  %v8839 = vunpack.c.l.b16 %v8795
  %v8840 = vunpack.c.h.b16 %v8795
  %v8841 = vpack.c.b16 %v8817, %v8813
  %v8842 = vpack.c.b16 %v8818, %v8814
  %v8843 = vpack.c.b16 %v8819, %v8815
  %v8844 = vpack.c.b16 %v8820, %v8816
  %v8845 = vpack.c.b16 %v8825, %v8821
  %v8846 = vpack.c.b16 %v8826, %v8822
  %v8847 = vpack.c.b16 %v8827, %v8823
  %v8848 = vpack.c.b16 %v8828, %v8824
  %v8849 = vpack.c.b16 %v8833, %v8829
  %v8850 = vpack.c.b16 %v8834, %v8830
  %v8851 = vpack.c.b16 %v8835, %v8831
  %v8852 = vpack.c.b16 %v8836, %v8832
  %v8853 = vpack.c.b16 %v8837, %v8837
  %v8854 = vpack.c.b16 %v8838, %v8838
  %v8855 = vpack.c.b16 %v8839, %v8839
  %v8856 = vpack.c.b16 %v8840, %v8840
  %v8870 = vsel %vm7728, %v8798, 0
  %v8873 = vsel %vm7732, %v8853, 0
  %v8876 = vsel %vm7732, %v8854, 0
  %v8879 = vsel %vm7732, %v8855, 0
  %v8882 = vsel %vm7732, %v8856, 0
  %8884 = vmatprep.subr.bf16.mxu0 0
  %8885 = vmatpush1.bf16.msra.mxu0 0
  %8886 = vmatprep.subr.bf16.mxu0 0
  %8887 = vmatpush1.bf16.msra.mxu0 0
  %8888 = vmatprep.subr.bf16.mxu0 0
  %8889 = vmatpush1.bf16.msra.mxu0 0
  %8890 = vmatprep.subr.bf16.mxu0 0
  %8891 = vmatpush1.bf16.msra.mxu0 0
  %8892 = vmatprep.subr.bf16.mxu0 %v8876
  %8893 = vmatpush1.bf16.msra.mxu0 %v8873
  %8894 = vmatprep.subr.bf16.mxu0 %v8850
  %8895 = vmatpush1.bf16.msra.mxu0 %v8849
  %8896 = vmatprep.subr.bf16.mxu0 %v8846
  %8897 = vmatpush1.bf16.msra.mxu0 %v8845
  %8898 = vmatprep.subr.bf16.mxu0 %v8842
  %8899 = vmatpush1.bf16.msra.mxu0 %v8841
  %8900 = vmatprep.subr.bf16.mxu0 0
  %8901 = vmatpush2.bf16.msra.mxu0 0
  %8902 = vmatprep.subr.bf16.mxu0 0
  %8903 = vmatpush2.bf16.msra.mxu0 0
  %8904 = vmatprep.subr.bf16.mxu0 0
  %8905 = vmatpush2.bf16.msra.mxu0 0
  %8906 = vmatprep.subr.bf16.mxu0 0
  %8907 = vmatpush2.bf16.msra.mxu0 0
  %8908 = vmatprep.subr.bf16.mxu0 0
  %8909 = vmatpush2.bf16.msra.mxu0 0
  %8910 = vmatprep.subr.bf16.mxu0 0
  %8911 = vmatpush2.bf16.msra.mxu0 0
  %8912 = vmatprep.subr.bf16.mxu0 0
  %8913 = vmatpush2.bf16.msra.mxu0 0
  %8914 = vmatprep.subr.bf16.mxu0 0
  %8915 = vmatpush2.bf16.msra.mxu0 0
  %8916 = vmatprep.mubr.bf16.mxu0 0
  %8917 = vmatmul.mubr.bf16.gmra.mxu0 %v8870
  %v8918 = vpop.f32.mrf.mxu0
  %v8919 = vadd.f32 0.0, %v8918
  %v8920 = vpop.f32.mrf.mxu0
  %v8921 = vadd.f32 0.0, %v8920
  %v8922 = vpop.f32.mrf.mxu0
  %v8923 = vpop.f32.mrf.mxu0
  %8924 = vdwg.mxu0
  %8925 = vmatprep.subr.bf16.mxu0 0
  %8926 = vmatpush1.bf16.msra.mxu0 0
  %8927 = vmatprep.subr.bf16.mxu0 0
  %8928 = vmatpush1.bf16.msra.mxu0 0
  %8929 = vmatprep.subr.bf16.mxu0 0
  %8930 = vmatpush1.bf16.msra.mxu0 0
  %8931 = vmatprep.subr.bf16.mxu0 0
  %8932 = vmatpush1.bf16.msra.mxu0 0
  %8933 = vmatprep.subr.bf16.mxu0 %v8882
  %8934 = vmatpush1.bf16.msra.mxu0 %v8879
  %8935 = vmatprep.subr.bf16.mxu0 %v8852
  %8936 = vmatpush1.bf16.msra.mxu0 %v8851
  %8937 = vmatprep.subr.bf16.mxu0 %v8848
  %8938 = vmatpush1.bf16.msra.mxu0 %v8847
  %8939 = vmatprep.subr.bf16.mxu0 %v8844
  %8940 = vmatpush1.bf16.msra.mxu0 %v8843
  %8941 = vmatprep.subr.bf16.mxu0 0
  %8942 = vmatpush2.bf16.msra.mxu0 0
  %8943 = vmatprep.subr.bf16.mxu0 0
  %8944 = vmatpush2.bf16.msra.mxu0 0
  %8945 = vmatprep.subr.bf16.mxu0 0
  %8946 = vmatpush2.bf16.msra.mxu0 0
  %8947 = vmatprep.subr.bf16.mxu0 0
  %8948 = vmatpush2.bf16.msra.mxu0 0
  %8949 = vmatprep.subr.bf16.mxu0 0
  %8950 = vmatpush2.bf16.msra.mxu0 0
  %8951 = vmatprep.subr.bf16.mxu0 0
  %8952 = vmatpush2.bf16.msra.mxu0 0
  %8953 = vmatprep.subr.bf16.mxu0 0
  %8954 = vmatpush2.bf16.msra.mxu0 0
  %8955 = vmatprep.subr.bf16.mxu0 0
  %8956 = vmatpush2.bf16.msra.mxu0 0
  %8957 = vmatprep.mubr.bf16.mxu0 0
  %8958 = vmatmul.mubr.bf16.gmra.mxu0 %v8870
  %v8959 = vpop.f32.mrf.mxu0
  %v8960 = vadd.f32 0.0, %v8959
  %v8961 = vpop.f32.mrf.mxu0
  %v8962 = vadd.f32 0.0, %v8961
  %v8963 = vpop.f32.mrf.mxu0
  %v8964 = vpop.f32.mrf.mxu0
  %8965 = vdwg.mxu0
  %v8966 = vadd.f32 %v8773, %v8919
  %v8967 = vadd.f32 %v8774, %v8921
  %v8968 = vadd.f32 %v8775, %v8960
  %v8969 = vadd.f32 %v8776, %v8962
  %v8970 = vmax.f32 %v7593, %v7594
  %v8971 = vadd.f32 %v8970, %v8192
  %v8972 = vmax.f32 %v8971, 0.0
  %v8973 = vpack.c.bf16 %v8972, %v8972
  %s8974 = scalar_lea.vmem %s5, 784
  %v8975 = vld [vmem:[%s8974] sm:$0xff]
  %v8976 = vld [vmem:[%s8974 + $0x8] sm:$0xff]
  %v8977 = vld [vmem:[%s8974 + $0x10] sm:$0xff]
  %v8978 = vld [vmem:[%s8974 + $0x18] sm:$0xff]
  %v8979 = vld [vmem:[%s8974 + $0x20] sm:$0xff]
  %v8980 = vld [vmem:[%s8974 + $0x28] sm:$0xff]
  %v8981 = vld [vmem:[%s8974 + $0x30] sm:$0xff]
  %v8982 = vld [vmem:[%s8974 + $0x38] sm:$0xff]
  %v8983 = vld [vmem:[%s8974 + $0x40] sm:$0xff]
  %v8984 = vld [vmem:[%s8974 + $0x48] sm:$0xff]
  %v8985 = vld [vmem:[%s8974 + $0x50] sm:$0xff]
  %v8986 = vld [vmem:[%s8974 + $0x58] sm:$0xff]
  %v8987 = vld [vmem:[%s8974 + $0x60] sm:$0x11]
  %v8988 = vld [vmem:[%s8974 + $0x68] sm:$0x11]
  %8990 = vrot.lane.b32.xlu0 %v8973, 84
  %v8991 = vpop.permute.xlu0 %8990
  %v9006 = vunpack.c.l.b16 %v8975
  %v9007 = vunpack.c.h.b16 %v8975
  %v9008 = vunpack.c.l.b16 %v8976
  %v9009 = vunpack.c.h.b16 %v8976
  %v9010 = vunpack.c.l.b16 %v8977
  %v9011 = vunpack.c.h.b16 %v8977
  %v9012 = vunpack.c.l.b16 %v8978
  %v9013 = vunpack.c.h.b16 %v8978
  %v9014 = vunpack.c.l.b16 %v8979
  %v9015 = vunpack.c.h.b16 %v8979
  %v9016 = vunpack.c.l.b16 %v8980
  %v9017 = vunpack.c.h.b16 %v8980
  %v9018 = vunpack.c.l.b16 %v8981
  %v9019 = vunpack.c.h.b16 %v8981
  %v9020 = vunpack.c.l.b16 %v8982
  %v9021 = vunpack.c.h.b16 %v8982
  %v9022 = vunpack.c.l.b16 %v8983
  %v9023 = vunpack.c.h.b16 %v8983
  %v9024 = vunpack.c.l.b16 %v8984
  %v9025 = vunpack.c.h.b16 %v8984
  %v9026 = vunpack.c.l.b16 %v8985
  %v9027 = vunpack.c.h.b16 %v8985
  %v9028 = vunpack.c.l.b16 %v8986
  %v9029 = vunpack.c.h.b16 %v8986
  %v9030 = vunpack.c.l.b16 %v8987
  %v9031 = vunpack.c.h.b16 %v8987
  %v9032 = vunpack.c.l.b16 %v8988
  %v9033 = vunpack.c.h.b16 %v8988
  %v9034 = vpack.c.b16 %v9010, %v9006
  %v9035 = vpack.c.b16 %v9011, %v9007
  %v9036 = vpack.c.b16 %v9012, %v9008
  %v9037 = vpack.c.b16 %v9013, %v9009
  %v9038 = vpack.c.b16 %v9018, %v9014
  %v9039 = vpack.c.b16 %v9019, %v9015
  %v9040 = vpack.c.b16 %v9020, %v9016
  %v9041 = vpack.c.b16 %v9021, %v9017
  %v9042 = vpack.c.b16 %v9026, %v9022
  %v9043 = vpack.c.b16 %v9027, %v9023
  %v9044 = vpack.c.b16 %v9028, %v9024
  %v9045 = vpack.c.b16 %v9029, %v9025
  %v9046 = vpack.c.b16 %v9030, %v9030
  %v9047 = vpack.c.b16 %v9031, %v9031
  %v9048 = vpack.c.b16 %v9032, %v9032
  %v9049 = vpack.c.b16 %v9033, %v9033
  %v9063 = vsel %vm7728, %v8991, 0
  %v9066 = vsel %vm7732, %v9046, 0
  %v9069 = vsel %vm7732, %v9047, 0
  %v9072 = vsel %vm7732, %v9048, 0
  %v9075 = vsel %vm7732, %v9049, 0
  %9077 = vmatprep.subr.bf16.mxu0 0
  %9078 = vmatpush1.bf16.msra.mxu0 0
  %9079 = vmatprep.subr.bf16.mxu0 0
  %9080 = vmatpush1.bf16.msra.mxu0 0
  %9081 = vmatprep.subr.bf16.mxu0 0
  %9082 = vmatpush1.bf16.msra.mxu0 0
  %9083 = vmatprep.subr.bf16.mxu0 0
  %9084 = vmatpush1.bf16.msra.mxu0 0
  %9085 = vmatprep.subr.bf16.mxu0 %v9069
  %9086 = vmatpush1.bf16.msra.mxu0 %v9066
  %9087 = vmatprep.subr.bf16.mxu0 %v9043
  %9088 = vmatpush1.bf16.msra.mxu0 %v9042
  %9089 = vmatprep.subr.bf16.mxu0 %v9039
  %9090 = vmatpush1.bf16.msra.mxu0 %v9038
  %9091 = vmatprep.subr.bf16.mxu0 %v9035
  %9092 = vmatpush1.bf16.msra.mxu0 %v9034
  %9093 = vmatprep.subr.bf16.mxu0 0
  %9094 = vmatpush2.bf16.msra.mxu0 0
  %9095 = vmatprep.subr.bf16.mxu0 0
  %9096 = vmatpush2.bf16.msra.mxu0 0
  %9097 = vmatprep.subr.bf16.mxu0 0
  %9098 = vmatpush2.bf16.msra.mxu0 0
  %9099 = vmatprep.subr.bf16.mxu0 0
  %9100 = vmatpush2.bf16.msra.mxu0 0
  %9101 = vmatprep.subr.bf16.mxu0 0
  %9102 = vmatpush2.bf16.msra.mxu0 0
  %9103 = vmatprep.subr.bf16.mxu0 0
  %9104 = vmatpush2.bf16.msra.mxu0 0
  %9105 = vmatprep.subr.bf16.mxu0 0
  %9106 = vmatpush2.bf16.msra.mxu0 0
  %9107 = vmatprep.subr.bf16.mxu0 0
  %9108 = vmatpush2.bf16.msra.mxu0 0
  %9109 = vmatprep.mubr.bf16.mxu0 0
  %9110 = vmatmul.mubr.bf16.gmra.mxu0 %v9063
  %v9111 = vpop.f32.mrf.mxu0
  %v9112 = vadd.f32 0.0, %v9111
  %v9113 = vpop.f32.mrf.mxu0
  %v9114 = vadd.f32 0.0, %v9113
  %v9115 = vpop.f32.mrf.mxu0
  %v9116 = vpop.f32.mrf.mxu0
  %9117 = vdwg.mxu0
  %9118 = vmatprep.subr.bf16.mxu0 0
  %9119 = vmatpush1.bf16.msra.mxu0 0
  %9120 = vmatprep.subr.bf16.mxu0 0
  %9121 = vmatpush1.bf16.msra.mxu0 0
  %9122 = vmatprep.subr.bf16.mxu0 0
  %9123 = vmatpush1.bf16.msra.mxu0 0
  %9124 = vmatprep.subr.bf16.mxu0 0
  %9125 = vmatpush1.bf16.msra.mxu0 0
  %9126 = vmatprep.subr.bf16.mxu0 %v9075
  %9127 = vmatpush1.bf16.msra.mxu0 %v9072
  %9128 = vmatprep.subr.bf16.mxu0 %v9045
  %9129 = vmatpush1.bf16.msra.mxu0 %v9044
  %9130 = vmatprep.subr.bf16.mxu0 %v9041
  %9131 = vmatpush1.bf16.msra.mxu0 %v9040
  %9132 = vmatprep.subr.bf16.mxu0 %v9037
  %9133 = vmatpush1.bf16.msra.mxu0 %v9036
  %9134 = vmatprep.subr.bf16.mxu0 0
  %9135 = vmatpush2.bf16.msra.mxu0 0
  %9136 = vmatprep.subr.bf16.mxu0 0
  %9137 = vmatpush2.bf16.msra.mxu0 0
  %9138 = vmatprep.subr.bf16.mxu0 0
  %9139 = vmatpush2.bf16.msra.mxu0 0
  %9140 = vmatprep.subr.bf16.mxu0 0
  %9141 = vmatpush2.bf16.msra.mxu0 0
  %9142 = vmatprep.subr.bf16.mxu0 0
  %9143 = vmatpush2.bf16.msra.mxu0 0
  %9144 = vmatprep.subr.bf16.mxu0 0
  %9145 = vmatpush2.bf16.msra.mxu0 0
  %9146 = vmatprep.subr.bf16.mxu0 0
  %9147 = vmatpush2.bf16.msra.mxu0 0
  %9148 = vmatprep.subr.bf16.mxu0 0
  %9149 = vmatpush2.bf16.msra.mxu0 0
  %9150 = vmatprep.mubr.bf16.mxu0 0
  %9151 = vmatmul.mubr.bf16.gmra.mxu0 %v9063
  %v9152 = vpop.f32.mrf.mxu0
  %v9153 = vadd.f32 0.0, %v9152
  %v9154 = vpop.f32.mrf.mxu0
  %v9155 = vadd.f32 0.0, %v9154
  %v9156 = vpop.f32.mrf.mxu0
  %v9157 = vpop.f32.mrf.mxu0
  %9158 = vdwg.mxu0
  %v9159 = vadd.f32 %v8966, %v9112
  %v9160 = vadd.f32 %v8967, %v9114
  %v9161 = vadd.f32 %v8968, %v9153
  %v9162 = vadd.f32 %v8969, %v9155
  %v9163 = vmax.f32 %v7450, %v7451
  %v9164 = vadd.f32 %v9163, %v7605
  %v9165 = vmax.f32 %v9164, 0.0
  %v9166 = vpack.c.bf16 %v9165, %v9165
  %s9167 = scalar_lea.vmem %s5, 896
  %v9168 = vld [vmem:[%s9167] sm:$0xff]
  %v9169 = vld [vmem:[%s9167 + $0x8] sm:$0xff]
  %v9170 = vld [vmem:[%s9167 + $0x10] sm:$0xff]
  %v9171 = vld [vmem:[%s9167 + $0x18] sm:$0xff]
  %v9172 = vld [vmem:[%s9167 + $0x20] sm:$0xff]
  %v9173 = vld [vmem:[%s9167 + $0x28] sm:$0xff]
  %v9174 = vld [vmem:[%s9167 + $0x30] sm:$0xff]
  %v9175 = vld [vmem:[%s9167 + $0x38] sm:$0xff]
  %v9176 = vld [vmem:[%s9167 + $0x40] sm:$0xff]
  %v9177 = vld [vmem:[%s9167 + $0x48] sm:$0xff]
  %v9178 = vld [vmem:[%s9167 + $0x50] sm:$0xff]
  %v9179 = vld [vmem:[%s9167 + $0x58] sm:$0xff]
  %v9180 = vld [vmem:[%s9167 + $0x60] sm:$0x11]
  %v9181 = vld [vmem:[%s9167 + $0x68] sm:$0x11]
  %v9196 = vunpack.c.l.b16 %v9168
  %v9197 = vunpack.c.h.b16 %v9168
  %v9198 = vunpack.c.l.b16 %v9169
  %v9199 = vunpack.c.h.b16 %v9169
  %v9200 = vunpack.c.l.b16 %v9170
  %v9201 = vunpack.c.h.b16 %v9170
  %v9202 = vunpack.c.l.b16 %v9171
  %v9203 = vunpack.c.h.b16 %v9171
  %v9204 = vunpack.c.l.b16 %v9172
  %v9205 = vunpack.c.h.b16 %v9172
  %v9206 = vunpack.c.l.b16 %v9173
  %v9207 = vunpack.c.h.b16 %v9173
  %v9208 = vunpack.c.l.b16 %v9174
  %v9209 = vunpack.c.h.b16 %v9174
  %v9210 = vunpack.c.l.b16 %v9175
  %v9211 = vunpack.c.h.b16 %v9175
  %v9212 = vunpack.c.l.b16 %v9176
  %v9213 = vunpack.c.h.b16 %v9176
  %v9214 = vunpack.c.l.b16 %v9177
  %v9215 = vunpack.c.h.b16 %v9177
  %v9216 = vunpack.c.l.b16 %v9178
  %v9217 = vunpack.c.h.b16 %v9178
  %v9218 = vunpack.c.l.b16 %v9179
  %v9219 = vunpack.c.h.b16 %v9179
  %v9220 = vunpack.c.l.b16 %v9180
  %v9221 = vunpack.c.h.b16 %v9180
  %v9222 = vunpack.c.l.b16 %v9181
  %v9223 = vunpack.c.h.b16 %v9181
  %v9224 = vpack.c.b16 %v9200, %v9196
  %v9225 = vpack.c.b16 %v9201, %v9197
  %v9226 = vpack.c.b16 %v9202, %v9198
  %v9227 = vpack.c.b16 %v9203, %v9199
  %v9228 = vpack.c.b16 %v9208, %v9204
  %v9229 = vpack.c.b16 %v9209, %v9205
  %v9230 = vpack.c.b16 %v9210, %v9206
  %v9231 = vpack.c.b16 %v9211, %v9207
  %v9232 = vpack.c.b16 %v9216, %v9212
  %v9233 = vpack.c.b16 %v9217, %v9213
  %v9234 = vpack.c.b16 %v9218, %v9214
  %v9235 = vpack.c.b16 %v9219, %v9215
  %v9236 = vpack.c.b16 %v9220, %v9220
  %v9237 = vpack.c.b16 %v9221, %v9221
  %v9238 = vpack.c.b16 %v9222, %v9222
  %v9239 = vpack.c.b16 %v9223, %v9223
  %v9253 = vsel %vm7728, %v9166, 0
  %v9256 = vsel %vm7732, %v9236, 0
  %v9259 = vsel %vm7732, %v9237, 0
  %v9262 = vsel %vm7732, %v9238, 0
  %v9265 = vsel %vm7732, %v9239, 0
  %9267 = vmatprep.subr.bf16.mxu0 0
  %9268 = vmatpush1.bf16.msra.mxu0 0
  %9269 = vmatprep.subr.bf16.mxu0 0
  %9270 = vmatpush1.bf16.msra.mxu0 0
  %9271 = vmatprep.subr.bf16.mxu0 0
  %9272 = vmatpush1.bf16.msra.mxu0 0
  %9273 = vmatprep.subr.bf16.mxu0 0
  %9274 = vmatpush1.bf16.msra.mxu0 0
  %9275 = vmatprep.subr.bf16.mxu0 %v9259
  %9276 = vmatpush1.bf16.msra.mxu0 %v9256
  %9277 = vmatprep.subr.bf16.mxu0 %v9233
  %9278 = vmatpush1.bf16.msra.mxu0 %v9232
  %9279 = vmatprep.subr.bf16.mxu0 %v9229
  %9280 = vmatpush1.bf16.msra.mxu0 %v9228
  %9281 = vmatprep.subr.bf16.mxu0 %v9225
  %9282 = vmatpush1.bf16.msra.mxu0 %v9224
  %9283 = vmatprep.subr.bf16.mxu0 0
  %9284 = vmatpush2.bf16.msra.mxu0 0
  %9285 = vmatprep.subr.bf16.mxu0 0
  %9286 = vmatpush2.bf16.msra.mxu0 0
  %9287 = vmatprep.subr.bf16.mxu0 0
  %9288 = vmatpush2.bf16.msra.mxu0 0
  %9289 = vmatprep.subr.bf16.mxu0 0
  %9290 = vmatpush2.bf16.msra.mxu0 0
  %9291 = vmatprep.subr.bf16.mxu0 0
  %9292 = vmatpush2.bf16.msra.mxu0 0
  %9293 = vmatprep.subr.bf16.mxu0 0
  %9294 = vmatpush2.bf16.msra.mxu0 0
  %9295 = vmatprep.subr.bf16.mxu0 0
  %9296 = vmatpush2.bf16.msra.mxu0 0
  %9297 = vmatprep.subr.bf16.mxu0 0
  %9298 = vmatpush2.bf16.msra.mxu0 0
  %9299 = vmatprep.mubr.bf16.mxu0 0
  %9300 = vmatmul.mubr.bf16.gmra.mxu0 %v9253
  %v9301 = vpop.f32.mrf.mxu0
  %v9302 = vadd.f32 0.0, %v9301
  %v9303 = vpop.f32.mrf.mxu0
  %v9304 = vadd.f32 0.0, %v9303
  %v9305 = vpop.f32.mrf.mxu0
  %v9306 = vpop.f32.mrf.mxu0
  %9307 = vdwg.mxu0
  %9308 = vmatprep.subr.bf16.mxu0 0
  %9309 = vmatpush1.bf16.msra.mxu0 0
  %9310 = vmatprep.subr.bf16.mxu0 0
  %9311 = vmatpush1.bf16.msra.mxu0 0
  %9312 = vmatprep.subr.bf16.mxu0 0
  %9313 = vmatpush1.bf16.msra.mxu0 0
  %9314 = vmatprep.subr.bf16.mxu0 0
  %9315 = vmatpush1.bf16.msra.mxu0 0
  %9316 = vmatprep.subr.bf16.mxu0 %v9265
  %9317 = vmatpush1.bf16.msra.mxu0 %v9262
  %9318 = vmatprep.subr.bf16.mxu0 %v9235
  %9319 = vmatpush1.bf16.msra.mxu0 %v9234
  %9320 = vmatprep.subr.bf16.mxu0 %v9231
  %9321 = vmatpush1.bf16.msra.mxu0 %v9230
  %9322 = vmatprep.subr.bf16.mxu0 %v9227
  %9323 = vmatpush1.bf16.msra.mxu0 %v9226
  %9324 = vmatprep.subr.bf16.mxu0 0
  %9325 = vmatpush2.bf16.msra.mxu0 0
  %9326 = vmatprep.subr.bf16.mxu0 0
  %9327 = vmatpush2.bf16.msra.mxu0 0
  %9328 = vmatprep.subr.bf16.mxu0 0
  %9329 = vmatpush2.bf16.msra.mxu0 0
  %9330 = vmatprep.subr.bf16.mxu0 0
  %9331 = vmatpush2.bf16.msra.mxu0 0
  %9332 = vmatprep.subr.bf16.mxu0 0
  %9333 = vmatpush2.bf16.msra.mxu0 0
  %9334 = vmatprep.subr.bf16.mxu0 0
  %9335 = vmatpush2.bf16.msra.mxu0 0
  %9336 = vmatprep.subr.bf16.mxu0 0
  %9337 = vmatpush2.bf16.msra.mxu0 0
  %9338 = vmatprep.subr.bf16.mxu0 0
  %9339 = vmatpush2.bf16.msra.mxu0 0
  %9340 = vmatprep.mubr.bf16.mxu0 0
  %9341 = vmatmul.mubr.bf16.gmra.mxu0 %v9253
  %v9342 = vpop.f32.mrf.mxu0
  %v9343 = vadd.f32 0.0, %v9342
  %v9344 = vpop.f32.mrf.mxu0
  %v9345 = vadd.f32 0.0, %v9344
  %v9346 = vpop.f32.mrf.mxu0
  %v9347 = vpop.f32.mrf.mxu0
  %9348 = vdwg.mxu0
  %v9349 = vadd.f32 %v9159, %v9302
  %v9350 = vadd.f32 %v9160, %v9304
  %v9351 = vadd.f32 %v9161, %v9343
  %v9352 = vadd.f32 %v9162, %v9345
  %v9353 = vmax.f32 %v7494, %v7496
  %v9354 = vmax.f32 %v7495, %v7497
  %v9355 = vadd.f32 %v9353, %v7627
  %v9356 = vadd.f32 %v9354, %v7627
  %v9357 = vmax.f32 %v9355, 0.0
  %v9358 = vmax.f32 %v9356, 0.0
  %v9359 = vpack.c.bf16 %v9357, %v9357
  %v9360 = vpack.c.bf16 %v9358, %v9358
  %s9361 = scalar_lea.vmem %s5, 1008
  %v9362 = vld [vmem:[%s9361] sm:$0xff]
  %v9363 = vld [vmem:[%s9361 + $0x8] sm:$0xff]
  %v9364 = vld [vmem:[%s9361 + $0x10] sm:$0xff]
  %v9365 = vld [vmem:[%s9361 + $0x18] sm:$0xff]
  %v9366 = vld [vmem:[%s9361 + $0x20] sm:$0xff]
  %v9367 = vld [vmem:[%s9361 + $0x28] sm:$0xff]
  %v9368 = vld [vmem:[%s9361 + $0x30] sm:$0xff]
  %v9369 = vld [vmem:[%s9361 + $0x38] sm:$0xff]
  %v9370 = vld [vmem:[%s9361 + $0x40] sm:$0xff]
  %v9371 = vld [vmem:[%s9361 + $0x48] sm:$0xff]
  %v9372 = vld [vmem:[%s9361 + $0x50] sm:$0xff]
  %v9373 = vld [vmem:[%s9361 + $0x58] sm:$0xff]
  %v9374 = vld [vmem:[%s9361 + $0x60] sm:$0x11]
  %v9375 = vld [vmem:[%s9361 + $0x68] sm:$0x11]
  %9378 = vrot.lane.b32.xlu0 %v9359, 28
  %v9379 = vpop.permute.xlu0 %9378
  %9380 = vrot.lane.b32.xlu0 %v9360, 28
  %v9381 = vpop.permute.xlu0 %9380
  %v9382 = vsel %vm7656, %v9379, %v9381
  %v9397 = vunpack.c.l.b16 %v9362
  %v9398 = vunpack.c.h.b16 %v9362
  %v9399 = vunpack.c.l.b16 %v9363
  %v9400 = vunpack.c.h.b16 %v9363
  %v9401 = vunpack.c.l.b16 %v9364
  %v9402 = vunpack.c.h.b16 %v9364
  %v9403 = vunpack.c.l.b16 %v9365
  %v9404 = vunpack.c.h.b16 %v9365
  %v9405 = vunpack.c.l.b16 %v9366
  %v9406 = vunpack.c.h.b16 %v9366
  %v9407 = vunpack.c.l.b16 %v9367
  %v9408 = vunpack.c.h.b16 %v9367
  %v9409 = vunpack.c.l.b16 %v9368
  %v9410 = vunpack.c.h.b16 %v9368
  %v9411 = vunpack.c.l.b16 %v9369
  %v9412 = vunpack.c.h.b16 %v9369
  %v9413 = vunpack.c.l.b16 %v9370
  %v9414 = vunpack.c.h.b16 %v9370
  %v9415 = vunpack.c.l.b16 %v9371
  %v9416 = vunpack.c.h.b16 %v9371
  %v9417 = vunpack.c.l.b16 %v9372
  %v9418 = vunpack.c.h.b16 %v9372
  %v9419 = vunpack.c.l.b16 %v9373
  %v9420 = vunpack.c.h.b16 %v9373
  %v9421 = vunpack.c.l.b16 %v9374
  %v9422 = vunpack.c.h.b16 %v9374
  %v9423 = vunpack.c.l.b16 %v9375
  %v9424 = vunpack.c.h.b16 %v9375
  %v9425 = vpack.c.b16 %v9401, %v9397
  %v9426 = vpack.c.b16 %v9402, %v9398
  %v9427 = vpack.c.b16 %v9403, %v9399
  %v9428 = vpack.c.b16 %v9404, %v9400
  %v9429 = vpack.c.b16 %v9409, %v9405
  %v9430 = vpack.c.b16 %v9410, %v9406
  %v9431 = vpack.c.b16 %v9411, %v9407
  %v9432 = vpack.c.b16 %v9412, %v9408
  %v9433 = vpack.c.b16 %v9417, %v9413
  %v9434 = vpack.c.b16 %v9418, %v9414
  %v9435 = vpack.c.b16 %v9419, %v9415
  %v9436 = vpack.c.b16 %v9420, %v9416
  %v9437 = vpack.c.b16 %v9421, %v9421
  %v9438 = vpack.c.b16 %v9422, %v9422
  %v9439 = vpack.c.b16 %v9423, %v9423
  %v9440 = vpack.c.b16 %v9424, %v9424
  %v9454 = vsel %vm7728, %v9382, 0
  %v9457 = vsel %vm7732, %v9437, 0
  %v9460 = vsel %vm7732, %v9438, 0
  %v9463 = vsel %vm7732, %v9439, 0
  %v9466 = vsel %vm7732, %v9440, 0
  %9468 = vmatprep.subr.bf16.mxu0 0
  %9469 = vmatpush1.bf16.msra.mxu0 0
  %9470 = vmatprep.subr.bf16.mxu0 0
  %9471 = vmatpush1.bf16.msra.mxu0 0
  %9472 = vmatprep.subr.bf16.mxu0 0
  %9473 = vmatpush1.bf16.msra.mxu0 0
  %9474 = vmatprep.subr.bf16.mxu0 0
  %9475 = vmatpush1.bf16.msra.mxu0 0
  %9476 = vmatprep.subr.bf16.mxu0 %v9460
  %9477 = vmatpush1.bf16.msra.mxu0 %v9457
  %9478 = vmatprep.subr.bf16.mxu0 %v9434
  %9479 = vmatpush1.bf16.msra.mxu0 %v9433
  %9480 = vmatprep.subr.bf16.mxu0 %v9430
  %9481 = vmatpush1.bf16.msra.mxu0 %v9429
  %9482 = vmatprep.subr.bf16.mxu0 %v9426
  %9483 = vmatpush1.bf16.msra.mxu0 %v9425
  %9484 = vmatprep.subr.bf16.mxu0 0
  %9485 = vmatpush2.bf16.msra.mxu0 0
  %9486 = vmatprep.subr.bf16.mxu0 0
  %9487 = vmatpush2.bf16.msra.mxu0 0
  %9488 = vmatprep.subr.bf16.mxu0 0
  %9489 = vmatpush2.bf16.msra.mxu0 0
  %9490 = vmatprep.subr.bf16.mxu0 0
  %9491 = vmatpush2.bf16.msra.mxu0 0
  %9492 = vmatprep.subr.bf16.mxu0 0
  %9493 = vmatpush2.bf16.msra.mxu0 0
  %9494 = vmatprep.subr.bf16.mxu0 0
  %9495 = vmatpush2.bf16.msra.mxu0 0
  %9496 = vmatprep.subr.bf16.mxu0 0
  %9497 = vmatpush2.bf16.msra.mxu0 0
  %9498 = vmatprep.subr.bf16.mxu0 0
  %9499 = vmatpush2.bf16.msra.mxu0 0
  %9500 = vmatprep.mubr.bf16.mxu0 0
  %9501 = vmatmul.mubr.bf16.gmra.mxu0 %v9454
  %v9502 = vpop.f32.mrf.mxu0
  %v9503 = vadd.f32 0.0, %v9502
  %v9504 = vpop.f32.mrf.mxu0
  %v9505 = vadd.f32 0.0, %v9504
  %v9506 = vpop.f32.mrf.mxu0
  %v9507 = vpop.f32.mrf.mxu0
  %9508 = vdwg.mxu0
  %9509 = vmatprep.subr.bf16.mxu0 0
  %9510 = vmatpush1.bf16.msra.mxu0 0
  %9511 = vmatprep.subr.bf16.mxu0 0
  %9512 = vmatpush1.bf16.msra.mxu0 0
  %9513 = vmatprep.subr.bf16.mxu0 0
  %9514 = vmatpush1.bf16.msra.mxu0 0
  %9515 = vmatprep.subr.bf16.mxu0 0
  %9516 = vmatpush1.bf16.msra.mxu0 0
  %9517 = vmatprep.subr.bf16.mxu0 %v9466
  %9518 = vmatpush1.bf16.msra.mxu0 %v9463
  %9519 = vmatprep.subr.bf16.mxu0 %v9436
  %9520 = vmatpush1.bf16.msra.mxu0 %v9435
  %9521 = vmatprep.subr.bf16.mxu0 %v9432
  %9522 = vmatpush1.bf16.msra.mxu0 %v9431
  %9523 = vmatprep.subr.bf16.mxu0 %v9428
  %9524 = vmatpush1.bf16.msra.mxu0 %v9427
  %9525 = vmatprep.subr.bf16.mxu0 0
  %9526 = vmatpush2.bf16.msra.mxu0 0
  %9527 = vmatprep.subr.bf16.mxu0 0
  %9528 = vmatpush2.bf16.msra.mxu0 0
  %9529 = vmatprep.subr.bf16.mxu0 0
  %9530 = vmatpush2.bf16.msra.mxu0 0
  %9531 = vmatprep.subr.bf16.mxu0 0
  %9532 = vmatpush2.bf16.msra.mxu0 0
  %9533 = vmatprep.subr.bf16.mxu0 0
  %9534 = vmatpush2.bf16.msra.mxu0 0
  %9535 = vmatprep.subr.bf16.mxu0 0
  %9536 = vmatpush2.bf16.msra.mxu0 0
  %9537 = vmatprep.subr.bf16.mxu0 0
  %9538 = vmatpush2.bf16.msra.mxu0 0
  %9539 = vmatprep.subr.bf16.mxu0 0
  %9540 = vmatpush2.bf16.msra.mxu0 0
  %9541 = vmatprep.mubr.bf16.mxu0 0
  %9542 = vmatmul.mubr.bf16.gmra.mxu0 %v9454
  %v9543 = vpop.f32.mrf.mxu0
  %v9544 = vadd.f32 0.0, %v9543
  %v9545 = vpop.f32.mrf.mxu0
  %v9546 = vadd.f32 0.0, %v9545
  %v9547 = vpop.f32.mrf.mxu0
  %v9548 = vpop.f32.mrf.mxu0
  %9549 = vdwg.mxu0
  %v9550 = vadd.f32 %v9349, %v9503
  %v9551 = vadd.f32 %v9350, %v9505
  %v9552 = vadd.f32 %v9351, %v9544
  %v9553 = vadd.f32 %v9352, %v9546
  %v9554 = vmax.f32 %v7547, %v7548
  %v9555 = vadd.f32 %v9554, %v7996
  %v9556 = vmax.f32 %v9555, 0.0
  %v9557 = vpack.c.bf16 %v9556, %v9556
  %s9558 = scalar_lea.vmem %s5, 1120
  %v9559 = vld [vmem:[%s9558] sm:$0xff]
  %v9560 = vld [vmem:[%s9558 + $0x8] sm:$0xff]
  %v9561 = vld [vmem:[%s9558 + $0x10] sm:$0xff]
  %v9562 = vld [vmem:[%s9558 + $0x18] sm:$0xff]
  %v9563 = vld [vmem:[%s9558 + $0x20] sm:$0xff]
  %v9564 = vld [vmem:[%s9558 + $0x28] sm:$0xff]
  %v9565 = vld [vmem:[%s9558 + $0x30] sm:$0xff]
  %v9566 = vld [vmem:[%s9558 + $0x38] sm:$0xff]
  %v9567 = vld [vmem:[%s9558 + $0x40] sm:$0xff]
  %v9568 = vld [vmem:[%s9558 + $0x48] sm:$0xff]
  %v9569 = vld [vmem:[%s9558 + $0x50] sm:$0xff]
  %v9570 = vld [vmem:[%s9558 + $0x58] sm:$0xff]
  %v9571 = vld [vmem:[%s9558 + $0x60] sm:$0x11]
  %v9572 = vld [vmem:[%s9558 + $0x68] sm:$0x11]
  %9574 = vrot.lane.b32.xlu0 %v9557, 56
  %v9575 = vpop.permute.xlu0 %9574
  %v9590 = vunpack.c.l.b16 %v9559
  %v9591 = vunpack.c.h.b16 %v9559
  %v9592 = vunpack.c.l.b16 %v9560
  %v9593 = vunpack.c.h.b16 %v9560
  %v9594 = vunpack.c.l.b16 %v9561
  %v9595 = vunpack.c.h.b16 %v9561
  %v9596 = vunpack.c.l.b16 %v9562
  %v9597 = vunpack.c.h.b16 %v9562
  %v9598 = vunpack.c.l.b16 %v9563
  %v9599 = vunpack.c.h.b16 %v9563
  %v9600 = vunpack.c.l.b16 %v9564
  %v9601 = vunpack.c.h.b16 %v9564
  %v9602 = vunpack.c.l.b16 %v9565
  %v9603 = vunpack.c.h.b16 %v9565
  %v9604 = vunpack.c.l.b16 %v9566
  %v9605 = vunpack.c.h.b16 %v9566
  %v9606 = vunpack.c.l.b16 %v9567
  %v9607 = vunpack.c.h.b16 %v9567
  %v9608 = vunpack.c.l.b16 %v9568
  %v9609 = vunpack.c.h.b16 %v9568
  %v9610 = vunpack.c.l.b16 %v9569
  %v9611 = vunpack.c.h.b16 %v9569
  %v9612 = vunpack.c.l.b16 %v9570
  %v9613 = vunpack.c.h.b16 %v9570
  %v9614 = vunpack.c.l.b16 %v9571
  %v9615 = vunpack.c.h.b16 %v9571
  %v9616 = vunpack.c.l.b16 %v9572
  %v9617 = vunpack.c.h.b16 %v9572
  %v9618 = vpack.c.b16 %v9594, %v9590
  %v9619 = vpack.c.b16 %v9595, %v9591
  %v9620 = vpack.c.b16 %v9596, %v9592
  %v9621 = vpack.c.b16 %v9597, %v9593
  %v9622 = vpack.c.b16 %v9602, %v9598
  %v9623 = vpack.c.b16 %v9603, %v9599
  %v9624 = vpack.c.b16 %v9604, %v9600
  %v9625 = vpack.c.b16 %v9605, %v9601
  %v9626 = vpack.c.b16 %v9610, %v9606
  %v9627 = vpack.c.b16 %v9611, %v9607
  %v9628 = vpack.c.b16 %v9612, %v9608
  %v9629 = vpack.c.b16 %v9613, %v9609
  %v9630 = vpack.c.b16 %v9614, %v9614
  %v9631 = vpack.c.b16 %v9615, %v9615
  %v9632 = vpack.c.b16 %v9616, %v9616
  %v9633 = vpack.c.b16 %v9617, %v9617
  %v9647 = vsel %vm7728, %v9575, 0
  %v9650 = vsel %vm7732, %v9630, 0
  %v9653 = vsel %vm7732, %v9631, 0
  %v9656 = vsel %vm7732, %v9632, 0
  %v9659 = vsel %vm7732, %v9633, 0
  %9661 = vmatprep.subr.bf16.mxu0 0
  %9662 = vmatpush1.bf16.msra.mxu0 0
  %9663 = vmatprep.subr.bf16.mxu0 0
  %9664 = vmatpush1.bf16.msra.mxu0 0
  %9665 = vmatprep.subr.bf16.mxu0 0
  %9666 = vmatpush1.bf16.msra.mxu0 0
  %9667 = vmatprep.subr.bf16.mxu0 0
  %9668 = vmatpush1.bf16.msra.mxu0 0
  %9669 = vmatprep.subr.bf16.mxu0 %v9653
  %9670 = vmatpush1.bf16.msra.mxu0 %v9650
  %9671 = vmatprep.subr.bf16.mxu0 %v9627
  %9672 = vmatpush1.bf16.msra.mxu0 %v9626
  %9673 = vmatprep.subr.bf16.mxu0 %v9623
  %9674 = vmatpush1.bf16.msra.mxu0 %v9622
  %9675 = vmatprep.subr.bf16.mxu0 %v9619
  %9676 = vmatpush1.bf16.msra.mxu0 %v9618
  %9677 = vmatprep.subr.bf16.mxu0 0
  %9678 = vmatpush2.bf16.msra.mxu0 0
  %9679 = vmatprep.subr.bf16.mxu0 0
  %9680 = vmatpush2.bf16.msra.mxu0 0
  %9681 = vmatprep.subr.bf16.mxu0 0
  %9682 = vmatpush2.bf16.msra.mxu0 0
  %9683 = vmatprep.subr.bf16.mxu0 0
  %9684 = vmatpush2.bf16.msra.mxu0 0
  %9685 = vmatprep.subr.bf16.mxu0 0
  %9686 = vmatpush2.bf16.msra.mxu0 0
  %9687 = vmatprep.subr.bf16.mxu0 0
  %9688 = vmatpush2.bf16.msra.mxu0 0
  %9689 = vmatprep.subr.bf16.mxu0 0
  %9690 = vmatpush2.bf16.msra.mxu0 0
  %9691 = vmatprep.subr.bf16.mxu0 0
  %9692 = vmatpush2.bf16.msra.mxu0 0
  %9693 = vmatprep.mubr.bf16.mxu0 0
  %9694 = vmatmul.mubr.bf16.gmra.mxu0 %v9647
  %v9695 = vpop.f32.mrf.mxu0
  %v9696 = vadd.f32 0.0, %v9695
  %v9697 = vpop.f32.mrf.mxu0
  %v9698 = vadd.f32 0.0, %v9697
  %v9699 = vpop.f32.mrf.mxu0
  %v9700 = vpop.f32.mrf.mxu0
  %9701 = vdwg.mxu0
  %9702 = vmatprep.subr.bf16.mxu0 0
  %9703 = vmatpush1.bf16.msra.mxu0 0
  %9704 = vmatprep.subr.bf16.mxu0 0
  %9705 = vmatpush1.bf16.msra.mxu0 0
  %9706 = vmatprep.subr.bf16.mxu0 0
  %9707 = vmatpush1.bf16.msra.mxu0 0
  %9708 = vmatprep.subr.bf16.mxu0 0
  %9709 = vmatpush1.bf16.msra.mxu0 0
  %9710 = vmatprep.subr.bf16.mxu0 %v9659
  %9711 = vmatpush1.bf16.msra.mxu0 %v9656
  %9712 = vmatprep.subr.bf16.mxu0 %v9629
  %9713 = vmatpush1.bf16.msra.mxu0 %v9628
  %9714 = vmatprep.subr.bf16.mxu0 %v9625
  %9715 = vmatpush1.bf16.msra.mxu0 %v9624
  %9716 = vmatprep.subr.bf16.mxu0 %v9621
  %9717 = vmatpush1.bf16.msra.mxu0 %v9620
  %9718 = vmatprep.subr.bf16.mxu0 0
  %9719 = vmatpush2.bf16.msra.mxu0 0
  %9720 = vmatprep.subr.bf16.mxu0 0
  %9721 = vmatpush2.bf16.msra.mxu0 0
  %9722 = vmatprep.subr.bf16.mxu0 0
  %9723 = vmatpush2.bf16.msra.mxu0 0
  %9724 = vmatprep.subr.bf16.mxu0 0
  %9725 = vmatpush2.bf16.msra.mxu0 0
  %9726 = vmatprep.subr.bf16.mxu0 0
  %9727 = vmatpush2.bf16.msra.mxu0 0
  %9728 = vmatprep.subr.bf16.mxu0 0
  %9729 = vmatpush2.bf16.msra.mxu0 0
  %9730 = vmatprep.subr.bf16.mxu0 0
  %9731 = vmatpush2.bf16.msra.mxu0 0
  %9732 = vmatprep.subr.bf16.mxu0 0
  %9733 = vmatpush2.bf16.msra.mxu0 0
  %9734 = vmatprep.mubr.bf16.mxu0 0
  %9735 = vmatmul.mubr.bf16.gmra.mxu0 %v9647
  %v9736 = vpop.f32.mrf.mxu0
  %v9737 = vadd.f32 0.0, %v9736
  %v9738 = vpop.f32.mrf.mxu0
  %v9739 = vadd.f32 0.0, %v9738
  %v9740 = vpop.f32.mrf.mxu0
  %v9741 = vpop.f32.mrf.mxu0
  %9742 = vdwg.mxu0
  %v9743 = vadd.f32 %v9550, %v9696
  %v9744 = vadd.f32 %v9551, %v9698
  %v9745 = vadd.f32 %v9552, %v9737
  %v9746 = vadd.f32 %v9553, %v9739
  %v9747 = vmax.f32 %v7595, %v7596
  %v9748 = vadd.f32 %v9747, %v8192
  %v9749 = vmax.f32 %v9748, 0.0
  %v9750 = vpack.c.bf16 %v9749, %v9749
  %s9751 = scalar_lea.vmem %s5, 1232
  %v9752 = vld [vmem:[%s9751] sm:$0xff]
  %v9753 = vld [vmem:[%s9751 + $0x8] sm:$0xff]
  %v9754 = vld [vmem:[%s9751 + $0x10] sm:$0xff]
  %v9755 = vld [vmem:[%s9751 + $0x18] sm:$0xff]
  %v9756 = vld [vmem:[%s9751 + $0x20] sm:$0xff]
  %v9757 = vld [vmem:[%s9751 + $0x28] sm:$0xff]
  %v9758 = vld [vmem:[%s9751 + $0x30] sm:$0xff]
  %v9759 = vld [vmem:[%s9751 + $0x38] sm:$0xff]
  %v9760 = vld [vmem:[%s9751 + $0x40] sm:$0xff]
  %v9761 = vld [vmem:[%s9751 + $0x48] sm:$0xff]
  %v9762 = vld [vmem:[%s9751 + $0x50] sm:$0xff]
  %v9763 = vld [vmem:[%s9751 + $0x58] sm:$0xff]
  %v9764 = vld [vmem:[%s9751 + $0x60] sm:$0x11]
  %v9765 = vld [vmem:[%s9751 + $0x68] sm:$0x11]
  %9767 = vrot.lane.b32.xlu0 %v9750, 84
  %v9768 = vpop.permute.xlu0 %9767
  %v9783 = vunpack.c.l.b16 %v9752
  %v9784 = vunpack.c.h.b16 %v9752
  %v9785 = vunpack.c.l.b16 %v9753
  %v9786 = vunpack.c.h.b16 %v9753
  %v9787 = vunpack.c.l.b16 %v9754
  %v9788 = vunpack.c.h.b16 %v9754
  %v9789 = vunpack.c.l.b16 %v9755
  %v9790 = vunpack.c.h.b16 %v9755
  %v9791 = vunpack.c.l.b16 %v9756
  %v9792 = vunpack.c.h.b16 %v9756
  %v9793 = vunpack.c.l.b16 %v9757
  %v9794 = vunpack.c.h.b16 %v9757
  %v9795 = vunpack.c.l.b16 %v9758
  %v9796 = vunpack.c.h.b16 %v9758
  %v9797 = vunpack.c.l.b16 %v9759
  %v9798 = vunpack.c.h.b16 %v9759
  %v9799 = vunpack.c.l.b16 %v9760
  %v9800 = vunpack.c.h.b16 %v9760
  %v9801 = vunpack.c.l.b16 %v9761
  %v9802 = vunpack.c.h.b16 %v9761
  %v9803 = vunpack.c.l.b16 %v9762
  %v9804 = vunpack.c.h.b16 %v9762
  %v9805 = vunpack.c.l.b16 %v9763
  %v9806 = vunpack.c.h.b16 %v9763
  %v9807 = vunpack.c.l.b16 %v9764
  %v9808 = vunpack.c.h.b16 %v9764
  %v9809 = vunpack.c.l.b16 %v9765
  %v9810 = vunpack.c.h.b16 %v9765
  %v9811 = vpack.c.b16 %v9787, %v9783
  %v9812 = vpack.c.b16 %v9788, %v9784
  %v9813 = vpack.c.b16 %v9789, %v9785
  %v9814 = vpack.c.b16 %v9790, %v9786
  %v9815 = vpack.c.b16 %v9795, %v9791
  %v9816 = vpack.c.b16 %v9796, %v9792
  %v9817 = vpack.c.b16 %v9797, %v9793
  %v9818 = vpack.c.b16 %v9798, %v9794
  %v9819 = vpack.c.b16 %v9803, %v9799
  %v9820 = vpack.c.b16 %v9804, %v9800
  %v9821 = vpack.c.b16 %v9805, %v9801
  %v9822 = vpack.c.b16 %v9806, %v9802
  %v9823 = vpack.c.b16 %v9807, %v9807
  %v9824 = vpack.c.b16 %v9808, %v9808
  %v9825 = vpack.c.b16 %v9809, %v9809
  %v9826 = vpack.c.b16 %v9810, %v9810
  %v9840 = vsel %vm7728, %v9768, 0
  %v9843 = vsel %vm7732, %v9823, 0
  %v9846 = vsel %vm7732, %v9824, 0
  %v9849 = vsel %vm7732, %v9825, 0
  %v9852 = vsel %vm7732, %v9826, 0
  %9854 = vmatprep.subr.bf16.mxu0 0
  %9855 = vmatpush1.bf16.msra.mxu0 0
  %9856 = vmatprep.subr.bf16.mxu0 0
  %9857 = vmatpush1.bf16.msra.mxu0 0
  %9858 = vmatprep.subr.bf16.mxu0 0
  %9859 = vmatpush1.bf16.msra.mxu0 0
  %9860 = vmatprep.subr.bf16.mxu0 0
  %9861 = vmatpush1.bf16.msra.mxu0 0
  %9862 = vmatprep.subr.bf16.mxu0 %v9846
  %9863 = vmatpush1.bf16.msra.mxu0 %v9843
  %9864 = vmatprep.subr.bf16.mxu0 %v9820
  %9865 = vmatpush1.bf16.msra.mxu0 %v9819
  %9866 = vmatprep.subr.bf16.mxu0 %v9816
  %9867 = vmatpush1.bf16.msra.mxu0 %v9815
  %9868 = vmatprep.subr.bf16.mxu0 %v9812
  %9869 = vmatpush1.bf16.msra.mxu0 %v9811
  %9870 = vmatprep.subr.bf16.mxu0 0
  %9871 = vmatpush2.bf16.msra.mxu0 0
  %9872 = vmatprep.subr.bf16.mxu0 0
  %9873 = vmatpush2.bf16.msra.mxu0 0
  %9874 = vmatprep.subr.bf16.mxu0 0
  %9875 = vmatpush2.bf16.msra.mxu0 0
  %9876 = vmatprep.subr.bf16.mxu0 0
  %9877 = vmatpush2.bf16.msra.mxu0 0
  %9878 = vmatprep.subr.bf16.mxu0 0
  %9879 = vmatpush2.bf16.msra.mxu0 0
  %9880 = vmatprep.subr.bf16.mxu0 0
  %9881 = vmatpush2.bf16.msra.mxu0 0
  %9882 = vmatprep.subr.bf16.mxu0 0
  %9883 = vmatpush2.bf16.msra.mxu0 0
  %9884 = vmatprep.subr.bf16.mxu0 0
  %9885 = vmatpush2.bf16.msra.mxu0 0
  %9886 = vmatprep.mubr.bf16.mxu0 0
  %9887 = vmatmul.mubr.bf16.gmra.mxu0 %v9840
  %v9888 = vpop.f32.mrf.mxu0
  %v9889 = vadd.f32 0.0, %v9888
  %v9890 = vpop.f32.mrf.mxu0
  %v9891 = vadd.f32 0.0, %v9890
  %v9892 = vpop.f32.mrf.mxu0
  %v9893 = vpop.f32.mrf.mxu0
  %9894 = vdwg.mxu0
  %9895 = vmatprep.subr.bf16.mxu0 0
  %9896 = vmatpush1.bf16.msra.mxu0 0
  %9897 = vmatprep.subr.bf16.mxu0 0
  %9898 = vmatpush1.bf16.msra.mxu0 0
  %9899 = vmatprep.subr.bf16.mxu0 0
  %9900 = vmatpush1.bf16.msra.mxu0 0
  %9901 = vmatprep.subr.bf16.mxu0 0
  %9902 = vmatpush1.bf16.msra.mxu0 0
  %9903 = vmatprep.subr.bf16.mxu0 %v9852
  %9904 = vmatpush1.bf16.msra.mxu0 %v9849
  %9905 = vmatprep.subr.bf16.mxu0 %v9822
  %9906 = vmatpush1.bf16.msra.mxu0 %v9821
  %9907 = vmatprep.subr.bf16.mxu0 %v9818
  %9908 = vmatpush1.bf16.msra.mxu0 %v9817
  %9909 = vmatprep.subr.bf16.mxu0 %v9814
  %9910 = vmatpush1.bf16.msra.mxu0 %v9813
  %9911 = vmatprep.subr.bf16.mxu0 0
  %9912 = vmatpush2.bf16.msra.mxu0 0
  %9913 = vmatprep.subr.bf16.mxu0 0
  %9914 = vmatpush2.bf16.msra.mxu0 0
  %9915 = vmatprep.subr.bf16.mxu0 0
  %9916 = vmatpush2.bf16.msra.mxu0 0
  %9917 = vmatprep.subr.bf16.mxu0 0
  %9918 = vmatpush2.bf16.msra.mxu0 0
  %9919 = vmatprep.subr.bf16.mxu0 0
  %9920 = vmatpush2.bf16.msra.mxu0 0
  %9921 = vmatprep.subr.bf16.mxu0 0
  %9922 = vmatpush2.bf16.msra.mxu0 0
  %9923 = vmatprep.subr.bf16.mxu0 0
  %9924 = vmatpush2.bf16.msra.mxu0 0
  %9925 = vmatprep.subr.bf16.mxu0 0
  %9926 = vmatpush2.bf16.msra.mxu0 0
  %9927 = vmatprep.mubr.bf16.mxu0 0
  %9928 = vmatmul.mubr.bf16.gmra.mxu0 %v9840
  %v9929 = vpop.f32.mrf.mxu0
  %v9930 = vadd.f32 0.0, %v9929
  %v9931 = vpop.f32.mrf.mxu0
  %v9932 = vadd.f32 0.0, %v9931
  %v9933 = vpop.f32.mrf.mxu0
  %v9934 = vpop.f32.mrf.mxu0
  %9935 = vdwg.mxu0
  %v9936 = vadd.f32 %v9743, %v9889
  %v9937 = vadd.f32 %v9744, %v9891
  %v9938 = vadd.f32 %v9745, %v9930
  %v9939 = vadd.f32 %v9746, %v9932
  %v9940 = vmax.f32 %v7452, %v7453
  %v9941 = vadd.f32 %v9940, %v7605
  %v9942 = vmax.f32 %v9941, 0.0
  %v9943 = vpack.c.bf16 %v9942, %v9942
  %s9944 = scalar_lea.vmem %s5, 1344
  %v9945 = vld [vmem:[%s9944] sm:$0xff]
  %v9946 = vld [vmem:[%s9944 + $0x8] sm:$0xff]
  %v9947 = vld [vmem:[%s9944 + $0x10] sm:$0xff]
  %v9948 = vld [vmem:[%s9944 + $0x18] sm:$0xff]
  %v9949 = vld [vmem:[%s9944 + $0x20] sm:$0xff]
  %v9950 = vld [vmem:[%s9944 + $0x28] sm:$0xff]
  %v9951 = vld [vmem:[%s9944 + $0x30] sm:$0xff]
  %v9952 = vld [vmem:[%s9944 + $0x38] sm:$0xff]
  %v9953 = vld [vmem:[%s9944 + $0x40] sm:$0xff]
  %v9954 = vld [vmem:[%s9944 + $0x48] sm:$0xff]
  %v9955 = vld [vmem:[%s9944 + $0x50] sm:$0xff]
  %v9956 = vld [vmem:[%s9944 + $0x58] sm:$0xff]
  %v9957 = vld [vmem:[%s9944 + $0x60] sm:$0x11]
  %v9958 = vld [vmem:[%s9944 + $0x68] sm:$0x11]
  %v9973 = vunpack.c.l.b16 %v9945
  %v9974 = vunpack.c.h.b16 %v9945
  %v9975 = vunpack.c.l.b16 %v9946
  %v9976 = vunpack.c.h.b16 %v9946
  %v9977 = vunpack.c.l.b16 %v9947
  %v9978 = vunpack.c.h.b16 %v9947
  %v9979 = vunpack.c.l.b16 %v9948
  %v9980 = vunpack.c.h.b16 %v9948
  %v9981 = vunpack.c.l.b16 %v9949
  %v9982 = vunpack.c.h.b16 %v9949
  %v9983 = vunpack.c.l.b16 %v9950
  %v9984 = vunpack.c.h.b16 %v9950
  %v9985 = vunpack.c.l.b16 %v9951
  %v9986 = vunpack.c.h.b16 %v9951
  %v9987 = vunpack.c.l.b16 %v9952
  %v9988 = vunpack.c.h.b16 %v9952
  %v9989 = vunpack.c.l.b16 %v9953
  %v9990 = vunpack.c.h.b16 %v9953
  %v9991 = vunpack.c.l.b16 %v9954
  %v9992 = vunpack.c.h.b16 %v9954
  %v9993 = vunpack.c.l.b16 %v9955
  %v9994 = vunpack.c.h.b16 %v9955
  %v9995 = vunpack.c.l.b16 %v9956
  %v9996 = vunpack.c.h.b16 %v9956
  %v9997 = vunpack.c.l.b16 %v9957
  %v9998 = vunpack.c.h.b16 %v9957
  %v9999 = vunpack.c.l.b16 %v9958
  %v10000 = vunpack.c.h.b16 %v9958
  %v10001 = vpack.c.b16 %v9977, %v9973
  %v10002 = vpack.c.b16 %v9978, %v9974
  %v10003 = vpack.c.b16 %v9979, %v9975
  %v10004 = vpack.c.b16 %v9980, %v9976
  %v10005 = vpack.c.b16 %v9985, %v9981
  %v10006 = vpack.c.b16 %v9986, %v9982
  %v10007 = vpack.c.b16 %v9987, %v9983
  %v10008 = vpack.c.b16 %v9988, %v9984
  %v10009 = vpack.c.b16 %v9993, %v9989
  %v10010 = vpack.c.b16 %v9994, %v9990
  %v10011 = vpack.c.b16 %v9995, %v9991
  %v10012 = vpack.c.b16 %v9996, %v9992
  %v10013 = vpack.c.b16 %v9997, %v9997
  %v10014 = vpack.c.b16 %v9998, %v9998
  %v10015 = vpack.c.b16 %v9999, %v9999
  %v10016 = vpack.c.b16 %v10000, %v10000
  %v10030 = vsel %vm7728, %v9943, 0
  %v10033 = vsel %vm7732, %v10013, 0
  %v10036 = vsel %vm7732, %v10014, 0
  %v10039 = vsel %vm7732, %v10015, 0
  %v10042 = vsel %vm7732, %v10016, 0
  %10044 = vmatprep.subr.bf16.mxu0 0
  %10045 = vmatpush1.bf16.msra.mxu0 0
  %10046 = vmatprep.subr.bf16.mxu0 0
  %10047 = vmatpush1.bf16.msra.mxu0 0
  %10048 = vmatprep.subr.bf16.mxu0 0
  %10049 = vmatpush1.bf16.msra.mxu0 0
  %10050 = vmatprep.subr.bf16.mxu0 0
  %10051 = vmatpush1.bf16.msra.mxu0 0
  %10052 = vmatprep.subr.bf16.mxu0 %v10036
  %10053 = vmatpush1.bf16.msra.mxu0 %v10033
  %10054 = vmatprep.subr.bf16.mxu0 %v10010
  %10055 = vmatpush1.bf16.msra.mxu0 %v10009
  %10056 = vmatprep.subr.bf16.mxu0 %v10006
  %10057 = vmatpush1.bf16.msra.mxu0 %v10005
  %10058 = vmatprep.subr.bf16.mxu0 %v10002
  %10059 = vmatpush1.bf16.msra.mxu0 %v10001
  %10060 = vmatprep.subr.bf16.mxu0 0
  %10061 = vmatpush2.bf16.msra.mxu0 0
  %10062 = vmatprep.subr.bf16.mxu0 0
  %10063 = vmatpush2.bf16.msra.mxu0 0
  %10064 = vmatprep.subr.bf16.mxu0 0
  %10065 = vmatpush2.bf16.msra.mxu0 0
  %10066 = vmatprep.subr.bf16.mxu0 0
  %10067 = vmatpush2.bf16.msra.mxu0 0
  %10068 = vmatprep.subr.bf16.mxu0 0
  %10069 = vmatpush2.bf16.msra.mxu0 0
  %10070 = vmatprep.subr.bf16.mxu0 0
  %10071 = vmatpush2.bf16.msra.mxu0 0
  %10072 = vmatprep.subr.bf16.mxu0 0
  %10073 = vmatpush2.bf16.msra.mxu0 0
  %10074 = vmatprep.subr.bf16.mxu0 0
  %10075 = vmatpush2.bf16.msra.mxu0 0
  %10076 = vmatprep.mubr.bf16.mxu0 0
  %10077 = vmatmul.mubr.bf16.gmra.mxu0 %v10030
  %v10078 = vpop.f32.mrf.mxu0
  %v10079 = vadd.f32 0.0, %v10078
  %v10080 = vpop.f32.mrf.mxu0
  %v10081 = vadd.f32 0.0, %v10080
  %v10082 = vpop.f32.mrf.mxu0
  %v10083 = vpop.f32.mrf.mxu0
  %10084 = vdwg.mxu0
  %10085 = vmatprep.subr.bf16.mxu0 0
  %10086 = vmatpush1.bf16.msra.mxu0 0
  %10087 = vmatprep.subr.bf16.mxu0 0
  %10088 = vmatpush1.bf16.msra.mxu0 0
  %10089 = vmatprep.subr.bf16.mxu0 0
  %10090 = vmatpush1.bf16.msra.mxu0 0
  %10091 = vmatprep.subr.bf16.mxu0 0
  %10092 = vmatpush1.bf16.msra.mxu0 0
  %10093 = vmatprep.subr.bf16.mxu0 %v10042
  %10094 = vmatpush1.bf16.msra.mxu0 %v10039
  %10095 = vmatprep.subr.bf16.mxu0 %v10012
  %10096 = vmatpush1.bf16.msra.mxu0 %v10011
  %10097 = vmatprep.subr.bf16.mxu0 %v10008
  %10098 = vmatpush1.bf16.msra.mxu0 %v10007
  %10099 = vmatprep.subr.bf16.mxu0 %v10004
  %10100 = vmatpush1.bf16.msra.mxu0 %v10003
  %10101 = vmatprep.subr.bf16.mxu0 0
  %10102 = vmatpush2.bf16.msra.mxu0 0
  %10103 = vmatprep.subr.bf16.mxu0 0
  %10104 = vmatpush2.bf16.msra.mxu0 0
  %10105 = vmatprep.subr.bf16.mxu0 0
  %10106 = vmatpush2.bf16.msra.mxu0 0
  %10107 = vmatprep.subr.bf16.mxu0 0
  %10108 = vmatpush2.bf16.msra.mxu0 0
  %10109 = vmatprep.subr.bf16.mxu0 0
  %10110 = vmatpush2.bf16.msra.mxu0 0
  %10111 = vmatprep.subr.bf16.mxu0 0
  %10112 = vmatpush2.bf16.msra.mxu0 0
  %10113 = vmatprep.subr.bf16.mxu0 0
  %10114 = vmatpush2.bf16.msra.mxu0 0
  %10115 = vmatprep.subr.bf16.mxu0 0
  %10116 = vmatpush2.bf16.msra.mxu0 0
  %10117 = vmatprep.mubr.bf16.mxu0 0
  %10118 = vmatmul.mubr.bf16.gmra.mxu0 %v10030
  %v10119 = vpop.f32.mrf.mxu0
  %v10120 = vadd.f32 0.0, %v10119
  %v10121 = vpop.f32.mrf.mxu0
  %v10122 = vadd.f32 0.0, %v10121
  %v10123 = vpop.f32.mrf.mxu0
  %v10124 = vpop.f32.mrf.mxu0
  %10125 = vdwg.mxu0
  %v10126 = vadd.f32 %v9936, %v10079
  %v10127 = vadd.f32 %v9937, %v10081
  %v10128 = vadd.f32 %v9938, %v10120
  %v10129 = vadd.f32 %v9939, %v10122
  %v10130 = vmax.f32 %v7498, %v7500
  %v10131 = vmax.f32 %v7499, %v7501
  %v10132 = vadd.f32 %v10130, %v7627
  %v10133 = vadd.f32 %v10131, %v7627
  %v10134 = vmax.f32 %v10132, 0.0
  %v10135 = vmax.f32 %v10133, 0.0
  %v10136 = vpack.c.bf16 %v10134, %v10134
  %v10137 = vpack.c.bf16 %v10135, %v10135
  %s10138 = scalar_lea.vmem %s5, 1456
  %v10139 = vld [vmem:[%s10138] sm:$0xff]
  %v10140 = vld [vmem:[%s10138 + $0x8] sm:$0xff]
  %v10141 = vld [vmem:[%s10138 + $0x10] sm:$0xff]
  %v10142 = vld [vmem:[%s10138 + $0x18] sm:$0xff]
  %v10143 = vld [vmem:[%s10138 + $0x20] sm:$0xff]
  %v10144 = vld [vmem:[%s10138 + $0x28] sm:$0xff]
  %v10145 = vld [vmem:[%s10138 + $0x30] sm:$0xff]
  %v10146 = vld [vmem:[%s10138 + $0x38] sm:$0xff]
  %v10147 = vld [vmem:[%s10138 + $0x40] sm:$0xff]
  %v10148 = vld [vmem:[%s10138 + $0x48] sm:$0xff]
  %v10149 = vld [vmem:[%s10138 + $0x50] sm:$0xff]
  %v10150 = vld [vmem:[%s10138 + $0x58] sm:$0xff]
  %v10151 = vld [vmem:[%s10138 + $0x60] sm:$0x11]
  %v10152 = vld [vmem:[%s10138 + $0x68] sm:$0x11]
  %10155 = vrot.lane.b32.xlu0 %v10136, 28
  %v10156 = vpop.permute.xlu0 %10155
  %10157 = vrot.lane.b32.xlu0 %v10137, 28
  %v10158 = vpop.permute.xlu0 %10157
  %v10159 = vsel %vm7656, %v10156, %v10158
  %v10174 = vunpack.c.l.b16 %v10139
  %v10175 = vunpack.c.h.b16 %v10139
  %v10176 = vunpack.c.l.b16 %v10140
  %v10177 = vunpack.c.h.b16 %v10140
  %v10178 = vunpack.c.l.b16 %v10141
  %v10179 = vunpack.c.h.b16 %v10141
  %v10180 = vunpack.c.l.b16 %v10142
  %v10181 = vunpack.c.h.b16 %v10142
  %v10182 = vunpack.c.l.b16 %v10143
  %v10183 = vunpack.c.h.b16 %v10143
  %v10184 = vunpack.c.l.b16 %v10144
  %v10185 = vunpack.c.h.b16 %v10144
  %v10186 = vunpack.c.l.b16 %v10145
  %v10187 = vunpack.c.h.b16 %v10145
  %v10188 = vunpack.c.l.b16 %v10146
  %v10189 = vunpack.c.h.b16 %v10146
  %v10190 = vunpack.c.l.b16 %v10147
  %v10191 = vunpack.c.h.b16 %v10147
  %v10192 = vunpack.c.l.b16 %v10148
  %v10193 = vunpack.c.h.b16 %v10148
  %v10194 = vunpack.c.l.b16 %v10149
  %v10195 = vunpack.c.h.b16 %v10149
  %v10196 = vunpack.c.l.b16 %v10150
  %v10197 = vunpack.c.h.b16 %v10150
  %v10198 = vunpack.c.l.b16 %v10151
  %v10199 = vunpack.c.h.b16 %v10151
  %v10200 = vunpack.c.l.b16 %v10152
  %v10201 = vunpack.c.h.b16 %v10152
  %v10202 = vpack.c.b16 %v10178, %v10174
  %v10203 = vpack.c.b16 %v10179, %v10175
  %v10204 = vpack.c.b16 %v10180, %v10176
  %v10205 = vpack.c.b16 %v10181, %v10177
  %v10206 = vpack.c.b16 %v10186, %v10182
  %v10207 = vpack.c.b16 %v10187, %v10183
  %v10208 = vpack.c.b16 %v10188, %v10184
  %v10209 = vpack.c.b16 %v10189, %v10185
  %v10210 = vpack.c.b16 %v10194, %v10190
  %v10211 = vpack.c.b16 %v10195, %v10191
  %v10212 = vpack.c.b16 %v10196, %v10192
  %v10213 = vpack.c.b16 %v10197, %v10193
  %v10214 = vpack.c.b16 %v10198, %v10198
  %v10215 = vpack.c.b16 %v10199, %v10199
  %v10216 = vpack.c.b16 %v10200, %v10200
  %v10217 = vpack.c.b16 %v10201, %v10201
  %v10231 = vsel %vm7728, %v10159, 0
  %v10234 = vsel %vm7732, %v10214, 0
  %v10237 = vsel %vm7732, %v10215, 0
  %v10240 = vsel %vm7732, %v10216, 0
  %v10243 = vsel %vm7732, %v10217, 0
  %10245 = vmatprep.subr.bf16.mxu0 0
  %10246 = vmatpush1.bf16.msra.mxu0 0
  %10247 = vmatprep.subr.bf16.mxu0 0
  %10248 = vmatpush1.bf16.msra.mxu0 0
  %10249 = vmatprep.subr.bf16.mxu0 0
  %10250 = vmatpush1.bf16.msra.mxu0 0
  %10251 = vmatprep.subr.bf16.mxu0 0
  %10252 = vmatpush1.bf16.msra.mxu0 0
  %10253 = vmatprep.subr.bf16.mxu0 %v10237
  %10254 = vmatpush1.bf16.msra.mxu0 %v10234
  %10255 = vmatprep.subr.bf16.mxu0 %v10211
  %10256 = vmatpush1.bf16.msra.mxu0 %v10210
  %10257 = vmatprep.subr.bf16.mxu0 %v10207
  %10258 = vmatpush1.bf16.msra.mxu0 %v10206
  %10259 = vmatprep.subr.bf16.mxu0 %v10203
  %10260 = vmatpush1.bf16.msra.mxu0 %v10202
  %10261 = vmatprep.subr.bf16.mxu0 0
  %10262 = vmatpush2.bf16.msra.mxu0 0
  %10263 = vmatprep.subr.bf16.mxu0 0
  %10264 = vmatpush2.bf16.msra.mxu0 0
  %10265 = vmatprep.subr.bf16.mxu0 0
  %10266 = vmatpush2.bf16.msra.mxu0 0
  %10267 = vmatprep.subr.bf16.mxu0 0
  %10268 = vmatpush2.bf16.msra.mxu0 0
  %10269 = vmatprep.subr.bf16.mxu0 0
  %10270 = vmatpush2.bf16.msra.mxu0 0
  %10271 = vmatprep.subr.bf16.mxu0 0
  %10272 = vmatpush2.bf16.msra.mxu0 0
  %10273 = vmatprep.subr.bf16.mxu0 0
  %10274 = vmatpush2.bf16.msra.mxu0 0
  %10275 = vmatprep.subr.bf16.mxu0 0
  %10276 = vmatpush2.bf16.msra.mxu0 0
  %10277 = vmatprep.mubr.bf16.mxu0 0
  %10278 = vmatmul.mubr.bf16.gmra.mxu0 %v10231
  %v10279 = vpop.f32.mrf.mxu0
  %v10280 = vadd.f32 0.0, %v10279
  %v10281 = vpop.f32.mrf.mxu0
  %v10282 = vadd.f32 0.0, %v10281
  %v10283 = vpop.f32.mrf.mxu0
  %v10284 = vpop.f32.mrf.mxu0
  %10285 = vdwg.mxu0
  %10286 = vmatprep.subr.bf16.mxu0 0
  %10287 = vmatpush1.bf16.msra.mxu0 0
  %10288 = vmatprep.subr.bf16.mxu0 0
  %10289 = vmatpush1.bf16.msra.mxu0 0
  %10290 = vmatprep.subr.bf16.mxu0 0
  %10291 = vmatpush1.bf16.msra.mxu0 0
  %10292 = vmatprep.subr.bf16.mxu0 0
  %10293 = vmatpush1.bf16.msra.mxu0 0
  %10294 = vmatprep.subr.bf16.mxu0 %v10243
  %10295 = vmatpush1.bf16.msra.mxu0 %v10240
  %10296 = vmatprep.subr.bf16.mxu0 %v10213
  %10297 = vmatpush1.bf16.msra.mxu0 %v10212
  %10298 = vmatprep.subr.bf16.mxu0 %v10209
  %10299 = vmatpush1.bf16.msra.mxu0 %v10208
  %10300 = vmatprep.subr.bf16.mxu0 %v10205
  %10301 = vmatpush1.bf16.msra.mxu0 %v10204
  %10302 = vmatprep.subr.bf16.mxu0 0
  %10303 = vmatpush2.bf16.msra.mxu0 0
  %10304 = vmatprep.subr.bf16.mxu0 0
  %10305 = vmatpush2.bf16.msra.mxu0 0
  %10306 = vmatprep.subr.bf16.mxu0 0
  %10307 = vmatpush2.bf16.msra.mxu0 0
  %10308 = vmatprep.subr.bf16.mxu0 0
  %10309 = vmatpush2.bf16.msra.mxu0 0
  %10310 = vmatprep.subr.bf16.mxu0 0
  %10311 = vmatpush2.bf16.msra.mxu0 0
  %10312 = vmatprep.subr.bf16.mxu0 0
  %10313 = vmatpush2.bf16.msra.mxu0 0
  %10314 = vmatprep.subr.bf16.mxu0 0
  %10315 = vmatpush2.bf16.msra.mxu0 0
  %10316 = vmatprep.subr.bf16.mxu0 0
  %10317 = vmatpush2.bf16.msra.mxu0 0
  %10318 = vmatprep.mubr.bf16.mxu0 0
  %10319 = vmatmul.mubr.bf16.gmra.mxu0 %v10231
  %v10320 = vpop.f32.mrf.mxu0
  %v10321 = vadd.f32 0.0, %v10320
  %v10322 = vpop.f32.mrf.mxu0
  %v10323 = vadd.f32 0.0, %v10322
  %v10324 = vpop.f32.mrf.mxu0
  %v10325 = vpop.f32.mrf.mxu0
  %10326 = vdwg.mxu0
  %v10327 = vadd.f32 %v10126, %v10280
  %v10328 = vadd.f32 %v10127, %v10282
  %v10329 = vadd.f32 %v10128, %v10321
  %v10330 = vadd.f32 %v10129, %v10323
  %v10331 = vmax.f32 %v7549, %v7550
  %v10332 = vadd.f32 %v10331, %v7996
  %v10333 = vmax.f32 %v10332, 0.0
  %v10334 = vpack.c.bf16 %v10333, %v10333
  %s10335 = scalar_lea.vmem %s5, 1568
  %v10336 = vld [vmem:[%s10335] sm:$0xff]
  %v10337 = vld [vmem:[%s10335 + $0x8] sm:$0xff]
  %v10338 = vld [vmem:[%s10335 + $0x10] sm:$0xff]
  %v10339 = vld [vmem:[%s10335 + $0x18] sm:$0xff]
  %v10340 = vld [vmem:[%s10335 + $0x20] sm:$0xff]
  %v10341 = vld [vmem:[%s10335 + $0x28] sm:$0xff]
  %v10342 = vld [vmem:[%s10335 + $0x30] sm:$0xff]
  %v10343 = vld [vmem:[%s10335 + $0x38] sm:$0xff]
  %v10344 = vld [vmem:[%s10335 + $0x40] sm:$0xff]
  %v10345 = vld [vmem:[%s10335 + $0x48] sm:$0xff]
  %v10346 = vld [vmem:[%s10335 + $0x50] sm:$0xff]
  %v10347 = vld [vmem:[%s10335 + $0x58] sm:$0xff]
  %v10348 = vld [vmem:[%s10335 + $0x60] sm:$0x11]
  %v10349 = vld [vmem:[%s10335 + $0x68] sm:$0x11]
  %10351 = vrot.lane.b32.xlu0 %v10334, 56
  %v10352 = vpop.permute.xlu0 %10351
  %v10367 = vunpack.c.l.b16 %v10336
  %v10368 = vunpack.c.h.b16 %v10336
  %v10369 = vunpack.c.l.b16 %v10337
  %v10370 = vunpack.c.h.b16 %v10337
  %v10371 = vunpack.c.l.b16 %v10338
  %v10372 = vunpack.c.h.b16 %v10338
  %v10373 = vunpack.c.l.b16 %v10339
  %v10374 = vunpack.c.h.b16 %v10339
  %v10375 = vunpack.c.l.b16 %v10340
  %v10376 = vunpack.c.h.b16 %v10340
  %v10377 = vunpack.c.l.b16 %v10341
  %v10378 = vunpack.c.h.b16 %v10341
  %v10379 = vunpack.c.l.b16 %v10342
  %v10380 = vunpack.c.h.b16 %v10342
  %v10381 = vunpack.c.l.b16 %v10343
  %v10382 = vunpack.c.h.b16 %v10343
  %v10383 = vunpack.c.l.b16 %v10344
  %v10384 = vunpack.c.h.b16 %v10344
  %v10385 = vunpack.c.l.b16 %v10345
  %v10386 = vunpack.c.h.b16 %v10345
  %v10387 = vunpack.c.l.b16 %v10346
  %v10388 = vunpack.c.h.b16 %v10346
  %v10389 = vunpack.c.l.b16 %v10347
  %v10390 = vunpack.c.h.b16 %v10347
  %v10391 = vunpack.c.l.b16 %v10348
  %v10392 = vunpack.c.h.b16 %v10348
  %v10393 = vunpack.c.l.b16 %v10349
  %v10394 = vunpack.c.h.b16 %v10349
  %v10395 = vpack.c.b16 %v10371, %v10367
  %v10396 = vpack.c.b16 %v10372, %v10368
  %v10397 = vpack.c.b16 %v10373, %v10369
  %v10398 = vpack.c.b16 %v10374, %v10370
  %v10399 = vpack.c.b16 %v10379, %v10375
  %v10400 = vpack.c.b16 %v10380, %v10376
  %v10401 = vpack.c.b16 %v10381, %v10377
  %v10402 = vpack.c.b16 %v10382, %v10378
  %v10403 = vpack.c.b16 %v10387, %v10383
  %v10404 = vpack.c.b16 %v10388, %v10384
  %v10405 = vpack.c.b16 %v10389, %v10385
  %v10406 = vpack.c.b16 %v10390, %v10386
  %v10407 = vpack.c.b16 %v10391, %v10391
  %v10408 = vpack.c.b16 %v10392, %v10392
  %v10409 = vpack.c.b16 %v10393, %v10393
  %v10410 = vpack.c.b16 %v10394, %v10394
  %v10424 = vsel %vm7728, %v10352, 0
  %v10427 = vsel %vm7732, %v10407, 0
  %v10430 = vsel %vm7732, %v10408, 0
  %v10433 = vsel %vm7732, %v10409, 0
  %v10436 = vsel %vm7732, %v10410, 0
  %10438 = vmatprep.subr.bf16.mxu0 0
  %10439 = vmatpush1.bf16.msra.mxu0 0
  %10440 = vmatprep.subr.bf16.mxu0 0
  %10441 = vmatpush1.bf16.msra.mxu0 0
  %10442 = vmatprep.subr.bf16.mxu0 0
  %10443 = vmatpush1.bf16.msra.mxu0 0
  %10444 = vmatprep.subr.bf16.mxu0 0
  %10445 = vmatpush1.bf16.msra.mxu0 0
  %10446 = vmatprep.subr.bf16.mxu0 %v10430
  %10447 = vmatpush1.bf16.msra.mxu0 %v10427
  %10448 = vmatprep.subr.bf16.mxu0 %v10404
  %10449 = vmatpush1.bf16.msra.mxu0 %v10403
  %10450 = vmatprep.subr.bf16.mxu0 %v10400
  %10451 = vmatpush1.bf16.msra.mxu0 %v10399
  %10452 = vmatprep.subr.bf16.mxu0 %v10396
  %10453 = vmatpush1.bf16.msra.mxu0 %v10395
  %10454 = vmatprep.subr.bf16.mxu0 0
  %10455 = vmatpush2.bf16.msra.mxu0 0
  %10456 = vmatprep.subr.bf16.mxu0 0
  %10457 = vmatpush2.bf16.msra.mxu0 0
  %10458 = vmatprep.subr.bf16.mxu0 0
  %10459 = vmatpush2.bf16.msra.mxu0 0
  %10460 = vmatprep.subr.bf16.mxu0 0
  %10461 = vmatpush2.bf16.msra.mxu0 0
  %10462 = vmatprep.subr.bf16.mxu0 0
  %10463 = vmatpush2.bf16.msra.mxu0 0
  %10464 = vmatprep.subr.bf16.mxu0 0
  %10465 = vmatpush2.bf16.msra.mxu0 0
  %10466 = vmatprep.subr.bf16.mxu0 0
  %10467 = vmatpush2.bf16.msra.mxu0 0
  %10468 = vmatprep.subr.bf16.mxu0 0
  %10469 = vmatpush2.bf16.msra.mxu0 0
  %10470 = vmatprep.mubr.bf16.mxu0 0
  %10471 = vmatmul.mubr.bf16.gmra.mxu0 %v10424
  %v10472 = vpop.f32.mrf.mxu0
  %v10473 = vadd.f32 0.0, %v10472
  %v10474 = vpop.f32.mrf.mxu0
  %v10475 = vadd.f32 0.0, %v10474
  %v10476 = vpop.f32.mrf.mxu0
  %v10477 = vpop.f32.mrf.mxu0
  %10478 = vdwg.mxu0
  %10479 = vmatprep.subr.bf16.mxu0 0
  %10480 = vmatpush1.bf16.msra.mxu0 0
  %10481 = vmatprep.subr.bf16.mxu0 0
  %10482 = vmatpush1.bf16.msra.mxu0 0
  %10483 = vmatprep.subr.bf16.mxu0 0
  %10484 = vmatpush1.bf16.msra.mxu0 0
  %10485 = vmatprep.subr.bf16.mxu0 0
  %10486 = vmatpush1.bf16.msra.mxu0 0
  %10487 = vmatprep.subr.bf16.mxu0 %v10436
  %10488 = vmatpush1.bf16.msra.mxu0 %v10433
  %10489 = vmatprep.subr.bf16.mxu0 %v10406
  %10490 = vmatpush1.bf16.msra.mxu0 %v10405
  %10491 = vmatprep.subr.bf16.mxu0 %v10402
  %10492 = vmatpush1.bf16.msra.mxu0 %v10401
  %10493 = vmatprep.subr.bf16.mxu0 %v10398
  %10494 = vmatpush1.bf16.msra.mxu0 %v10397
  %10495 = vmatprep.subr.bf16.mxu0 0
  %10496 = vmatpush2.bf16.msra.mxu0 0
  %10497 = vmatprep.subr.bf16.mxu0 0
  %10498 = vmatpush2.bf16.msra.mxu0 0
  %10499 = vmatprep.subr.bf16.mxu0 0
  %10500 = vmatpush2.bf16.msra.mxu0 0
  %10501 = vmatprep.subr.bf16.mxu0 0
  %10502 = vmatpush2.bf16.msra.mxu0 0
  %10503 = vmatprep.subr.bf16.mxu0 0
  %10504 = vmatpush2.bf16.msra.mxu0 0
  %10505 = vmatprep.subr.bf16.mxu0 0
  %10506 = vmatpush2.bf16.msra.mxu0 0
  %10507 = vmatprep.subr.bf16.mxu0 0
  %10508 = vmatpush2.bf16.msra.mxu0 0
  %10509 = vmatprep.subr.bf16.mxu0 0
  %10510 = vmatpush2.bf16.msra.mxu0 0
  %10511 = vmatprep.mubr.bf16.mxu0 0
  %10512 = vmatmul.mubr.bf16.gmra.mxu0 %v10424
  %v10513 = vpop.f32.mrf.mxu0
  %v10514 = vadd.f32 0.0, %v10513
  %v10515 = vpop.f32.mrf.mxu0
  %v10516 = vadd.f32 0.0, %v10515
  %v10517 = vpop.f32.mrf.mxu0
  %v10518 = vpop.f32.mrf.mxu0
  %10519 = vdwg.mxu0
  %v10520 = vadd.f32 %v10327, %v10473
  %v10521 = vadd.f32 %v10328, %v10475
  %v10522 = vadd.f32 %v10329, %v10514
  %v10523 = vadd.f32 %v10330, %v10516
  %v10524 = vmax.f32 %v7597, %v7598
  %v10525 = vadd.f32 %v10524, %v8192
  %v10526 = vmax.f32 %v10525, 0.0
  %v10527 = vpack.c.bf16 %v10526, %v10526
  %s10528 = scalar_lea.vmem %s5, 1680
  %v10529 = vld [vmem:[%s10528] sm:$0xff]
  %v10530 = vld [vmem:[%s10528 + $0x8] sm:$0xff]
  %v10531 = vld [vmem:[%s10528 + $0x10] sm:$0xff]
  %v10532 = vld [vmem:[%s10528 + $0x18] sm:$0xff]
  %v10533 = vld [vmem:[%s10528 + $0x20] sm:$0xff]
  %v10534 = vld [vmem:[%s10528 + $0x28] sm:$0xff]
  %v10535 = vld [vmem:[%s10528 + $0x30] sm:$0xff]
  %v10536 = vld [vmem:[%s10528 + $0x38] sm:$0xff]
  %v10537 = vld [vmem:[%s10528 + $0x40] sm:$0xff]
  %v10538 = vld [vmem:[%s10528 + $0x48] sm:$0xff]
  %v10539 = vld [vmem:[%s10528 + $0x50] sm:$0xff]
  %v10540 = vld [vmem:[%s10528 + $0x58] sm:$0xff]
  %v10541 = vld [vmem:[%s10528 + $0x60] sm:$0x11]
  %v10542 = vld [vmem:[%s10528 + $0x68] sm:$0x11]
  %10544 = vrot.lane.b32.xlu0 %v10527, 84
  %v10545 = vpop.permute.xlu0 %10544
  %v10560 = vunpack.c.l.b16 %v10529
  %v10561 = vunpack.c.h.b16 %v10529
  %v10562 = vunpack.c.l.b16 %v10530
  %v10563 = vunpack.c.h.b16 %v10530
  %v10564 = vunpack.c.l.b16 %v10531
  %v10565 = vunpack.c.h.b16 %v10531
  %v10566 = vunpack.c.l.b16 %v10532
  %v10567 = vunpack.c.h.b16 %v10532
  %v10568 = vunpack.c.l.b16 %v10533
  %v10569 = vunpack.c.h.b16 %v10533
  %v10570 = vunpack.c.l.b16 %v10534
  %v10571 = vunpack.c.h.b16 %v10534
  %v10572 = vunpack.c.l.b16 %v10535
  %v10573 = vunpack.c.h.b16 %v10535
  %v10574 = vunpack.c.l.b16 %v10536
  %v10575 = vunpack.c.h.b16 %v10536
  %v10576 = vunpack.c.l.b16 %v10537
  %v10577 = vunpack.c.h.b16 %v10537
  %v10578 = vunpack.c.l.b16 %v10538
  %v10579 = vunpack.c.h.b16 %v10538
  %v10580 = vunpack.c.l.b16 %v10539
  %v10581 = vunpack.c.h.b16 %v10539
  %v10582 = vunpack.c.l.b16 %v10540
  %v10583 = vunpack.c.h.b16 %v10540
  %v10584 = vunpack.c.l.b16 %v10541
  %v10585 = vunpack.c.h.b16 %v10541
  %v10586 = vunpack.c.l.b16 %v10542
  %v10587 = vunpack.c.h.b16 %v10542
  %v10588 = vpack.c.b16 %v10564, %v10560
  %v10589 = vpack.c.b16 %v10565, %v10561
  %v10590 = vpack.c.b16 %v10566, %v10562
  %v10591 = vpack.c.b16 %v10567, %v10563
  %v10592 = vpack.c.b16 %v10572, %v10568
  %v10593 = vpack.c.b16 %v10573, %v10569
  %v10594 = vpack.c.b16 %v10574, %v10570
  %v10595 = vpack.c.b16 %v10575, %v10571
  %v10596 = vpack.c.b16 %v10580, %v10576
  %v10597 = vpack.c.b16 %v10581, %v10577
  %v10598 = vpack.c.b16 %v10582, %v10578
  %v10599 = vpack.c.b16 %v10583, %v10579
  %v10600 = vpack.c.b16 %v10584, %v10584
  %v10601 = vpack.c.b16 %v10585, %v10585
  %v10602 = vpack.c.b16 %v10586, %v10586
  %v10603 = vpack.c.b16 %v10587, %v10587
  %v10617 = vsel %vm7728, %v10545, 0
  %v10620 = vsel %vm7732, %v10600, 0
  %v10623 = vsel %vm7732, %v10601, 0
  %v10626 = vsel %vm7732, %v10602, 0
  %v10629 = vsel %vm7732, %v10603, 0
  %10631 = vmatprep.subr.bf16.mxu0 0
  %10632 = vmatpush1.bf16.msra.mxu0 0
  %10633 = vmatprep.subr.bf16.mxu0 0
  %10634 = vmatpush1.bf16.msra.mxu0 0
  %10635 = vmatprep.subr.bf16.mxu0 0
  %10636 = vmatpush1.bf16.msra.mxu0 0
  %10637 = vmatprep.subr.bf16.mxu0 0
  %10638 = vmatpush1.bf16.msra.mxu0 0
  %10639 = vmatprep.subr.bf16.mxu0 %v10623
  %10640 = vmatpush1.bf16.msra.mxu0 %v10620
  %10641 = vmatprep.subr.bf16.mxu0 %v10597
  %10642 = vmatpush1.bf16.msra.mxu0 %v10596
  %10643 = vmatprep.subr.bf16.mxu0 %v10593
  %10644 = vmatpush1.bf16.msra.mxu0 %v10592
  %10645 = vmatprep.subr.bf16.mxu0 %v10589
  %10646 = vmatpush1.bf16.msra.mxu0 %v10588
  %10647 = vmatprep.subr.bf16.mxu0 0
  %10648 = vmatpush2.bf16.msra.mxu0 0
  %10649 = vmatprep.subr.bf16.mxu0 0
  %10650 = vmatpush2.bf16.msra.mxu0 0
  %10651 = vmatprep.subr.bf16.mxu0 0
  %10652 = vmatpush2.bf16.msra.mxu0 0
  %10653 = vmatprep.subr.bf16.mxu0 0
  %10654 = vmatpush2.bf16.msra.mxu0 0
  %10655 = vmatprep.subr.bf16.mxu0 0
  %10656 = vmatpush2.bf16.msra.mxu0 0
  %10657 = vmatprep.subr.bf16.mxu0 0
  %10658 = vmatpush2.bf16.msra.mxu0 0
  %10659 = vmatprep.subr.bf16.mxu0 0
  %10660 = vmatpush2.bf16.msra.mxu0 0
  %10661 = vmatprep.subr.bf16.mxu0 0
  %10662 = vmatpush2.bf16.msra.mxu0 0
  %10663 = vmatprep.mubr.bf16.mxu0 0
  %10664 = vmatmul.mubr.bf16.gmra.mxu0 %v10617
  %v10665 = vpop.f32.mrf.mxu0
  %v10666 = vadd.f32 0.0, %v10665
  %v10667 = vpop.f32.mrf.mxu0
  %v10668 = vadd.f32 0.0, %v10667
  %v10669 = vpop.f32.mrf.mxu0
  %v10670 = vpop.f32.mrf.mxu0
  %10671 = vdwg.mxu0
  %10672 = vmatprep.subr.bf16.mxu0 0
  %10673 = vmatpush1.bf16.msra.mxu0 0
  %10674 = vmatprep.subr.bf16.mxu0 0
  %10675 = vmatpush1.bf16.msra.mxu0 0
  %10676 = vmatprep.subr.bf16.mxu0 0
  %10677 = vmatpush1.bf16.msra.mxu0 0
  %10678 = vmatprep.subr.bf16.mxu0 0
  %10679 = vmatpush1.bf16.msra.mxu0 0
  %10680 = vmatprep.subr.bf16.mxu0 %v10629
  %10681 = vmatpush1.bf16.msra.mxu0 %v10626
  %10682 = vmatprep.subr.bf16.mxu0 %v10599
  %10683 = vmatpush1.bf16.msra.mxu0 %v10598
  %10684 = vmatprep.subr.bf16.mxu0 %v10595
  %10685 = vmatpush1.bf16.msra.mxu0 %v10594
  %10686 = vmatprep.subr.bf16.mxu0 %v10591
  %10687 = vmatpush1.bf16.msra.mxu0 %v10590
  %10688 = vmatprep.subr.bf16.mxu0 0
  %10689 = vmatpush2.bf16.msra.mxu0 0
  %10690 = vmatprep.subr.bf16.mxu0 0
  %10691 = vmatpush2.bf16.msra.mxu0 0
  %10692 = vmatprep.subr.bf16.mxu0 0
  %10693 = vmatpush2.bf16.msra.mxu0 0
  %10694 = vmatprep.subr.bf16.mxu0 0
  %10695 = vmatpush2.bf16.msra.mxu0 0
  %10696 = vmatprep.subr.bf16.mxu0 0
  %10697 = vmatpush2.bf16.msra.mxu0 0
  %10698 = vmatprep.subr.bf16.mxu0 0
  %10699 = vmatpush2.bf16.msra.mxu0 0
  %10700 = vmatprep.subr.bf16.mxu0 0
  %10701 = vmatpush2.bf16.msra.mxu0 0
  %10702 = vmatprep.subr.bf16.mxu0 0
  %10703 = vmatpush2.bf16.msra.mxu0 0
  %10704 = vmatprep.mubr.bf16.mxu0 0
  %10705 = vmatmul.mubr.bf16.gmra.mxu0 %v10617
  %v10706 = vpop.f32.mrf.mxu0
  %v10707 = vadd.f32 0.0, %v10706
  %v10708 = vpop.f32.mrf.mxu0
  %v10709 = vadd.f32 0.0, %v10708
  %v10710 = vpop.f32.mrf.mxu0
  %v10711 = vpop.f32.mrf.mxu0
  %10712 = vdwg.mxu0
  %v10713 = vadd.f32 %v10520, %v10666
  %v10714 = vadd.f32 %v10521, %v10668
  %v10715 = vadd.f32 %v10522, %v10707
  %v10716 = vadd.f32 %v10523, %v10709
  %v10717 = vld [vmem:[%s6] sm:$0xf]
  %v10719 = vlaneseq
  %v10720 = vshrl.u32 %v10719, 7
  %v10721 = vsub.s32 0, %v10720
  %v10722 = vrot.slane %v10717, %v10721
  %v10723 = vlaneseq
  %v10724 = vshrl.u32 %v10723, 7
  %v10725 = vsub.s32 1, %v10724
  %v10726 = vrot.slane %v10717, %v10725
  %v10727 = vlaneseq
  %v10728 = vshrl.u32 %v10727, 7
  %v10729 = vsub.s32 2, %v10728
  %v10730 = vrot.slane %v10717, %v10729
  %v10731 = vlaneseq
  %v10732 = vshrl.u32 %v10731, 7
  %v10733 = vsub.s32 3, %v10732
  %v10734 = vrot.slane %v10717, %v10733
  %v10739 = vadd.f32 %v10713, %v10722
  %v10740 = vadd.f32 %v10714, %v10726
  %v10741 = vadd.f32 %v10715, %v10730
  %v10742 = vadd.f32 %v10716, %v10734
  %v10743 = vmax.f32 %v10739, 0.0
  %v10744 = vmax.f32 %v10740, 0.0
  %v10745 = vmax.f32 %v10741, 0.0
  %v10746 = vmax.f32 %v10742, 0.0
  %v10747 = vpack.c.bf16 %v10743, %v10743
  %v10748 = vpack.c.bf16 %v10744, %v10744
  %v10749 = vpack.c.bf16 %v10745, %v10745
  %v10750 = vpack.c.bf16 %v10746, %v10746
  %v10751 = vld [vmem:[%s7] sm:$0xf]
  %v10752 = vld [vmem:[%s7 + $0x4] sm:$0xf]
  %v10753 = vld [vmem:[%s7 + $0x8] sm:$0xf]
  %v10754 = vld [vmem:[%s7 + $0xc] sm:$0xf]
  %v10755 = vld [vmem:[%s7 + $0x10] sm:$0xf]
  %v10756 = vld [vmem:[%s7 + $0x14] sm:$0xf]
  %v10757 = vld [vmem:[%s7 + $0x18] sm:$0xf]
  %v10758 = vld [vmem:[%s7 + $0x1c] sm:$0xf]
  %v10759 = vld [vmem:[%s7 + $0x20] sm:$0xf]
  %v10760 = vld [vmem:[%s7 + $0x24] sm:$0xf]
  %v10761 = vld [vmem:[%s7 + $0x28] sm:$0xf]
  %v10762 = vld [vmem:[%s7 + $0x2c] sm:$0xf]
  %v10763 = vld [vmem:[%s7 + $0x30] sm:$0xf]
  %v10764 = vld [vmem:[%s7 + $0x34] sm:$0xf]
  %v10765 = vld [vmem:[%s7 + $0x38] sm:$0xf]
  %v10766 = vld [vmem:[%s7 + $0x3c] sm:$0xf]
  %v10767 = vld [vmem:[%s7 + $0x40] sm:$0xf]
  %v10768 = vld [vmem:[%s7 + $0x44] sm:$0xf]
  %v10769 = vld [vmem:[%s7 + $0x48] sm:$0xf]
  %v10770 = vld [vmem:[%s7 + $0x4c] sm:$0xf]
  %v10771 = vld [vmem:[%s7 + $0x50] sm:$0xf]
  %v10772 = vld [vmem:[%s7 + $0x54] sm:$0xf]
  %v10773 = vld [vmem:[%s7 + $0x58] sm:$0xf]
  %v10774 = vld [vmem:[%s7 + $0x5c] sm:$0xf]
  %v10775 = vld [vmem:[%s7 + $0x60] sm:$0xf]
  %v10776 = vld [vmem:[%s7 + $0x64] sm:$0xf]
  %v10777 = vld [vmem:[%s7 + $0x68] sm:$0xf]
  %v10778 = vld [vmem:[%s7 + $0x6c] sm:$0xf]
  %v10779 = vld [vmem:[%s7 + $0x70] sm:$0xf]
  %v10780 = vld [vmem:[%s7 + $0x74] sm:$0xf]
  %v10781 = vld [vmem:[%s7 + $0x78] sm:$0xf]
  %v10782 = vld [vmem:[%s7 + $0x7c] sm:$0xf]
  %v10783 = vld [vmem:[%s7 + $0x80] sm:$0xf]
  %v10784 = vld [vmem:[%s7 + $0x84] sm:$0xf]
  %v10785 = vld [vmem:[%s7 + $0x88] sm:$0xf]
  %v10786 = vld [vmem:[%s7 + $0x8c] sm:$0xf]
  %v10787 = vld [vmem:[%s7 + $0x90] sm:$0xf]
  %v10788 = vld [vmem:[%s7 + $0x94] sm:$0xf]
  %v10789 = vld [vmem:[%s7 + $0x98] sm:$0xf]
  %v10790 = vld [vmem:[%s7 + $0x9c] sm:$0xf]
  %v10791 = vld [vmem:[%s7 + $0xa0] sm:$0xf]
  %v10792 = vld [vmem:[%s7 + $0xa4] sm:$0xf]
  %v10793 = vld [vmem:[%s7 + $0xa8] sm:$0xf]
  %v10794 = vld [vmem:[%s7 + $0xac] sm:$0xf]
  %v10795 = vld [vmem:[%s7 + $0xb0] sm:$0xf]
  %v10796 = vld [vmem:[%s7 + $0xb4] sm:$0xf]
  %v10797 = vld [vmem:[%s7 + $0xb8] sm:$0xf]
  %v10798 = vld [vmem:[%s7 + $0xbc] sm:$0xf]
  %v10799 = vld [vmem:[%s7 + $0xc0] sm:$0xf]
  %v10800 = vld [vmem:[%s7 + $0xc4] sm:$0xf]
  %v10801 = vld [vmem:[%s7 + $0xc8] sm:$0xf]
  %v10802 = vld [vmem:[%s7 + $0xcc] sm:$0xf]
  %v10803 = vld [vmem:[%s7 + $0xd0] sm:$0xf]
  %v10804 = vld [vmem:[%s7 + $0xd4] sm:$0xf]
  %v10805 = vld [vmem:[%s7 + $0xd8] sm:$0xf]
  %v10806 = vld [vmem:[%s7 + $0xdc] sm:$0xf]
  %v10807 = vld [vmem:[%s7 + $0xe0] sm:$0xf]
  %v10808 = vld [vmem:[%s7 + $0xe4] sm:$0xf]
  %v10809 = vld [vmem:[%s7 + $0xe8] sm:$0xf]
  %v10810 = vld [vmem:[%s7 + $0xec] sm:$0xf]
  %v10811 = vld [vmem:[%s7 + $0xf0] sm:$0xf]
  %v10812 = vld [vmem:[%s7 + $0xf4] sm:$0xf]
  %v10813 = vld [vmem:[%s7 + $0xf8] sm:$0xf]
  %v10814 = vld [vmem:[%s7 + $0xfc] sm:$0xf]
  %v10815 = vld [vmem:[%s8] sm:$0x1]
  %v10817 = vlaneseq
  %v10818 = vshrl.u32 %v10817, 7
  %v10819 = vsub.s32 0, %v10818
  %v10820 = vrot.slane %v10815, %v10819
  %v10886 = vunpack.c.l.b16 %v10751
  %v10887 = vunpack.c.l.b16 %v10752
  %v10888 = vunpack.c.l.b16 %v10753
  %v10889 = vunpack.c.l.b16 %v10754
  %v10890 = vunpack.c.l.b16 %v10755
  %v10891 = vunpack.c.l.b16 %v10756
  %v10892 = vunpack.c.l.b16 %v10757
  %v10893 = vunpack.c.l.b16 %v10758
  %v10894 = vunpack.c.l.b16 %v10759
  %v10895 = vunpack.c.l.b16 %v10760
  %v10896 = vunpack.c.l.b16 %v10761
  %v10897 = vunpack.c.l.b16 %v10762
  %v10898 = vunpack.c.l.b16 %v10763
  %v10899 = vunpack.c.l.b16 %v10764
  %v10900 = vunpack.c.l.b16 %v10765
  %v10901 = vunpack.c.l.b16 %v10766
  %v10902 = vunpack.c.l.b16 %v10767
  %v10903 = vunpack.c.l.b16 %v10768
  %v10904 = vunpack.c.l.b16 %v10769
  %v10905 = vunpack.c.l.b16 %v10770
  %v10906 = vunpack.c.l.b16 %v10771
  %v10907 = vunpack.c.l.b16 %v10772
  %v10908 = vunpack.c.l.b16 %v10773
  %v10909 = vunpack.c.l.b16 %v10774
  %v10910 = vunpack.c.l.b16 %v10775
  %v10911 = vunpack.c.l.b16 %v10776
  %v10912 = vunpack.c.l.b16 %v10777
  %v10913 = vunpack.c.l.b16 %v10778
  %v10914 = vunpack.c.l.b16 %v10779
  %v10915 = vunpack.c.l.b16 %v10780
  %v10916 = vunpack.c.l.b16 %v10781
  %v10917 = vunpack.c.l.b16 %v10782
  %v10918 = vunpack.c.l.b16 %v10783
  %v10919 = vunpack.c.l.b16 %v10784
  %v10920 = vunpack.c.l.b16 %v10785
  %v10921 = vunpack.c.l.b16 %v10786
  %v10922 = vunpack.c.l.b16 %v10787
  %v10923 = vunpack.c.l.b16 %v10788
  %v10924 = vunpack.c.l.b16 %v10789
  %v10925 = vunpack.c.l.b16 %v10790
  %v10926 = vunpack.c.l.b16 %v10791
  %v10927 = vunpack.c.l.b16 %v10792
  %v10928 = vunpack.c.l.b16 %v10793
  %v10929 = vunpack.c.l.b16 %v10794
  %v10930 = vunpack.c.l.b16 %v10795
  %v10931 = vunpack.c.l.b16 %v10796
  %v10932 = vunpack.c.l.b16 %v10797
  %v10933 = vunpack.c.l.b16 %v10798
  %v10934 = vunpack.c.l.b16 %v10799
  %v10935 = vunpack.c.l.b16 %v10800
  %v10936 = vunpack.c.l.b16 %v10801
  %v10937 = vunpack.c.l.b16 %v10802
  %v10938 = vunpack.c.l.b16 %v10803
  %v10939 = vunpack.c.l.b16 %v10804
  %v10940 = vunpack.c.l.b16 %v10805
  %v10941 = vunpack.c.l.b16 %v10806
  %v10942 = vunpack.c.l.b16 %v10807
  %v10943 = vunpack.c.l.b16 %v10808
  %v10944 = vunpack.c.l.b16 %v10809
  %v10945 = vunpack.c.l.b16 %v10810
  %v10946 = vunpack.c.l.b16 %v10811
  %v10947 = vunpack.c.l.b16 %v10812
  %v10948 = vunpack.c.l.b16 %v10813
  %v10949 = vunpack.c.l.b16 %v10814
  %v10950 = vpack.c.b16 %v10887, %v10886
  %v10951 = vpack.c.b16 %v10889, %v10888
  %v10952 = vpack.c.b16 %v10891, %v10890
  %v10953 = vpack.c.b16 %v10893, %v10892
  %v10954 = vpack.c.b16 %v10895, %v10894
  %v10955 = vpack.c.b16 %v10897, %v10896
  %v10956 = vpack.c.b16 %v10899, %v10898
  %v10957 = vpack.c.b16 %v10901, %v10900
  %v10958 = vpack.c.b16 %v10903, %v10902
  %v10959 = vpack.c.b16 %v10905, %v10904
  %v10960 = vpack.c.b16 %v10907, %v10906
  %v10961 = vpack.c.b16 %v10909, %v10908
  %v10962 = vpack.c.b16 %v10911, %v10910
  %v10963 = vpack.c.b16 %v10913, %v10912
  %v10964 = vpack.c.b16 %v10915, %v10914
  %v10965 = vpack.c.b16 %v10917, %v10916
  %v10966 = vpack.c.b16 %v10919, %v10918
  %v10967 = vpack.c.b16 %v10921, %v10920
  %v10968 = vpack.c.b16 %v10923, %v10922
  %v10969 = vpack.c.b16 %v10925, %v10924
  %v10970 = vpack.c.b16 %v10927, %v10926
  %v10971 = vpack.c.b16 %v10929, %v10928
  %v10972 = vpack.c.b16 %v10931, %v10930
  %v10973 = vpack.c.b16 %v10933, %v10932
  %v10974 = vpack.c.b16 %v10935, %v10934
  %v10975 = vpack.c.b16 %v10937, %v10936
  %v10976 = vpack.c.b16 %v10939, %v10938
  %v10977 = vpack.c.b16 %v10941, %v10940
  %v10978 = vpack.c.b16 %v10943, %v10942
  %v10979 = vpack.c.b16 %v10945, %v10944
  %v10980 = vpack.c.b16 %v10947, %v10946
  %v10981 = vpack.c.b16 %v10949, %v10948
  %11014 = vmatprep.subr.bf16.mxu0 0
  %11015 = vmatpush1.bf16.msra.mxu0 %v10957
  %11016 = vmatprep.subr.bf16.mxu0 0
  %11017 = vmatpush1.bf16.msra.mxu0 %v10956
  %11018 = vmatprep.subr.bf16.mxu0 0
  %11019 = vmatpush1.bf16.msra.mxu0 %v10955
  %11020 = vmatprep.subr.bf16.mxu0 0
  %11021 = vmatpush1.bf16.msra.mxu0 %v10954
  %11022 = vmatprep.subr.bf16.mxu0 0
  %11023 = vmatpush1.bf16.msra.mxu0 %v10953
  %11024 = vmatprep.subr.bf16.mxu0 0
  %11025 = vmatpush1.bf16.msra.mxu0 %v10952
  %11026 = vmatprep.subr.bf16.mxu0 0
  %11027 = vmatpush1.bf16.msra.mxu0 %v10951
  %11028 = vmatprep.subr.bf16.mxu0 0
  %11029 = vmatpush1.bf16.msra.mxu0 %v10950
  %11030 = vmatprep.subr.bf16.mxu0 0
  %11031 = vmatpush2.bf16.msra.mxu0 %v10965
  %11032 = vmatprep.subr.bf16.mxu0 0
  %11033 = vmatpush2.bf16.msra.mxu0 %v10964
  %11034 = vmatprep.subr.bf16.mxu0 0
  %11035 = vmatpush2.bf16.msra.mxu0 %v10963
  %11036 = vmatprep.subr.bf16.mxu0 0
  %11037 = vmatpush2.bf16.msra.mxu0 %v10962
  %11038 = vmatprep.subr.bf16.mxu0 0
  %11039 = vmatpush2.bf16.msra.mxu0 %v10961
  %11040 = vmatprep.subr.bf16.mxu0 0
  %11041 = vmatpush2.bf16.msra.mxu0 %v10960
  %11042 = vmatprep.subr.bf16.mxu0 0
  %11043 = vmatpush2.bf16.msra.mxu0 %v10959
  %11044 = vmatprep.subr.bf16.mxu0 0
  %11045 = vmatpush2.bf16.msra.mxu0 %v10958
  %11046 = vmatprep.mubr.bf16.mxu0 %v10748
  %11047 = vmatmul.mubr.bf16.gmra.mxu0 %v10747
  %v11048 = vpop.f32.mrf.mxu0
  %v11049 = vadd.f32 %v10820, %v11048
  %v11050 = vpop.f32.mrf.mxu0
  %v11051 = vpop.f32.mrf.mxu0
  %v11052 = vpop.f32.mrf.mxu0
  %11053 = vdwg.mxu0
  %11054 = vmatprep.subr.bf16.mxu0 0
  %11055 = vmatpush1.bf16.msra.mxu0 %v10973
  %11056 = vmatprep.subr.bf16.mxu0 0
  %11057 = vmatpush1.bf16.msra.mxu0 %v10972
  %11058 = vmatprep.subr.bf16.mxu0 0
  %11059 = vmatpush1.bf16.msra.mxu0 %v10971
  %11060 = vmatprep.subr.bf16.mxu0 0
  %11061 = vmatpush1.bf16.msra.mxu0 %v10970
  %11062 = vmatprep.subr.bf16.mxu0 0
  %11063 = vmatpush1.bf16.msra.mxu0 %v10969
  %11064 = vmatprep.subr.bf16.mxu0 0
  %11065 = vmatpush1.bf16.msra.mxu0 %v10968
  %11066 = vmatprep.subr.bf16.mxu0 0
  %11067 = vmatpush1.bf16.msra.mxu0 %v10967
  %11068 = vmatprep.subr.bf16.mxu0 0
  %11069 = vmatpush1.bf16.msra.mxu0 %v10966
  %11070 = vmatprep.subr.bf16.mxu0 0
  %11071 = vmatpush2.bf16.msra.mxu0 %v10981
  %11072 = vmatprep.subr.bf16.mxu0 0
  %11073 = vmatpush2.bf16.msra.mxu0 %v10980
  %11074 = vmatprep.subr.bf16.mxu0 0
  %11075 = vmatpush2.bf16.msra.mxu0 %v10979
  %11076 = vmatprep.subr.bf16.mxu0 0
  %11077 = vmatpush2.bf16.msra.mxu0 %v10978
  %11078 = vmatprep.subr.bf16.mxu0 0
  %11079 = vmatpush2.bf16.msra.mxu0 %v10977
  %11080 = vmatprep.subr.bf16.mxu0 0
  %11081 = vmatpush2.bf16.msra.mxu0 %v10976
  %11082 = vmatprep.subr.bf16.mxu0 0
  %11083 = vmatpush2.bf16.msra.mxu0 %v10975
  %11084 = vmatprep.subr.bf16.mxu0 0
  %11085 = vmatpush2.bf16.msra.mxu0 %v10974
  %11086 = vmatprep.mubr.bf16.mxu0 %v10750
  %11087 = vmatmul.mubr.bf16.gmra.mxu0 %v10749
  %v11088 = vpop.f32.mrf.mxu0
  %v11089 = vadd.f32 %v11049, %v11088
  %v11090 = vpop.f32.mrf.mxu0
  %v11091 = vpop.f32.mrf.mxu0
  %v11092 = vpop.f32.mrf.mxu0
  %11093 = vdwg.mxu0
  %vm11094 = vcmask 80896
  %v11095 = vsel %vm11094, %v11089, -inf
  %11096 = vmax.xlane.f32.xlu0 %v11095
  %v11097 = vpop.xlane.xlu0 %11096
  %v11098 = vsub.f32 %v11089, %v11097
  %v11099 = vmul.f32 %v11098, 1.442695
  %v11100 = vpow.pop %v11099
  %v11101 = vsel %vm11094, %v11100, 0.0
  %11102 = vadd.xlane.f32.xlu0 %v11101
  %v11103 = vpop.xlane.xlu0 %11102
  %v11104 = vlog2.pop %v11103
  %v11105 = vmul.f32 %v11104, 0.6931472
  %v11106 = vsub.f32 %v11098, %v11105
  %11107 = vst.msk [vmem:[%s9] sm:$0xff] %vm11094, %v11106
  // Predicated region
  $region38: #{mnist_net_forward.1} parent=0 // pred_check
    _
  $region39: #{mnist_net_forward.1} parent=0 // pred_check_branch
    %11109 = sbr.rel (0) target = $region41
  $region40: #{mnist_net_forward.1} parent=0 // pred_region
    _
  $region41: #{mnist_net_forward.1} parent=0 // pred_fallthru
    _
  // Predicated region
  $region42: #{mnist_net_forward.1} parent=0 // pred_check
    _
  $region43: #{mnist_net_forward.1} parent=0 // pred_check_branch
    %11111 = sbr.rel (0) target = $region45
  $region44: #{mnist_net_forward.1} parent=0 // pred_region
    _
  $region45: #{mnist_net_forward.1} parent=0 // pred_fallthru
    _

</llo_original>
